<compile_context>
chip_gen: v5e
topology: v5e:2x2
jax: 0.10.0
libtpu: 0.0.40
codegen_flags: <defaults>
</compile_context>

<pallas_src>
import jax
import jax.numpy as jnp
import numpy as np
from jax.experimental import pallas as pl
from jax.experimental.pallas import tpu as pltpu


def _round_up(x, m):
    return (x + m - 1) // m * m


def _vgg_block_kernel(p_ref, mask_ref, w1_ref, s1_ref, b1_ref,
                      w2_ref, s2_ref, b2_ref, out_ref, y1p_ref):
    """One batch-block per grid step.

    p_ref   : (M_acc, K1p)      conv1 im2col patches over the full padded grid (bf16)
    mask_ref: (M_acc, 1)        1.0 on valid (interior) positions, 0.0 on the halo (f32)
    w1_ref  : (K1p, Cp)         conv1 weights, row = (kh*3+kw)*Cin + cin (zero-padded)
    w2_ref  : (9*Cp, Cp)        conv2 weights, row = (kh*3+kw)*Cp + cin
    s*/b*   : (1, Cp)           folded BatchNorm scale / bias (f32)
    out_ref : (BB, Hh, Wh, Cp)  pooled output (bf16, lane-dense)
    y1p_ref : (M_scr, Cp)       VMEM scratch: FLAT padded conv1 activation
                                (row = b*Hp*Wp + i*Wp + j), plus a small zero tail
    """
    BB, Hh, Wh, Cp = out_ref.shape
    H, W = 2 * Hh, 2 * Wh
    Hp = H + 2
    M_acc = p_ref.shape[0]
    M_img = M_acc // BB
    Wp = M_img // Hp
    M_scr = y1p_ref.shape[0]

    # ---- conv1: one matmul over the whole padded grid, then ReLU + folded BN1.
    # The border mask zeroes the 1-px halo (and alignment columns), so the result IS the
    # zero-padded conv2 input and can be stored with a single contiguous write.
    acc1 = jnp.dot(p_ref[...], w1_ref[...], preferred_element_type=jnp.float32)
    y1 = (jnp.maximum(acc1, 0.0) * s1_ref[...] + b1_ref[...]) * mask_ref[...]

    y1p_ref[pl.ds(0, M_acc), :] = y1.astype(y1p_ref.dtype)
    # Zero the small tail that the shifted conv2 views run into (keeps junk rows finite).
    y1p_ref[pl.ds(M_acc, M_scr - M_acc), :] = jnp.zeros((M_scr - M_acc, Cp),
                                                        y1p_ref.dtype)

    # ---- conv2: 3 accumulating matmuls (one per kh), K = 3*Cp.  Each tap operand is a
    # pure row-offset view of the flattened padded activation (offset kh*Wp + kw); only
    # the lane-aligned concat of three Cp-wide chunks is formed per kh (no 9x im2col).
    acc2 = jnp.zeros((M_acc, Cp), jnp.float32)
    for kh in range(3):
        lhs = jnp.concatenate(
            [y1p_ref[pl.ds(kh * Wp + kw, M_acc), :] for kw in range(3)], axis=1)
        acc2 = acc2 + jnp.dot(lhs, w2_ref[pl.ds(kh * 3 * Cp, 3 * Cp), :],
                              preferred_element_type=jnp.float32)
    y2 = jnp.maximum(acc2, 0.0) * s2_ref[...] + b2_ref[...]          # ReLU + folded BN2

    # ---- fused 2x2 max-pool epilogue (pure VPU; activation never leaves VMEM).
    # Accumulator rows beyond (H, W) are junk from the padded grid and are sliced off
    # before the lane-dense bf16 store.
    v = y2.reshape(BB, Hp // 2, 2, Wp, Cp)
    hm = jnp.maximum(v[:, :, 0], v[:, :, 1])                         # (BB, Hp/2, Wp, Cp)
    u = hm.reshape(BB, Hp // 2, Wp // 2, 2, Cp)
    pooled = jnp.maximum(u[..., 0, :], u[..., 1, :])                 # (BB, Hp/2, Wp/2, Cp)
    out_ref[...] = pooled[:, :Hh, :Wh, :].astype(out_ref.dtype)


def vgg_conv1_forward_nhwc(x_nhwc, w1_hwio, w2_hwio, scale1, bias1, scale2, bias2,
                           compute_dtype=jnp.bfloat16, out_dtype=jnp.bfloat16):
    """Fused VGG block, NHWC in -> NHWC out (preferred API: stays lane-dense end-to-end).

    Pass compute_dtype=jnp.float32 / out_dtype=jnp.float32 for exact-f32 parity.
    """
    N, H, W, Cin = x_nhwc.shape
    Cout = w1_hwio.shape[-1]
    assert H % 2 == 0 and W % 2 == 0, "MaxPool2x2 needs even spatial dims"
    assert W % 8 == 0, "width must be a multiple of 8 (sublane alignment)"
    Hh, Wh = H // 2, W // 2

    Cp = _round_up(Cout, 128)                 # lane-dense channel dim
    K1 = 9 * Cin
    K1p = _round_up(K1, 16)                   # bf16 sublane-pack multiple
    Hp = H + 2
    Wp = _round_up(W + 2, 8)                  # padded width, sublane aligned
    M_img = Hp * Wp
    BB = N if H * W <= 64 * 64 else 1         # block several small images per grid step
    assert N % BB == 0
    M_acc = BB * M_img
    M_scr = M_acc + _round_up(2 * Wp + 2, 8)  # + tail read by the shifted conv2 views

    # conv1 im2col patches over the FULL padded grid, built by XLA (conv1 input is tiny,
    # so the 9x duplication is negligible).  Halo positions carry garbage taps; they are
    # masked to zero in-kernel, so no in-kernel padding/scatter is ever needed.
    xp2 = jnp.pad(x_nhwc, ((0, 0), (2, 2), (2, Wp - W), (0, 0)))
    taps = [xp2[:, kh:kh + Hp, kw:kw + Wp, :] for kh in range(3) for kw in range(3)]
    patches = jnp.concatenate(taps, axis=-1).reshape(N, M_img, K1)
    patches = jnp.pad(patches, ((0, 0), (0, 0), (0, K1p - K1)))
    patches = patches.reshape(N * M_img, K1p).astype(compute_dtype)

    ii = jnp.arange(Hp)[:, None]
    jj = jnp.arange(Wp)[None, :]
    m2d = ((ii >= 1) & (ii <= H) & (jj >= 1) & (jj <= W)).astype(jnp.float32)
    mask = jnp.tile(m2d.reshape(M_img, 1), (BB, 1))                  # (M_acc, 1)

    # Channel padding to Cp: padded channels stay exactly zero end-to-end and are sliced
    # off after the kernel.  Contraction dim of conv1 padded to K1p with zero rows.
    pc = Cp - Cout
    w1k = jnp.pad(w1_hwio, ((0, 0), (0, 0), (0, 0), (0, pc))).reshape(K1, Cp)
    w1k = jnp.pad(w1k, ((0, K1p - K1), (0, 0))).astype(compute_dtype)
    w2k = jnp.pad(w2_hwio, ((0, 0), (0, 0), (0, pc), (0, pc))
                  ).reshape(9 * Cp, Cp).astype(compute_dtype)
    s1 = jnp.pad(scale1, (0, pc), constant_values=1.0).reshape(1, Cp).astype(jnp.float32)
    b1 = jnp.pad(bias1, (0, pc)).reshape(1, Cp).astype(jnp.float32)
    s2 = jnp.pad(scale2, (0, pc), constant_values=1.0).reshape(1, Cp).astype(jnp.float32)
    b2 = jnp.pad(bias2, (0, pc)).reshape(1, Cp).astype(jnp.float32)

    pooled = pl.pallas_call(
        _vgg_block_kernel,
        out_shape=jax.ShapeDtypeStruct((N, Hh, Wh, Cp), out_dtype),
        grid=(N // BB,),
        in_specs=[
            pl.BlockSpec((M_acc, K1p), lambda g: (g, 0)),     # conv1 patches (per block)
            pl.BlockSpec((M_acc, 1), lambda g: (0, 0)),       # border mask (constant)
            # Constant operands below; single-buffering them (pipeline_mode=pl.Buffered(1))
            # would save a little VMEM on v7x but is left default for portability.
            pl.BlockSpec((K1p, Cp), lambda g: (0, 0)),        # w1
            pl.BlockSpec((1, Cp), lambda g: (0, 0)),          # bn1 scale
            pl.BlockSpec((1, Cp), lambda g: (0, 0)),          # bn1 bias
            pl.BlockSpec((9 * Cp, Cp), lambda g: (0, 0)),     # w2
            pl.BlockSpec((1, Cp), lambda g: (0, 0)),          # bn2 scale
            pl.BlockSpec((1, Cp), lambda g: (0, 0)),          # bn2 bias
        ],
        out_specs=pl.BlockSpec((BB, Hh, Wh, Cp), lambda g: (g, 0, 0, 0)),
        scratch_shapes=[pltpu.VMEM((M_scr, Cp), compute_dtype)],
        compiler_params=pltpu.CompilerParams(
            dimension_semantics=("parallel",),            # images are independent
            vmem_limit_bytes=32 * 1024 * 1024),           # explicit (v5e default is 16MiB)
    )(patches, mask, w1k, s1, b1, w2k, s2, b2)

    return pooled[..., :Cout]                             # NHWC, out_dtype


def vgg_conv1_forward(x_nchw, w1_hwio, w2_hwio, scale1, bias1, scale2, bias2,
                      compute_dtype=jnp.bfloat16, out_dtype=jnp.bfloat16):
    """PyTorch-layout parity wrapper (NCHW in / NCHW out).

    For chained VGG blocks prefer vgg_conv1_forward_nhwc and keep NHWC end-to-end: the
    slice-to-Cout + NCHW transpose here is an extra HBM pass that a consumer can fuse.
    """
    x = jnp.transpose(x_nchw, (0, 2, 3, 1))
    y = vgg_conv1_forward_nhwc(x, w1_hwio, w2_hwio, scale1, bias1, scale2, bias2,
                               compute_dtype=compute_dtype, out_dtype=out_dtype)
    return jnp.transpose(y, (0, 3, 1, 2))


def _reference(x_nchw, w1_hwio, w2_hwio, s1, b1, s2, b2):
    """Pure-JAX f32 reference: conv -> ReLU -> folded BN, twice, then maxpool2x2."""
    x = jnp.transpose(x_nchw, (0, 2, 3, 1))
    y = jax.lax.conv_general_dilated(x, w1_hwio, (1, 1), "SAME",
                                     dimension_numbers=("NHWC", "HWIO", "NHWC"),
                                     precision=jax.lax.Precision.HIGHEST)
    y = jnp.maximum(y, 0.0) * s1 + b1
    y = jax.lax.conv_general_dilated(y, w2_hwio, (1, 1), "SAME",
                                     dimension_numbers=("NHWC", "HWIO", "NHWC"),
                                     precision=jax.lax.Precision.HIGHEST)
    y = jnp.maximum(y, 0.0) * s2 + b2
    N, H, W, C = y.shape
    y = y.reshape(N, H // 2, 2, W // 2, 2, C).max(axis=(2, 4))
    return jnp.transpose(y, (0, 3, 1, 2))


if __name__ == "__main__":
    N, Cin, Cout, H, W = 2, 4, 8, 16, 16
    eps = 1e-5

    keys = jax.random.split(jax.random.PRNGKey(0), 12)
    x = jax.random.normal(keys[0], (N, Cin, H, W), jnp.float32)

    # Conv weights (synthetic, deterministic). PyTorch stores OIHW; we generate HWIO.
    w1 = jax.random.normal(keys[1], (3, 3, Cin, Cout), jnp.float32) * (2.0 / (9 * Cin)) ** 0.5
    w2 = jax.random.normal(keys[2], (3, 3, Cout, Cout), jnp.float32) * (2.0 / (9 * Cout)) ** 0.5

    # BatchNorm parameters / running stats, folded into per-channel scale & bias.
    gamma1 = 1.0 + 0.1 * jax.random.normal(keys[3], (Cout,), jnp.float32)
    beta1 = 0.1 * jax.random.normal(keys[4], (Cout,), jnp.float32)
    mean1 = 0.1 * jax.random.normal(keys[5], (Cout,), jnp.float32)
    var1 = 1.0 + 0.2 * jax.random.uniform(keys[6], (Cout,), jnp.float32)
    gamma2 = 1.0 + 0.1 * jax.random.normal(keys[7], (Cout,), jnp.float32)
    beta2 = 0.1 * jax.random.normal(keys[8], (Cout,), jnp.float32)
    mean2 = 0.1 * jax.random.normal(keys[9], (Cout,), jnp.float32)
    var2 = 1.0 + 0.2 * jax.random.uniform(keys[10], (Cout,), jnp.float32)

    scale1 = gamma1 / jnp.sqrt(var1 + eps)
    bias1 = beta1 - mean1 * scale1
    scale2 = gamma2 / jnp.sqrt(var2 + eps)
    bias2 = beta2 - mean2 * scale2

    out = vgg_conv1_forward(x, w1, w2, scale1, bias1, scale2, bias2)
    out = jax.block_until_ready(out)
    assert out.shape == (N, Cout, H // 2, W // 2)

    # bf16 MXU operands / bf16 output, f32 accumulation vs. a full-f32 XLA reference.
    ref = _reference(x, w1, w2, scale1, bias1, scale2, bias2)
    np.testing.assert_allclose(np.asarray(out.astype(jnp.float32)), np.asarray(ref),
                               rtol=3e-2, atol=3e-2)

    print("KERNEL_OK")
</pallas_src>

<mosaic_0001>
module attributes {stable_mosaic.version = 11 : i64} {
  func.func @_vgg_block_kernel(%arg0: i32, %arg1: memref<864x48xbf16, #tpu.memory_space<vmem>>, %arg2: memref<864x1xf32, #tpu.memory_space<vmem>>, %arg3: memref<48x128xbf16, #tpu.memory_space<vmem>>, %arg4: memref<1x128xf32, #tpu.memory_space<vmem>>, %arg5: memref<1x128xf32, #tpu.memory_space<vmem>>, %arg6: memref<1152x128xbf16, #tpu.memory_space<vmem>>, %arg7: memref<1x128xf32, #tpu.memory_space<vmem>>, %arg8: memref<1x128xf32, #tpu.memory_space<vmem>>, %arg9: memref<2x8x8x128xbf16, #tpu.memory_space<vmem>>, %arg10: memref<920x128xbf16, #tpu.memory_space<vmem>>) attributes {dimension_semantics = [#tpu.dimension_semantics<parallel>], iteration_bounds = array<i64: 1>, scalar_prefetch = 0 : i64, scratch_operands = 1 : i64, tpu.core_type = #tpu.core_type<tc>, window_params = [{transform_indices = @transform_0, window_bounds = array<i64: 864, 48>}, {pipeline_mode = #tpu.pipeline_mode<synchronous>, transform_indices = @transform_1, window_bounds = array<i64: 864, 1>}, {pipeline_mode = #tpu.pipeline_mode<synchronous>, transform_indices = @transform_2, window_bounds = array<i64: 48, 128>}, {pipeline_mode = #tpu.pipeline_mode<synchronous>, transform_indices = @transform_3, window_bounds = array<i64: 1, 128>}, {pipeline_mode = #tpu.pipeline_mode<synchronous>, transform_indices = @transform_4, window_bounds = array<i64: 1, 128>}, {pipeline_mode = #tpu.pipeline_mode<synchronous>, transform_indices = @transform_5, window_bounds = array<i64: 1152, 128>}, {pipeline_mode = #tpu.pipeline_mode<synchronous>, transform_indices = @transform_6, window_bounds = array<i64: 1, 128>}, {pipeline_mode = #tpu.pipeline_mode<synchronous>, transform_indices = @transform_7, window_bounds = array<i64: 1, 128>}, {transform_indices = @transform_8, window_bounds = array<i64: 2, 8, 8, 128>}]} {
    %c0 = arith.constant 0 : index
    %c0_0 = arith.constant 0 : index
    %0 = vector.load %arg1[%c0, %c0_0] : memref<864x48xbf16, #tpu.memory_space<vmem>>, vector<864x48xbf16>
    %c0_1 = arith.constant 0 : index
    %c0_2 = arith.constant 0 : index
    %1 = vector.load %arg3[%c0_1, %c0_2] : memref<48x128xbf16, #tpu.memory_space<vmem>>, vector<48x128xbf16>
    %cst = arith.constant dense<0.000000e+00> : vector<864x128xf32>
    %2 = tpu.matmul %0, %1, %cst {dimension_numbers = #tpu.dot_dimension_numbers<[1], [0], [0], [1], [0, 0, 1, 1], [], []>} : vector<864x48xbf16>, vector<48x128xbf16>, vector<864x128xf32> -> vector<864x128xf32>
    %cst_3 = arith.constant 0.000000e+00 : f32
    %3 = vector.broadcast %cst_3 : f32 to vector<864x128xf32>
    %4 = arith.maximumf %2, %3 : vector<864x128xf32>
    %c0_4 = arith.constant 0 : index
    %c0_5 = arith.constant 0 : index
    %5 = vector.load %arg4[%c0_4, %c0_5] : memref<1x128xf32, #tpu.memory_space<vmem>>, vector<1x128xf32>
    %6 = vector.broadcast %5 : vector<1x128xf32> to vector<864x128xf32>
    %7 = arith.mulf %4, %6 : vector<864x128xf32>
    %c0_6 = arith.constant 0 : index
    %c0_7 = arith.constant 0 : index
    %8 = vector.load %arg5[%c0_6, %c0_7] : memref<1x128xf32, #tpu.memory_space<vmem>>, vector<1x128xf32>
    %9 = vector.broadcast %8 : vector<1x128xf32> to vector<864x128xf32>
    %10 = arith.addf %7, %9 : vector<864x128xf32>
    %c0_8 = arith.constant 0 : index
    %c0_9 = arith.constant 0 : index
    %11 = vector.load %arg2[%c0_8, %c0_9] : memref<864x1xf32, #tpu.memory_space<vmem>>, vector<864x1xf32>
    %12 = vector.broadcast %11 : vector<864x1xf32> to vector<864x128xf32>
    %13 = arith.mulf %10, %12 : vector<864x128xf32>
    %14 = arith.truncf %13 : vector<864x128xf32> to vector<864x128xbf16>
    %c0_10 = arith.constant 0 : index
    %c0_11 = arith.constant 0 : index
    %15 = vector.load %arg10[%c0_10, %c0_11] : memref<920x128xbf16, #tpu.memory_space<vmem>>, vector<864x128xbf16>
    tpu.vector_store %arg10[%c0_10, %c0_11], %14 {strides = array<i32>} : memref<920x128xbf16, #tpu.memory_space<vmem>>, vector<864x128xbf16>,
    %cst_12 = arith.constant 0.000000e+00 : bf16
    %16 = vector.broadcast %cst_12 : bf16 to vector<56x128xbf16>
    %c864 = arith.constant 864 : index
    %c0_13 = arith.constant 0 : index
    %17 = vector.load %arg10[%c864, %c0_13] : memref<920x128xbf16, #tpu.memory_space<vmem>>, vector<56x128xbf16>
    tpu.vector_store %arg10[%c864, %c0_13], %16 {strides = array<i32>} : memref<920x128xbf16, #tpu.memory_space<vmem>>, vector<56x128xbf16>,
    %cst_14 = arith.constant 0.000000e+00 : f32
    %18 = vector.broadcast %cst_14 : f32 to vector<864x128xf32>
    %c0_15 = arith.constant 0 : index
    %c0_16 = arith.constant 0 : index
    %19 = vector.load %arg10[%c0_15, %c0_16] : memref<920x128xbf16, #tpu.memory_space<vmem>>, vector<864x128xbf16>
    %c1 = arith.constant 1 : index
    %c0_17 = arith.constant 0 : index
    %20 = vector.load %arg10[%c1, %c0_17] : memref<920x128xbf16, #tpu.memory_space<vmem>>, vector<864x128xbf16>
    %c2 = arith.constant 2 : index
    %c0_18 = arith.constant 0 : index
    %21 = vector.load %arg10[%c2, %c0_18] : memref<920x128xbf16, #tpu.memory_space<vmem>>, vector<864x128xbf16>
    %22 = tpu.concatenate %19, %20, %21 in 1 : vector<864x128xbf16>, vector<864x128xbf16>, vector<864x128xbf16> -> vector<864x384xbf16>
    %c0_19 = arith.constant 0 : index
    %c0_20 = arith.constant 0 : index
    %23 = vector.load %arg6[%c0_19, %c0_20] : memref<1152x128xbf16, #tpu.memory_space<vmem>>, vector<384x128xbf16>
    %cst_21 = arith.constant dense<0.000000e+00> : vector<864x128xf32>
    %24 = tpu.matmul %22, %23, %cst_21 {dimension_numbers = #tpu.dot_dimension_numbers<[1], [0], [0], [1], [0, 0, 1, 1], [], []>} : vector<864x384xbf16>, vector<384x128xbf16>, vector<864x128xf32> -> vector<864x128xf32>
    %25 = arith.addf %18, %24 : vector<864x128xf32>
    %c24 = arith.constant 24 : index
    %c0_22 = arith.constant 0 : index
    %26 = vector.load %arg10[%c24, %c0_22] : memref<920x128xbf16, #tpu.memory_space<vmem>>, vector<864x128xbf16>
    %c25 = arith.constant 25 : index
    %c0_23 = arith.constant 0 : index
    %27 = vector.load %arg10[%c25, %c0_23] : memref<920x128xbf16, #tpu.memory_space<vmem>>, vector<864x128xbf16>
    %c26 = arith.constant 26 : index
    %c0_24 = arith.constant 0 : index
    %28 = vector.load %arg10[%c26, %c0_24] : memref<920x128xbf16, #tpu.memory_space<vmem>>, vector<864x128xbf16>
    %29 = tpu.concatenate %26, %27, %28 in 1 : vector<864x128xbf16>, vector<864x128xbf16>, vector<864x128xbf16> -> vector<864x384xbf16>
    %c384 = arith.constant 384 : index
    %c0_25 = arith.constant 0 : index
    %30 = vector.load %arg6[%c384, %c0_25] : memref<1152x128xbf16, #tpu.memory_space<vmem>>, vector<384x128xbf16>
    %cst_26 = arith.constant dense<0.000000e+00> : vector<864x128xf32>
    %31 = tpu.matmul %29, %30, %cst_26 {dimension_numbers = #tpu.dot_dimension_numbers<[1], [0], [0], [1], [0, 0, 1, 1], [], []>} : vector<864x384xbf16>, vector<384x128xbf16>, vector<864x128xf32> -> vector<864x128xf32>
    %32 = arith.addf %25, %31 : vector<864x128xf32>
    %c48 = arith.constant 48 : index
    %c0_27 = arith.constant 0 : index
    %33 = vector.load %arg10[%c48, %c0_27] : memref<920x128xbf16, #tpu.memory_space<vmem>>, vector<864x128xbf16>
    %c49 = arith.constant 49 : index
    %c0_28 = arith.constant 0 : index
    %34 = vector.load %arg10[%c49, %c0_28] : memref<920x128xbf16, #tpu.memory_space<vmem>>, vector<864x128xbf16>
    %c50 = arith.constant 50 : index
    %c0_29 = arith.constant 0 : index
    %35 = vector.load %arg10[%c50, %c0_29] : memref<920x128xbf16, #tpu.memory_space<vmem>>, vector<864x128xbf16>
    %36 = tpu.concatenate %33, %34, %35 in 1 : vector<864x128xbf16>, vector<864x128xbf16>, vector<864x128xbf16> -> vector<864x384xbf16>
    %c768 = arith.constant 768 : index
    %c0_30 = arith.constant 0 : index
    %37 = vector.load %arg6[%c768, %c0_30] : memref<1152x128xbf16, #tpu.memory_space<vmem>>, vector<384x128xbf16>
    %cst_31 = arith.constant dense<0.000000e+00> : vector<864x128xf32>
    %38 = tpu.matmul %36, %37, %cst_31 {dimension_numbers = #tpu.dot_dimension_numbers<[1], [0], [0], [1], [0, 0, 1, 1], [], []>} : vector<864x384xbf16>, vector<384x128xbf16>, vector<864x128xf32> -> vector<864x128xf32>
    %39 = arith.addf %32, %38 : vector<864x128xf32>
    %cst_32 = arith.constant 0.000000e+00 : f32
    %40 = vector.broadcast %cst_32 : f32 to vector<864x128xf32>
    %41 = arith.maximumf %39, %40 : vector<864x128xf32>
    %c0_33 = arith.constant 0 : index
    %c0_34 = arith.constant 0 : index
    %42 = vector.load %arg7[%c0_33, %c0_34] : memref<1x128xf32, #tpu.memory_space<vmem>>, vector<1x128xf32>
    %43 = vector.broadcast %42 : vector<1x128xf32> to vector<864x128xf32>
    %44 = arith.mulf %41, %43 : vector<864x128xf32>
    %c0_35 = arith.constant 0 : index
    %c0_36 = arith.constant 0 : index
    %45 = vector.load %arg8[%c0_35, %c0_36] : memref<1x128xf32, #tpu.memory_space<vmem>>, vector<1x128xf32>
    %46 = vector.broadcast %45 : vector<1x128xf32> to vector<864x128xf32>
    %47 = arith.addf %44, %46 : vector<864x128xf32>
    %48 = vector.shape_cast %47 : vector<864x128xf32> to vector<2x9x2x24x128xf32>
    %49 = vector.extract_strided_slice %48 {offsets = [0, 0, 0, 0, 0], sizes = [2, 9, 1, 24, 128], strides = [1, 1, 1, 1, 1]} : vector<2x9x2x24x128xf32> to vector<2x9x1x24x128xf32>
    %50 = vector.shape_cast %49 : vector<2x9x1x24x128xf32> to vector<2x9x24x128xf32>
    %51 = vector.extract_strided_slice %48 {offsets = [0, 0, 1, 0, 0], sizes = [2, 9, 1, 24, 128], strides = [1, 1, 1, 1, 1]} : vector<2x9x2x24x128xf32> to vector<2x9x1x24x128xf32>
    %52 = vector.shape_cast %51 : vector<2x9x1x24x128xf32> to vector<2x9x24x128xf32>
    %53 = arith.maximumf %50, %52 : vector<2x9x24x128xf32>
    %54 = vector.shape_cast %53 : vector<2x9x24x128xf32> to vector<2x9x12x2x128xf32>
    %55 = vector.extract_strided_slice %54 {offsets = [0, 0, 0, 0, 0], sizes = [2, 9, 12, 1, 128], strides = [1, 1, 1, 1, 1]} : vector<2x9x12x2x128xf32> to vector<2x9x12x1x128xf32>
    %56 = vector.shape_cast %55 : vector<2x9x12x1x128xf32> to vector<2x9x12x128xf32>
    %57 = vector.extract_strided_slice %54 {offsets = [0, 0, 0, 1, 0], sizes = [2, 9, 12, 1, 128], strides = [1, 1, 1, 1, 1]} : vector<2x9x12x2x128xf32> to vector<2x9x12x1x128xf32>
    %58 = vector.shape_cast %57 : vector<2x9x12x1x128xf32> to vector<2x9x12x128xf32>
    %59 = arith.maximumf %56, %58 : vector<2x9x12x128xf32>
    %60 = vector.extract_strided_slice %59 {offsets = [0, 0, 0, 0], sizes = [2, 8, 8, 128], strides = [1, 1, 1, 1]} : vector<2x9x12x128xf32> to vector<2x8x8x128xf32>
    %61 = arith.truncf %60 : vector<2x8x8x128xf32> to vector<2x8x8x128xbf16>
    %c0_37 = arith.constant 0 : index
    %c0_38 = arith.constant 0 : index
    %c0_39 = arith.constant 0 : index
    %c0_40 = arith.constant 0 : index
    %62 = vector.load %arg9[%c0_37, %c0_38, %c0_39, %c0_40] : memref<2x8x8x128xbf16, #tpu.memory_space<vmem>>, vector<2x8x8x128xbf16>
    tpu.vector_store %arg9[%c0_37, %c0_38, %c0_39, %c0_40], %61 {strides = array<i32>} : memref<2x8x8x128xbf16, #tpu.memory_space<vmem>>, vector<2x8x8x128xbf16>,
    return
  }
  func.func @transform_0(%arg0: i32) -> (i32, i32) {
    %c0_i32 = arith.constant 0 : i32
    %c0_i32_0 = arith.constant 0 : i32
    return %arg0, %c0_i32 : i32, i32
  }
  func.func @transform_1(%arg0: i32) -> (i32, i32) {
    %c0_i32 = arith.constant 0 : i32
    %c0_i32_0 = arith.constant 0 : i32
    %c0_i32_1 = arith.constant 0 : i32
    return %c0_i32, %c0_i32_0 : i32, i32
  }
  func.func @transform_2(%arg0: i32) -> (i32, i32) {
    %c0_i32 = arith.constant 0 : i32
    %c0_i32_0 = arith.constant 0 : i32
    %c0_i32_1 = arith.constant 0 : i32
    return %c0_i32, %c0_i32_0 : i32, i32
  }
  func.func @transform_3(%arg0: i32) -> (i32, i32) {
    %c0_i32 = arith.constant 0 : i32
    %c0_i32_0 = arith.constant 0 : i32
    %c0_i32_1 = arith.constant 0 : i32
    return %c0_i32, %c0_i32_0 : i32, i32
  }
  func.func @transform_4(%arg0: i32) -> (i32, i32) {
    %c0_i32 = arith.constant 0 : i32
    %c0_i32_0 = arith.constant 0 : i32
    %c0_i32_1 = arith.constant 0 : i32
    return %c0_i32, %c0_i32_0 : i32, i32
  }
  func.func @transform_5(%arg0: i32) -> (i32, i32) {
    %c0_i32 = arith.constant 0 : i32
    %c0_i32_0 = arith.constant 0 : i32
    %c0_i32_1 = arith.constant 0 : i32
    return %c0_i32, %c0_i32_0 : i32, i32
  }
  func.func @transform_6(%arg0: i32) -> (i32, i32) {
    %c0_i32 = arith.constant 0 : i32
    %c0_i32_0 = arith.constant 0 : i32
    %c0_i32_1 = arith.constant 0 : i32
    return %c0_i32, %c0_i32_0 : i32, i32
  }
  func.func @transform_7(%arg0: i32) -> (i32, i32) {
    %c0_i32 = arith.constant 0 : i32
    %c0_i32_0 = arith.constant 0 : i32
    %c0_i32_1 = arith.constant 0 : i32
    return %c0_i32, %c0_i32_0 : i32, i32
  }
  func.func @transform_8(%arg0: i32) -> (i32, i32, i32, i32) {
    %c0_i32 = arith.constant 0 : i32
    %c0_i32_0 = arith.constant 0 : i32
    %c0_i32_1 = arith.constant 0 : i32
    %c0_i32_2 = arith.constant 0 : i32
    return %arg0, %c0_i32, %c0_i32_0, %c0_i32_1 : i32, i32, i32, i32
  }
}

</mosaic_0001>

<llo_original>
// kernel: tpu_custom_call.1
$region0: #{tpu_custom_call.1}
  #allocation0 [shape = 'u32[]', space=smem, size = 0x4, offset = 0x4, fixed_abs, tag = 'smem constant byte address 0x4 - core index']
  #allocation1 [shape = 'u32[72,128]{1,0:T(1,128)}', space=vmem, size = 0x9000, scoped, tag = 'internal scratch']
  #allocation2 [shape = 'bf16[920,128]{1,0:T(8,128)(2,1)}', space=vmem, size = 0x39800, scoped, tag = 'scratch operand']
  %s0 = inlined_call_operand.vmem [shape: bf16[864,48], index: 0, kind: input, shape index: {}]
  %s1 = inlined_call_operand.vmem [shape: f32[864,1], index: 1, kind: input, shape index: {}]
  %s2 = inlined_call_operand.vmem [shape: bf16[48,128], index: 2, kind: input, shape index: {}]
  %s3 = inlined_call_operand.vmem [shape: f32[1,128], index: 3, kind: input, shape index: {}]
  %s4 = inlined_call_operand.vmem [shape: f32[1,128], index: 4, kind: input, shape index: {}]
  %s5 = inlined_call_operand.vmem [shape: bf16[1152,128], index: 5, kind: input, shape index: {}]
  %s6 = inlined_call_operand.vmem [shape: f32[1,128], index: 6, kind: input, shape index: {}]
  %s7 = inlined_call_operand.vmem [shape: f32[1,128], index: 7, kind: input, shape index: {}]
  %s8 = inlined_call_operand.hbm [shape: bf16[2,8,8,128], index: 8, kind: output, shape index: {}]
  %s9 = sld [smem:[#allocation0]]
  $region42: #{tpu_custom_call.1} parent=0
    _
  %s11 = ssub.s32 1, %s9
  %s12 = scalar_select 0, %s11, %s9
  $region1: #{tpu_custom_call.1} parent=0
    #allocation3 [shape = 'u8[32768]{0}', space=vmem, size = 0x8000, scoped, tag = 'output window, operand 0, single buffered']
    #allocation4 [shape = 's32[1]{0}', space=sflag, size = 0x4, scoped, tag = 'scoped memory for tpu_custom_call.1']
    %13 = vsyncpa [#allocation4], 0
    // Predicated region
    $region2: #{tpu_custom_call.1} parent=1 // pred_check
      _
    $region3: #{tpu_custom_call.1} parent=1 // pred_check_branch
      %15 = sbr.rel (0) target = $region5
    $region4: #{tpu_custom_call.1} parent=1 // pred_region
      _
    $region5: #{tpu_custom_call.1} parent=1 // pred_fallthru
      _
    // Predicated region
    $region6: #{tpu_custom_call.1} parent=1 // pred_check
      _
    $region7: #{tpu_custom_call.1} parent=1 // pred_check_branch
      %17 = sbr.rel (0) target = $region9
    $region8: #{tpu_custom_call.1} parent=1 // pred_region
      _
    $region9: #{tpu_custom_call.1} parent=1 // pred_fallthru
      _
    // Predicated region
    $region10: #{tpu_custom_call.1} parent=1 // pred_check
      _
    $region11: #{tpu_custom_call.1} parent=1 // pred_check_branch
      %19 = sbr.rel (0) target = $region13
    $region12: #{tpu_custom_call.1} parent=1 // pred_region
      _
    $region13: #{tpu_custom_call.1} parent=1 // pred_fallthru
      _
    // Predicated region
    $region14: #{tpu_custom_call.1} parent=1 // pred_check
      _
    $region15: #{tpu_custom_call.1} parent=1 // pred_check_branch
      %21 = sbr.rel (0) target = $region17
    $region16: #{tpu_custom_call.1} parent=1 // pred_region
      _
    $region17: #{tpu_custom_call.1} parent=1 // pred_fallthru
      _
    // Predicated region
    $region18: #{tpu_custom_call.1} parent=1 // pred_check
      _
    $region19: #{tpu_custom_call.1} parent=1 // pred_check_branch
      %23 = sbr.rel (0) target = $region21
    $region20: #{tpu_custom_call.1} parent=1 // pred_region
      _
    $region21: #{tpu_custom_call.1} parent=1 // pred_fallthru
      _
    // Predicated region
    $region22: #{tpu_custom_call.1} parent=1 // pred_check
      _
    $region23: #{tpu_custom_call.1} parent=1 // pred_check_branch
      %25 = sbr.rel (0) target = $region25
    $region24: #{tpu_custom_call.1} parent=1 // pred_region
      _
    $region25: #{tpu_custom_call.1} parent=1 // pred_fallthru
      _
    // Predicated region
    $region26: #{tpu_custom_call.1} parent=1 // pred_check
      _
    $region27: #{tpu_custom_call.1} parent=1 // pred_check_branch
      %27 = sbr.rel (0) target = $region29
    $region28: #{tpu_custom_call.1} parent=1 // pred_region
      _
    $region29: #{tpu_custom_call.1} parent=1 // pred_fallthru
      _
    // Predicated region
    $region30: #{tpu_custom_call.1} parent=1 // pred_check
      _
    $region31: #{tpu_custom_call.1} parent=1 // pred_check_branch
      %29 = sbr.rel (0) target = $region33
    $region32: #{tpu_custom_call.1} parent=1 // pred_region
      _
    $region33: #{tpu_custom_call.1} parent=1 // pred_fallthru
      _
    %v31 = vld [vmem:[%s0] sm:$0xf]
    %v32 = vld [vmem:[%s0 + $0x4] sm:$0xf]
    %v33 = vld [vmem:[%s0 + $0x8] sm:$0xf]
    %v34 = vld [vmem:[%s0 + $0xc] sm:$0xf]
    %v35 = vld [vmem:[%s0 + $0x10] sm:$0xf]
    %v36 = vld [vmem:[%s0 + $0x14] sm:$0xf]
    %v37 = vld [vmem:[%s0 + $0x18] sm:$0xf]
    %v38 = vld [vmem:[%s0 + $0x1c] sm:$0xf]
    %v39 = vld [vmem:[%s0 + $0x20] sm:$0xf]
    %v40 = vld [vmem:[%s0 + $0x24] sm:$0xf]
    %v41 = vld [vmem:[%s0 + $0x28] sm:$0xf]
    %v42 = vld [vmem:[%s0 + $0x2c] sm:$0xf]
    %v43 = vld [vmem:[%s0 + $0x30] sm:$0xf]
    %v44 = vld [vmem:[%s0 + $0x34] sm:$0xf]
    %v45 = vld [vmem:[%s0 + $0x38] sm:$0xf]
    %v46 = vld [vmem:[%s0 + $0x3c] sm:$0xf]
    %v47 = vld [vmem:[%s0 + $0x40] sm:$0xf]
    %v48 = vld [vmem:[%s0 + $0x44] sm:$0xf]
    %v49 = vld [vmem:[%s0 + $0x48] sm:$0xf]
    %v50 = vld [vmem:[%s0 + $0x4c] sm:$0xf]
    %v51 = vld [vmem:[%s0 + $0x50] sm:$0xf]
    %v52 = vld [vmem:[%s0 + $0x54] sm:$0xf]
    %v53 = vld [vmem:[%s0 + $0x58] sm:$0xf]
    %v54 = vld [vmem:[%s0 + $0x5c] sm:$0xf]
    %v55 = vld [vmem:[%s0 + $0x60] sm:$0xf]
    %v56 = vld [vmem:[%s0 + $0x64] sm:$0xf]
    %v57 = vld [vmem:[%s0 + $0x68] sm:$0xf]
    %v58 = vld [vmem:[%s0 + $0x6c] sm:$0xf]
    %v59 = vld [vmem:[%s0 + $0x70] sm:$0xf]
    %v60 = vld [vmem:[%s0 + $0x74] sm:$0xf]
    %v61 = vld [vmem:[%s0 + $0x78] sm:$0xf]
    %v62 = vld [vmem:[%s0 + $0x7c] sm:$0xf]
    %v63 = vld [vmem:[%s0 + $0x80] sm:$0xf]
    %v64 = vld [vmem:[%s0 + $0x84] sm:$0xf]
    %v65 = vld [vmem:[%s0 + $0x88] sm:$0xf]
    %v66 = vld [vmem:[%s0 + $0x8c] sm:$0xf]
    %v67 = vld [vmem:[%s0 + $0x90] sm:$0xf]
    %v68 = vld [vmem:[%s0 + $0x94] sm:$0xf]
    %v69 = vld [vmem:[%s0 + $0x98] sm:$0xf]
    %v70 = vld [vmem:[%s0 + $0x9c] sm:$0xf]
    %v71 = vld [vmem:[%s0 + $0xa0] sm:$0xf]
    %v72 = vld [vmem:[%s0 + $0xa4] sm:$0xf]
    %v73 = vld [vmem:[%s0 + $0xa8] sm:$0xf]
    %v74 = vld [vmem:[%s0 + $0xac] sm:$0xf]
    %v75 = vld [vmem:[%s0 + $0xb0] sm:$0xf]
    %v76 = vld [vmem:[%s0 + $0xb4] sm:$0xf]
    %v77 = vld [vmem:[%s0 + $0xb8] sm:$0xf]
    %v78 = vld [vmem:[%s0 + $0xbc] sm:$0xf]
    %v79 = vld [vmem:[%s0 + $0xc0] sm:$0xf]
    %v80 = vld [vmem:[%s0 + $0xc4] sm:$0xf]
    %v81 = vld [vmem:[%s0 + $0xc8] sm:$0xf]
    %v82 = vld [vmem:[%s0 + $0xcc] sm:$0xf]
    %v83 = vld [vmem:[%s0 + $0xd0] sm:$0xf]
    %v84 = vld [vmem:[%s0 + $0xd4] sm:$0xf]
    %v85 = vld [vmem:[%s0 + $0xd8] sm:$0xf]
    %v86 = vld [vmem:[%s0 + $0xdc] sm:$0xf]
    %v87 = vld [vmem:[%s0 + $0xe0] sm:$0xf]
    %v88 = vld [vmem:[%s0 + $0xe4] sm:$0xf]
    %v89 = vld [vmem:[%s0 + $0xe8] sm:$0xf]
    %v90 = vld [vmem:[%s0 + $0xec] sm:$0xf]
    %v91 = vld [vmem:[%s0 + $0xf0] sm:$0xf]
    %v92 = vld [vmem:[%s0 + $0xf4] sm:$0xf]
    %v93 = vld [vmem:[%s0 + $0xf8] sm:$0xf]
    %v94 = vld [vmem:[%s0 + $0xfc] sm:$0xf]
    %v95 = vld [vmem:[%s0 + $0x100] sm:$0xf]
    %v96 = vld [vmem:[%s0 + $0x104] sm:$0xf]
    %v97 = vld [vmem:[%s0 + $0x108] sm:$0xf]
    %v98 = vld [vmem:[%s0 + $0x10c] sm:$0xf]
    %v99 = vld [vmem:[%s0 + $0x110] sm:$0xf]
    %v100 = vld [vmem:[%s0 + $0x114] sm:$0xf]
    %v101 = vld [vmem:[%s0 + $0x118] sm:$0xf]
    %v102 = vld [vmem:[%s0 + $0x11c] sm:$0xf]
    %v103 = vld [vmem:[%s0 + $0x120] sm:$0xf]
    %v104 = vld [vmem:[%s0 + $0x124] sm:$0xf]
    %v105 = vld [vmem:[%s0 + $0x128] sm:$0xf]
    %v106 = vld [vmem:[%s0 + $0x12c] sm:$0xf]
    %v107 = vld [vmem:[%s0 + $0x130] sm:$0xf]
    %v108 = vld [vmem:[%s0 + $0x134] sm:$0xf]
    %v109 = vld [vmem:[%s0 + $0x138] sm:$0xf]
    %v110 = vld [vmem:[%s0 + $0x13c] sm:$0xf]
    %v111 = vld [vmem:[%s0 + $0x140] sm:$0xf]
    %v112 = vld [vmem:[%s0 + $0x144] sm:$0xf]
    %v113 = vld [vmem:[%s0 + $0x148] sm:$0xf]
    %v114 = vld [vmem:[%s0 + $0x14c] sm:$0xf]
    %v115 = vld [vmem:[%s0 + $0x150] sm:$0xf]
    %v116 = vld [vmem:[%s0 + $0x154] sm:$0xf]
    %v117 = vld [vmem:[%s0 + $0x158] sm:$0xf]
    %v118 = vld [vmem:[%s0 + $0x15c] sm:$0xf]
    %v119 = vld [vmem:[%s0 + $0x160] sm:$0xf]
    %v120 = vld [vmem:[%s0 + $0x164] sm:$0xf]
    %v121 = vld [vmem:[%s0 + $0x168] sm:$0xf]
    %v122 = vld [vmem:[%s0 + $0x16c] sm:$0xf]
    %v123 = vld [vmem:[%s0 + $0x170] sm:$0xf]
    %v124 = vld [vmem:[%s0 + $0x174] sm:$0xf]
    %v125 = vld [vmem:[%s0 + $0x178] sm:$0xf]
    %v126 = vld [vmem:[%s0 + $0x17c] sm:$0xf]
    %v127 = vld [vmem:[%s0 + $0x180] sm:$0xf]
    %v128 = vld [vmem:[%s0 + $0x184] sm:$0xf]
    %v129 = vld [vmem:[%s0 + $0x188] sm:$0xf]
    %v130 = vld [vmem:[%s0 + $0x18c] sm:$0xf]
    %v131 = vld [vmem:[%s0 + $0x190] sm:$0xf]
    %v132 = vld [vmem:[%s0 + $0x194] sm:$0xf]
    %v133 = vld [vmem:[%s0 + $0x198] sm:$0xf]
    %v134 = vld [vmem:[%s0 + $0x19c] sm:$0xf]
    %v135 = vld [vmem:[%s0 + $0x1a0] sm:$0xf]
    %v136 = vld [vmem:[%s0 + $0x1a4] sm:$0xf]
    %v137 = vld [vmem:[%s0 + $0x1a8] sm:$0xf]
    %v138 = vld [vmem:[%s0 + $0x1ac] sm:$0xf]
    %v139 = vld [vmem:[%s2] sm:$0xf]
    %v140 = vld [vmem:[%s2 + $0x4] sm:$0xf]
    %v141 = vld [vmem:[%s2 + $0x8] sm:$0xf]
    %v142 = vld [vmem:[%s2 + $0xc] sm:$0xf]
    %v143 = vld [vmem:[%s2 + $0x10] sm:$0xf]
    %v144 = vld [vmem:[%s2 + $0x14] sm:$0xf]
    %v253 = vunpack.c.l.b16 %v31
    %v254 = vunpack.c.l.b16 %v32
    %v255 = vunpack.c.l.b16 %v33
    %v256 = vunpack.c.l.b16 %v34
    %v257 = vunpack.c.l.b16 %v35
    %v258 = vunpack.c.l.b16 %v36
    %v259 = vunpack.c.l.b16 %v37
    %v260 = vunpack.c.l.b16 %v38
    %v261 = vunpack.c.l.b16 %v39
    %v262 = vunpack.c.l.b16 %v40
    %v263 = vunpack.c.l.b16 %v41
    %v264 = vunpack.c.l.b16 %v42
    %v265 = vunpack.c.l.b16 %v43
    %v266 = vunpack.c.l.b16 %v44
    %v267 = vunpack.c.l.b16 %v45
    %v268 = vunpack.c.l.b16 %v46
    %v269 = vunpack.c.l.b16 %v47
    %v270 = vunpack.c.l.b16 %v48
    %v271 = vunpack.c.l.b16 %v49
    %v272 = vunpack.c.l.b16 %v50
    %v273 = vunpack.c.l.b16 %v51
    %v274 = vunpack.c.l.b16 %v52
    %v275 = vunpack.c.l.b16 %v53
    %v276 = vunpack.c.l.b16 %v54
    %v277 = vunpack.c.l.b16 %v55
    %v278 = vunpack.c.l.b16 %v56
    %v279 = vunpack.c.l.b16 %v57
    %v280 = vunpack.c.l.b16 %v58
    %v281 = vunpack.c.l.b16 %v59
    %v282 = vunpack.c.l.b16 %v60
    %v283 = vunpack.c.l.b16 %v61
    %v284 = vunpack.c.l.b16 %v62
    %v285 = vunpack.c.l.b16 %v63
    %v286 = vunpack.c.l.b16 %v64
    %v287 = vunpack.c.l.b16 %v65
    %v288 = vunpack.c.l.b16 %v66
    %v289 = vunpack.c.l.b16 %v67
    %v290 = vunpack.c.l.b16 %v68
    %v291 = vunpack.c.l.b16 %v69
    %v292 = vunpack.c.l.b16 %v70
    %v293 = vunpack.c.l.b16 %v71
    %v294 = vunpack.c.l.b16 %v72
    %v295 = vunpack.c.l.b16 %v73
    %v296 = vunpack.c.l.b16 %v74
    %v297 = vunpack.c.l.b16 %v75
    %v298 = vunpack.c.l.b16 %v76
    %v299 = vunpack.c.l.b16 %v77
    %v300 = vunpack.c.l.b16 %v78
    %v301 = vunpack.c.l.b16 %v79
    %v302 = vunpack.c.l.b16 %v80
    %v303 = vunpack.c.l.b16 %v81
    %v304 = vunpack.c.l.b16 %v82
    %v305 = vunpack.c.l.b16 %v83
    %v306 = vunpack.c.l.b16 %v84
    %v307 = vunpack.c.l.b16 %v85
    %v308 = vunpack.c.l.b16 %v86
    %v309 = vunpack.c.l.b16 %v87
    %v310 = vunpack.c.l.b16 %v88
    %v311 = vunpack.c.l.b16 %v89
    %v312 = vunpack.c.l.b16 %v90
    %v313 = vunpack.c.l.b16 %v91
    %v314 = vunpack.c.l.b16 %v92
    %v315 = vunpack.c.l.b16 %v93
    %v316 = vunpack.c.l.b16 %v94
    %v317 = vunpack.c.l.b16 %v95
    %v318 = vunpack.c.l.b16 %v96
    %v319 = vunpack.c.l.b16 %v97
    %v320 = vunpack.c.l.b16 %v98
    %v321 = vunpack.c.l.b16 %v99
    %v322 = vunpack.c.l.b16 %v100
    %v323 = vunpack.c.l.b16 %v101
    %v324 = vunpack.c.l.b16 %v102
    %v325 = vunpack.c.l.b16 %v103
    %v326 = vunpack.c.l.b16 %v104
    %v327 = vunpack.c.l.b16 %v105
    %v328 = vunpack.c.l.b16 %v106
    %v329 = vunpack.c.l.b16 %v107
    %v330 = vunpack.c.l.b16 %v108
    %v331 = vunpack.c.l.b16 %v109
    %v332 = vunpack.c.l.b16 %v110
    %v333 = vunpack.c.l.b16 %v111
    %v334 = vunpack.c.l.b16 %v112
    %v335 = vunpack.c.l.b16 %v113
    %v336 = vunpack.c.l.b16 %v114
    %v337 = vunpack.c.l.b16 %v115
    %v338 = vunpack.c.l.b16 %v116
    %v339 = vunpack.c.l.b16 %v117
    %v340 = vunpack.c.l.b16 %v118
    %v341 = vunpack.c.l.b16 %v119
    %v342 = vunpack.c.l.b16 %v120
    %v343 = vunpack.c.l.b16 %v121
    %v344 = vunpack.c.l.b16 %v122
    %v345 = vunpack.c.l.b16 %v123
    %v346 = vunpack.c.l.b16 %v124
    %v347 = vunpack.c.l.b16 %v125
    %v348 = vunpack.c.l.b16 %v126
    %v349 = vunpack.c.l.b16 %v127
    %v350 = vunpack.c.l.b16 %v128
    %v351 = vunpack.c.l.b16 %v129
    %v352 = vunpack.c.l.b16 %v130
    %v353 = vunpack.c.l.b16 %v131
    %v354 = vunpack.c.l.b16 %v132
    %v355 = vunpack.c.l.b16 %v133
    %v356 = vunpack.c.l.b16 %v134
    %v357 = vunpack.c.l.b16 %v135
    %v358 = vunpack.c.l.b16 %v136
    %v359 = vunpack.c.l.b16 %v137
    %v360 = vunpack.c.l.b16 %v138
    %v361 = vpack.c.b16 %v254, %v253
    %v362 = vpack.c.b16 %v256, %v255
    %v363 = vpack.c.b16 %v258, %v257
    %v364 = vpack.c.b16 %v260, %v259
    %v365 = vpack.c.b16 %v262, %v261
    %v366 = vpack.c.b16 %v264, %v263
    %v367 = vpack.c.b16 %v266, %v265
    %v368 = vpack.c.b16 %v268, %v267
    %v369 = vpack.c.b16 %v270, %v269
    %v370 = vpack.c.b16 %v272, %v271
    %v371 = vpack.c.b16 %v274, %v273
    %v372 = vpack.c.b16 %v276, %v275
    %v373 = vpack.c.b16 %v278, %v277
    %v374 = vpack.c.b16 %v280, %v279
    %v375 = vpack.c.b16 %v282, %v281
    %v376 = vpack.c.b16 %v284, %v283
    %v377 = vpack.c.b16 %v286, %v285
    %v378 = vpack.c.b16 %v288, %v287
    %v379 = vpack.c.b16 %v290, %v289
    %v380 = vpack.c.b16 %v292, %v291
    %v381 = vpack.c.b16 %v294, %v293
    %v382 = vpack.c.b16 %v296, %v295
    %v383 = vpack.c.b16 %v298, %v297
    %v384 = vpack.c.b16 %v300, %v299
    %v385 = vpack.c.b16 %v302, %v301
    %v386 = vpack.c.b16 %v304, %v303
    %v387 = vpack.c.b16 %v306, %v305
    %v388 = vpack.c.b16 %v308, %v307
    %v389 = vpack.c.b16 %v310, %v309
    %v390 = vpack.c.b16 %v312, %v311
    %v391 = vpack.c.b16 %v314, %v313
    %v392 = vpack.c.b16 %v316, %v315
    %v393 = vpack.c.b16 %v318, %v317
    %v394 = vpack.c.b16 %v320, %v319
    %v395 = vpack.c.b16 %v322, %v321
    %v396 = vpack.c.b16 %v324, %v323
    %v397 = vpack.c.b16 %v326, %v325
    %v398 = vpack.c.b16 %v328, %v327
    %v399 = vpack.c.b16 %v330, %v329
    %v400 = vpack.c.b16 %v332, %v331
    %v401 = vpack.c.b16 %v334, %v333
    %v402 = vpack.c.b16 %v336, %v335
    %v403 = vpack.c.b16 %v338, %v337
    %v404 = vpack.c.b16 %v340, %v339
    %v405 = vpack.c.b16 %v342, %v341
    %v406 = vpack.c.b16 %v344, %v343
    %v407 = vpack.c.b16 %v346, %v345
    %v408 = vpack.c.b16 %v348, %v347
    %v409 = vpack.c.b16 %v350, %v349
    %v410 = vpack.c.b16 %v352, %v351
    %v411 = vpack.c.b16 %v354, %v353
    %v412 = vpack.c.b16 %v356, %v355
    %v413 = vpack.c.b16 %v358, %v357
    %v414 = vpack.c.b16 %v360, %v359
    %v421 = vunpack.c.l.b16 %v139
    %v422 = vunpack.c.l.b16 %v140
    %v423 = vunpack.c.l.b16 %v141
    %v424 = vunpack.c.l.b16 %v142
    %v425 = vunpack.c.l.b16 %v143
    %v426 = vunpack.c.l.b16 %v144
    %v427 = vpack.c.b16 %v422, %v421
    %v428 = vpack.c.b16 %v424, %v423
    %v429 = vpack.c.b16 %v426, %v425
    %vm433 = vcmask 392192
    %v435 = vsel %vm433, %v361, 0
    %v438 = vsel %vm433, %v362, 0
    %v441 = vsel %vm433, %v363, 0
    %v444 = vsel %vm433, %v364, 0
    %v447 = vsel %vm433, %v365, 0
    %v450 = vsel %vm433, %v366, 0
    %v453 = vsel %vm433, %v367, 0
    %v456 = vsel %vm433, %v368, 0
    %v459 = vsel %vm433, %v369, 0
    %v462 = vsel %vm433, %v370, 0
    %v465 = vsel %vm433, %v371, 0
    %v468 = vsel %vm433, %v372, 0
    %v471 = vsel %vm433, %v373, 0
    %v474 = vsel %vm433, %v374, 0
    %v477 = vsel %vm433, %v375, 0
    %v480 = vsel %vm433, %v376, 0
    %v483 = vsel %vm433, %v377, 0
    %v486 = vsel %vm433, %v378, 0
    %v489 = vsel %vm433, %v379, 0
    %v492 = vsel %vm433, %v380, 0
    %v495 = vsel %vm433, %v381, 0
    %v498 = vsel %vm433, %v382, 0
    %v501 = vsel %vm433, %v383, 0
    %v504 = vsel %vm433, %v384, 0
    %v507 = vsel %vm433, %v385, 0
    %v510 = vsel %vm433, %v386, 0
    %v513 = vsel %vm433, %v387, 0
    %v516 = vsel %vm433, %v388, 0
    %v519 = vsel %vm433, %v389, 0
    %v522 = vsel %vm433, %v390, 0
    %v525 = vsel %vm433, %v391, 0
    %v528 = vsel %vm433, %v392, 0
    %v531 = vsel %vm433, %v393, 0
    %v534 = vsel %vm433, %v394, 0
    %v537 = vsel %vm433, %v395, 0
    %v540 = vsel %vm433, %v396, 0
    %v543 = vsel %vm433, %v397, 0
    %v546 = vsel %vm433, %v398, 0
    %v549 = vsel %vm433, %v399, 0
    %v552 = vsel %vm433, %v400, 0
    %v555 = vsel %vm433, %v401, 0
    %v558 = vsel %vm433, %v402, 0
    %v561 = vsel %vm433, %v403, 0
    %v564 = vsel %vm433, %v404, 0
    %v567 = vsel %vm433, %v405, 0
    %v570 = vsel %vm433, %v406, 0
    %v573 = vsel %vm433, %v407, 0
    %v576 = vsel %vm433, %v408, 0
    %v579 = vsel %vm433, %v409, 0
    %v582 = vsel %vm433, %v410, 0
    %v585 = vsel %vm433, %v411, 0
    %v588 = vsel %vm433, %v412, 0
    %v591 = vsel %vm433, %v413, 0
    %v594 = vsel %vm433, %v414, 0
    %596 = vmatpush.bf16.msra.mxu0 0
    %597 = vmatpush.bf16.msra.mxu0 0
    %598 = vmatpush.bf16.msra.mxu0 0
    %599 = vmatpush.bf16.msra.mxu0 0
    %600 = vmatpush.bf16.msra.mxu0 0
    %601 = vmatpush.bf16.msra.mxu0 %v429
    %602 = vmatpush.bf16.msra.mxu0 %v428
    %603 = vmatpush.bf16.msra.mxu0 %v427
    %604 = vmatmul.bf16.gmra.mxu0 %v435
    %v605 = vpop.f32.mrf.mxu0
    %v606 = vadd.f32 0.0, %v605
    %v607 = vpop.f32.mrf.mxu0
    %v608 = vadd.f32 0.0, %v607
    %609 = vmatmul.bf16.gmra.mxu0 %v438
    %v610 = vpop.f32.mrf.mxu0
    %v611 = vadd.f32 0.0, %v610
    %v612 = vpop.f32.mrf.mxu0
    %v613 = vadd.f32 0.0, %v612
    %614 = vmatmul.bf16.gmra.mxu0 %v441
    %v615 = vpop.f32.mrf.mxu0
    %v616 = vadd.f32 0.0, %v615
    %v617 = vpop.f32.mrf.mxu0
    %v618 = vadd.f32 0.0, %v617
    %619 = vmatmul.bf16.gmra.mxu0 %v444
    %v620 = vpop.f32.mrf.mxu0
    %v621 = vadd.f32 0.0, %v620
    %v622 = vpop.f32.mrf.mxu0
    %v623 = vadd.f32 0.0, %v622
    %624 = vmatmul.bf16.gmra.mxu0 %v447
    %v625 = vpop.f32.mrf.mxu0
    %v626 = vadd.f32 0.0, %v625
    %v627 = vpop.f32.mrf.mxu0
    %v628 = vadd.f32 0.0, %v627
    %629 = vmatmul.bf16.gmra.mxu0 %v450
    %v630 = vpop.f32.mrf.mxu0
    %v631 = vadd.f32 0.0, %v630
    %v632 = vpop.f32.mrf.mxu0
    %v633 = vadd.f32 0.0, %v632
    %634 = vmatmul.bf16.gmra.mxu0 %v453
    %v635 = vpop.f32.mrf.mxu0
    %v636 = vadd.f32 0.0, %v635
    %v637 = vpop.f32.mrf.mxu0
    %v638 = vadd.f32 0.0, %v637
    %639 = vmatmul.bf16.gmra.mxu0 %v456
    %v640 = vpop.f32.mrf.mxu0
    %v641 = vadd.f32 0.0, %v640
    %v642 = vpop.f32.mrf.mxu0
    %v643 = vadd.f32 0.0, %v642
    %644 = vmatmul.bf16.gmra.mxu0 %v459
    %v645 = vpop.f32.mrf.mxu0
    %v646 = vadd.f32 0.0, %v645
    %v647 = vpop.f32.mrf.mxu0
    %v648 = vadd.f32 0.0, %v647
    %649 = vmatmul.bf16.gmra.mxu0 %v462
    %v650 = vpop.f32.mrf.mxu0
    %v651 = vadd.f32 0.0, %v650
    %v652 = vpop.f32.mrf.mxu0
    %v653 = vadd.f32 0.0, %v652
    %654 = vmatmul.bf16.gmra.mxu0 %v465
    %v655 = vpop.f32.mrf.mxu0
    %v656 = vadd.f32 0.0, %v655
    %v657 = vpop.f32.mrf.mxu0
    %v658 = vadd.f32 0.0, %v657
    %659 = vmatmul.bf16.gmra.mxu0 %v468
    %v660 = vpop.f32.mrf.mxu0
    %v661 = vadd.f32 0.0, %v660
    %v662 = vpop.f32.mrf.mxu0
    %v663 = vadd.f32 0.0, %v662
    %664 = vmatmul.bf16.gmra.mxu0 %v471
    %v665 = vpop.f32.mrf.mxu0
    %v666 = vadd.f32 0.0, %v665
    %v667 = vpop.f32.mrf.mxu0
    %v668 = vadd.f32 0.0, %v667
    %669 = vmatmul.bf16.gmra.mxu0 %v474
    %v670 = vpop.f32.mrf.mxu0
    %v671 = vadd.f32 0.0, %v670
    %v672 = vpop.f32.mrf.mxu0
    %v673 = vadd.f32 0.0, %v672
    %674 = vmatmul.bf16.gmra.mxu0 %v477
    %v675 = vpop.f32.mrf.mxu0
    %v676 = vadd.f32 0.0, %v675
    %v677 = vpop.f32.mrf.mxu0
    %v678 = vadd.f32 0.0, %v677
    %679 = vmatmul.bf16.gmra.mxu0 %v480
    %v680 = vpop.f32.mrf.mxu0
    %v681 = vadd.f32 0.0, %v680
    %v682 = vpop.f32.mrf.mxu0
    %v683 = vadd.f32 0.0, %v682
    %684 = vmatmul.bf16.gmra.mxu0 %v483
    %v685 = vpop.f32.mrf.mxu0
    %v686 = vadd.f32 0.0, %v685
    %v687 = vpop.f32.mrf.mxu0
    %v688 = vadd.f32 0.0, %v687
    %689 = vmatmul.bf16.gmra.mxu0 %v486
    %v690 = vpop.f32.mrf.mxu0
    %v691 = vadd.f32 0.0, %v690
    %v692 = vpop.f32.mrf.mxu0
    %v693 = vadd.f32 0.0, %v692
    %694 = vmatmul.bf16.gmra.mxu0 %v489
    %v695 = vpop.f32.mrf.mxu0
    %v696 = vadd.f32 0.0, %v695
    %v697 = vpop.f32.mrf.mxu0
    %v698 = vadd.f32 0.0, %v697
    %699 = vmatmul.bf16.gmra.mxu0 %v492
    %v700 = vpop.f32.mrf.mxu0
    %v701 = vadd.f32 0.0, %v700
    %v702 = vpop.f32.mrf.mxu0
    %v703 = vadd.f32 0.0, %v702
    %704 = vmatmul.bf16.gmra.mxu0 %v495
    %v705 = vpop.f32.mrf.mxu0
    %v706 = vadd.f32 0.0, %v705
    %v707 = vpop.f32.mrf.mxu0
    %v708 = vadd.f32 0.0, %v707
    %709 = vmatmul.bf16.gmra.mxu0 %v498
    %v710 = vpop.f32.mrf.mxu0
    %v711 = vadd.f32 0.0, %v710
    %v712 = vpop.f32.mrf.mxu0
    %v713 = vadd.f32 0.0, %v712
    %714 = vmatmul.bf16.gmra.mxu0 %v501
    %v715 = vpop.f32.mrf.mxu0
    %v716 = vadd.f32 0.0, %v715
    %v717 = vpop.f32.mrf.mxu0
    %v718 = vadd.f32 0.0, %v717
    %719 = vmatmul.bf16.gmra.mxu0 %v504
    %v720 = vpop.f32.mrf.mxu0
    %v721 = vadd.f32 0.0, %v720
    %v722 = vpop.f32.mrf.mxu0
    %v723 = vadd.f32 0.0, %v722
    %724 = vmatmul.bf16.gmra.mxu0 %v507
    %v725 = vpop.f32.mrf.mxu0
    %v726 = vadd.f32 0.0, %v725
    %v727 = vpop.f32.mrf.mxu0
    %v728 = vadd.f32 0.0, %v727
    %729 = vmatmul.bf16.gmra.mxu0 %v510
    %v730 = vpop.f32.mrf.mxu0
    %v731 = vadd.f32 0.0, %v730
    %v732 = vpop.f32.mrf.mxu0
    %v733 = vadd.f32 0.0, %v732
    %734 = vmatmul.bf16.gmra.mxu0 %v513
    %v735 = vpop.f32.mrf.mxu0
    %v736 = vadd.f32 0.0, %v735
    %v737 = vpop.f32.mrf.mxu0
    %v738 = vadd.f32 0.0, %v737
    %739 = vmatmul.bf16.gmra.mxu0 %v516
    %v740 = vpop.f32.mrf.mxu0
    %v741 = vadd.f32 0.0, %v740
    %v742 = vpop.f32.mrf.mxu0
    %v743 = vadd.f32 0.0, %v742
    %744 = vmatmul.bf16.gmra.mxu0 %v519
    %v745 = vpop.f32.mrf.mxu0
    %v746 = vadd.f32 0.0, %v745
    %v747 = vpop.f32.mrf.mxu0
    %v748 = vadd.f32 0.0, %v747
    %749 = vmatmul.bf16.gmra.mxu0 %v522
    %v750 = vpop.f32.mrf.mxu0
    %v751 = vadd.f32 0.0, %v750
    %v752 = vpop.f32.mrf.mxu0
    %v753 = vadd.f32 0.0, %v752
    %754 = vmatmul.bf16.gmra.mxu0 %v525
    %v755 = vpop.f32.mrf.mxu0
    %v756 = vadd.f32 0.0, %v755
    %v757 = vpop.f32.mrf.mxu0
    %v758 = vadd.f32 0.0, %v757
    %759 = vmatmul.bf16.gmra.mxu0 %v528
    %v760 = vpop.f32.mrf.mxu0
    %v761 = vadd.f32 0.0, %v760
    %v762 = vpop.f32.mrf.mxu0
    %v763 = vadd.f32 0.0, %v762
    %764 = vmatmul.bf16.gmra.mxu0 %v531
    %v765 = vpop.f32.mrf.mxu0
    %v766 = vadd.f32 0.0, %v765
    %v767 = vpop.f32.mrf.mxu0
    %v768 = vadd.f32 0.0, %v767
    %769 = vmatmul.bf16.gmra.mxu0 %v534
    %v770 = vpop.f32.mrf.mxu0
    %v771 = vadd.f32 0.0, %v770
    %v772 = vpop.f32.mrf.mxu0
    %v773 = vadd.f32 0.0, %v772
    %774 = vmatmul.bf16.gmra.mxu0 %v537
    %v775 = vpop.f32.mrf.mxu0
    %v776 = vadd.f32 0.0, %v775
    %v777 = vpop.f32.mrf.mxu0
    %v778 = vadd.f32 0.0, %v777
    %779 = vmatmul.bf16.gmra.mxu0 %v540
    %v780 = vpop.f32.mrf.mxu0
    %v781 = vadd.f32 0.0, %v780
    %v782 = vpop.f32.mrf.mxu0
    %v783 = vadd.f32 0.0, %v782
    %784 = vmatmul.bf16.gmra.mxu0 %v543
    %v785 = vpop.f32.mrf.mxu0
    %v786 = vadd.f32 0.0, %v785
    %v787 = vpop.f32.mrf.mxu0
    %v788 = vadd.f32 0.0, %v787
    %789 = vmatmul.bf16.gmra.mxu0 %v546
    %v790 = vpop.f32.mrf.mxu0
    %v791 = vadd.f32 0.0, %v790
    %v792 = vpop.f32.mrf.mxu0
    %v793 = vadd.f32 0.0, %v792
    %794 = vmatmul.bf16.gmra.mxu0 %v549
    %v795 = vpop.f32.mrf.mxu0
    %v796 = vadd.f32 0.0, %v795
    %v797 = vpop.f32.mrf.mxu0
    %v798 = vadd.f32 0.0, %v797
    %799 = vmatmul.bf16.gmra.mxu0 %v552
    %v800 = vpop.f32.mrf.mxu0
    %v801 = vadd.f32 0.0, %v800
    %v802 = vpop.f32.mrf.mxu0
    %v803 = vadd.f32 0.0, %v802
    %804 = vmatmul.bf16.gmra.mxu0 %v555
    %v805 = vpop.f32.mrf.mxu0
    %v806 = vadd.f32 0.0, %v805
    %v807 = vpop.f32.mrf.mxu0
    %v808 = vadd.f32 0.0, %v807
    %809 = vmatmul.bf16.gmra.mxu0 %v558
    %v810 = vpop.f32.mrf.mxu0
    %v811 = vadd.f32 0.0, %v810
    %v812 = vpop.f32.mrf.mxu0
    %v813 = vadd.f32 0.0, %v812
    %814 = vmatmul.bf16.gmra.mxu0 %v561
    %v815 = vpop.f32.mrf.mxu0
    %v816 = vadd.f32 0.0, %v815
    %v817 = vpop.f32.mrf.mxu0
    %v818 = vadd.f32 0.0, %v817
    %819 = vmatmul.bf16.gmra.mxu0 %v564
    %v820 = vpop.f32.mrf.mxu0
    %v821 = vadd.f32 0.0, %v820
    %v822 = vpop.f32.mrf.mxu0
    %v823 = vadd.f32 0.0, %v822
    %824 = vmatmul.bf16.gmra.mxu0 %v567
    %v825 = vpop.f32.mrf.mxu0
    %v826 = vadd.f32 0.0, %v825
    %v827 = vpop.f32.mrf.mxu0
    %v828 = vadd.f32 0.0, %v827
    %829 = vmatmul.bf16.gmra.mxu0 %v570
    %v830 = vpop.f32.mrf.mxu0
    %v831 = vadd.f32 0.0, %v830
    %v832 = vpop.f32.mrf.mxu0
    %v833 = vadd.f32 0.0, %v832
    %834 = vmatmul.bf16.gmra.mxu0 %v573
    %v835 = vpop.f32.mrf.mxu0
    %v836 = vadd.f32 0.0, %v835
    %v837 = vpop.f32.mrf.mxu0
    %v838 = vadd.f32 0.0, %v837
    %839 = vmatmul.bf16.gmra.mxu0 %v576
    %v840 = vpop.f32.mrf.mxu0
    %v841 = vadd.f32 0.0, %v840
    %v842 = vpop.f32.mrf.mxu0
    %v843 = vadd.f32 0.0, %v842
    %844 = vmatmul.bf16.gmra.mxu0 %v579
    %v845 = vpop.f32.mrf.mxu0
    %v846 = vadd.f32 0.0, %v845
    %v847 = vpop.f32.mrf.mxu0
    %v848 = vadd.f32 0.0, %v847
    %849 = vmatmul.bf16.gmra.mxu0 %v582
    %v850 = vpop.f32.mrf.mxu0
    %v851 = vadd.f32 0.0, %v850
    %v852 = vpop.f32.mrf.mxu0
    %v853 = vadd.f32 0.0, %v852
    %854 = vmatmul.bf16.gmra.mxu0 %v585
    %v855 = vpop.f32.mrf.mxu0
    %v856 = vadd.f32 0.0, %v855
    %v857 = vpop.f32.mrf.mxu0
    %v858 = vadd.f32 0.0, %v857
    %859 = vmatmul.bf16.gmra.mxu0 %v588
    %v860 = vpop.f32.mrf.mxu0
    %v861 = vadd.f32 0.0, %v860
    %v862 = vpop.f32.mrf.mxu0
    %v863 = vadd.f32 0.0, %v862
    %864 = vmatmul.bf16.gmra.mxu0 %v591
    %v865 = vpop.f32.mrf.mxu0
    %v866 = vadd.f32 0.0, %v865
    %v867 = vpop.f32.mrf.mxu0
    %v868 = vadd.f32 0.0, %v867
    %869 = vmatmul.bf16.gmra.mxu0 %v594
    %v870 = vpop.f32.mrf.mxu0
    %v871 = vadd.f32 0.0, %v870
    %v872 = vpop.f32.mrf.mxu0
    %v873 = vadd.f32 0.0, %v872
    %874 = vdwg.mxu0
    %v875 = vmax.f32 %v606, 0.0
    %v876 = vmax.f32 %v608, 0.0
    %v877 = vmax.f32 %v611, 0.0
    %v878 = vmax.f32 %v613, 0.0
    %v879 = vmax.f32 %v616, 0.0
    %v880 = vmax.f32 %v618, 0.0
    %v881 = vmax.f32 %v621, 0.0
    %v882 = vmax.f32 %v623, 0.0
    %v883 = vmax.f32 %v626, 0.0
    %v884 = vmax.f32 %v628, 0.0
    %v885 = vmax.f32 %v631, 0.0
    %v886 = vmax.f32 %v633, 0.0
    %v887 = vmax.f32 %v636, 0.0
    %v888 = vmax.f32 %v638, 0.0
    %v889 = vmax.f32 %v641, 0.0
    %v890 = vmax.f32 %v643, 0.0
    %v891 = vmax.f32 %v646, 0.0
    %v892 = vmax.f32 %v648, 0.0
    %v893 = vmax.f32 %v651, 0.0
    %v894 = vmax.f32 %v653, 0.0
    %v895 = vmax.f32 %v656, 0.0
    %v896 = vmax.f32 %v658, 0.0
    %v897 = vmax.f32 %v661, 0.0
    %v898 = vmax.f32 %v663, 0.0
    %v899 = vmax.f32 %v666, 0.0
    %v900 = vmax.f32 %v668, 0.0
    %v901 = vmax.f32 %v671, 0.0
    %v902 = vmax.f32 %v673, 0.0
    %v903 = vmax.f32 %v676, 0.0
    %v904 = vmax.f32 %v678, 0.0
    %v905 = vmax.f32 %v681, 0.0
    %v906 = vmax.f32 %v683, 0.0
    %v907 = vmax.f32 %v686, 0.0
    %v908 = vmax.f32 %v688, 0.0
    %v909 = vmax.f32 %v691, 0.0
    %v910 = vmax.f32 %v693, 0.0
    %v911 = vmax.f32 %v696, 0.0
    %v912 = vmax.f32 %v698, 0.0
    %v913 = vmax.f32 %v701, 0.0
    %v914 = vmax.f32 %v703, 0.0
    %v915 = vmax.f32 %v706, 0.0
    %v916 = vmax.f32 %v708, 0.0
    %v917 = vmax.f32 %v711, 0.0
    %v918 = vmax.f32 %v713, 0.0
    %v919 = vmax.f32 %v716, 0.0
    %v920 = vmax.f32 %v718, 0.0
    %v921 = vmax.f32 %v721, 0.0
    %v922 = vmax.f32 %v723, 0.0
    %v923 = vmax.f32 %v726, 0.0
    %v924 = vmax.f32 %v728, 0.0
    %v925 = vmax.f32 %v731, 0.0
    %v926 = vmax.f32 %v733, 0.0
    %v927 = vmax.f32 %v736, 0.0
    %v928 = vmax.f32 %v738, 0.0
    %v929 = vmax.f32 %v741, 0.0
    %v930 = vmax.f32 %v743, 0.0
    %v931 = vmax.f32 %v746, 0.0
    %v932 = vmax.f32 %v748, 0.0
    %v933 = vmax.f32 %v751, 0.0
    %v934 = vmax.f32 %v753, 0.0
    %v935 = vmax.f32 %v756, 0.0
    %v936 = vmax.f32 %v758, 0.0
    %v937 = vmax.f32 %v761, 0.0
    %v938 = vmax.f32 %v763, 0.0
    %v939 = vmax.f32 %v766, 0.0
    %v940 = vmax.f32 %v768, 0.0
    %v941 = vmax.f32 %v771, 0.0
    %v942 = vmax.f32 %v773, 0.0
    %v943 = vmax.f32 %v776, 0.0
    %v944 = vmax.f32 %v778, 0.0
    %v945 = vmax.f32 %v781, 0.0
    %v946 = vmax.f32 %v783, 0.0
    %v947 = vmax.f32 %v786, 0.0
    %v948 = vmax.f32 %v788, 0.0
    %v949 = vmax.f32 %v791, 0.0
    %v950 = vmax.f32 %v793, 0.0
    %v951 = vmax.f32 %v796, 0.0
    %v952 = vmax.f32 %v798, 0.0
    %v953 = vmax.f32 %v801, 0.0
    %v954 = vmax.f32 %v803, 0.0
    %v955 = vmax.f32 %v806, 0.0
    %v956 = vmax.f32 %v808, 0.0
    %v957 = vmax.f32 %v811, 0.0
    %v958 = vmax.f32 %v813, 0.0
    %v959 = vmax.f32 %v816, 0.0
    %v960 = vmax.f32 %v818, 0.0
    %v961 = vmax.f32 %v821, 0.0
    %v962 = vmax.f32 %v823, 0.0
    %v963 = vmax.f32 %v826, 0.0
    %v964 = vmax.f32 %v828, 0.0
    %v965 = vmax.f32 %v831, 0.0
    %v966 = vmax.f32 %v833, 0.0
    %v967 = vmax.f32 %v836, 0.0
    %v968 = vmax.f32 %v838, 0.0
    %v969 = vmax.f32 %v841, 0.0
    %v970 = vmax.f32 %v843, 0.0
    %v971 = vmax.f32 %v846, 0.0
    %v972 = vmax.f32 %v848, 0.0
    %v973 = vmax.f32 %v851, 0.0
    %v974 = vmax.f32 %v853, 0.0
    %v975 = vmax.f32 %v856, 0.0
    %v976 = vmax.f32 %v858, 0.0
    %v977 = vmax.f32 %v861, 0.0
    %v978 = vmax.f32 %v863, 0.0
    %v979 = vmax.f32 %v866, 0.0
    %v980 = vmax.f32 %v868, 0.0
    %v981 = vmax.f32 %v871, 0.0
    %v982 = vmax.f32 %v873, 0.0
    %v983 = vld [vmem:[%s3] sm:$0x1]
    %v985 = vperm.slane %v983, 0
    %v987 = vmul.f32 %v875, %v985
    %v988 = vmul.f32 %v876, %v985
    %v989 = vmul.f32 %v877, %v985
    %v990 = vmul.f32 %v878, %v985
    %v991 = vmul.f32 %v879, %v985
    %v992 = vmul.f32 %v880, %v985
    %v993 = vmul.f32 %v881, %v985
    %v994 = vmul.f32 %v882, %v985
    %v995 = vmul.f32 %v883, %v985
    %v996 = vmul.f32 %v884, %v985
    %v997 = vmul.f32 %v885, %v985
    %v998 = vmul.f32 %v886, %v985
    %v999 = vmul.f32 %v887, %v985
    %v1000 = vmul.f32 %v888, %v985
    %v1001 = vmul.f32 %v889, %v985
    %v1002 = vmul.f32 %v890, %v985
    %v1003 = vmul.f32 %v891, %v985
    %v1004 = vmul.f32 %v892, %v985
    %v1005 = vmul.f32 %v893, %v985
    %v1006 = vmul.f32 %v894, %v985
    %v1007 = vmul.f32 %v895, %v985
    %v1008 = vmul.f32 %v896, %v985
    %v1009 = vmul.f32 %v897, %v985
    %v1010 = vmul.f32 %v898, %v985
    %v1011 = vmul.f32 %v899, %v985
    %v1012 = vmul.f32 %v900, %v985
    %v1013 = vmul.f32 %v901, %v985
    %v1014 = vmul.f32 %v902, %v985
    %v1015 = vmul.f32 %v903, %v985
    %v1016 = vmul.f32 %v904, %v985
    %v1017 = vmul.f32 %v905, %v985
    %v1018 = vmul.f32 %v906, %v985
    %v1019 = vmul.f32 %v907, %v985
    %v1020 = vmul.f32 %v908, %v985
    %v1021 = vmul.f32 %v909, %v985
    %v1022 = vmul.f32 %v910, %v985
    %v1023 = vmul.f32 %v911, %v985
    %v1024 = vmul.f32 %v912, %v985
    %v1025 = vmul.f32 %v913, %v985
    %v1026 = vmul.f32 %v914, %v985
    %v1027 = vmul.f32 %v915, %v985
    %v1028 = vmul.f32 %v916, %v985
    %v1029 = vmul.f32 %v917, %v985
    %v1030 = vmul.f32 %v918, %v985
    %v1031 = vmul.f32 %v919, %v985
    %v1032 = vmul.f32 %v920, %v985
    %v1033 = vmul.f32 %v921, %v985
    %v1034 = vmul.f32 %v922, %v985
    %v1035 = vmul.f32 %v923, %v985
    %v1036 = vmul.f32 %v924, %v985
    %v1037 = vmul.f32 %v925, %v985
    %v1038 = vmul.f32 %v926, %v985
    %v1039 = vmul.f32 %v927, %v985
    %v1040 = vmul.f32 %v928, %v985
    %v1041 = vmul.f32 %v929, %v985
    %v1042 = vmul.f32 %v930, %v985
    %v1043 = vmul.f32 %v931, %v985
    %v1044 = vmul.f32 %v932, %v985
    %v1045 = vmul.f32 %v933, %v985
    %v1046 = vmul.f32 %v934, %v985
    %v1047 = vmul.f32 %v935, %v985
    %v1048 = vmul.f32 %v936, %v985
    %v1049 = vmul.f32 %v937, %v985
    %v1050 = vmul.f32 %v938, %v985
    %v1051 = vmul.f32 %v939, %v985
    %v1052 = vmul.f32 %v940, %v985
    %v1053 = vmul.f32 %v941, %v985
    %v1054 = vmul.f32 %v942, %v985
    %v1055 = vmul.f32 %v943, %v985
    %v1056 = vmul.f32 %v944, %v985
    %v1057 = vmul.f32 %v945, %v985
    %v1058 = vmul.f32 %v946, %v985
    %v1059 = vmul.f32 %v947, %v985
    %v1060 = vmul.f32 %v948, %v985
    %v1061 = vmul.f32 %v949, %v985
    %v1062 = vmul.f32 %v950, %v985
    %v1063 = vmul.f32 %v951, %v985
    %v1064 = vmul.f32 %v952, %v985
    %v1065 = vmul.f32 %v953, %v985
    %v1066 = vmul.f32 %v954, %v985
    %v1067 = vmul.f32 %v955, %v985
    %v1068 = vmul.f32 %v956, %v985
    %v1069 = vmul.f32 %v957, %v985
    %v1070 = vmul.f32 %v958, %v985
    %v1071 = vmul.f32 %v959, %v985
    %v1072 = vmul.f32 %v960, %v985
    %v1073 = vmul.f32 %v961, %v985
    %v1074 = vmul.f32 %v962, %v985
    %v1075 = vmul.f32 %v963, %v985
    %v1076 = vmul.f32 %v964, %v985
    %v1077 = vmul.f32 %v965, %v985
    %v1078 = vmul.f32 %v966, %v985
    %v1079 = vmul.f32 %v967, %v985
    %v1080 = vmul.f32 %v968, %v985
    %v1081 = vmul.f32 %v969, %v985
    %v1082 = vmul.f32 %v970, %v985
    %v1083 = vmul.f32 %v971, %v985
    %v1084 = vmul.f32 %v972, %v985
    %v1085 = vmul.f32 %v973, %v985
    %v1086 = vmul.f32 %v974, %v985
    %v1087 = vmul.f32 %v975, %v985
    %v1088 = vmul.f32 %v976, %v985
    %v1089 = vmul.f32 %v977, %v985
    %v1090 = vmul.f32 %v978, %v985
    %v1091 = vmul.f32 %v979, %v985
    %v1092 = vmul.f32 %v980, %v985
    %v1093 = vmul.f32 %v981, %v985
    %v1094 = vmul.f32 %v982, %v985
    %v1095 = vld [vmem:[%s4] sm:$0x1]
    %v1097 = vperm.slane %v1095, 0
    %v1099 = vadd.f32 %v987, %v1097
    %v1100 = vadd.f32 %v988, %v1097
    %v1101 = vadd.f32 %v989, %v1097
    %v1102 = vadd.f32 %v990, %v1097
    %v1103 = vadd.f32 %v991, %v1097
    %v1104 = vadd.f32 %v992, %v1097
    %v1105 = vadd.f32 %v993, %v1097
    %v1106 = vadd.f32 %v994, %v1097
    %v1107 = vadd.f32 %v995, %v1097
    %v1108 = vadd.f32 %v996, %v1097
    %v1109 = vadd.f32 %v997, %v1097
    %v1110 = vadd.f32 %v998, %v1097
    %v1111 = vadd.f32 %v999, %v1097
    %v1112 = vadd.f32 %v1000, %v1097
    %v1113 = vadd.f32 %v1001, %v1097
    %v1114 = vadd.f32 %v1002, %v1097
    %v1115 = vadd.f32 %v1003, %v1097
    %v1116 = vadd.f32 %v1004, %v1097
    %v1117 = vadd.f32 %v1005, %v1097
    %v1118 = vadd.f32 %v1006, %v1097
    %v1119 = vadd.f32 %v1007, %v1097
    %v1120 = vadd.f32 %v1008, %v1097
    %v1121 = vadd.f32 %v1009, %v1097
    %v1122 = vadd.f32 %v1010, %v1097
    %v1123 = vadd.f32 %v1011, %v1097
    %v1124 = vadd.f32 %v1012, %v1097
    %v1125 = vadd.f32 %v1013, %v1097
    %v1126 = vadd.f32 %v1014, %v1097
    %v1127 = vadd.f32 %v1015, %v1097
    %v1128 = vadd.f32 %v1016, %v1097
    %v1129 = vadd.f32 %v1017, %v1097
    %v1130 = vadd.f32 %v1018, %v1097
    %v1131 = vadd.f32 %v1019, %v1097
    %v1132 = vadd.f32 %v1020, %v1097
    %v1133 = vadd.f32 %v1021, %v1097
    %v1134 = vadd.f32 %v1022, %v1097
    %v1135 = vadd.f32 %v1023, %v1097
    %v1136 = vadd.f32 %v1024, %v1097
    %v1137 = vadd.f32 %v1025, %v1097
    %v1138 = vadd.f32 %v1026, %v1097
    %v1139 = vadd.f32 %v1027, %v1097
    %v1140 = vadd.f32 %v1028, %v1097
    %v1141 = vadd.f32 %v1029, %v1097
    %v1142 = vadd.f32 %v1030, %v1097
    %v1143 = vadd.f32 %v1031, %v1097
    %v1144 = vadd.f32 %v1032, %v1097
    %v1145 = vadd.f32 %v1033, %v1097
    %v1146 = vadd.f32 %v1034, %v1097
    %v1147 = vadd.f32 %v1035, %v1097
    %v1148 = vadd.f32 %v1036, %v1097
    %v1149 = vadd.f32 %v1037, %v1097
    %v1150 = vadd.f32 %v1038, %v1097
    %v1151 = vadd.f32 %v1039, %v1097
    %v1152 = vadd.f32 %v1040, %v1097
    %v1153 = vadd.f32 %v1041, %v1097
    %v1154 = vadd.f32 %v1042, %v1097
    %v1155 = vadd.f32 %v1043, %v1097
    %v1156 = vadd.f32 %v1044, %v1097
    %v1157 = vadd.f32 %v1045, %v1097
    %v1158 = vadd.f32 %v1046, %v1097
    %v1159 = vadd.f32 %v1047, %v1097
    %v1160 = vadd.f32 %v1048, %v1097
    %v1161 = vadd.f32 %v1049, %v1097
    %v1162 = vadd.f32 %v1050, %v1097
    %v1163 = vadd.f32 %v1051, %v1097
    %v1164 = vadd.f32 %v1052, %v1097
    %v1165 = vadd.f32 %v1053, %v1097
    %v1166 = vadd.f32 %v1054, %v1097
    %v1167 = vadd.f32 %v1055, %v1097
    %v1168 = vadd.f32 %v1056, %v1097
    %v1169 = vadd.f32 %v1057, %v1097
    %v1170 = vadd.f32 %v1058, %v1097
    %v1171 = vadd.f32 %v1059, %v1097
    %v1172 = vadd.f32 %v1060, %v1097
    %v1173 = vadd.f32 %v1061, %v1097
    %v1174 = vadd.f32 %v1062, %v1097
    %v1175 = vadd.f32 %v1063, %v1097
    %v1176 = vadd.f32 %v1064, %v1097
    %v1177 = vadd.f32 %v1065, %v1097
    %v1178 = vadd.f32 %v1066, %v1097
    %v1179 = vadd.f32 %v1067, %v1097
    %v1180 = vadd.f32 %v1068, %v1097
    %v1181 = vadd.f32 %v1069, %v1097
    %v1182 = vadd.f32 %v1070, %v1097
    %v1183 = vadd.f32 %v1071, %v1097
    %v1184 = vadd.f32 %v1072, %v1097
    %v1185 = vadd.f32 %v1073, %v1097
    %v1186 = vadd.f32 %v1074, %v1097
    %v1187 = vadd.f32 %v1075, %v1097
    %v1188 = vadd.f32 %v1076, %v1097
    %v1189 = vadd.f32 %v1077, %v1097
    %v1190 = vadd.f32 %v1078, %v1097
    %v1191 = vadd.f32 %v1079, %v1097
    %v1192 = vadd.f32 %v1080, %v1097
    %v1193 = vadd.f32 %v1081, %v1097
    %v1194 = vadd.f32 %v1082, %v1097
    %v1195 = vadd.f32 %v1083, %v1097
    %v1196 = vadd.f32 %v1084, %v1097
    %v1197 = vadd.f32 %v1085, %v1097
    %v1198 = vadd.f32 %v1086, %v1097
    %v1199 = vadd.f32 %v1087, %v1097
    %v1200 = vadd.f32 %v1088, %v1097
    %v1201 = vadd.f32 %v1089, %v1097
    %v1202 = vadd.f32 %v1090, %v1097
    %v1203 = vadd.f32 %v1091, %v1097
    %v1204 = vadd.f32 %v1092, %v1097
    %v1205 = vadd.f32 %v1093, %v1097
    %v1206 = vadd.f32 %v1094, %v1097
    %v1207 = vld [vmem:[%s1] sm:$0xff]
    %v1208 = vld [vmem:[%s1 + $0x8] sm:$0xff]
    %v1209 = vld [vmem:[%s1 + $0x10] sm:$0xff]
    %v1210 = vld [vmem:[%s1 + $0x18] sm:$0xff]
    %v1211 = vld [vmem:[%s1 + $0x20] sm:$0xff]
    %v1212 = vld [vmem:[%s1 + $0x28] sm:$0xff]
    %v1213 = vld [vmem:[%s1 + $0x30] sm:$0xff]
    %v1214 = vld [vmem:[%s1 + $0x38] sm:$0xff]
    %v1215 = vld [vmem:[%s1 + $0x40] sm:$0xff]
    %v1216 = vld [vmem:[%s1 + $0x48] sm:$0xff]
    %v1217 = vld [vmem:[%s1 + $0x50] sm:$0xff]
    %v1218 = vld [vmem:[%s1 + $0x58] sm:$0xff]
    %v1219 = vld [vmem:[%s1 + $0x60] sm:$0xff]
    %v1220 = vld [vmem:[%s1 + $0x68] sm:$0xff]
    %v1221 = vld [vmem:[%s1 + $0x70] sm:$0xff]
    %v1222 = vld [vmem:[%s1 + $0x78] sm:$0xff]
    %v1223 = vld [vmem:[%s1 + $0x80] sm:$0xff]
    %v1224 = vld [vmem:[%s1 + $0x88] sm:$0xff]
    %v1225 = vld [vmem:[%s1 + $0x90] sm:$0xff]
    %v1226 = vld [vmem:[%s1 + $0x98] sm:$0xff]
    %v1227 = vld [vmem:[%s1 + $0xa0] sm:$0xff]
    %v1228 = vld [vmem:[%s1 + $0xa8] sm:$0xff]
    %v1229 = vld [vmem:[%s1 + $0xb0] sm:$0xff]
    %v1230 = vld [vmem:[%s1 + $0xb8] sm:$0xff]
    %v1231 = vld [vmem:[%s1 + $0xc0] sm:$0xff]
    %v1232 = vld [vmem:[%s1 + $0xc8] sm:$0xff]
    %v1233 = vld [vmem:[%s1 + $0xd0] sm:$0xff]
    %v1234 = vld [vmem:[%s1 + $0xd8] sm:$0xff]
    %v1235 = vld [vmem:[%s1 + $0xe0] sm:$0xff]
    %v1236 = vld [vmem:[%s1 + $0xe8] sm:$0xff]
    %v1237 = vld [vmem:[%s1 + $0xf0] sm:$0xff]
    %v1238 = vld [vmem:[%s1 + $0xf8] sm:$0xff]
    %v1239 = vld [vmem:[%s1 + $0x100] sm:$0xff]
    %v1240 = vld [vmem:[%s1 + $0x108] sm:$0xff]
    %v1241 = vld [vmem:[%s1 + $0x110] sm:$0xff]
    %v1242 = vld [vmem:[%s1 + $0x118] sm:$0xff]
    %v1243 = vld [vmem:[%s1 + $0x120] sm:$0xff]
    %v1244 = vld [vmem:[%s1 + $0x128] sm:$0xff]
    %v1245 = vld [vmem:[%s1 + $0x130] sm:$0xff]
    %v1246 = vld [vmem:[%s1 + $0x138] sm:$0xff]
    %v1247 = vld [vmem:[%s1 + $0x140] sm:$0xff]
    %v1248 = vld [vmem:[%s1 + $0x148] sm:$0xff]
    %v1249 = vld [vmem:[%s1 + $0x150] sm:$0xff]
    %v1250 = vld [vmem:[%s1 + $0x158] sm:$0xff]
    %v1251 = vld [vmem:[%s1 + $0x160] sm:$0xff]
    %v1252 = vld [vmem:[%s1 + $0x168] sm:$0xff]
    %v1253 = vld [vmem:[%s1 + $0x170] sm:$0xff]
    %v1254 = vld [vmem:[%s1 + $0x178] sm:$0xff]
    %v1255 = vld [vmem:[%s1 + $0x180] sm:$0xff]
    %v1256 = vld [vmem:[%s1 + $0x188] sm:$0xff]
    %v1257 = vld [vmem:[%s1 + $0x190] sm:$0xff]
    %v1258 = vld [vmem:[%s1 + $0x198] sm:$0xff]
    %v1259 = vld [vmem:[%s1 + $0x1a0] sm:$0xff]
    %v1260 = vld [vmem:[%s1 + $0x1a8] sm:$0xff]
    %v1261 = vld [vmem:[%s1 + $0x1b0] sm:$0xff]
    %v1262 = vld [vmem:[%s1 + $0x1b8] sm:$0xff]
    %v1263 = vld [vmem:[%s1 + $0x1c0] sm:$0xff]
    %v1264 = vld [vmem:[%s1 + $0x1c8] sm:$0xff]
    %v1265 = vld [vmem:[%s1 + $0x1d0] sm:$0xff]
    %v1266 = vld [vmem:[%s1 + $0x1d8] sm:$0xff]
    %v1267 = vld [vmem:[%s1 + $0x1e0] sm:$0xff]
    %v1268 = vld [vmem:[%s1 + $0x1e8] sm:$0xff]
    %v1269 = vld [vmem:[%s1 + $0x1f0] sm:$0xff]
    %v1270 = vld [vmem:[%s1 + $0x1f8] sm:$0xff]
    %v1271 = vld [vmem:[%s1 + $0x200] sm:$0xff]
    %v1272 = vld [vmem:[%s1 + $0x208] sm:$0xff]
    %v1273 = vld [vmem:[%s1 + $0x210] sm:$0xff]
    %v1274 = vld [vmem:[%s1 + $0x218] sm:$0xff]
    %v1275 = vld [vmem:[%s1 + $0x220] sm:$0xff]
    %v1276 = vld [vmem:[%s1 + $0x228] sm:$0xff]
    %v1277 = vld [vmem:[%s1 + $0x230] sm:$0xff]
    %v1278 = vld [vmem:[%s1 + $0x238] sm:$0xff]
    %v1279 = vld [vmem:[%s1 + $0x240] sm:$0xff]
    %v1280 = vld [vmem:[%s1 + $0x248] sm:$0xff]
    %v1281 = vld [vmem:[%s1 + $0x250] sm:$0xff]
    %v1282 = vld [vmem:[%s1 + $0x258] sm:$0xff]
    %v1283 = vld [vmem:[%s1 + $0x260] sm:$0xff]
    %v1284 = vld [vmem:[%s1 + $0x268] sm:$0xff]
    %v1285 = vld [vmem:[%s1 + $0x270] sm:$0xff]
    %v1286 = vld [vmem:[%s1 + $0x278] sm:$0xff]
    %v1287 = vld [vmem:[%s1 + $0x280] sm:$0xff]
    %v1288 = vld [vmem:[%s1 + $0x288] sm:$0xff]
    %v1289 = vld [vmem:[%s1 + $0x290] sm:$0xff]
    %v1290 = vld [vmem:[%s1 + $0x298] sm:$0xff]
    %v1291 = vld [vmem:[%s1 + $0x2a0] sm:$0xff]
    %v1292 = vld [vmem:[%s1 + $0x2a8] sm:$0xff]
    %v1293 = vld [vmem:[%s1 + $0x2b0] sm:$0xff]
    %v1294 = vld [vmem:[%s1 + $0x2b8] sm:$0xff]
    %v1295 = vld [vmem:[%s1 + $0x2c0] sm:$0xff]
    %v1296 = vld [vmem:[%s1 + $0x2c8] sm:$0xff]
    %v1297 = vld [vmem:[%s1 + $0x2d0] sm:$0xff]
    %v1298 = vld [vmem:[%s1 + $0x2d8] sm:$0xff]
    %v1299 = vld [vmem:[%s1 + $0x2e0] sm:$0xff]
    %v1300 = vld [vmem:[%s1 + $0x2e8] sm:$0xff]
    %v1301 = vld [vmem:[%s1 + $0x2f0] sm:$0xff]
    %v1302 = vld [vmem:[%s1 + $0x2f8] sm:$0xff]
    %v1303 = vld [vmem:[%s1 + $0x300] sm:$0xff]
    %v1304 = vld [vmem:[%s1 + $0x308] sm:$0xff]
    %v1305 = vld [vmem:[%s1 + $0x310] sm:$0xff]
    %v1306 = vld [vmem:[%s1 + $0x318] sm:$0xff]
    %v1307 = vld [vmem:[%s1 + $0x320] sm:$0xff]
    %v1308 = vld [vmem:[%s1 + $0x328] sm:$0xff]
    %v1309 = vld [vmem:[%s1 + $0x330] sm:$0xff]
    %v1310 = vld [vmem:[%s1 + $0x338] sm:$0xff]
    %v1311 = vld [vmem:[%s1 + $0x340] sm:$0xff]
    %v1312 = vld [vmem:[%s1 + $0x348] sm:$0xff]
    %v1313 = vld [vmem:[%s1 + $0x350] sm:$0xff]
    %v1314 = vld [vmem:[%s1 + $0x358] sm:$0xff]
    %1316 = vset.pattern.permute.xlu0 0
    %1317 = vperm.xlu0 %1316, %v1207
    %v1318 = vpop.permute.xlu0 %1317
    %1321 = vset.pattern.permute.xlu0 0
    %1322 = vperm.xlu0 %1321, %v1208
    %v1323 = vpop.permute.xlu0 %1322
    %1326 = vset.pattern.permute.xlu0 0
    %1327 = vperm.xlu0 %1326, %v1209
    %v1328 = vpop.permute.xlu0 %1327
    %1331 = vset.pattern.permute.xlu0 0
    %1332 = vperm.xlu0 %1331, %v1210
    %v1333 = vpop.permute.xlu0 %1332
    %1336 = vset.pattern.permute.xlu0 0
    %1337 = vperm.xlu0 %1336, %v1211
    %v1338 = vpop.permute.xlu0 %1337
    %1341 = vset.pattern.permute.xlu0 0
    %1342 = vperm.xlu0 %1341, %v1212
    %v1343 = vpop.permute.xlu0 %1342
    %1346 = vset.pattern.permute.xlu0 0
    %1347 = vperm.xlu0 %1346, %v1213
    %v1348 = vpop.permute.xlu0 %1347
    %1351 = vset.pattern.permute.xlu0 0
    %1352 = vperm.xlu0 %1351, %v1214
    %v1353 = vpop.permute.xlu0 %1352
    %1356 = vset.pattern.permute.xlu0 0
    %1357 = vperm.xlu0 %1356, %v1215
    %v1358 = vpop.permute.xlu0 %1357
    %1361 = vset.pattern.permute.xlu0 0
    %1362 = vperm.xlu0 %1361, %v1216
    %v1363 = vpop.permute.xlu0 %1362
    %1366 = vset.pattern.permute.xlu0 0
    %1367 = vperm.xlu0 %1366, %v1217
    %v1368 = vpop.permute.xlu0 %1367
    %1371 = vset.pattern.permute.xlu0 0
    %1372 = vperm.xlu0 %1371, %v1218
    %v1373 = vpop.permute.xlu0 %1372
    %1376 = vset.pattern.permute.xlu0 0
    %1377 = vperm.xlu0 %1376, %v1219
    %v1378 = vpop.permute.xlu0 %1377
    %1381 = vset.pattern.permute.xlu0 0
    %1382 = vperm.xlu0 %1381, %v1220
    %v1383 = vpop.permute.xlu0 %1382
    %1386 = vset.pattern.permute.xlu0 0
    %1387 = vperm.xlu0 %1386, %v1221
    %v1388 = vpop.permute.xlu0 %1387
    %1391 = vset.pattern.permute.xlu0 0
    %1392 = vperm.xlu0 %1391, %v1222
    %v1393 = vpop.permute.xlu0 %1392
    %1396 = vset.pattern.permute.xlu0 0
    %1397 = vperm.xlu0 %1396, %v1223
    %v1398 = vpop.permute.xlu0 %1397
    %1401 = vset.pattern.permute.xlu0 0
    %1402 = vperm.xlu0 %1401, %v1224
    %v1403 = vpop.permute.xlu0 %1402
    %1406 = vset.pattern.permute.xlu0 0
    %1407 = vperm.xlu0 %1406, %v1225
    %v1408 = vpop.permute.xlu0 %1407
    %1411 = vset.pattern.permute.xlu0 0
    %1412 = vperm.xlu0 %1411, %v1226
    %v1413 = vpop.permute.xlu0 %1412
    %1416 = vset.pattern.permute.xlu0 0
    %1417 = vperm.xlu0 %1416, %v1227
    %v1418 = vpop.permute.xlu0 %1417
    %1421 = vset.pattern.permute.xlu0 0
    %1422 = vperm.xlu0 %1421, %v1228
    %v1423 = vpop.permute.xlu0 %1422
    %1426 = vset.pattern.permute.xlu0 0
    %1427 = vperm.xlu0 %1426, %v1229
    %v1428 = vpop.permute.xlu0 %1427
    %1431 = vset.pattern.permute.xlu0 0
    %1432 = vperm.xlu0 %1431, %v1230
    %v1433 = vpop.permute.xlu0 %1432
    %1436 = vset.pattern.permute.xlu0 0
    %1437 = vperm.xlu0 %1436, %v1231
    %v1438 = vpop.permute.xlu0 %1437
    %1441 = vset.pattern.permute.xlu0 0
    %1442 = vperm.xlu0 %1441, %v1232
    %v1443 = vpop.permute.xlu0 %1442
    %1446 = vset.pattern.permute.xlu0 0
    %1447 = vperm.xlu0 %1446, %v1233
    %v1448 = vpop.permute.xlu0 %1447
    %1451 = vset.pattern.permute.xlu0 0
    %1452 = vperm.xlu0 %1451, %v1234
    %v1453 = vpop.permute.xlu0 %1452
    %1456 = vset.pattern.permute.xlu0 0
    %1457 = vperm.xlu0 %1456, %v1235
    %v1458 = vpop.permute.xlu0 %1457
    %1461 = vset.pattern.permute.xlu0 0
    %1462 = vperm.xlu0 %1461, %v1236
    %v1463 = vpop.permute.xlu0 %1462
    %1466 = vset.pattern.permute.xlu0 0
    %1467 = vperm.xlu0 %1466, %v1237
    %v1468 = vpop.permute.xlu0 %1467
    %1471 = vset.pattern.permute.xlu0 0
    %1472 = vperm.xlu0 %1471, %v1238
    %v1473 = vpop.permute.xlu0 %1472
    %1476 = vset.pattern.permute.xlu0 0
    %1477 = vperm.xlu0 %1476, %v1239
    %v1478 = vpop.permute.xlu0 %1477
    %1481 = vset.pattern.permute.xlu0 0
    %1482 = vperm.xlu0 %1481, %v1240
    %v1483 = vpop.permute.xlu0 %1482
    %1486 = vset.pattern.permute.xlu0 0
    %1487 = vperm.xlu0 %1486, %v1241
    %v1488 = vpop.permute.xlu0 %1487
    %1491 = vset.pattern.permute.xlu0 0
    %1492 = vperm.xlu0 %1491, %v1242
    %v1493 = vpop.permute.xlu0 %1492
    %1496 = vset.pattern.permute.xlu0 0
    %1497 = vperm.xlu0 %1496, %v1243
    %v1498 = vpop.permute.xlu0 %1497
    %1501 = vset.pattern.permute.xlu0 0
    %1502 = vperm.xlu0 %1501, %v1244
    %v1503 = vpop.permute.xlu0 %1502
    %1506 = vset.pattern.permute.xlu0 0
    %1507 = vperm.xlu0 %1506, %v1245
    %v1508 = vpop.permute.xlu0 %1507
    %1511 = vset.pattern.permute.xlu0 0
    %1512 = vperm.xlu0 %1511, %v1246
    %v1513 = vpop.permute.xlu0 %1512
    %1516 = vset.pattern.permute.xlu0 0
    %1517 = vperm.xlu0 %1516, %v1247
    %v1518 = vpop.permute.xlu0 %1517
    %1521 = vset.pattern.permute.xlu0 0
    %1522 = vperm.xlu0 %1521, %v1248
    %v1523 = vpop.permute.xlu0 %1522
    %1526 = vset.pattern.permute.xlu0 0
    %1527 = vperm.xlu0 %1526, %v1249
    %v1528 = vpop.permute.xlu0 %1527
    %1531 = vset.pattern.permute.xlu0 0
    %1532 = vperm.xlu0 %1531, %v1250
    %v1533 = vpop.permute.xlu0 %1532
    %1536 = vset.pattern.permute.xlu0 0
    %1537 = vperm.xlu0 %1536, %v1251
    %v1538 = vpop.permute.xlu0 %1537
    %1541 = vset.pattern.permute.xlu0 0
    %1542 = vperm.xlu0 %1541, %v1252
    %v1543 = vpop.permute.xlu0 %1542
    %1546 = vset.pattern.permute.xlu0 0
    %1547 = vperm.xlu0 %1546, %v1253
    %v1548 = vpop.permute.xlu0 %1547
    %1551 = vset.pattern.permute.xlu0 0
    %1552 = vperm.xlu0 %1551, %v1254
    %v1553 = vpop.permute.xlu0 %1552
    %1556 = vset.pattern.permute.xlu0 0
    %1557 = vperm.xlu0 %1556, %v1255
    %v1558 = vpop.permute.xlu0 %1557
    %1561 = vset.pattern.permute.xlu0 0
    %1562 = vperm.xlu0 %1561, %v1256
    %v1563 = vpop.permute.xlu0 %1562
    %1566 = vset.pattern.permute.xlu0 0
    %1567 = vperm.xlu0 %1566, %v1257
    %v1568 = vpop.permute.xlu0 %1567
    %1571 = vset.pattern.permute.xlu0 0
    %1572 = vperm.xlu0 %1571, %v1258
    %v1573 = vpop.permute.xlu0 %1572
    %1576 = vset.pattern.permute.xlu0 0
    %1577 = vperm.xlu0 %1576, %v1259
    %v1578 = vpop.permute.xlu0 %1577
    %1581 = vset.pattern.permute.xlu0 0
    %1582 = vperm.xlu0 %1581, %v1260
    %v1583 = vpop.permute.xlu0 %1582
    %1586 = vset.pattern.permute.xlu0 0
    %1587 = vperm.xlu0 %1586, %v1261
    %v1588 = vpop.permute.xlu0 %1587
    %1591 = vset.pattern.permute.xlu0 0
    %1592 = vperm.xlu0 %1591, %v1262
    %v1593 = vpop.permute.xlu0 %1592
    %1596 = vset.pattern.permute.xlu0 0
    %1597 = vperm.xlu0 %1596, %v1263
    %v1598 = vpop.permute.xlu0 %1597
    %1601 = vset.pattern.permute.xlu0 0
    %1602 = vperm.xlu0 %1601, %v1264
    %v1603 = vpop.permute.xlu0 %1602
    %1606 = vset.pattern.permute.xlu0 0
    %1607 = vperm.xlu0 %1606, %v1265
    %v1608 = vpop.permute.xlu0 %1607
    %1611 = vset.pattern.permute.xlu0 0
    %1612 = vperm.xlu0 %1611, %v1266
    %v1613 = vpop.permute.xlu0 %1612
    %1616 = vset.pattern.permute.xlu0 0
    %1617 = vperm.xlu0 %1616, %v1267
    %v1618 = vpop.permute.xlu0 %1617
    %1621 = vset.pattern.permute.xlu0 0
    %1622 = vperm.xlu0 %1621, %v1268
    %v1623 = vpop.permute.xlu0 %1622
    %1626 = vset.pattern.permute.xlu0 0
    %1627 = vperm.xlu0 %1626, %v1269
    %v1628 = vpop.permute.xlu0 %1627
    %1631 = vset.pattern.permute.xlu0 0
    %1632 = vperm.xlu0 %1631, %v1270
    %v1633 = vpop.permute.xlu0 %1632
    %1636 = vset.pattern.permute.xlu0 0
    %1637 = vperm.xlu0 %1636, %v1271
    %v1638 = vpop.permute.xlu0 %1637
    %1641 = vset.pattern.permute.xlu0 0
    %1642 = vperm.xlu0 %1641, %v1272
    %v1643 = vpop.permute.xlu0 %1642
    %1646 = vset.pattern.permute.xlu0 0
    %1647 = vperm.xlu0 %1646, %v1273
    %v1648 = vpop.permute.xlu0 %1647
    %1651 = vset.pattern.permute.xlu0 0
    %1652 = vperm.xlu0 %1651, %v1274
    %v1653 = vpop.permute.xlu0 %1652
    %1656 = vset.pattern.permute.xlu0 0
    %1657 = vperm.xlu0 %1656, %v1275
    %v1658 = vpop.permute.xlu0 %1657
    %1661 = vset.pattern.permute.xlu0 0
    %1662 = vperm.xlu0 %1661, %v1276
    %v1663 = vpop.permute.xlu0 %1662
    %1666 = vset.pattern.permute.xlu0 0
    %1667 = vperm.xlu0 %1666, %v1277
    %v1668 = vpop.permute.xlu0 %1667
    %1671 = vset.pattern.permute.xlu0 0
    %1672 = vperm.xlu0 %1671, %v1278
    %v1673 = vpop.permute.xlu0 %1672
    %1676 = vset.pattern.permute.xlu0 0
    %1677 = vperm.xlu0 %1676, %v1279
    %v1678 = vpop.permute.xlu0 %1677
    %1681 = vset.pattern.permute.xlu0 0
    %1682 = vperm.xlu0 %1681, %v1280
    %v1683 = vpop.permute.xlu0 %1682
    %1686 = vset.pattern.permute.xlu0 0
    %1687 = vperm.xlu0 %1686, %v1281
    %v1688 = vpop.permute.xlu0 %1687
    %1691 = vset.pattern.permute.xlu0 0
    %1692 = vperm.xlu0 %1691, %v1282
    %v1693 = vpop.permute.xlu0 %1692
    %1696 = vset.pattern.permute.xlu0 0
    %1697 = vperm.xlu0 %1696, %v1283
    %v1698 = vpop.permute.xlu0 %1697
    %1701 = vset.pattern.permute.xlu0 0
    %1702 = vperm.xlu0 %1701, %v1284
    %v1703 = vpop.permute.xlu0 %1702
    %1706 = vset.pattern.permute.xlu0 0
    %1707 = vperm.xlu0 %1706, %v1285
    %v1708 = vpop.permute.xlu0 %1707
    %1711 = vset.pattern.permute.xlu0 0
    %1712 = vperm.xlu0 %1711, %v1286
    %v1713 = vpop.permute.xlu0 %1712
    %1716 = vset.pattern.permute.xlu0 0
    %1717 = vperm.xlu0 %1716, %v1287
    %v1718 = vpop.permute.xlu0 %1717
    %1721 = vset.pattern.permute.xlu0 0
    %1722 = vperm.xlu0 %1721, %v1288
    %v1723 = vpop.permute.xlu0 %1722
    %1726 = vset.pattern.permute.xlu0 0
    %1727 = vperm.xlu0 %1726, %v1289
    %v1728 = vpop.permute.xlu0 %1727
    %1731 = vset.pattern.permute.xlu0 0
    %1732 = vperm.xlu0 %1731, %v1290
    %v1733 = vpop.permute.xlu0 %1732
    %1736 = vset.pattern.permute.xlu0 0
    %1737 = vperm.xlu0 %1736, %v1291
    %v1738 = vpop.permute.xlu0 %1737
    %1741 = vset.pattern.permute.xlu0 0
    %1742 = vperm.xlu0 %1741, %v1292
    %v1743 = vpop.permute.xlu0 %1742
    %1746 = vset.pattern.permute.xlu0 0
    %1747 = vperm.xlu0 %1746, %v1293
    %v1748 = vpop.permute.xlu0 %1747
    %1751 = vset.pattern.permute.xlu0 0
    %1752 = vperm.xlu0 %1751, %v1294
    %v1753 = vpop.permute.xlu0 %1752
    %1756 = vset.pattern.permute.xlu0 0
    %1757 = vperm.xlu0 %1756, %v1295
    %v1758 = vpop.permute.xlu0 %1757
    %1761 = vset.pattern.permute.xlu0 0
    %1762 = vperm.xlu0 %1761, %v1296
    %v1763 = vpop.permute.xlu0 %1762
    %1766 = vset.pattern.permute.xlu0 0
    %1767 = vperm.xlu0 %1766, %v1297
    %v1768 = vpop.permute.xlu0 %1767
    %1771 = vset.pattern.permute.xlu0 0
    %1772 = vperm.xlu0 %1771, %v1298
    %v1773 = vpop.permute.xlu0 %1772
    %1776 = vset.pattern.permute.xlu0 0
    %1777 = vperm.xlu0 %1776, %v1299
    %v1778 = vpop.permute.xlu0 %1777
    %1781 = vset.pattern.permute.xlu0 0
    %1782 = vperm.xlu0 %1781, %v1300
    %v1783 = vpop.permute.xlu0 %1782
    %1786 = vset.pattern.permute.xlu0 0
    %1787 = vperm.xlu0 %1786, %v1301
    %v1788 = vpop.permute.xlu0 %1787
    %1791 = vset.pattern.permute.xlu0 0
    %1792 = vperm.xlu0 %1791, %v1302
    %v1793 = vpop.permute.xlu0 %1792
    %1796 = vset.pattern.permute.xlu0 0
    %1797 = vperm.xlu0 %1796, %v1303
    %v1798 = vpop.permute.xlu0 %1797
    %1801 = vset.pattern.permute.xlu0 0
    %1802 = vperm.xlu0 %1801, %v1304
    %v1803 = vpop.permute.xlu0 %1802
    %1806 = vset.pattern.permute.xlu0 0
    %1807 = vperm.xlu0 %1806, %v1305
    %v1808 = vpop.permute.xlu0 %1807
    %1811 = vset.pattern.permute.xlu0 0
    %1812 = vperm.xlu0 %1811, %v1306
    %v1813 = vpop.permute.xlu0 %1812
    %1816 = vset.pattern.permute.xlu0 0
    %1817 = vperm.xlu0 %1816, %v1307
    %v1818 = vpop.permute.xlu0 %1817
    %1821 = vset.pattern.permute.xlu0 0
    %1822 = vperm.xlu0 %1821, %v1308
    %v1823 = vpop.permute.xlu0 %1822
    %1826 = vset.pattern.permute.xlu0 0
    %1827 = vperm.xlu0 %1826, %v1309
    %v1828 = vpop.permute.xlu0 %1827
    %1831 = vset.pattern.permute.xlu0 0
    %1832 = vperm.xlu0 %1831, %v1310
    %v1833 = vpop.permute.xlu0 %1832
    %1836 = vset.pattern.permute.xlu0 0
    %1837 = vperm.xlu0 %1836, %v1311
    %v1838 = vpop.permute.xlu0 %1837
    %1841 = vset.pattern.permute.xlu0 0
    %1842 = vperm.xlu0 %1841, %v1312
    %v1843 = vpop.permute.xlu0 %1842
    %1846 = vset.pattern.permute.xlu0 0
    %1847 = vperm.xlu0 %1846, %v1313
    %v1848 = vpop.permute.xlu0 %1847
    %1851 = vset.pattern.permute.xlu0 0
    %1852 = vperm.xlu0 %1851, %v1314
    %v1853 = vpop.permute.xlu0 %1852
    %v1855 = vmul.f32 %v1099, %v1318
    %v1856 = vmul.f32 %v1100, %v1323
    %v1857 = vmul.f32 %v1101, %v1328
    %v1858 = vmul.f32 %v1102, %v1333
    %v1859 = vmul.f32 %v1103, %v1338
    %v1860 = vmul.f32 %v1104, %v1343
    %v1861 = vmul.f32 %v1105, %v1348
    %v1862 = vmul.f32 %v1106, %v1353
    %v1863 = vmul.f32 %v1107, %v1358
    %v1864 = vmul.f32 %v1108, %v1363
    %v1865 = vmul.f32 %v1109, %v1368
    %v1866 = vmul.f32 %v1110, %v1373
    %v1867 = vmul.f32 %v1111, %v1378
    %v1868 = vmul.f32 %v1112, %v1383
    %v1869 = vmul.f32 %v1113, %v1388
    %v1870 = vmul.f32 %v1114, %v1393
    %v1871 = vmul.f32 %v1115, %v1398
    %v1872 = vmul.f32 %v1116, %v1403
    %v1873 = vmul.f32 %v1117, %v1408
    %v1874 = vmul.f32 %v1118, %v1413
    %v1875 = vmul.f32 %v1119, %v1418
    %v1876 = vmul.f32 %v1120, %v1423
    %v1877 = vmul.f32 %v1121, %v1428
    %v1878 = vmul.f32 %v1122, %v1433
    %v1879 = vmul.f32 %v1123, %v1438
    %v1880 = vmul.f32 %v1124, %v1443
    %v1881 = vmul.f32 %v1125, %v1448
    %v1882 = vmul.f32 %v1126, %v1453
    %v1883 = vmul.f32 %v1127, %v1458
    %v1884 = vmul.f32 %v1128, %v1463
    %v1885 = vmul.f32 %v1129, %v1468
    %v1886 = vmul.f32 %v1130, %v1473
    %v1887 = vmul.f32 %v1131, %v1478
    %v1888 = vmul.f32 %v1132, %v1483
    %v1889 = vmul.f32 %v1133, %v1488
    %v1890 = vmul.f32 %v1134, %v1493
    %v1891 = vmul.f32 %v1135, %v1498
    %v1892 = vmul.f32 %v1136, %v1503
    %v1893 = vmul.f32 %v1137, %v1508
    %v1894 = vmul.f32 %v1138, %v1513
    %v1895 = vmul.f32 %v1139, %v1518
    %v1896 = vmul.f32 %v1140, %v1523
    %v1897 = vmul.f32 %v1141, %v1528
    %v1898 = vmul.f32 %v1142, %v1533
    %v1899 = vmul.f32 %v1143, %v1538
    %v1900 = vmul.f32 %v1144, %v1543
    %v1901 = vmul.f32 %v1145, %v1548
    %v1902 = vmul.f32 %v1146, %v1553
    %v1903 = vmul.f32 %v1147, %v1558
    %v1904 = vmul.f32 %v1148, %v1563
    %v1905 = vmul.f32 %v1149, %v1568
    %v1906 = vmul.f32 %v1150, %v1573
    %v1907 = vmul.f32 %v1151, %v1578
    %v1908 = vmul.f32 %v1152, %v1583
    %v1909 = vmul.f32 %v1153, %v1588
    %v1910 = vmul.f32 %v1154, %v1593
    %v1911 = vmul.f32 %v1155, %v1598
    %v1912 = vmul.f32 %v1156, %v1603
    %v1913 = vmul.f32 %v1157, %v1608
    %v1914 = vmul.f32 %v1158, %v1613
    %v1915 = vmul.f32 %v1159, %v1618
    %v1916 = vmul.f32 %v1160, %v1623
    %v1917 = vmul.f32 %v1161, %v1628
    %v1918 = vmul.f32 %v1162, %v1633
    %v1919 = vmul.f32 %v1163, %v1638
    %v1920 = vmul.f32 %v1164, %v1643
    %v1921 = vmul.f32 %v1165, %v1648
    %v1922 = vmul.f32 %v1166, %v1653
    %v1923 = vmul.f32 %v1167, %v1658
    %v1924 = vmul.f32 %v1168, %v1663
    %v1925 = vmul.f32 %v1169, %v1668
    %v1926 = vmul.f32 %v1170, %v1673
    %v1927 = vmul.f32 %v1171, %v1678
    %v1928 = vmul.f32 %v1172, %v1683
    %v1929 = vmul.f32 %v1173, %v1688
    %v1930 = vmul.f32 %v1174, %v1693
    %v1931 = vmul.f32 %v1175, %v1698
    %v1932 = vmul.f32 %v1176, %v1703
    %v1933 = vmul.f32 %v1177, %v1708
    %v1934 = vmul.f32 %v1178, %v1713
    %v1935 = vmul.f32 %v1179, %v1718
    %v1936 = vmul.f32 %v1180, %v1723
    %v1937 = vmul.f32 %v1181, %v1728
    %v1938 = vmul.f32 %v1182, %v1733
    %v1939 = vmul.f32 %v1183, %v1738
    %v1940 = vmul.f32 %v1184, %v1743
    %v1941 = vmul.f32 %v1185, %v1748
    %v1942 = vmul.f32 %v1186, %v1753
    %v1943 = vmul.f32 %v1187, %v1758
    %v1944 = vmul.f32 %v1188, %v1763
    %v1945 = vmul.f32 %v1189, %v1768
    %v1946 = vmul.f32 %v1190, %v1773
    %v1947 = vmul.f32 %v1191, %v1778
    %v1948 = vmul.f32 %v1192, %v1783
    %v1949 = vmul.f32 %v1193, %v1788
    %v1950 = vmul.f32 %v1194, %v1793
    %v1951 = vmul.f32 %v1195, %v1798
    %v1952 = vmul.f32 %v1196, %v1803
    %v1953 = vmul.f32 %v1197, %v1808
    %v1954 = vmul.f32 %v1198, %v1813
    %v1955 = vmul.f32 %v1199, %v1818
    %v1956 = vmul.f32 %v1200, %v1823
    %v1957 = vmul.f32 %v1201, %v1828
    %v1958 = vmul.f32 %v1202, %v1833
    %v1959 = vmul.f32 %v1203, %v1838
    %v1960 = vmul.f32 %v1204, %v1843
    %v1961 = vmul.f32 %v1205, %v1848
    %v1962 = vmul.f32 %v1206, %v1853
    %v1963 = vpack.c.bf16 %v1855, %v1855
    %v1964 = vpack.c.bf16 %v1856, %v1856
    %v1965 = vpack.c.bf16 %v1857, %v1857
    %v1966 = vpack.c.bf16 %v1858, %v1858
    %v1967 = vpack.c.bf16 %v1859, %v1859
    %v1968 = vpack.c.bf16 %v1860, %v1860
    %v1969 = vpack.c.bf16 %v1861, %v1861
    %v1970 = vpack.c.bf16 %v1862, %v1862
    %v1971 = vpack.c.bf16 %v1863, %v1863
    %v1972 = vpack.c.bf16 %v1864, %v1864
    %v1973 = vpack.c.bf16 %v1865, %v1865
    %v1974 = vpack.c.bf16 %v1866, %v1866
    %v1975 = vpack.c.bf16 %v1867, %v1867
    %v1976 = vpack.c.bf16 %v1868, %v1868
    %v1977 = vpack.c.bf16 %v1869, %v1869
    %v1978 = vpack.c.bf16 %v1870, %v1870
    %v1979 = vpack.c.bf16 %v1871, %v1871
    %v1980 = vpack.c.bf16 %v1872, %v1872
    %v1981 = vpack.c.bf16 %v1873, %v1873
    %v1982 = vpack.c.bf16 %v1874, %v1874
    %v1983 = vpack.c.bf16 %v1875, %v1875
    %v1984 = vpack.c.bf16 %v1876, %v1876
    %v1985 = vpack.c.bf16 %v1877, %v1877
    %v1986 = vpack.c.bf16 %v1878, %v1878
    %v1987 = vpack.c.bf16 %v1879, %v1879
    %v1988 = vpack.c.bf16 %v1880, %v1880
    %v1989 = vpack.c.bf16 %v1881, %v1881
    %v1990 = vpack.c.bf16 %v1882, %v1882
    %v1991 = vpack.c.bf16 %v1883, %v1883
    %v1992 = vpack.c.bf16 %v1884, %v1884
    %v1993 = vpack.c.bf16 %v1885, %v1885
    %v1994 = vpack.c.bf16 %v1886, %v1886
    %v1995 = vpack.c.bf16 %v1887, %v1887
    %v1996 = vpack.c.bf16 %v1888, %v1888
    %v1997 = vpack.c.bf16 %v1889, %v1889
    %v1998 = vpack.c.bf16 %v1890, %v1890
    %v1999 = vpack.c.bf16 %v1891, %v1891
    %v2000 = vpack.c.bf16 %v1892, %v1892
    %v2001 = vpack.c.bf16 %v1893, %v1893
    %v2002 = vpack.c.bf16 %v1894, %v1894
    %v2003 = vpack.c.bf16 %v1895, %v1895
    %v2004 = vpack.c.bf16 %v1896, %v1896
    %v2005 = vpack.c.bf16 %v1897, %v1897
    %v2006 = vpack.c.bf16 %v1898, %v1898
    %v2007 = vpack.c.bf16 %v1899, %v1899
    %v2008 = vpack.c.bf16 %v1900, %v1900
    %v2009 = vpack.c.bf16 %v1901, %v1901
    %v2010 = vpack.c.bf16 %v1902, %v1902
    %v2011 = vpack.c.bf16 %v1903, %v1903
    %v2012 = vpack.c.bf16 %v1904, %v1904
    %v2013 = vpack.c.bf16 %v1905, %v1905
    %v2014 = vpack.c.bf16 %v1906, %v1906
    %v2015 = vpack.c.bf16 %v1907, %v1907
    %v2016 = vpack.c.bf16 %v1908, %v1908
    %v2017 = vpack.c.bf16 %v1909, %v1909
    %v2018 = vpack.c.bf16 %v1910, %v1910
    %v2019 = vpack.c.bf16 %v1911, %v1911
    %v2020 = vpack.c.bf16 %v1912, %v1912
    %v2021 = vpack.c.bf16 %v1913, %v1913
    %v2022 = vpack.c.bf16 %v1914, %v1914
    %v2023 = vpack.c.bf16 %v1915, %v1915
    %v2024 = vpack.c.bf16 %v1916, %v1916
    %v2025 = vpack.c.bf16 %v1917, %v1917
    %v2026 = vpack.c.bf16 %v1918, %v1918
    %v2027 = vpack.c.bf16 %v1919, %v1919
    %v2028 = vpack.c.bf16 %v1920, %v1920
    %v2029 = vpack.c.bf16 %v1921, %v1921
    %v2030 = vpack.c.bf16 %v1922, %v1922
    %v2031 = vpack.c.bf16 %v1923, %v1923
    %v2032 = vpack.c.bf16 %v1924, %v1924
    %v2033 = vpack.c.bf16 %v1925, %v1925
    %v2034 = vpack.c.bf16 %v1926, %v1926
    %v2035 = vpack.c.bf16 %v1927, %v1927
    %v2036 = vpack.c.bf16 %v1928, %v1928
    %v2037 = vpack.c.bf16 %v1929, %v1929
    %v2038 = vpack.c.bf16 %v1930, %v1930
    %v2039 = vpack.c.bf16 %v1931, %v1931
    %v2040 = vpack.c.bf16 %v1932, %v1932
    %v2041 = vpack.c.bf16 %v1933, %v1933
    %v2042 = vpack.c.bf16 %v1934, %v1934
    %v2043 = vpack.c.bf16 %v1935, %v1935
    %v2044 = vpack.c.bf16 %v1936, %v1936
    %v2045 = vpack.c.bf16 %v1937, %v1937
    %v2046 = vpack.c.bf16 %v1938, %v1938
    %v2047 = vpack.c.bf16 %v1939, %v1939
    %v2048 = vpack.c.bf16 %v1940, %v1940
    %v2049 = vpack.c.bf16 %v1941, %v1941
    %v2050 = vpack.c.bf16 %v1942, %v1942
    %v2051 = vpack.c.bf16 %v1943, %v1943
    %v2052 = vpack.c.bf16 %v1944, %v1944
    %v2053 = vpack.c.bf16 %v1945, %v1945
    %v2054 = vpack.c.bf16 %v1946, %v1946
    %v2055 = vpack.c.bf16 %v1947, %v1947
    %v2056 = vpack.c.bf16 %v1948, %v1948
    %v2057 = vpack.c.bf16 %v1949, %v1949
    %v2058 = vpack.c.bf16 %v1950, %v1950
    %v2059 = vpack.c.bf16 %v1951, %v1951
    %v2060 = vpack.c.bf16 %v1952, %v1952
    %v2061 = vpack.c.bf16 %v1953, %v1953
    %v2062 = vpack.c.bf16 %v1954, %v1954
    %v2063 = vpack.c.bf16 %v1955, %v1955
    %v2064 = vpack.c.bf16 %v1956, %v1956
    %v2065 = vpack.c.bf16 %v1957, %v1957
    %v2066 = vpack.c.bf16 %v1958, %v1958
    %v2067 = vpack.c.bf16 %v1959, %v1959
    %v2068 = vpack.c.bf16 %v1960, %v1960
    %v2069 = vpack.c.bf16 %v1961, %v1961
    %v2070 = vpack.c.bf16 %v1962, %v1962
    %2071 = vst [vmem:[#allocation2] sm:$0xf] %v1963
    %2072 = vst [vmem:[#allocation2 + $0x4] sm:$0xf] %v1964
    %2073 = vst [vmem:[#allocation2 + $0x8] sm:$0xf] %v1965
    %2074 = vst [vmem:[#allocation2 + $0xc] sm:$0xf] %v1966
    %2075 = vst [vmem:[#allocation2 + $0x10] sm:$0xf] %v1967
    %2076 = vst [vmem:[#allocation2 + $0x14] sm:$0xf] %v1968
    %2077 = vst [vmem:[#allocation2 + $0x18] sm:$0xf] %v1969
    %2078 = vst [vmem:[#allocation2 + $0x1c] sm:$0xf] %v1970
    %2079 = vst [vmem:[#allocation2 + $0x20] sm:$0xf] %v1971
    %2080 = vst [vmem:[#allocation2 + $0x24] sm:$0xf] %v1972
    %2081 = vst [vmem:[#allocation2 + $0x28] sm:$0xf] %v1973
    %2082 = vst [vmem:[#allocation2 + $0x2c] sm:$0xf] %v1974
    %2083 = vst [vmem:[#allocation2 + $0x30] sm:$0xf] %v1975
    %2084 = vst [vmem:[#allocation2 + $0x34] sm:$0xf] %v1976
    %2085 = vst [vmem:[#allocation2 + $0x38] sm:$0xf] %v1977
    %2086 = vst [vmem:[#allocation2 + $0x3c] sm:$0xf] %v1978
    %2087 = vst [vmem:[#allocation2 + $0x40] sm:$0xf] %v1979
    %2088 = vst [vmem:[#allocation2 + $0x44] sm:$0xf] %v1980
    %2089 = vst [vmem:[#allocation2 + $0x48] sm:$0xf] %v1981
    %2090 = vst [vmem:[#allocation2 + $0x4c] sm:$0xf] %v1982
    %2091 = vst [vmem:[#allocation2 + $0x50] sm:$0xf] %v1983
    %2092 = vst [vmem:[#allocation2 + $0x54] sm:$0xf] %v1984
    %2093 = vst [vmem:[#allocation2 + $0x58] sm:$0xf] %v1985
    %2094 = vst [vmem:[#allocation2 + $0x5c] sm:$0xf] %v1986
    %2095 = vst [vmem:[#allocation2 + $0x60] sm:$0xf] %v1987
    %2096 = vst [vmem:[#allocation2 + $0x64] sm:$0xf] %v1988
    %2097 = vst [vmem:[#allocation2 + $0x68] sm:$0xf] %v1989
    %2098 = vst [vmem:[#allocation2 + $0x6c] sm:$0xf] %v1990
    %2099 = vst [vmem:[#allocation2 + $0x70] sm:$0xf] %v1991
    %2100 = vst [vmem:[#allocation2 + $0x74] sm:$0xf] %v1992
    %2101 = vst [vmem:[#allocation2 + $0x78] sm:$0xf] %v1993
    %2102 = vst [vmem:[#allocation2 + $0x7c] sm:$0xf] %v1994
    %2103 = vst [vmem:[#allocation2 + $0x80] sm:$0xf] %v1995
    %2104 = vst [vmem:[#allocation2 + $0x84] sm:$0xf] %v1996
    %2105 = vst [vmem:[#allocation2 + $0x88] sm:$0xf] %v1997
    %2106 = vst [vmem:[#allocation2 + $0x8c] sm:$0xf] %v1998
    %2107 = vst [vmem:[#allocation2 + $0x90] sm:$0xf] %v1999
    %2108 = vst [vmem:[#allocation2 + $0x94] sm:$0xf] %v2000
    %2109 = vst [vmem:[#allocation2 + $0x98] sm:$0xf] %v2001
    %2110 = vst [vmem:[#allocation2 + $0x9c] sm:$0xf] %v2002
    %2111 = vst [vmem:[#allocation2 + $0xa0] sm:$0xf] %v2003
    %2112 = vst [vmem:[#allocation2 + $0xa4] sm:$0xf] %v2004
    %2113 = vst [vmem:[#allocation2 + $0xa8] sm:$0xf] %v2005
    %2114 = vst [vmem:[#allocation2 + $0xac] sm:$0xf] %v2006
    %2115 = vst [vmem:[#allocation2 + $0xb0] sm:$0xf] %v2007
    %2116 = vst [vmem:[#allocation2 + $0xb4] sm:$0xf] %v2008
    %2117 = vst [vmem:[#allocation2 + $0xb8] sm:$0xf] %v2009
    %2118 = vst [vmem:[#allocation2 + $0xbc] sm:$0xf] %v2010
    %2119 = vst [vmem:[#allocation2 + $0xc0] sm:$0xf] %v2011
    %2120 = vst [vmem:[#allocation2 + $0xc4] sm:$0xf] %v2012
    %2121 = vst [vmem:[#allocation2 + $0xc8] sm:$0xf] %v2013
    %2122 = vst [vmem:[#allocation2 + $0xcc] sm:$0xf] %v2014
    %2123 = vst [vmem:[#allocation2 + $0xd0] sm:$0xf] %v2015
    %2124 = vst [vmem:[#allocation2 + $0xd4] sm:$0xf] %v2016
    %2125 = vst [vmem:[#allocation2 + $0xd8] sm:$0xf] %v2017
    %2126 = vst [vmem:[#allocation2 + $0xdc] sm:$0xf] %v2018
    %2127 = vst [vmem:[#allocation2 + $0xe0] sm:$0xf] %v2019
    %2128 = vst [vmem:[#allocation2 + $0xe4] sm:$0xf] %v2020
    %2129 = vst [vmem:[#allocation2 + $0xe8] sm:$0xf] %v2021
    %2130 = vst [vmem:[#allocation2 + $0xec] sm:$0xf] %v2022
    %2131 = vst [vmem:[#allocation2 + $0xf0] sm:$0xf] %v2023
    %2132 = vst [vmem:[#allocation2 + $0xf4] sm:$0xf] %v2024
    %2133 = vst [vmem:[#allocation2 + $0xf8] sm:$0xf] %v2025
    %2134 = vst [vmem:[#allocation2 + $0xfc] sm:$0xf] %v2026
    %2135 = vst [vmem:[#allocation2 + $0x100] sm:$0xf] %v2027
    %2136 = vst [vmem:[#allocation2 + $0x104] sm:$0xf] %v2028
    %2137 = vst [vmem:[#allocation2 + $0x108] sm:$0xf] %v2029
    %2138 = vst [vmem:[#allocation2 + $0x10c] sm:$0xf] %v2030
    %2139 = vst [vmem:[#allocation2 + $0x110] sm:$0xf] %v2031
    %2140 = vst [vmem:[#allocation2 + $0x114] sm:$0xf] %v2032
    %2141 = vst [vmem:[#allocation2 + $0x118] sm:$0xf] %v2033
    %2142 = vst [vmem:[#allocation2 + $0x11c] sm:$0xf] %v2034
    %2143 = vst [vmem:[#allocation2 + $0x120] sm:$0xf] %v2035
    %2144 = vst [vmem:[#allocation2 + $0x124] sm:$0xf] %v2036
    %2145 = vst [vmem:[#allocation2 + $0x128] sm:$0xf] %v2037
    %2146 = vst [vmem:[#allocation2 + $0x12c] sm:$0xf] %v2038
    %2147 = vst [vmem:[#allocation2 + $0x130] sm:$0xf] %v2039
    %2148 = vst [vmem:[#allocation2 + $0x134] sm:$0xf] %v2040
    %2149 = vst [vmem:[#allocation2 + $0x138] sm:$0xf] %v2041
    %2150 = vst [vmem:[#allocation2 + $0x13c] sm:$0xf] %v2042
    %2151 = vst [vmem:[#allocation2 + $0x140] sm:$0xf] %v2043
    %2152 = vst [vmem:[#allocation2 + $0x144] sm:$0xf] %v2044
    %2153 = vst [vmem:[#allocation2 + $0x148] sm:$0xf] %v2045
    %2154 = vst [vmem:[#allocation2 + $0x14c] sm:$0xf] %v2046
    %2155 = vst [vmem:[#allocation2 + $0x150] sm:$0xf] %v2047
    %2156 = vst [vmem:[#allocation2 + $0x154] sm:$0xf] %v2048
    %2157 = vst [vmem:[#allocation2 + $0x158] sm:$0xf] %v2049
    %2158 = vst [vmem:[#allocation2 + $0x15c] sm:$0xf] %v2050
    %2159 = vst [vmem:[#allocation2 + $0x160] sm:$0xf] %v2051
    %2160 = vst [vmem:[#allocation2 + $0x164] sm:$0xf] %v2052
    %2161 = vst [vmem:[#allocation2 + $0x168] sm:$0xf] %v2053
    %2162 = vst [vmem:[#allocation2 + $0x16c] sm:$0xf] %v2054
    %2163 = vst [vmem:[#allocation2 + $0x170] sm:$0xf] %v2055
    %2164 = vst [vmem:[#allocation2 + $0x174] sm:$0xf] %v2056
    %2165 = vst [vmem:[#allocation2 + $0x178] sm:$0xf] %v2057
    %2166 = vst [vmem:[#allocation2 + $0x17c] sm:$0xf] %v2058
    %2167 = vst [vmem:[#allocation2 + $0x180] sm:$0xf] %v2059
    %2168 = vst [vmem:[#allocation2 + $0x184] sm:$0xf] %v2060
    %2169 = vst [vmem:[#allocation2 + $0x188] sm:$0xf] %v2061
    %2170 = vst [vmem:[#allocation2 + $0x18c] sm:$0xf] %v2062
    %2171 = vst [vmem:[#allocation2 + $0x190] sm:$0xf] %v2063
    %2172 = vst [vmem:[#allocation2 + $0x194] sm:$0xf] %v2064
    %2173 = vst [vmem:[#allocation2 + $0x198] sm:$0xf] %v2065
    %2174 = vst [vmem:[#allocation2 + $0x19c] sm:$0xf] %v2066
    %2175 = vst [vmem:[#allocation2 + $0x1a0] sm:$0xf] %v2067
    %2176 = vst [vmem:[#allocation2 + $0x1a4] sm:$0xf] %v2068
    %2177 = vst [vmem:[#allocation2 + $0x1a8] sm:$0xf] %v2069
    %2178 = vst [vmem:[#allocation2 + $0x1ac] sm:$0xf] %v2070
    %2179 = vst [vmem:[#allocation2 + $0x1b0] sm:$0xf] 0
    %2180 = vst [vmem:[#allocation2 + $0x1b4] sm:$0xf] 0
    %2181 = vst [vmem:[#allocation2 + $0x1b8] sm:$0xf] 0
    %2182 = vst [vmem:[#allocation2 + $0x1bc] sm:$0xf] 0
    %2183 = vst [vmem:[#allocation2 + $0x1c0] sm:$0xf] 0
    %2184 = vst [vmem:[#allocation2 + $0x1c4] sm:$0xf] 0
    %2185 = vst [vmem:[#allocation2 + $0x1c8] sm:$0xf] 0
    %v2186 = vld [vmem:[#allocation2] sm:$0xf]
    %v2187 = vld [vmem:[#allocation2 + $0x4] sm:$0xf]
    %v2188 = vld [vmem:[#allocation2 + $0x8] sm:$0xf]
    %v2189 = vld [vmem:[#allocation2 + $0xc] sm:$0xf]
    %v2190 = vld [vmem:[#allocation2 + $0x10] sm:$0xf]
    %v2191 = vld [vmem:[#allocation2 + $0x14] sm:$0xf]
    %v2192 = vld [vmem:[#allocation2 + $0x18] sm:$0xf]
    %v2193 = vld [vmem:[#allocation2 + $0x1c] sm:$0xf]
    %v2194 = vld [vmem:[#allocation2 + $0x20] sm:$0xf]
    %v2195 = vld [vmem:[#allocation2 + $0x24] sm:$0xf]
    %v2196 = vld [vmem:[#allocation2 + $0x28] sm:$0xf]
    %v2197 = vld [vmem:[#allocation2 + $0x2c] sm:$0xf]
    %v2198 = vld [vmem:[#allocation2 + $0x30] sm:$0xf]
    %v2199 = vld [vmem:[#allocation2 + $0x34] sm:$0xf]
    %v2200 = vld [vmem:[#allocation2 + $0x38] sm:$0xf]
    %v2201 = vld [vmem:[#allocation2 + $0x3c] sm:$0xf]
    %v2202 = vld [vmem:[#allocation2 + $0x40] sm:$0xf]
    %v2203 = vld [vmem:[#allocation2 + $0x44] sm:$0xf]
    %v2204 = vld [vmem:[#allocation2 + $0x48] sm:$0xf]
    %v2205 = vld [vmem:[#allocation2 + $0x4c] sm:$0xf]
    %v2206 = vld [vmem:[#allocation2 + $0x50] sm:$0xf]
    %v2207 = vld [vmem:[#allocation2 + $0x54] sm:$0xf]
    %v2208 = vld [vmem:[#allocation2 + $0x58] sm:$0xf]
    %v2209 = vld [vmem:[#allocation2 + $0x5c] sm:$0xf]
    %v2210 = vld [vmem:[#allocation2 + $0x60] sm:$0xf]
    %v2211 = vld [vmem:[#allocation2 + $0x64] sm:$0xf]
    %v2212 = vld [vmem:[#allocation2 + $0x68] sm:$0xf]
    %v2213 = vld [vmem:[#allocation2 + $0x6c] sm:$0xf]
    %v2214 = vld [vmem:[#allocation2 + $0x70] sm:$0xf]
    %v2215 = vld [vmem:[#allocation2 + $0x74] sm:$0xf]
    %v2216 = vld [vmem:[#allocation2 + $0x78] sm:$0xf]
    %v2217 = vld [vmem:[#allocation2 + $0x7c] sm:$0xf]
    %v2218 = vld [vmem:[#allocation2 + $0x80] sm:$0xf]
    %v2219 = vld [vmem:[#allocation2 + $0x84] sm:$0xf]
    %v2220 = vld [vmem:[#allocation2 + $0x88] sm:$0xf]
    %v2221 = vld [vmem:[#allocation2 + $0x8c] sm:$0xf]
    %v2222 = vld [vmem:[#allocation2 + $0x90] sm:$0xf]
    %v2223 = vld [vmem:[#allocation2 + $0x94] sm:$0xf]
    %v2224 = vld [vmem:[#allocation2 + $0x98] sm:$0xf]
    %v2225 = vld [vmem:[#allocation2 + $0x9c] sm:$0xf]
    %v2226 = vld [vmem:[#allocation2 + $0xa0] sm:$0xf]
    %v2227 = vld [vmem:[#allocation2 + $0xa4] sm:$0xf]
    %v2228 = vld [vmem:[#allocation2 + $0xa8] sm:$0xf]
    %v2229 = vld [vmem:[#allocation2 + $0xac] sm:$0xf]
    %v2230 = vld [vmem:[#allocation2 + $0xb0] sm:$0xf]
    %v2231 = vld [vmem:[#allocation2 + $0xb4] sm:$0xf]
    %v2232 = vld [vmem:[#allocation2 + $0xb8] sm:$0xf]
    %v2233 = vld [vmem:[#allocation2 + $0xbc] sm:$0xf]
    %v2234 = vld [vmem:[#allocation2 + $0xc0] sm:$0xf]
    %v2235 = vld [vmem:[#allocation2 + $0xc4] sm:$0xf]
    %v2236 = vld [vmem:[#allocation2 + $0xc8] sm:$0xf]
    %v2237 = vld [vmem:[#allocation2 + $0xcc] sm:$0xf]
    %v2238 = vld [vmem:[#allocation2 + $0xd0] sm:$0xf]
    %v2239 = vld [vmem:[#allocation2 + $0xd4] sm:$0xf]
    %v2240 = vld [vmem:[#allocation2 + $0xd8] sm:$0xf]
    %v2241 = vld [vmem:[#allocation2 + $0xdc] sm:$0xf]
    %v2242 = vld [vmem:[#allocation2 + $0xe0] sm:$0xf]
    %v2243 = vld [vmem:[#allocation2 + $0xe4] sm:$0xf]
    %v2244 = vld [vmem:[#allocation2 + $0xe8] sm:$0xf]
    %v2245 = vld [vmem:[#allocation2 + $0xec] sm:$0xf]
    %v2246 = vld [vmem:[#allocation2 + $0xf0] sm:$0xf]
    %v2247 = vld [vmem:[#allocation2 + $0xf4] sm:$0xf]
    %v2248 = vld [vmem:[#allocation2 + $0xf8] sm:$0xf]
    %v2249 = vld [vmem:[#allocation2 + $0xfc] sm:$0xf]
    %v2250 = vld [vmem:[#allocation2 + $0x100] sm:$0xf]
    %v2251 = vld [vmem:[#allocation2 + $0x104] sm:$0xf]
    %v2252 = vld [vmem:[#allocation2 + $0x108] sm:$0xf]
    %v2253 = vld [vmem:[#allocation2 + $0x10c] sm:$0xf]
    %v2254 = vld [vmem:[#allocation2 + $0x110] sm:$0xf]
    %v2255 = vld [vmem:[#allocation2 + $0x114] sm:$0xf]
    %v2256 = vld [vmem:[#allocation2 + $0x118] sm:$0xf]
    %v2257 = vld [vmem:[#allocation2 + $0x11c] sm:$0xf]
    %v2258 = vld [vmem:[#allocation2 + $0x120] sm:$0xf]
    %v2259 = vld [vmem:[#allocation2 + $0x124] sm:$0xf]
    %v2260 = vld [vmem:[#allocation2 + $0x128] sm:$0xf]
    %v2261 = vld [vmem:[#allocation2 + $0x12c] sm:$0xf]
    %v2262 = vld [vmem:[#allocation2 + $0x130] sm:$0xf]
    %v2263 = vld [vmem:[#allocation2 + $0x134] sm:$0xf]
    %v2264 = vld [vmem:[#allocation2 + $0x138] sm:$0xf]
    %v2265 = vld [vmem:[#allocation2 + $0x13c] sm:$0xf]
    %v2266 = vld [vmem:[#allocation2 + $0x140] sm:$0xf]
    %v2267 = vld [vmem:[#allocation2 + $0x144] sm:$0xf]
    %v2268 = vld [vmem:[#allocation2 + $0x148] sm:$0xf]
    %v2269 = vld [vmem:[#allocation2 + $0x14c] sm:$0xf]
    %v2270 = vld [vmem:[#allocation2 + $0x150] sm:$0xf]
    %v2271 = vld [vmem:[#allocation2 + $0x154] sm:$0xf]
    %v2272 = vld [vmem:[#allocation2 + $0x158] sm:$0xf]
    %v2273 = vld [vmem:[#allocation2 + $0x15c] sm:$0xf]
    %v2274 = vld [vmem:[#allocation2 + $0x160] sm:$0xf]
    %v2275 = vld [vmem:[#allocation2 + $0x164] sm:$0xf]
    %v2276 = vld [vmem:[#allocation2 + $0x168] sm:$0xf]
    %v2277 = vld [vmem:[#allocation2 + $0x16c] sm:$0xf]
    %v2278 = vld [vmem:[#allocation2 + $0x170] sm:$0xf]
    %v2279 = vld [vmem:[#allocation2 + $0x174] sm:$0xf]
    %v2280 = vld [vmem:[#allocation2 + $0x178] sm:$0xf]
    %v2281 = vld [vmem:[#allocation2 + $0x17c] sm:$0xf]
    %v2282 = vld [vmem:[#allocation2 + $0x180] sm:$0xf]
    %v2283 = vld [vmem:[#allocation2 + $0x184] sm:$0xf]
    %v2284 = vld [vmem:[#allocation2 + $0x188] sm:$0xf]
    %v2285 = vld [vmem:[#allocation2 + $0x18c] sm:$0xf]
    %v2286 = vld [vmem:[#allocation2 + $0x190] sm:$0xf]
    %v2287 = vld [vmem:[#allocation2 + $0x194] sm:$0xf]
    %v2288 = vld [vmem:[#allocation2 + $0x198] sm:$0xf]
    %v2289 = vld [vmem:[#allocation2 + $0x19c] sm:$0xf]
    %v2290 = vld [vmem:[#allocation2 + $0x1a0] sm:$0xf]
    %v2291 = vld [vmem:[#allocation2 + $0x1a4] sm:$0xf]
    %v2292 = vld [vmem:[#allocation2 + $0x1a8] sm:$0xf]
    %v2293 = vld [vmem:[#allocation2 + $0x1ac] sm:$0xf]
    %v2294 = vld [vmem:[#allocation2 + $0x1b0] sm:$0x1]
    %v2295 = vld [vmem:[#allocation2] sm:$0xe]
    %v2404 = vunpack.c.l.b16 %v2186
    %v2405 = vunpack.c.l.b16 %v2187
    %v2406 = vunpack.c.l.b16 %v2188
    %v2407 = vunpack.c.l.b16 %v2189
    %v2408 = vunpack.c.l.b16 %v2190
    %v2409 = vunpack.c.l.b16 %v2191
    %v2410 = vunpack.c.l.b16 %v2192
    %v2411 = vunpack.c.l.b16 %v2193
    %v2412 = vunpack.c.l.b16 %v2194
    %v2413 = vunpack.c.l.b16 %v2195
    %v2414 = vunpack.c.l.b16 %v2196
    %v2415 = vunpack.c.l.b16 %v2197
    %v2416 = vunpack.c.l.b16 %v2198
    %v2417 = vunpack.c.l.b16 %v2199
    %v2418 = vunpack.c.l.b16 %v2200
    %v2419 = vunpack.c.l.b16 %v2201
    %v2420 = vunpack.c.l.b16 %v2202
    %v2421 = vunpack.c.l.b16 %v2203
    %v2422 = vunpack.c.l.b16 %v2204
    %v2423 = vunpack.c.l.b16 %v2205
    %v2424 = vunpack.c.l.b16 %v2206
    %v2425 = vunpack.c.l.b16 %v2207
    %v2426 = vunpack.c.l.b16 %v2208
    %v2427 = vunpack.c.l.b16 %v2209
    %v2428 = vunpack.c.l.b16 %v2210
    %v2429 = vunpack.c.l.b16 %v2211
    %v2430 = vunpack.c.l.b16 %v2212
    %v2431 = vunpack.c.l.b16 %v2213
    %v2432 = vunpack.c.l.b16 %v2214
    %v2433 = vunpack.c.l.b16 %v2215
    %v2434 = vunpack.c.l.b16 %v2216
    %v2435 = vunpack.c.l.b16 %v2217
    %v2436 = vunpack.c.l.b16 %v2218
    %v2437 = vunpack.c.l.b16 %v2219
    %v2438 = vunpack.c.l.b16 %v2220
    %v2439 = vunpack.c.l.b16 %v2221
    %v2440 = vunpack.c.l.b16 %v2222
    %v2441 = vunpack.c.l.b16 %v2223
    %v2442 = vunpack.c.l.b16 %v2224
    %v2443 = vunpack.c.l.b16 %v2225
    %v2444 = vunpack.c.l.b16 %v2226
    %v2445 = vunpack.c.l.b16 %v2227
    %v2446 = vunpack.c.l.b16 %v2228
    %v2447 = vunpack.c.l.b16 %v2229
    %v2448 = vunpack.c.l.b16 %v2230
    %v2449 = vunpack.c.l.b16 %v2231
    %v2450 = vunpack.c.l.b16 %v2232
    %v2451 = vunpack.c.l.b16 %v2233
    %v2452 = vunpack.c.l.b16 %v2234
    %v2453 = vunpack.c.l.b16 %v2235
    %v2454 = vunpack.c.l.b16 %v2236
    %v2455 = vunpack.c.l.b16 %v2237
    %v2456 = vunpack.c.l.b16 %v2238
    %v2457 = vunpack.c.l.b16 %v2239
    %v2458 = vunpack.c.l.b16 %v2240
    %v2459 = vunpack.c.l.b16 %v2241
    %v2460 = vunpack.c.l.b16 %v2242
    %v2461 = vunpack.c.l.b16 %v2243
    %v2462 = vunpack.c.l.b16 %v2244
    %v2463 = vunpack.c.l.b16 %v2245
    %v2464 = vunpack.c.l.b16 %v2246
    %v2465 = vunpack.c.l.b16 %v2247
    %v2466 = vunpack.c.l.b16 %v2248
    %v2467 = vunpack.c.l.b16 %v2249
    %v2468 = vunpack.c.l.b16 %v2250
    %v2469 = vunpack.c.l.b16 %v2251
    %v2470 = vunpack.c.l.b16 %v2252
    %v2471 = vunpack.c.l.b16 %v2253
    %v2472 = vunpack.c.l.b16 %v2254
    %v2473 = vunpack.c.l.b16 %v2255
    %v2474 = vunpack.c.l.b16 %v2256
    %v2475 = vunpack.c.l.b16 %v2257
    %v2476 = vunpack.c.l.b16 %v2258
    %v2477 = vunpack.c.l.b16 %v2259
    %v2478 = vunpack.c.l.b16 %v2260
    %v2479 = vunpack.c.l.b16 %v2261
    %v2480 = vunpack.c.l.b16 %v2262
    %v2481 = vunpack.c.l.b16 %v2263
    %v2482 = vunpack.c.l.b16 %v2264
    %v2483 = vunpack.c.l.b16 %v2265
    %v2484 = vunpack.c.l.b16 %v2266
    %v2485 = vunpack.c.l.b16 %v2267
    %v2486 = vunpack.c.l.b16 %v2268
    %v2487 = vunpack.c.l.b16 %v2269
    %v2488 = vunpack.c.l.b16 %v2270
    %v2489 = vunpack.c.l.b16 %v2271
    %v2490 = vunpack.c.l.b16 %v2272
    %v2491 = vunpack.c.l.b16 %v2273
    %v2492 = vunpack.c.l.b16 %v2274
    %v2493 = vunpack.c.l.b16 %v2275
    %v2494 = vunpack.c.l.b16 %v2276
    %v2495 = vunpack.c.l.b16 %v2277
    %v2496 = vunpack.c.l.b16 %v2278
    %v2497 = vunpack.c.l.b16 %v2279
    %v2498 = vunpack.c.l.b16 %v2280
    %v2499 = vunpack.c.l.b16 %v2281
    %v2500 = vunpack.c.l.b16 %v2282
    %v2501 = vunpack.c.l.b16 %v2283
    %v2502 = vunpack.c.l.b16 %v2284
    %v2503 = vunpack.c.l.b16 %v2285
    %v2504 = vunpack.c.l.b16 %v2286
    %v2505 = vunpack.c.l.b16 %v2287
    %v2506 = vunpack.c.l.b16 %v2288
    %v2507 = vunpack.c.l.b16 %v2289
    %v2508 = vunpack.c.l.b16 %v2290
    %v2509 = vunpack.c.l.b16 %v2291
    %v2510 = vunpack.c.l.b16 %v2292
    %v2511 = vunpack.c.l.b16 %v2293
    %v2512 = vpack.c.b16 %v2405, %v2404
    %v2513 = vpack.c.b16 %v2407, %v2406
    %v2514 = vpack.c.b16 %v2409, %v2408
    %v2515 = vpack.c.b16 %v2411, %v2410
    %v2516 = vpack.c.b16 %v2413, %v2412
    %v2517 = vpack.c.b16 %v2415, %v2414
    %v2518 = vpack.c.b16 %v2417, %v2416
    %v2519 = vpack.c.b16 %v2419, %v2418
    %v2520 = vpack.c.b16 %v2421, %v2420
    %v2521 = vpack.c.b16 %v2423, %v2422
    %v2522 = vpack.c.b16 %v2425, %v2424
    %v2523 = vpack.c.b16 %v2427, %v2426
    %v2524 = vpack.c.b16 %v2429, %v2428
    %v2525 = vpack.c.b16 %v2431, %v2430
    %v2526 = vpack.c.b16 %v2433, %v2432
    %v2527 = vpack.c.b16 %v2435, %v2434
    %v2528 = vpack.c.b16 %v2437, %v2436
    %v2529 = vpack.c.b16 %v2439, %v2438
    %v2530 = vpack.c.b16 %v2441, %v2440
    %v2531 = vpack.c.b16 %v2443, %v2442
    %v2532 = vpack.c.b16 %v2445, %v2444
    %v2533 = vpack.c.b16 %v2447, %v2446
    %v2534 = vpack.c.b16 %v2449, %v2448
    %v2535 = vpack.c.b16 %v2451, %v2450
    %v2536 = vpack.c.b16 %v2453, %v2452
    %v2537 = vpack.c.b16 %v2455, %v2454
    %v2538 = vpack.c.b16 %v2457, %v2456
    %v2539 = vpack.c.b16 %v2459, %v2458
    %v2540 = vpack.c.b16 %v2461, %v2460
    %v2541 = vpack.c.b16 %v2463, %v2462
    %v2542 = vpack.c.b16 %v2465, %v2464
    %v2543 = vpack.c.b16 %v2467, %v2466
    %v2544 = vpack.c.b16 %v2469, %v2468
    %v2545 = vpack.c.b16 %v2471, %v2470
    %v2546 = vpack.c.b16 %v2473, %v2472
    %v2547 = vpack.c.b16 %v2475, %v2474
    %v2548 = vpack.c.b16 %v2477, %v2476
    %v2549 = vpack.c.b16 %v2479, %v2478
    %v2550 = vpack.c.b16 %v2481, %v2480
    %v2551 = vpack.c.b16 %v2483, %v2482
    %v2552 = vpack.c.b16 %v2485, %v2484
    %v2553 = vpack.c.b16 %v2487, %v2486
    %v2554 = vpack.c.b16 %v2489, %v2488
    %v2555 = vpack.c.b16 %v2491, %v2490
    %v2556 = vpack.c.b16 %v2493, %v2492
    %v2557 = vpack.c.b16 %v2495, %v2494
    %v2558 = vpack.c.b16 %v2497, %v2496
    %v2559 = vpack.c.b16 %v2499, %v2498
    %v2560 = vpack.c.b16 %v2501, %v2500
    %v2561 = vpack.c.b16 %v2503, %v2502
    %v2562 = vpack.c.b16 %v2505, %v2504
    %v2563 = vpack.c.b16 %v2507, %v2506
    %v2564 = vpack.c.b16 %v2509, %v2508
    %v2565 = vpack.c.b16 %v2511, %v2510
    %v2621 = vunpack.c.l.b16 %v2294
    %v2622 = vpack.c.b16 %v2621, %v2621
    %vm2623 = vsmask.f32 7424
    %v2625 = vshrl.u32 %v2512, 16
    %v2627 = vshll.u32 %v2512, 16
    %v2629 = vrot.slane %v2627, 1
    %v2630 = vor.u32 %v2625, %v2629
    %v2632 = vshll.u32 %v2513, 16
    %v2634 = vrot.slane %v2632, 1
    %v2635 = vsel %vm2623, %v2630, %v2634
    %v2636 = vshrl.u32 %v2513, 16
    %v2638 = vor.u32 %v2636, %v2634
    %v2640 = vshll.u32 %v2514, 16
    %v2642 = vrot.slane %v2640, 1
    %v2643 = vsel %vm2623, %v2638, %v2642
    %v2644 = vshrl.u32 %v2514, 16
    %v2646 = vor.u32 %v2644, %v2642
    %v2648 = vshll.u32 %v2515, 16
    %v2650 = vrot.slane %v2648, 1
    %v2651 = vsel %vm2623, %v2646, %v2650
    %v2652 = vshrl.u32 %v2515, 16
    %v2654 = vor.u32 %v2652, %v2650
    %v2656 = vshll.u32 %v2516, 16
    %v2658 = vrot.slane %v2656, 1
    %v2659 = vsel %vm2623, %v2654, %v2658
    %v2660 = vshrl.u32 %v2516, 16
    %v2662 = vor.u32 %v2660, %v2658
    %v2664 = vshll.u32 %v2517, 16
    %v2666 = vrot.slane %v2664, 1
    %v2667 = vsel %vm2623, %v2662, %v2666
    %v2668 = vshrl.u32 %v2517, 16
    %v2670 = vor.u32 %v2668, %v2666
    %v2672 = vshll.u32 %v2518, 16
    %v2674 = vrot.slane %v2672, 1
    %v2675 = vsel %vm2623, %v2670, %v2674
    %v2676 = vshrl.u32 %v2518, 16
    %v2678 = vor.u32 %v2676, %v2674
    %v2680 = vshll.u32 %v2519, 16
    %v2682 = vrot.slane %v2680, 1
    %v2683 = vsel %vm2623, %v2678, %v2682
    %v2684 = vshrl.u32 %v2519, 16
    %v2686 = vor.u32 %v2684, %v2682
    %v2688 = vshll.u32 %v2520, 16
    %v2690 = vrot.slane %v2688, 1
    %v2691 = vsel %vm2623, %v2686, %v2690
    %v2692 = vshrl.u32 %v2520, 16
    %v2694 = vor.u32 %v2692, %v2690
    %v2696 = vshll.u32 %v2521, 16
    %v2698 = vrot.slane %v2696, 1
    %v2699 = vsel %vm2623, %v2694, %v2698
    %v2700 = vshrl.u32 %v2521, 16
    %v2702 = vor.u32 %v2700, %v2698
    %v2704 = vshll.u32 %v2522, 16
    %v2706 = vrot.slane %v2704, 1
    %v2707 = vsel %vm2623, %v2702, %v2706
    %v2708 = vshrl.u32 %v2522, 16
    %v2710 = vor.u32 %v2708, %v2706
    %v2712 = vshll.u32 %v2523, 16
    %v2714 = vrot.slane %v2712, 1
    %v2715 = vsel %vm2623, %v2710, %v2714
    %v2716 = vshrl.u32 %v2523, 16
    %v2718 = vor.u32 %v2716, %v2714
    %v2720 = vshll.u32 %v2524, 16
    %v2722 = vrot.slane %v2720, 1
    %v2723 = vsel %vm2623, %v2718, %v2722
    %v2724 = vshrl.u32 %v2524, 16
    %v2726 = vor.u32 %v2724, %v2722
    %v2728 = vshll.u32 %v2525, 16
    %v2730 = vrot.slane %v2728, 1
    %v2731 = vsel %vm2623, %v2726, %v2730
    %v2732 = vshrl.u32 %v2525, 16
    %v2734 = vor.u32 %v2732, %v2730
    %v2736 = vshll.u32 %v2526, 16
    %v2738 = vrot.slane %v2736, 1
    %v2739 = vsel %vm2623, %v2734, %v2738
    %v2740 = vshrl.u32 %v2526, 16
    %v2742 = vor.u32 %v2740, %v2738
    %v2744 = vshll.u32 %v2527, 16
    %v2746 = vrot.slane %v2744, 1
    %v2747 = vsel %vm2623, %v2742, %v2746
    %v2748 = vshrl.u32 %v2527, 16
    %v2750 = vor.u32 %v2748, %v2746
    %v2752 = vshll.u32 %v2528, 16
    %v2754 = vrot.slane %v2752, 1
    %v2755 = vsel %vm2623, %v2750, %v2754
    %v2756 = vshrl.u32 %v2528, 16
    %v2758 = vor.u32 %v2756, %v2754
    %v2760 = vshll.u32 %v2529, 16
    %v2762 = vrot.slane %v2760, 1
    %v2763 = vsel %vm2623, %v2758, %v2762
    %v2764 = vshrl.u32 %v2529, 16
    %v2766 = vor.u32 %v2764, %v2762
    %v2768 = vshll.u32 %v2530, 16
    %v2770 = vrot.slane %v2768, 1
    %v2771 = vsel %vm2623, %v2766, %v2770
    %v2772 = vshrl.u32 %v2530, 16
    %v2774 = vor.u32 %v2772, %v2770
    %v2776 = vshll.u32 %v2531, 16
    %v2778 = vrot.slane %v2776, 1
    %v2779 = vsel %vm2623, %v2774, %v2778
    %v2780 = vshrl.u32 %v2531, 16
    %v2782 = vor.u32 %v2780, %v2778
    %v2784 = vshll.u32 %v2532, 16
    %v2786 = vrot.slane %v2784, 1
    %v2787 = vsel %vm2623, %v2782, %v2786
    %v2788 = vshrl.u32 %v2532, 16
    %v2790 = vor.u32 %v2788, %v2786
    %v2792 = vshll.u32 %v2533, 16
    %v2794 = vrot.slane %v2792, 1
    %v2795 = vsel %vm2623, %v2790, %v2794
    %v2796 = vshrl.u32 %v2533, 16
    %v2798 = vor.u32 %v2796, %v2794
    %v2800 = vshll.u32 %v2534, 16
    %v2802 = vrot.slane %v2800, 1
    %v2803 = vsel %vm2623, %v2798, %v2802
    %v2804 = vshrl.u32 %v2534, 16
    %v2806 = vor.u32 %v2804, %v2802
    %v2808 = vshll.u32 %v2535, 16
    %v2810 = vrot.slane %v2808, 1
    %v2811 = vsel %vm2623, %v2806, %v2810
    %v2812 = vshrl.u32 %v2535, 16
    %v2814 = vor.u32 %v2812, %v2810
    %v2816 = vshll.u32 %v2536, 16
    %v2818 = vrot.slane %v2816, 1
    %v2819 = vsel %vm2623, %v2814, %v2818
    %v2820 = vshrl.u32 %v2536, 16
    %v2822 = vor.u32 %v2820, %v2818
    %v2824 = vshll.u32 %v2537, 16
    %v2826 = vrot.slane %v2824, 1
    %v2827 = vsel %vm2623, %v2822, %v2826
    %v2828 = vshrl.u32 %v2537, 16
    %v2830 = vor.u32 %v2828, %v2826
    %v2832 = vshll.u32 %v2538, 16
    %v2834 = vrot.slane %v2832, 1
    %v2835 = vsel %vm2623, %v2830, %v2834
    %v2836 = vshrl.u32 %v2538, 16
    %v2838 = vor.u32 %v2836, %v2834
    %v2840 = vshll.u32 %v2539, 16
    %v2842 = vrot.slane %v2840, 1
    %v2843 = vsel %vm2623, %v2838, %v2842
    %v2844 = vshrl.u32 %v2539, 16
    %v2846 = vor.u32 %v2844, %v2842
    %v2848 = vshll.u32 %v2540, 16
    %v2850 = vrot.slane %v2848, 1
    %v2851 = vsel %vm2623, %v2846, %v2850
    %v2852 = vshrl.u32 %v2540, 16
    %v2854 = vor.u32 %v2852, %v2850
    %v2856 = vshll.u32 %v2541, 16
    %v2858 = vrot.slane %v2856, 1
    %v2859 = vsel %vm2623, %v2854, %v2858
    %v2860 = vshrl.u32 %v2541, 16
    %v2862 = vor.u32 %v2860, %v2858
    %v2864 = vshll.u32 %v2542, 16
    %v2866 = vrot.slane %v2864, 1
    %v2867 = vsel %vm2623, %v2862, %v2866
    %v2868 = vshrl.u32 %v2542, 16
    %v2870 = vor.u32 %v2868, %v2866
    %v2872 = vshll.u32 %v2543, 16
    %v2874 = vrot.slane %v2872, 1
    %v2875 = vsel %vm2623, %v2870, %v2874
    %v2876 = vshrl.u32 %v2543, 16
    %v2878 = vor.u32 %v2876, %v2874
    %v2880 = vshll.u32 %v2544, 16
    %v2882 = vrot.slane %v2880, 1
    %v2883 = vsel %vm2623, %v2878, %v2882
    %v2884 = vshrl.u32 %v2544, 16
    %v2886 = vor.u32 %v2884, %v2882
    %v2888 = vshll.u32 %v2545, 16
    %v2890 = vrot.slane %v2888, 1
    %v2891 = vsel %vm2623, %v2886, %v2890
    %v2892 = vshrl.u32 %v2545, 16
    %v2894 = vor.u32 %v2892, %v2890
    %v2896 = vshll.u32 %v2546, 16
    %v2898 = vrot.slane %v2896, 1
    %v2899 = vsel %vm2623, %v2894, %v2898
    %v2900 = vshrl.u32 %v2546, 16
    %v2902 = vor.u32 %v2900, %v2898
    %v2904 = vshll.u32 %v2547, 16
    %v2906 = vrot.slane %v2904, 1
    %v2907 = vsel %vm2623, %v2902, %v2906
    %v2908 = vshrl.u32 %v2547, 16
    %v2910 = vor.u32 %v2908, %v2906
    %v2912 = vshll.u32 %v2548, 16
    %v2914 = vrot.slane %v2912, 1
    %v2915 = vsel %vm2623, %v2910, %v2914
    %v2916 = vshrl.u32 %v2548, 16
    %v2918 = vor.u32 %v2916, %v2914
    %v2920 = vshll.u32 %v2549, 16
    %v2922 = vrot.slane %v2920, 1
    %v2923 = vsel %vm2623, %v2918, %v2922
    %v2924 = vshrl.u32 %v2549, 16
    %v2926 = vor.u32 %v2924, %v2922
    %v2928 = vshll.u32 %v2550, 16
    %v2930 = vrot.slane %v2928, 1
    %v2931 = vsel %vm2623, %v2926, %v2930
    %v2932 = vshrl.u32 %v2550, 16
    %v2934 = vor.u32 %v2932, %v2930
    %v2936 = vshll.u32 %v2551, 16
    %v2938 = vrot.slane %v2936, 1
    %v2939 = vsel %vm2623, %v2934, %v2938
    %v2940 = vshrl.u32 %v2551, 16
    %v2942 = vor.u32 %v2940, %v2938
    %v2944 = vshll.u32 %v2552, 16
    %v2946 = vrot.slane %v2944, 1
    %v2947 = vsel %vm2623, %v2942, %v2946
    %v2948 = vshrl.u32 %v2552, 16
    %v2950 = vor.u32 %v2948, %v2946
    %v2952 = vshll.u32 %v2553, 16
    %v2954 = vrot.slane %v2952, 1
    %v2955 = vsel %vm2623, %v2950, %v2954
    %v2956 = vshrl.u32 %v2553, 16
    %v2958 = vor.u32 %v2956, %v2954
    %v2960 = vshll.u32 %v2554, 16
    %v2962 = vrot.slane %v2960, 1
    %v2963 = vsel %vm2623, %v2958, %v2962
    %v2964 = vshrl.u32 %v2554, 16
    %v2966 = vor.u32 %v2964, %v2962
    %v2968 = vshll.u32 %v2555, 16
    %v2970 = vrot.slane %v2968, 1
    %v2971 = vsel %vm2623, %v2966, %v2970
    %v2972 = vshrl.u32 %v2555, 16
    %v2974 = vor.u32 %v2972, %v2970
    %v2976 = vshll.u32 %v2556, 16
    %v2978 = vrot.slane %v2976, 1
    %v2979 = vsel %vm2623, %v2974, %v2978
    %v2980 = vshrl.u32 %v2556, 16
    %v2982 = vor.u32 %v2980, %v2978
    %v2984 = vshll.u32 %v2557, 16
    %v2986 = vrot.slane %v2984, 1
    %v2987 = vsel %vm2623, %v2982, %v2986
    %v2988 = vshrl.u32 %v2557, 16
    %v2990 = vor.u32 %v2988, %v2986
    %v2992 = vshll.u32 %v2558, 16
    %v2994 = vrot.slane %v2992, 1
    %v2995 = vsel %vm2623, %v2990, %v2994
    %v2996 = vshrl.u32 %v2558, 16
    %v2998 = vor.u32 %v2996, %v2994
    %v3000 = vshll.u32 %v2559, 16
    %v3002 = vrot.slane %v3000, 1
    %v3003 = vsel %vm2623, %v2998, %v3002
    %v3004 = vshrl.u32 %v2559, 16
    %v3006 = vor.u32 %v3004, %v3002
    %v3008 = vshll.u32 %v2560, 16
    %v3010 = vrot.slane %v3008, 1
    %v3011 = vsel %vm2623, %v3006, %v3010
    %v3012 = vshrl.u32 %v2560, 16
    %v3014 = vor.u32 %v3012, %v3010
    %v3016 = vshll.u32 %v2561, 16
    %v3018 = vrot.slane %v3016, 1
    %v3019 = vsel %vm2623, %v3014, %v3018
    %v3020 = vshrl.u32 %v2561, 16
    %v3022 = vor.u32 %v3020, %v3018
    %v3024 = vshll.u32 %v2562, 16
    %v3026 = vrot.slane %v3024, 1
    %v3027 = vsel %vm2623, %v3022, %v3026
    %v3028 = vshrl.u32 %v2562, 16
    %v3030 = vor.u32 %v3028, %v3026
    %v3032 = vshll.u32 %v2563, 16
    %v3034 = vrot.slane %v3032, 1
    %v3035 = vsel %vm2623, %v3030, %v3034
    %v3036 = vshrl.u32 %v2563, 16
    %v3038 = vor.u32 %v3036, %v3034
    %v3040 = vshll.u32 %v2564, 16
    %v3042 = vrot.slane %v3040, 1
    %v3043 = vsel %vm2623, %v3038, %v3042
    %v3044 = vshrl.u32 %v2564, 16
    %v3046 = vor.u32 %v3044, %v3042
    %v3048 = vshll.u32 %v2565, 16
    %v3050 = vrot.slane %v3048, 1
    %v3051 = vsel %vm2623, %v3046, %v3050
    %v3052 = vshrl.u32 %v2565, 16
    %v3054 = vor.u32 %v3052, %v3050
    %v3056 = vshll.u32 %v2622, 16
    %v3058 = vrot.slane %v3056, 1
    %v3059 = vsel %vm2623, %v3054, %v3058
    %v3115 = vunpack.c.l.b16 %v2295
    %v3116 = vpack.c.b16 %v2405, %v3115
    %vm3117 = vcmask 1046528
    %v3118 = vrot.slane %v3116, 1
    %v3119 = vrot.slane %v2513, 1
    %v3120 = vsel %vm3117, %v3118, %v3119
    %v3121 = vrot.slane %v2514, 1
    %v3122 = vsel %vm3117, %v3119, %v3121
    %v3123 = vrot.slane %v2515, 1
    %v3124 = vsel %vm3117, %v3121, %v3123
    %v3125 = vrot.slane %v2516, 1
    %v3126 = vsel %vm3117, %v3123, %v3125
    %v3127 = vrot.slane %v2517, 1
    %v3128 = vsel %vm3117, %v3125, %v3127
    %v3129 = vrot.slane %v2518, 1
    %v3130 = vsel %vm3117, %v3127, %v3129
    %v3131 = vrot.slane %v2519, 1
    %v3132 = vsel %vm3117, %v3129, %v3131
    %v3133 = vrot.slane %v2520, 1
    %v3134 = vsel %vm3117, %v3131, %v3133
    %v3135 = vrot.slane %v2521, 1
    %v3136 = vsel %vm3117, %v3133, %v3135
    %v3137 = vrot.slane %v2522, 1
    %v3138 = vsel %vm3117, %v3135, %v3137
    %v3139 = vrot.slane %v2523, 1
    %v3140 = vsel %vm3117, %v3137, %v3139
    %v3141 = vrot.slane %v2524, 1
    %v3142 = vsel %vm3117, %v3139, %v3141
    %v3143 = vrot.slane %v2525, 1
    %v3144 = vsel %vm3117, %v3141, %v3143
    %v3145 = vrot.slane %v2526, 1
    %v3146 = vsel %vm3117, %v3143, %v3145
    %v3147 = vrot.slane %v2527, 1
    %v3148 = vsel %vm3117, %v3145, %v3147
    %v3149 = vrot.slane %v2528, 1
    %v3150 = vsel %vm3117, %v3147, %v3149
    %v3151 = vrot.slane %v2529, 1
    %v3152 = vsel %vm3117, %v3149, %v3151
    %v3153 = vrot.slane %v2530, 1
    %v3154 = vsel %vm3117, %v3151, %v3153
    %v3155 = vrot.slane %v2531, 1
    %v3156 = vsel %vm3117, %v3153, %v3155
    %v3157 = vrot.slane %v2532, 1
    %v3158 = vsel %vm3117, %v3155, %v3157
    %v3159 = vrot.slane %v2533, 1
    %v3160 = vsel %vm3117, %v3157, %v3159
    %v3161 = vrot.slane %v2534, 1
    %v3162 = vsel %vm3117, %v3159, %v3161
    %v3163 = vrot.slane %v2535, 1
    %v3164 = vsel %vm3117, %v3161, %v3163
    %v3165 = vrot.slane %v2536, 1
    %v3166 = vsel %vm3117, %v3163, %v3165
    %v3167 = vrot.slane %v2537, 1
    %v3168 = vsel %vm3117, %v3165, %v3167
    %v3169 = vrot.slane %v2538, 1
    %v3170 = vsel %vm3117, %v3167, %v3169
    %v3171 = vrot.slane %v2539, 1
    %v3172 = vsel %vm3117, %v3169, %v3171
    %v3173 = vrot.slane %v2540, 1
    %v3174 = vsel %vm3117, %v3171, %v3173
    %v3175 = vrot.slane %v2541, 1
    %v3176 = vsel %vm3117, %v3173, %v3175
    %v3177 = vrot.slane %v2542, 1
    %v3178 = vsel %vm3117, %v3175, %v3177
    %v3179 = vrot.slane %v2543, 1
    %v3180 = vsel %vm3117, %v3177, %v3179
    %v3181 = vrot.slane %v2544, 1
    %v3182 = vsel %vm3117, %v3179, %v3181
    %v3183 = vrot.slane %v2545, 1
    %v3184 = vsel %vm3117, %v3181, %v3183
    %v3185 = vrot.slane %v2546, 1
    %v3186 = vsel %vm3117, %v3183, %v3185
    %v3187 = vrot.slane %v2547, 1
    %v3188 = vsel %vm3117, %v3185, %v3187
    %v3189 = vrot.slane %v2548, 1
    %v3190 = vsel %vm3117, %v3187, %v3189
    %v3191 = vrot.slane %v2549, 1
    %v3192 = vsel %vm3117, %v3189, %v3191
    %v3193 = vrot.slane %v2550, 1
    %v3194 = vsel %vm3117, %v3191, %v3193
    %v3195 = vrot.slane %v2551, 1
    %v3196 = vsel %vm3117, %v3193, %v3195
    %v3197 = vrot.slane %v2552, 1
    %v3198 = vsel %vm3117, %v3195, %v3197
    %v3199 = vrot.slane %v2553, 1
    %v3200 = vsel %vm3117, %v3197, %v3199
    %v3201 = vrot.slane %v2554, 1
    %v3202 = vsel %vm3117, %v3199, %v3201
    %v3203 = vrot.slane %v2555, 1
    %v3204 = vsel %vm3117, %v3201, %v3203
    %v3205 = vrot.slane %v2556, 1
    %v3206 = vsel %vm3117, %v3203, %v3205
    %v3207 = vrot.slane %v2557, 1
    %v3208 = vsel %vm3117, %v3205, %v3207
    %v3209 = vrot.slane %v2558, 1
    %v3210 = vsel %vm3117, %v3207, %v3209
    %v3211 = vrot.slane %v2559, 1
    %v3212 = vsel %vm3117, %v3209, %v3211
    %v3213 = vrot.slane %v2560, 1
    %v3214 = vsel %vm3117, %v3211, %v3213
    %v3215 = vrot.slane %v2561, 1
    %v3216 = vsel %vm3117, %v3213, %v3215
    %v3217 = vrot.slane %v2562, 1
    %v3218 = vsel %vm3117, %v3215, %v3217
    %v3219 = vrot.slane %v2563, 1
    %v3220 = vsel %vm3117, %v3217, %v3219
    %v3221 = vrot.slane %v2564, 1
    %v3222 = vsel %vm3117, %v3219, %v3221
    %v3223 = vrot.slane %v2565, 1
    %v3224 = vsel %vm3117, %v3221, %v3223
    %v3225 = vrot.slane %v2622, 1
    %v3226 = vsel %vm3117, %v3223, %v3225
    %v3281 = vld [vmem:[%s5] sm:$0xf]
    %v3282 = vld [vmem:[%s5 + $0x4] sm:$0xf]
    %v3283 = vld [vmem:[%s5 + $0x8] sm:$0xf]
    %v3284 = vld [vmem:[%s5 + $0xc] sm:$0xf]
    %v3285 = vld [vmem:[%s5 + $0x10] sm:$0xf]
    %v3286 = vld [vmem:[%s5 + $0x14] sm:$0xf]
    %v3287 = vld [vmem:[%s5 + $0x18] sm:$0xf]
    %v3288 = vld [vmem:[%s5 + $0x1c] sm:$0xf]
    %v3289 = vld [vmem:[%s5 + $0x20] sm:$0xf]
    %v3290 = vld [vmem:[%s5 + $0x24] sm:$0xf]
    %v3291 = vld [vmem:[%s5 + $0x28] sm:$0xf]
    %v3292 = vld [vmem:[%s5 + $0x2c] sm:$0xf]
    %v3293 = vld [vmem:[%s5 + $0x30] sm:$0xf]
    %v3294 = vld [vmem:[%s5 + $0x34] sm:$0xf]
    %v3295 = vld [vmem:[%s5 + $0x38] sm:$0xf]
    %v3296 = vld [vmem:[%s5 + $0x3c] sm:$0xf]
    %v3297 = vld [vmem:[%s5 + $0x40] sm:$0xf]
    %v3298 = vld [vmem:[%s5 + $0x44] sm:$0xf]
    %v3299 = vld [vmem:[%s5 + $0x48] sm:$0xf]
    %v3300 = vld [vmem:[%s5 + $0x4c] sm:$0xf]
    %v3301 = vld [vmem:[%s5 + $0x50] sm:$0xf]
    %v3302 = vld [vmem:[%s5 + $0x54] sm:$0xf]
    %v3303 = vld [vmem:[%s5 + $0x58] sm:$0xf]
    %v3304 = vld [vmem:[%s5 + $0x5c] sm:$0xf]
    %v3305 = vld [vmem:[%s5 + $0x60] sm:$0xf]
    %v3306 = vld [vmem:[%s5 + $0x64] sm:$0xf]
    %v3307 = vld [vmem:[%s5 + $0x68] sm:$0xf]
    %v3308 = vld [vmem:[%s5 + $0x6c] sm:$0xf]
    %v3309 = vld [vmem:[%s5 + $0x70] sm:$0xf]
    %v3310 = vld [vmem:[%s5 + $0x74] sm:$0xf]
    %v3311 = vld [vmem:[%s5 + $0x78] sm:$0xf]
    %v3312 = vld [vmem:[%s5 + $0x7c] sm:$0xf]
    %v3313 = vld [vmem:[%s5 + $0x80] sm:$0xf]
    %v3314 = vld [vmem:[%s5 + $0x84] sm:$0xf]
    %v3315 = vld [vmem:[%s5 + $0x88] sm:$0xf]
    %v3316 = vld [vmem:[%s5 + $0x8c] sm:$0xf]
    %v3317 = vld [vmem:[%s5 + $0x90] sm:$0xf]
    %v3318 = vld [vmem:[%s5 + $0x94] sm:$0xf]
    %v3319 = vld [vmem:[%s5 + $0x98] sm:$0xf]
    %v3320 = vld [vmem:[%s5 + $0x9c] sm:$0xf]
    %v3321 = vld [vmem:[%s5 + $0xa0] sm:$0xf]
    %v3322 = vld [vmem:[%s5 + $0xa4] sm:$0xf]
    %v3323 = vld [vmem:[%s5 + $0xa8] sm:$0xf]
    %v3324 = vld [vmem:[%s5 + $0xac] sm:$0xf]
    %v3325 = vld [vmem:[%s5 + $0xb0] sm:$0xf]
    %v3326 = vld [vmem:[%s5 + $0xb4] sm:$0xf]
    %v3327 = vld [vmem:[%s5 + $0xb8] sm:$0xf]
    %v3328 = vld [vmem:[%s5 + $0xbc] sm:$0xf]
    %v3329 = vld [vmem:[#allocation2 + $0x1b0] sm:$0xf]
    %v3330 = vld [vmem:[#allocation2 + $0x1b4] sm:$0xf]
    %v3331 = vld [vmem:[#allocation2 + $0x1b8] sm:$0xf]
    %v3332 = vld [vmem:[#allocation2 + $0x1bc] sm:$0x1]
    %v3333 = vld [vmem:[#allocation2 + $0xc] sm:$0xe]
    %v3337 = vunpack.c.l.b16 %v3329
    %v3338 = vunpack.c.l.b16 %v3330
    %v3339 = vunpack.c.l.b16 %v3331
    %v3340 = vpack.c.b16 %v2408, %v2407
    %v3341 = vpack.c.b16 %v2410, %v2409
    %v3342 = vpack.c.b16 %v2412, %v2411
    %v3343 = vpack.c.b16 %v2414, %v2413
    %v3344 = vpack.c.b16 %v2416, %v2415
    %v3345 = vpack.c.b16 %v2418, %v2417
    %v3346 = vpack.c.b16 %v2420, %v2419
    %v3347 = vpack.c.b16 %v2422, %v2421
    %v3348 = vpack.c.b16 %v2424, %v2423
    %v3349 = vpack.c.b16 %v2426, %v2425
    %v3350 = vpack.c.b16 %v2428, %v2427
    %v3351 = vpack.c.b16 %v2430, %v2429
    %v3352 = vpack.c.b16 %v2432, %v2431
    %v3353 = vpack.c.b16 %v2434, %v2433
    %v3354 = vpack.c.b16 %v2436, %v2435
    %v3355 = vpack.c.b16 %v2438, %v2437
    %v3356 = vpack.c.b16 %v2440, %v2439
    %v3357 = vpack.c.b16 %v2442, %v2441
    %v3358 = vpack.c.b16 %v2444, %v2443
    %v3359 = vpack.c.b16 %v2446, %v2445
    %v3360 = vpack.c.b16 %v2448, %v2447
    %v3361 = vpack.c.b16 %v2450, %v2449
    %v3362 = vpack.c.b16 %v2452, %v2451
    %v3363 = vpack.c.b16 %v2454, %v2453
    %v3364 = vpack.c.b16 %v2456, %v2455
    %v3365 = vpack.c.b16 %v2458, %v2457
    %v3366 = vpack.c.b16 %v2460, %v2459
    %v3367 = vpack.c.b16 %v2462, %v2461
    %v3368 = vpack.c.b16 %v2464, %v2463
    %v3369 = vpack.c.b16 %v2466, %v2465
    %v3370 = vpack.c.b16 %v2468, %v2467
    %v3371 = vpack.c.b16 %v2470, %v2469
    %v3372 = vpack.c.b16 %v2472, %v2471
    %v3373 = vpack.c.b16 %v2474, %v2473
    %v3374 = vpack.c.b16 %v2476, %v2475
    %v3375 = vpack.c.b16 %v2478, %v2477
    %v3376 = vpack.c.b16 %v2480, %v2479
    %v3377 = vpack.c.b16 %v2482, %v2481
    %v3378 = vpack.c.b16 %v2484, %v2483
    %v3379 = vpack.c.b16 %v2486, %v2485
    %v3380 = vpack.c.b16 %v2488, %v2487
    %v3381 = vpack.c.b16 %v2490, %v2489
    %v3382 = vpack.c.b16 %v2492, %v2491
    %v3383 = vpack.c.b16 %v2494, %v2493
    %v3384 = vpack.c.b16 %v2496, %v2495
    %v3385 = vpack.c.b16 %v2498, %v2497
    %v3386 = vpack.c.b16 %v2500, %v2499
    %v3387 = vpack.c.b16 %v2502, %v2501
    %v3388 = vpack.c.b16 %v2504, %v2503
    %v3389 = vpack.c.b16 %v2506, %v2505
    %v3390 = vpack.c.b16 %v2508, %v2507
    %v3391 = vpack.c.b16 %v2510, %v2509
    %v3392 = vpack.c.b16 %v3337, %v2511
    %v3393 = vpack.c.b16 %v3339, %v3338
    %v3449 = vunpack.c.l.b16 %v3332
    %v3450 = vpack.c.b16 %v3449, %v3449
    %v3452 = vshrl.u32 %v3340, 16
    %v3454 = vshll.u32 %v3340, 16
    %v3456 = vrot.slane %v3454, 1
    %v3457 = vor.u32 %v3452, %v3456
    %v3459 = vshll.u32 %v3341, 16
    %v3461 = vrot.slane %v3459, 1
    %v3462 = vsel %vm2623, %v3457, %v3461
    %v3463 = vshrl.u32 %v3341, 16
    %v3465 = vor.u32 %v3463, %v3461
    %v3467 = vshll.u32 %v3342, 16
    %v3469 = vrot.slane %v3467, 1
    %v3470 = vsel %vm2623, %v3465, %v3469
    %v3471 = vshrl.u32 %v3342, 16
    %v3473 = vor.u32 %v3471, %v3469
    %v3475 = vshll.u32 %v3343, 16
    %v3477 = vrot.slane %v3475, 1
    %v3478 = vsel %vm2623, %v3473, %v3477
    %v3479 = vshrl.u32 %v3343, 16
    %v3481 = vor.u32 %v3479, %v3477
    %v3483 = vshll.u32 %v3344, 16
    %v3485 = vrot.slane %v3483, 1
    %v3486 = vsel %vm2623, %v3481, %v3485
    %v3487 = vshrl.u32 %v3344, 16
    %v3489 = vor.u32 %v3487, %v3485
    %v3491 = vshll.u32 %v3345, 16
    %v3493 = vrot.slane %v3491, 1
    %v3494 = vsel %vm2623, %v3489, %v3493
    %v3495 = vshrl.u32 %v3345, 16
    %v3497 = vor.u32 %v3495, %v3493
    %v3499 = vshll.u32 %v3346, 16
    %v3501 = vrot.slane %v3499, 1
    %v3502 = vsel %vm2623, %v3497, %v3501
    %v3503 = vshrl.u32 %v3346, 16
    %v3505 = vor.u32 %v3503, %v3501
    %v3507 = vshll.u32 %v3347, 16
    %v3509 = vrot.slane %v3507, 1
    %v3510 = vsel %vm2623, %v3505, %v3509
    %v3511 = vshrl.u32 %v3347, 16
    %v3513 = vor.u32 %v3511, %v3509
    %v3515 = vshll.u32 %v3348, 16
    %v3517 = vrot.slane %v3515, 1
    %v3518 = vsel %vm2623, %v3513, %v3517
    %v3519 = vshrl.u32 %v3348, 16
    %v3521 = vor.u32 %v3519, %v3517
    %v3523 = vshll.u32 %v3349, 16
    %v3525 = vrot.slane %v3523, 1
    %v3526 = vsel %vm2623, %v3521, %v3525
    %v3527 = vshrl.u32 %v3349, 16
    %v3529 = vor.u32 %v3527, %v3525
    %v3531 = vshll.u32 %v3350, 16
    %v3533 = vrot.slane %v3531, 1
    %v3534 = vsel %vm2623, %v3529, %v3533
    %v3535 = vshrl.u32 %v3350, 16
    %v3537 = vor.u32 %v3535, %v3533
    %v3539 = vshll.u32 %v3351, 16
    %v3541 = vrot.slane %v3539, 1
    %v3542 = vsel %vm2623, %v3537, %v3541
    %v3543 = vshrl.u32 %v3351, 16
    %v3545 = vor.u32 %v3543, %v3541
    %v3547 = vshll.u32 %v3352, 16
    %v3549 = vrot.slane %v3547, 1
    %v3550 = vsel %vm2623, %v3545, %v3549
    %v3551 = vshrl.u32 %v3352, 16
    %v3553 = vor.u32 %v3551, %v3549
    %v3555 = vshll.u32 %v3353, 16
    %v3557 = vrot.slane %v3555, 1
    %v3558 = vsel %vm2623, %v3553, %v3557
    %v3559 = vshrl.u32 %v3353, 16
    %v3561 = vor.u32 %v3559, %v3557
    %v3563 = vshll.u32 %v3354, 16
    %v3565 = vrot.slane %v3563, 1
    %v3566 = vsel %vm2623, %v3561, %v3565
    %v3567 = vshrl.u32 %v3354, 16
    %v3569 = vor.u32 %v3567, %v3565
    %v3571 = vshll.u32 %v3355, 16
    %v3573 = vrot.slane %v3571, 1
    %v3574 = vsel %vm2623, %v3569, %v3573
    %v3575 = vshrl.u32 %v3355, 16
    %v3577 = vor.u32 %v3575, %v3573
    %v3579 = vshll.u32 %v3356, 16
    %v3581 = vrot.slane %v3579, 1
    %v3582 = vsel %vm2623, %v3577, %v3581
    %v3583 = vshrl.u32 %v3356, 16
    %v3585 = vor.u32 %v3583, %v3581
    %v3587 = vshll.u32 %v3357, 16
    %v3589 = vrot.slane %v3587, 1
    %v3590 = vsel %vm2623, %v3585, %v3589
    %v3591 = vshrl.u32 %v3357, 16
    %v3593 = vor.u32 %v3591, %v3589
    %v3595 = vshll.u32 %v3358, 16
    %v3597 = vrot.slane %v3595, 1
    %v3598 = vsel %vm2623, %v3593, %v3597
    %v3599 = vshrl.u32 %v3358, 16
    %v3601 = vor.u32 %v3599, %v3597
    %v3603 = vshll.u32 %v3359, 16
    %v3605 = vrot.slane %v3603, 1
    %v3606 = vsel %vm2623, %v3601, %v3605
    %v3607 = vshrl.u32 %v3359, 16
    %v3609 = vor.u32 %v3607, %v3605
    %v3611 = vshll.u32 %v3360, 16
    %v3613 = vrot.slane %v3611, 1
    %v3614 = vsel %vm2623, %v3609, %v3613
    %v3615 = vshrl.u32 %v3360, 16
    %v3617 = vor.u32 %v3615, %v3613
    %v3619 = vshll.u32 %v3361, 16
    %v3621 = vrot.slane %v3619, 1
    %v3622 = vsel %vm2623, %v3617, %v3621
    %v3623 = vshrl.u32 %v3361, 16
    %v3625 = vor.u32 %v3623, %v3621
    %v3627 = vshll.u32 %v3362, 16
    %v3629 = vrot.slane %v3627, 1
    %v3630 = vsel %vm2623, %v3625, %v3629
    %v3631 = vshrl.u32 %v3362, 16
    %v3633 = vor.u32 %v3631, %v3629
    %v3635 = vshll.u32 %v3363, 16
    %v3637 = vrot.slane %v3635, 1
    %v3638 = vsel %vm2623, %v3633, %v3637
    %v3639 = vshrl.u32 %v3363, 16
    %v3641 = vor.u32 %v3639, %v3637
    %v3643 = vshll.u32 %v3364, 16
    %v3645 = vrot.slane %v3643, 1
    %v3646 = vsel %vm2623, %v3641, %v3645
    %v3647 = vshrl.u32 %v3364, 16
    %v3649 = vor.u32 %v3647, %v3645
    %v3651 = vshll.u32 %v3365, 16
    %v3653 = vrot.slane %v3651, 1
    %v3654 = vsel %vm2623, %v3649, %v3653
    %v3655 = vshrl.u32 %v3365, 16
    %v3657 = vor.u32 %v3655, %v3653
    %v3659 = vshll.u32 %v3366, 16
    %v3661 = vrot.slane %v3659, 1
    %v3662 = vsel %vm2623, %v3657, %v3661
    %v3663 = vshrl.u32 %v3366, 16
    %v3665 = vor.u32 %v3663, %v3661
    %v3667 = vshll.u32 %v3367, 16
    %v3669 = vrot.slane %v3667, 1
    %v3670 = vsel %vm2623, %v3665, %v3669
    %v3671 = vshrl.u32 %v3367, 16
    %v3673 = vor.u32 %v3671, %v3669
    %v3675 = vshll.u32 %v3368, 16
    %v3677 = vrot.slane %v3675, 1
    %v3678 = vsel %vm2623, %v3673, %v3677
    %v3679 = vshrl.u32 %v3368, 16
    %v3681 = vor.u32 %v3679, %v3677
    %v3683 = vshll.u32 %v3369, 16
    %v3685 = vrot.slane %v3683, 1
    %v3686 = vsel %vm2623, %v3681, %v3685
    %v3687 = vshrl.u32 %v3369, 16
    %v3689 = vor.u32 %v3687, %v3685
    %v3691 = vshll.u32 %v3370, 16
    %v3693 = vrot.slane %v3691, 1
    %v3694 = vsel %vm2623, %v3689, %v3693
    %v3695 = vshrl.u32 %v3370, 16
    %v3697 = vor.u32 %v3695, %v3693
    %v3699 = vshll.u32 %v3371, 16
    %v3701 = vrot.slane %v3699, 1
    %v3702 = vsel %vm2623, %v3697, %v3701
    %v3703 = vshrl.u32 %v3371, 16
    %v3705 = vor.u32 %v3703, %v3701
    %v3707 = vshll.u32 %v3372, 16
    %v3709 = vrot.slane %v3707, 1
    %v3710 = vsel %vm2623, %v3705, %v3709
    %v3711 = vshrl.u32 %v3372, 16
    %v3713 = vor.u32 %v3711, %v3709
    %v3715 = vshll.u32 %v3373, 16
    %v3717 = vrot.slane %v3715, 1
    %v3718 = vsel %vm2623, %v3713, %v3717
    %v3719 = vshrl.u32 %v3373, 16
    %v3721 = vor.u32 %v3719, %v3717
    %v3723 = vshll.u32 %v3374, 16
    %v3725 = vrot.slane %v3723, 1
    %v3726 = vsel %vm2623, %v3721, %v3725
    %v3727 = vshrl.u32 %v3374, 16
    %v3729 = vor.u32 %v3727, %v3725
    %v3731 = vshll.u32 %v3375, 16
    %v3733 = vrot.slane %v3731, 1
    %v3734 = vsel %vm2623, %v3729, %v3733
    %v3735 = vshrl.u32 %v3375, 16
    %v3737 = vor.u32 %v3735, %v3733
    %v3739 = vshll.u32 %v3376, 16
    %v3741 = vrot.slane %v3739, 1
    %v3742 = vsel %vm2623, %v3737, %v3741
    %v3743 = vshrl.u32 %v3376, 16
    %v3745 = vor.u32 %v3743, %v3741
    %v3747 = vshll.u32 %v3377, 16
    %v3749 = vrot.slane %v3747, 1
    %v3750 = vsel %vm2623, %v3745, %v3749
    %v3751 = vshrl.u32 %v3377, 16
    %v3753 = vor.u32 %v3751, %v3749
    %v3755 = vshll.u32 %v3378, 16
    %v3757 = vrot.slane %v3755, 1
    %v3758 = vsel %vm2623, %v3753, %v3757
    %v3759 = vshrl.u32 %v3378, 16
    %v3761 = vor.u32 %v3759, %v3757
    %v3763 = vshll.u32 %v3379, 16
    %v3765 = vrot.slane %v3763, 1
    %v3766 = vsel %vm2623, %v3761, %v3765
    %v3767 = vshrl.u32 %v3379, 16
    %v3769 = vor.u32 %v3767, %v3765
    %v3771 = vshll.u32 %v3380, 16
    %v3773 = vrot.slane %v3771, 1
    %v3774 = vsel %vm2623, %v3769, %v3773
    %v3775 = vshrl.u32 %v3380, 16
    %v3777 = vor.u32 %v3775, %v3773
    %v3779 = vshll.u32 %v3381, 16
    %v3781 = vrot.slane %v3779, 1
    %v3782 = vsel %vm2623, %v3777, %v3781
    %v3783 = vshrl.u32 %v3381, 16
    %v3785 = vor.u32 %v3783, %v3781
    %v3787 = vshll.u32 %v3382, 16
    %v3789 = vrot.slane %v3787, 1
    %v3790 = vsel %vm2623, %v3785, %v3789
    %v3791 = vshrl.u32 %v3382, 16
    %v3793 = vor.u32 %v3791, %v3789
    %v3795 = vshll.u32 %v3383, 16
    %v3797 = vrot.slane %v3795, 1
    %v3798 = vsel %vm2623, %v3793, %v3797
    %v3799 = vshrl.u32 %v3383, 16
    %v3801 = vor.u32 %v3799, %v3797
    %v3803 = vshll.u32 %v3384, 16
    %v3805 = vrot.slane %v3803, 1
    %v3806 = vsel %vm2623, %v3801, %v3805
    %v3807 = vshrl.u32 %v3384, 16
    %v3809 = vor.u32 %v3807, %v3805
    %v3811 = vshll.u32 %v3385, 16
    %v3813 = vrot.slane %v3811, 1
    %v3814 = vsel %vm2623, %v3809, %v3813
    %v3815 = vshrl.u32 %v3385, 16
    %v3817 = vor.u32 %v3815, %v3813
    %v3819 = vshll.u32 %v3386, 16
    %v3821 = vrot.slane %v3819, 1
    %v3822 = vsel %vm2623, %v3817, %v3821
    %v3823 = vshrl.u32 %v3386, 16
    %v3825 = vor.u32 %v3823, %v3821
    %v3827 = vshll.u32 %v3387, 16
    %v3829 = vrot.slane %v3827, 1
    %v3830 = vsel %vm2623, %v3825, %v3829
    %v3831 = vshrl.u32 %v3387, 16
    %v3833 = vor.u32 %v3831, %v3829
    %v3835 = vshll.u32 %v3388, 16
    %v3837 = vrot.slane %v3835, 1
    %v3838 = vsel %vm2623, %v3833, %v3837
    %v3839 = vshrl.u32 %v3388, 16
    %v3841 = vor.u32 %v3839, %v3837
    %v3843 = vshll.u32 %v3389, 16
    %v3845 = vrot.slane %v3843, 1
    %v3846 = vsel %vm2623, %v3841, %v3845
    %v3847 = vshrl.u32 %v3389, 16
    %v3849 = vor.u32 %v3847, %v3845
    %v3851 = vshll.u32 %v3390, 16
    %v3853 = vrot.slane %v3851, 1
    %v3854 = vsel %vm2623, %v3849, %v3853
    %v3855 = vshrl.u32 %v3390, 16
    %v3857 = vor.u32 %v3855, %v3853
    %v3859 = vshll.u32 %v3391, 16
    %v3861 = vrot.slane %v3859, 1
    %v3862 = vsel %vm2623, %v3857, %v3861
    %v3863 = vshrl.u32 %v3391, 16
    %v3865 = vor.u32 %v3863, %v3861
    %v3867 = vshll.u32 %v3392, 16
    %v3869 = vrot.slane %v3867, 1
    %v3870 = vsel %vm2623, %v3865, %v3869
    %v3871 = vshrl.u32 %v3392, 16
    %v3873 = vor.u32 %v3871, %v3869
    %v3875 = vshll.u32 %v3393, 16
    %v3877 = vrot.slane %v3875, 1
    %v3878 = vsel %vm2623, %v3873, %v3877
    %v3879 = vshrl.u32 %v3393, 16
    %v3881 = vor.u32 %v3879, %v3877
    %v3883 = vshll.u32 %v3450, 16
    %v3885 = vrot.slane %v3883, 1
    %v3886 = vsel %vm2623, %v3881, %v3885
    %v3942 = vunpack.c.l.b16 %v3333
    %v3943 = vpack.c.b16 %v2408, %v3942
    %v3944 = vrot.slane %v3943, 1
    %v3945 = vrot.slane %v3341, 1
    %v3946 = vsel %vm3117, %v3944, %v3945
    %v3947 = vrot.slane %v3342, 1
    %v3948 = vsel %vm3117, %v3945, %v3947
    %v3949 = vrot.slane %v3343, 1
    %v3950 = vsel %vm3117, %v3947, %v3949
    %v3951 = vrot.slane %v3344, 1
    %v3952 = vsel %vm3117, %v3949, %v3951
    %v3953 = vrot.slane %v3345, 1
    %v3954 = vsel %vm3117, %v3951, %v3953
    %v3955 = vrot.slane %v3346, 1
    %v3956 = vsel %vm3117, %v3953, %v3955
    %v3957 = vrot.slane %v3347, 1
    %v3958 = vsel %vm3117, %v3955, %v3957
    %v3959 = vrot.slane %v3348, 1
    %v3960 = vsel %vm3117, %v3957, %v3959
    %v3961 = vrot.slane %v3349, 1
    %v3962 = vsel %vm3117, %v3959, %v3961
    %v3963 = vrot.slane %v3350, 1
    %v3964 = vsel %vm3117, %v3961, %v3963
    %v3965 = vrot.slane %v3351, 1
    %v3966 = vsel %vm3117, %v3963, %v3965
    %v3967 = vrot.slane %v3352, 1
    %v3968 = vsel %vm3117, %v3965, %v3967
    %v3969 = vrot.slane %v3353, 1
    %v3970 = vsel %vm3117, %v3967, %v3969
    %v3971 = vrot.slane %v3354, 1
    %v3972 = vsel %vm3117, %v3969, %v3971
    %v3973 = vrot.slane %v3355, 1
    %v3974 = vsel %vm3117, %v3971, %v3973
    %v3975 = vrot.slane %v3356, 1
    %v3976 = vsel %vm3117, %v3973, %v3975
    %v3977 = vrot.slane %v3357, 1
    %v3978 = vsel %vm3117, %v3975, %v3977
    %v3979 = vrot.slane %v3358, 1
    %v3980 = vsel %vm3117, %v3977, %v3979
    %v3981 = vrot.slane %v3359, 1
    %v3982 = vsel %vm3117, %v3979, %v3981
    %v3983 = vrot.slane %v3360, 1
    %v3984 = vsel %vm3117, %v3981, %v3983
    %v3985 = vrot.slane %v3361, 1
    %v3986 = vsel %vm3117, %v3983, %v3985
    %v3987 = vrot.slane %v3362, 1
    %v3988 = vsel %vm3117, %v3985, %v3987
    %v3989 = vrot.slane %v3363, 1
    %v3990 = vsel %vm3117, %v3987, %v3989
    %v3991 = vrot.slane %v3364, 1
    %v3992 = vsel %vm3117, %v3989, %v3991
    %v3993 = vrot.slane %v3365, 1
    %v3994 = vsel %vm3117, %v3991, %v3993
    %v3995 = vrot.slane %v3366, 1
    %v3996 = vsel %vm3117, %v3993, %v3995
    %v3997 = vrot.slane %v3367, 1
    %v3998 = vsel %vm3117, %v3995, %v3997
    %v3999 = vrot.slane %v3368, 1
    %v4000 = vsel %vm3117, %v3997, %v3999
    %v4001 = vrot.slane %v3369, 1
    %v4002 = vsel %vm3117, %v3999, %v4001
    %v4003 = vrot.slane %v3370, 1
    %v4004 = vsel %vm3117, %v4001, %v4003
    %v4005 = vrot.slane %v3371, 1
    %v4006 = vsel %vm3117, %v4003, %v4005
    %v4007 = vrot.slane %v3372, 1
    %v4008 = vsel %vm3117, %v4005, %v4007
    %v4009 = vrot.slane %v3373, 1
    %v4010 = vsel %vm3117, %v4007, %v4009
    %v4011 = vrot.slane %v3374, 1
    %v4012 = vsel %vm3117, %v4009, %v4011
    %v4013 = vrot.slane %v3375, 1
    %v4014 = vsel %vm3117, %v4011, %v4013
    %v4015 = vrot.slane %v3376, 1
    %v4016 = vsel %vm3117, %v4013, %v4015
    %v4017 = vrot.slane %v3377, 1
    %v4018 = vsel %vm3117, %v4015, %v4017
    %v4019 = vrot.slane %v3378, 1
    %v4020 = vsel %vm3117, %v4017, %v4019
    %v4021 = vrot.slane %v3379, 1
    %v4022 = vsel %vm3117, %v4019, %v4021
    %v4023 = vrot.slane %v3380, 1
    %v4024 = vsel %vm3117, %v4021, %v4023
    %v4025 = vrot.slane %v3381, 1
    %v4026 = vsel %vm3117, %v4023, %v4025
    %v4027 = vrot.slane %v3382, 1
    %v4028 = vsel %vm3117, %v4025, %v4027
    %v4029 = vrot.slane %v3383, 1
    %v4030 = vsel %vm3117, %v4027, %v4029
    %v4031 = vrot.slane %v3384, 1
    %v4032 = vsel %vm3117, %v4029, %v4031
    %v4033 = vrot.slane %v3385, 1
    %v4034 = vsel %vm3117, %v4031, %v4033
    %v4035 = vrot.slane %v3386, 1
    %v4036 = vsel %vm3117, %v4033, %v4035
    %v4037 = vrot.slane %v3387, 1
    %v4038 = vsel %vm3117, %v4035, %v4037
    %v4039 = vrot.slane %v3388, 1
    %v4040 = vsel %vm3117, %v4037, %v4039
    %v4041 = vrot.slane %v3389, 1
    %v4042 = vsel %vm3117, %v4039, %v4041
    %v4043 = vrot.slane %v3390, 1
    %v4044 = vsel %vm3117, %v4041, %v4043
    %v4045 = vrot.slane %v3391, 1
    %v4046 = vsel %vm3117, %v4043, %v4045
    %v4047 = vrot.slane %v3392, 1
    %v4048 = vsel %vm3117, %v4045, %v4047
    %v4049 = vrot.slane %v3393, 1
    %v4050 = vsel %vm3117, %v4047, %v4049
    %v4051 = vrot.slane %v3450, 1
    %v4052 = vsel %vm3117, %v4049, %v4051
    %v4107 = vld [vmem:[%s5 + $0xc0] sm:$0xf]
    %v4108 = vld [vmem:[%s5 + $0xc4] sm:$0xf]
    %v4109 = vld [vmem:[%s5 + $0xc8] sm:$0xf]
    %v4110 = vld [vmem:[%s5 + $0xcc] sm:$0xf]
    %v4111 = vld [vmem:[%s5 + $0xd0] sm:$0xf]
    %v4112 = vld [vmem:[%s5 + $0xd4] sm:$0xf]
    %v4113 = vld [vmem:[%s5 + $0xd8] sm:$0xf]
    %v4114 = vld [vmem:[%s5 + $0xdc] sm:$0xf]
    %v4115 = vld [vmem:[%s5 + $0xe0] sm:$0xf]
    %v4116 = vld [vmem:[%s5 + $0xe4] sm:$0xf]
    %v4117 = vld [vmem:[%s5 + $0xe8] sm:$0xf]
    %v4118 = vld [vmem:[%s5 + $0xec] sm:$0xf]
    %v4119 = vld [vmem:[%s5 + $0xf0] sm:$0xf]
    %v4120 = vld [vmem:[%s5 + $0xf4] sm:$0xf]
    %v4121 = vld [vmem:[%s5 + $0xf8] sm:$0xf]
    %v4122 = vld [vmem:[%s5 + $0xfc] sm:$0xf]
    %v4123 = vld [vmem:[%s5 + $0x100] sm:$0xf]
    %v4124 = vld [vmem:[%s5 + $0x104] sm:$0xf]
    %v4125 = vld [vmem:[%s5 + $0x108] sm:$0xf]
    %v4126 = vld [vmem:[%s5 + $0x10c] sm:$0xf]
    %v4127 = vld [vmem:[%s5 + $0x110] sm:$0xf]
    %v4128 = vld [vmem:[%s5 + $0x114] sm:$0xf]
    %v4129 = vld [vmem:[%s5 + $0x118] sm:$0xf]
    %v4130 = vld [vmem:[%s5 + $0x11c] sm:$0xf]
    %v4131 = vld [vmem:[%s5 + $0x120] sm:$0xf]
    %v4132 = vld [vmem:[%s5 + $0x124] sm:$0xf]
    %v4133 = vld [vmem:[%s5 + $0x128] sm:$0xf]
    %v4134 = vld [vmem:[%s5 + $0x12c] sm:$0xf]
    %v4135 = vld [vmem:[%s5 + $0x130] sm:$0xf]
    %v4136 = vld [vmem:[%s5 + $0x134] sm:$0xf]
    %v4137 = vld [vmem:[%s5 + $0x138] sm:$0xf]
    %v4138 = vld [vmem:[%s5 + $0x13c] sm:$0xf]
    %v4139 = vld [vmem:[%s5 + $0x140] sm:$0xf]
    %v4140 = vld [vmem:[%s5 + $0x144] sm:$0xf]
    %v4141 = vld [vmem:[%s5 + $0x148] sm:$0xf]
    %v4142 = vld [vmem:[%s5 + $0x14c] sm:$0xf]
    %v4143 = vld [vmem:[%s5 + $0x150] sm:$0xf]
    %v4144 = vld [vmem:[%s5 + $0x154] sm:$0xf]
    %v4145 = vld [vmem:[%s5 + $0x158] sm:$0xf]
    %v4146 = vld [vmem:[%s5 + $0x15c] sm:$0xf]
    %v4147 = vld [vmem:[%s5 + $0x160] sm:$0xf]
    %v4148 = vld [vmem:[%s5 + $0x164] sm:$0xf]
    %v4149 = vld [vmem:[%s5 + $0x168] sm:$0xf]
    %v4150 = vld [vmem:[%s5 + $0x16c] sm:$0xf]
    %v4151 = vld [vmem:[%s5 + $0x170] sm:$0xf]
    %v4152 = vld [vmem:[%s5 + $0x174] sm:$0xf]
    %v4153 = vld [vmem:[%s5 + $0x178] sm:$0xf]
    %v4154 = vld [vmem:[%s5 + $0x17c] sm:$0xf]
    %v4203 = vunpack.c.l.b16 %v4107
    %v4204 = vunpack.c.l.b16 %v4108
    %v4205 = vunpack.c.l.b16 %v4109
    %v4206 = vunpack.c.l.b16 %v4110
    %v4207 = vunpack.c.l.b16 %v4111
    %v4208 = vunpack.c.l.b16 %v4112
    %v4209 = vunpack.c.l.b16 %v4113
    %v4210 = vunpack.c.l.b16 %v4114
    %v4211 = vunpack.c.l.b16 %v4115
    %v4212 = vunpack.c.l.b16 %v4116
    %v4213 = vunpack.c.l.b16 %v4117
    %v4214 = vunpack.c.l.b16 %v4118
    %v4215 = vunpack.c.l.b16 %v4119
    %v4216 = vunpack.c.l.b16 %v4120
    %v4217 = vunpack.c.l.b16 %v4121
    %v4218 = vunpack.c.l.b16 %v4122
    %v4219 = vunpack.c.l.b16 %v4123
    %v4220 = vunpack.c.l.b16 %v4124
    %v4221 = vunpack.c.l.b16 %v4125
    %v4222 = vunpack.c.l.b16 %v4126
    %v4223 = vunpack.c.l.b16 %v4127
    %v4224 = vunpack.c.l.b16 %v4128
    %v4225 = vunpack.c.l.b16 %v4129
    %v4226 = vunpack.c.l.b16 %v4130
    %v4227 = vunpack.c.l.b16 %v4131
    %v4228 = vunpack.c.l.b16 %v4132
    %v4229 = vunpack.c.l.b16 %v4133
    %v4230 = vunpack.c.l.b16 %v4134
    %v4231 = vunpack.c.l.b16 %v4135
    %v4232 = vunpack.c.l.b16 %v4136
    %v4233 = vunpack.c.l.b16 %v4137
    %v4234 = vunpack.c.l.b16 %v4138
    %v4235 = vunpack.c.l.b16 %v4139
    %v4236 = vunpack.c.l.b16 %v4140
    %v4237 = vunpack.c.l.b16 %v4141
    %v4238 = vunpack.c.l.b16 %v4142
    %v4239 = vunpack.c.l.b16 %v4143
    %v4240 = vunpack.c.l.b16 %v4144
    %v4241 = vunpack.c.l.b16 %v4145
    %v4242 = vunpack.c.l.b16 %v4146
    %v4243 = vunpack.c.l.b16 %v4147
    %v4244 = vunpack.c.l.b16 %v4148
    %v4245 = vunpack.c.l.b16 %v4149
    %v4246 = vunpack.c.l.b16 %v4150
    %v4247 = vunpack.c.l.b16 %v4151
    %v4248 = vunpack.c.l.b16 %v4152
    %v4249 = vunpack.c.l.b16 %v4153
    %v4250 = vunpack.c.l.b16 %v4154
    %v4251 = vpack.c.b16 %v4204, %v4203
    %v4252 = vpack.c.b16 %v4206, %v4205
    %v4253 = vpack.c.b16 %v4208, %v4207
    %v4254 = vpack.c.b16 %v4210, %v4209
    %v4255 = vpack.c.b16 %v4212, %v4211
    %v4256 = vpack.c.b16 %v4214, %v4213
    %v4257 = vpack.c.b16 %v4216, %v4215
    %v4258 = vpack.c.b16 %v4218, %v4217
    %v4259 = vpack.c.b16 %v4220, %v4219
    %v4260 = vpack.c.b16 %v4222, %v4221
    %v4261 = vpack.c.b16 %v4224, %v4223
    %v4262 = vpack.c.b16 %v4226, %v4225
    %v4263 = vpack.c.b16 %v4228, %v4227
    %v4264 = vpack.c.b16 %v4230, %v4229
    %v4265 = vpack.c.b16 %v4232, %v4231
    %v4266 = vpack.c.b16 %v4234, %v4233
    %v4267 = vpack.c.b16 %v4236, %v4235
    %v4268 = vpack.c.b16 %v4238, %v4237
    %v4269 = vpack.c.b16 %v4240, %v4239
    %v4270 = vpack.c.b16 %v4242, %v4241
    %v4271 = vpack.c.b16 %v4244, %v4243
    %v4272 = vpack.c.b16 %v4246, %v4245
    %v4273 = vpack.c.b16 %v4248, %v4247
    %v4274 = vpack.c.b16 %v4250, %v4249
    %4299 = vmatpush.bf16.msra.mxu0 %v4258
    %4300 = vmatpush.bf16.msra.mxu0 %v4257
    %4301 = vmatpush.bf16.msra.mxu0 %v4256
    %4302 = vmatpush.bf16.msra.mxu0 %v4255
    %4303 = vmatpush.bf16.msra.mxu0 %v4254
    %4304 = vmatpush.bf16.msra.mxu0 %v4253
    %4305 = vmatpush.bf16.msra.mxu0 %v4252
    %4306 = vmatpush.bf16.msra.mxu0 %v4251
    %4307 = vmatmul.bf16.gmra.mxu0 %v3340
    %v4308 = vpop.f32.mrf.mxu0
    %v4309 = vadd.f32 0.0, %v4308
    %v4310 = vpop.f32.mrf.mxu0
    %v4311 = vadd.f32 0.0, %v4310
    %4312 = vmatmul.bf16.gmra.mxu0 %v3341
    %v4313 = vpop.f32.mrf.mxu0
    %v4314 = vpop.f32.mrf.mxu0
    %v4315 = vadd.f32 0.0, %v4314
    %4316 = vmatmul.bf16.gmra.mxu0 %v3342
    %v4317 = vpop.f32.mrf.mxu0
    %v4318 = vadd.f32 0.0, %v4317
    %v4319 = vpop.f32.mrf.mxu0
    %4320 = vmatmul.bf16.gmra.mxu0 %v3343
    %v4321 = vpop.f32.mrf.mxu0
    %v4322 = vadd.f32 0.0, %v4321
    %v4323 = vpop.f32.mrf.mxu0
    %v4324 = vadd.f32 0.0, %v4323
    %4325 = vmatmul.bf16.gmra.mxu0 %v3344
    %v4326 = vpop.f32.mrf.mxu0
    %v4327 = vpop.f32.mrf.mxu0
    %v4328 = vadd.f32 0.0, %v4327
    %4329 = vmatmul.bf16.gmra.mxu0 %v3345
    %v4330 = vpop.f32.mrf.mxu0
    %v4331 = vadd.f32 0.0, %v4330
    %v4332 = vpop.f32.mrf.mxu0
    %4333 = vmatmul.bf16.gmra.mxu0 %v3346
    %v4334 = vpop.f32.mrf.mxu0
    %v4335 = vadd.f32 0.0, %v4334
    %v4336 = vpop.f32.mrf.mxu0
    %v4337 = vadd.f32 0.0, %v4336
    %4338 = vmatmul.bf16.gmra.mxu0 %v3347
    %v4339 = vpop.f32.mrf.mxu0
    %v4340 = vpop.f32.mrf.mxu0
    %v4341 = vadd.f32 0.0, %v4340
    %4342 = vmatmul.bf16.gmra.mxu0 %v3348
    %v4343 = vpop.f32.mrf.mxu0
    %v4344 = vadd.f32 0.0, %v4343
    %v4345 = vpop.f32.mrf.mxu0
    %4346 = vmatmul.bf16.gmra.mxu0 %v3349
    %v4347 = vpop.f32.mrf.mxu0
    %v4348 = vadd.f32 0.0, %v4347
    %v4349 = vpop.f32.mrf.mxu0
    %v4350 = vadd.f32 0.0, %v4349
    %4351 = vmatmul.bf16.gmra.mxu0 %v3350
    %v4352 = vpop.f32.mrf.mxu0
    %v4353 = vpop.f32.mrf.mxu0
    %v4354 = vadd.f32 0.0, %v4353
    %4355 = vmatmul.bf16.gmra.mxu0 %v3351
    %v4356 = vpop.f32.mrf.mxu0
    %v4357 = vadd.f32 0.0, %v4356
    %v4358 = vpop.f32.mrf.mxu0
    %4359 = vmatmul.bf16.gmra.mxu0 %v3352
    %v4360 = vpop.f32.mrf.mxu0
    %v4361 = vadd.f32 0.0, %v4360
    %v4362 = vpop.f32.mrf.mxu0
    %v4363 = vadd.f32 0.0, %v4362
    %4364 = vmatmul.bf16.gmra.mxu0 %v3353
    %v4365 = vpop.f32.mrf.mxu0
    %v4366 = vpop.f32.mrf.mxu0
    %v4367 = vadd.f32 0.0, %v4366
    %4368 = vmatmul.bf16.gmra.mxu0 %v3354
    %v4369 = vpop.f32.mrf.mxu0
    %v4370 = vadd.f32 0.0, %v4369
    %v4371 = vpop.f32.mrf.mxu0
    %4372 = vmatmul.bf16.gmra.mxu0 %v3355
    %v4373 = vpop.f32.mrf.mxu0
    %v4374 = vadd.f32 0.0, %v4373
    %v4375 = vpop.f32.mrf.mxu0
    %v4376 = vadd.f32 0.0, %v4375
    %4377 = vmatmul.bf16.gmra.mxu0 %v3356
    %v4378 = vpop.f32.mrf.mxu0
    %v4379 = vpop.f32.mrf.mxu0
    %v4380 = vadd.f32 0.0, %v4379
    %4381 = vmatmul.bf16.gmra.mxu0 %v3357
    %v4382 = vpop.f32.mrf.mxu0
    %v4383 = vadd.f32 0.0, %v4382
    %v4384 = vpop.f32.mrf.mxu0
    %4385 = vmatmul.bf16.gmra.mxu0 %v3358
    %v4386 = vpop.f32.mrf.mxu0
    %v4387 = vadd.f32 0.0, %v4386
    %v4388 = vpop.f32.mrf.mxu0
    %v4389 = vadd.f32 0.0, %v4388
    %4390 = vmatmul.bf16.gmra.mxu0 %v3359
    %v4391 = vpop.f32.mrf.mxu0
    %v4392 = vpop.f32.mrf.mxu0
    %v4393 = vadd.f32 0.0, %v4392
    %4394 = vmatmul.bf16.gmra.mxu0 %v3360
    %v4395 = vpop.f32.mrf.mxu0
    %v4396 = vadd.f32 0.0, %v4395
    %v4397 = vpop.f32.mrf.mxu0
    %4398 = vmatmul.bf16.gmra.mxu0 %v3361
    %v4399 = vpop.f32.mrf.mxu0
    %v4400 = vadd.f32 0.0, %v4399
    %v4401 = vpop.f32.mrf.mxu0
    %v4402 = vadd.f32 0.0, %v4401
    %4403 = vmatmul.bf16.gmra.mxu0 %v3362
    %v4404 = vpop.f32.mrf.mxu0
    %v4405 = vpop.f32.mrf.mxu0
    %v4406 = vadd.f32 0.0, %v4405
    %4407 = vmatmul.bf16.gmra.mxu0 %v3363
    %v4408 = vpop.f32.mrf.mxu0
    %v4409 = vadd.f32 0.0, %v4408
    %v4410 = vpop.f32.mrf.mxu0
    %4411 = vmatmul.bf16.gmra.mxu0 %v3364
    %v4412 = vpop.f32.mrf.mxu0
    %v4413 = vpop.f32.mrf.mxu0
    %4414 = vmatmul.bf16.gmra.mxu0 %v3365
    %v4415 = vpop.f32.mrf.mxu0
    %v4416 = vpop.f32.mrf.mxu0
    %4417 = vmatmul.bf16.gmra.mxu0 %v3366
    %v4418 = vpop.f32.mrf.mxu0
    %v4419 = vpop.f32.mrf.mxu0
    %4420 = vmatmul.bf16.gmra.mxu0 %v3367
    %v4421 = vpop.f32.mrf.mxu0
    %v4422 = vadd.f32 0.0, %v4421
    %v4423 = vpop.f32.mrf.mxu0
    %v4424 = vadd.f32 0.0, %v4423
    %4425 = vmatmul.bf16.gmra.mxu0 %v3368
    %v4426 = vpop.f32.mrf.mxu0
    %v4427 = vpop.f32.mrf.mxu0
    %v4428 = vadd.f32 0.0, %v4427
    %4429 = vmatmul.bf16.gmra.mxu0 %v3369
    %v4430 = vpop.f32.mrf.mxu0
    %v4431 = vadd.f32 0.0, %v4430
    %v4432 = vpop.f32.mrf.mxu0
    %4433 = vmatmul.bf16.gmra.mxu0 %v3370
    %v4434 = vpop.f32.mrf.mxu0
    %v4435 = vadd.f32 0.0, %v4434
    %v4436 = vpop.f32.mrf.mxu0
    %v4437 = vadd.f32 0.0, %v4436
    %4438 = vmatmul.bf16.gmra.mxu0 %v3371
    %v4439 = vpop.f32.mrf.mxu0
    %v4440 = vpop.f32.mrf.mxu0
    %v4441 = vadd.f32 0.0, %v4440
    %4442 = vmatmul.bf16.gmra.mxu0 %v3372
    %v4443 = vpop.f32.mrf.mxu0
    %v4444 = vadd.f32 0.0, %v4443
    %v4445 = vpop.f32.mrf.mxu0
    %4446 = vmatmul.bf16.gmra.mxu0 %v3373
    %v4447 = vpop.f32.mrf.mxu0
    %v4448 = vadd.f32 0.0, %v4447
    %v4449 = vpop.f32.mrf.mxu0
    %v4450 = vadd.f32 0.0, %v4449
    %4451 = vmatmul.bf16.gmra.mxu0 %v3374
    %v4452 = vpop.f32.mrf.mxu0
    %v4453 = vpop.f32.mrf.mxu0
    %v4454 = vadd.f32 0.0, %v4453
    %4455 = vmatmul.bf16.gmra.mxu0 %v3375
    %v4456 = vpop.f32.mrf.mxu0
    %v4457 = vadd.f32 0.0, %v4456
    %v4458 = vpop.f32.mrf.mxu0
    %4459 = vmatmul.bf16.gmra.mxu0 %v3376
    %v4460 = vpop.f32.mrf.mxu0
    %v4461 = vadd.f32 0.0, %v4460
    %v4462 = vpop.f32.mrf.mxu0
    %v4463 = vadd.f32 0.0, %v4462
    %4464 = vmatmul.bf16.gmra.mxu0 %v3377
    %v4465 = vpop.f32.mrf.mxu0
    %v4466 = vpop.f32.mrf.mxu0
    %v4467 = vadd.f32 0.0, %v4466
    %4468 = vmatmul.bf16.gmra.mxu0 %v3378
    %v4469 = vpop.f32.mrf.mxu0
    %v4470 = vadd.f32 0.0, %v4469
    %v4471 = vpop.f32.mrf.mxu0
    %4472 = vmatmul.bf16.gmra.mxu0 %v3379
    %v4473 = vpop.f32.mrf.mxu0
    %v4474 = vadd.f32 0.0, %v4473
    %v4475 = vpop.f32.mrf.mxu0
    %v4476 = vadd.f32 0.0, %v4475
    %4477 = vmatmul.bf16.gmra.mxu0 %v3380
    %v4478 = vpop.f32.mrf.mxu0
    %v4479 = vpop.f32.mrf.mxu0
    %v4480 = vadd.f32 0.0, %v4479
    %4481 = vmatmul.bf16.gmra.mxu0 %v3381
    %v4482 = vpop.f32.mrf.mxu0
    %v4483 = vadd.f32 0.0, %v4482
    %v4484 = vpop.f32.mrf.mxu0
    %4485 = vmatmul.bf16.gmra.mxu0 %v3382
    %v4486 = vpop.f32.mrf.mxu0
    %v4487 = vadd.f32 0.0, %v4486
    %v4488 = vpop.f32.mrf.mxu0
    %v4489 = vadd.f32 0.0, %v4488
    %4490 = vmatmul.bf16.gmra.mxu0 %v3383
    %v4491 = vpop.f32.mrf.mxu0
    %v4492 = vpop.f32.mrf.mxu0
    %v4493 = vadd.f32 0.0, %v4492
    %4494 = vmatmul.bf16.gmra.mxu0 %v3384
    %v4495 = vpop.f32.mrf.mxu0
    %v4496 = vadd.f32 0.0, %v4495
    %v4497 = vpop.f32.mrf.mxu0
    %4498 = vmatmul.bf16.gmra.mxu0 %v3385
    %v4499 = vpop.f32.mrf.mxu0
    %v4500 = vadd.f32 0.0, %v4499
    %v4501 = vpop.f32.mrf.mxu0
    %v4502 = vadd.f32 0.0, %v4501
    %4503 = vmatmul.bf16.gmra.mxu0 %v3386
    %v4504 = vpop.f32.mrf.mxu0
    %v4505 = vpop.f32.mrf.mxu0
    %v4506 = vadd.f32 0.0, %v4505
    %4507 = vmatmul.bf16.gmra.mxu0 %v3387
    %v4508 = vpop.f32.mrf.mxu0
    %v4509 = vadd.f32 0.0, %v4508
    %v4510 = vpop.f32.mrf.mxu0
    %4511 = vmatmul.bf16.gmra.mxu0 %v3388
    %v4512 = vpop.f32.mrf.mxu0
    %v4513 = vadd.f32 0.0, %v4512
    %v4514 = vpop.f32.mrf.mxu0
    %v4515 = vadd.f32 0.0, %v4514
    %4516 = vmatmul.bf16.gmra.mxu0 %v3389
    %v4517 = vpop.f32.mrf.mxu0
    %v4518 = vpop.f32.mrf.mxu0
    %v4519 = vadd.f32 0.0, %v4518
    %4520 = vmatmul.bf16.gmra.mxu0 %v3390
    %v4521 = vpop.f32.mrf.mxu0
    %v4522 = vadd.f32 0.0, %v4521
    %v4523 = vpop.f32.mrf.mxu0
    %4524 = vmatmul.bf16.gmra.mxu0 %v3391
    %v4525 = vpop.f32.mrf.mxu0
    %v4526 = vpop.f32.mrf.mxu0
    %4527 = vmatmul.bf16.gmra.mxu0 %v3392
    %v4528 = vpop.f32.mrf.mxu0
    %v4529 = vpop.f32.mrf.mxu0
    %4530 = vmatmul.bf16.gmra.mxu0 %v3393
    %v4531 = vpop.f32.mrf.mxu0
    %v4532 = vpop.f32.mrf.mxu0
    %4533 = vdwg.mxu0
    %4534 = vmatpush.bf16.msra.mxu0 %v4266
    %4535 = vmatpush.bf16.msra.mxu0 %v4265
    %4536 = vmatpush.bf16.msra.mxu0 %v4264
    %4537 = vmatpush.bf16.msra.mxu0 %v4263
    %4538 = vmatpush.bf16.msra.mxu0 %v4262
    %4539 = vmatpush.bf16.msra.mxu0 %v4261
    %4540 = vmatpush.bf16.msra.mxu0 %v4260
    %4541 = vmatpush.bf16.msra.mxu0 %v4259
    %4542 = vmatmul.bf16.gmra.mxu0 %v3462
    %v4543 = vpop.f32.mrf.mxu0
    %v4544 = vadd.f32 %v4309, %v4543
    %v4545 = vpop.f32.mrf.mxu0
    %v4546 = vadd.f32 %v4311, %v4545
    %4547 = vmatmul.bf16.gmra.mxu0 %v3470
    %v4548 = vpop.f32.mrf.mxu0
    %v4549 = vpop.f32.mrf.mxu0
    %v4550 = vadd.f32 %v4315, %v4549
    %4551 = vmatmul.bf16.gmra.mxu0 %v3478
    %v4552 = vpop.f32.mrf.mxu0
    %v4553 = vadd.f32 %v4318, %v4552
    %v4554 = vpop.f32.mrf.mxu0
    %4555 = vmatmul.bf16.gmra.mxu0 %v3486
    %v4556 = vpop.f32.mrf.mxu0
    %v4557 = vadd.f32 %v4322, %v4556
    %v4558 = vpop.f32.mrf.mxu0
    %v4559 = vadd.f32 %v4324, %v4558
    %4560 = vmatmul.bf16.gmra.mxu0 %v3494
    %v4561 = vpop.f32.mrf.mxu0
    %v4562 = vpop.f32.mrf.mxu0
    %v4563 = vadd.f32 %v4328, %v4562
    %4564 = vmatmul.bf16.gmra.mxu0 %v3502
    %v4565 = vpop.f32.mrf.mxu0
    %v4566 = vadd.f32 %v4331, %v4565
    %v4567 = vpop.f32.mrf.mxu0
    %4568 = vmatmul.bf16.gmra.mxu0 %v3510
    %v4569 = vpop.f32.mrf.mxu0
    %v4570 = vadd.f32 %v4335, %v4569
    %v4571 = vpop.f32.mrf.mxu0
    %v4572 = vadd.f32 %v4337, %v4571
    %4573 = vmatmul.bf16.gmra.mxu0 %v3518
    %v4574 = vpop.f32.mrf.mxu0
    %v4575 = vpop.f32.mrf.mxu0
    %v4576 = vadd.f32 %v4341, %v4575
    %4577 = vmatmul.bf16.gmra.mxu0 %v3526
    %v4578 = vpop.f32.mrf.mxu0
    %v4579 = vadd.f32 %v4344, %v4578
    %v4580 = vpop.f32.mrf.mxu0
    %4581 = vmatmul.bf16.gmra.mxu0 %v3534
    %v4582 = vpop.f32.mrf.mxu0
    %v4583 = vadd.f32 %v4348, %v4582
    %v4584 = vpop.f32.mrf.mxu0
    %v4585 = vadd.f32 %v4350, %v4584
    %4586 = vmatmul.bf16.gmra.mxu0 %v3542
    %v4587 = vpop.f32.mrf.mxu0
    %v4588 = vpop.f32.mrf.mxu0
    %v4589 = vadd.f32 %v4354, %v4588
    %4590 = vmatmul.bf16.gmra.mxu0 %v3550
    %v4591 = vpop.f32.mrf.mxu0
    %v4592 = vadd.f32 %v4357, %v4591
    %v4593 = vpop.f32.mrf.mxu0
    %4594 = vmatmul.bf16.gmra.mxu0 %v3558
    %v4595 = vpop.f32.mrf.mxu0
    %v4596 = vadd.f32 %v4361, %v4595
    %v4597 = vpop.f32.mrf.mxu0
    %v4598 = vadd.f32 %v4363, %v4597
    %4599 = vmatmul.bf16.gmra.mxu0 %v3566
    %v4600 = vpop.f32.mrf.mxu0
    %v4601 = vpop.f32.mrf.mxu0
    %v4602 = vadd.f32 %v4367, %v4601
    %4603 = vmatmul.bf16.gmra.mxu0 %v3574
    %v4604 = vpop.f32.mrf.mxu0
    %v4605 = vadd.f32 %v4370, %v4604
    %v4606 = vpop.f32.mrf.mxu0
    %4607 = vmatmul.bf16.gmra.mxu0 %v3582
    %v4608 = vpop.f32.mrf.mxu0
    %v4609 = vadd.f32 %v4374, %v4608
    %v4610 = vpop.f32.mrf.mxu0
    %v4611 = vadd.f32 %v4376, %v4610
    %4612 = vmatmul.bf16.gmra.mxu0 %v3590
    %v4613 = vpop.f32.mrf.mxu0
    %v4614 = vpop.f32.mrf.mxu0
    %v4615 = vadd.f32 %v4380, %v4614
    %4616 = vmatmul.bf16.gmra.mxu0 %v3598
    %v4617 = vpop.f32.mrf.mxu0
    %v4618 = vadd.f32 %v4383, %v4617
    %v4619 = vpop.f32.mrf.mxu0
    %4620 = vmatmul.bf16.gmra.mxu0 %v3606
    %v4621 = vpop.f32.mrf.mxu0
    %v4622 = vadd.f32 %v4387, %v4621
    %v4623 = vpop.f32.mrf.mxu0
    %v4624 = vadd.f32 %v4389, %v4623
    %4625 = vmatmul.bf16.gmra.mxu0 %v3614
    %v4626 = vpop.f32.mrf.mxu0
    %v4627 = vpop.f32.mrf.mxu0
    %v4628 = vadd.f32 %v4393, %v4627
    %4629 = vmatmul.bf16.gmra.mxu0 %v3622
    %v4630 = vpop.f32.mrf.mxu0
    %v4631 = vadd.f32 %v4396, %v4630
    %v4632 = vpop.f32.mrf.mxu0
    %4633 = vmatmul.bf16.gmra.mxu0 %v3630
    %v4634 = vpop.f32.mrf.mxu0
    %v4635 = vadd.f32 %v4400, %v4634
    %v4636 = vpop.f32.mrf.mxu0
    %v4637 = vadd.f32 %v4402, %v4636
    %4638 = vmatmul.bf16.gmra.mxu0 %v3638
    %v4639 = vpop.f32.mrf.mxu0
    %v4640 = vpop.f32.mrf.mxu0
    %v4641 = vadd.f32 %v4406, %v4640
    %4642 = vmatmul.bf16.gmra.mxu0 %v3646
    %v4643 = vpop.f32.mrf.mxu0
    %v4644 = vadd.f32 %v4409, %v4643
    %v4645 = vpop.f32.mrf.mxu0
    %4646 = vmatmul.bf16.gmra.mxu0 %v3654
    %v4647 = vpop.f32.mrf.mxu0
    %v4648 = vpop.f32.mrf.mxu0
    %4649 = vmatmul.bf16.gmra.mxu0 %v3662
    %v4650 = vpop.f32.mrf.mxu0
    %v4651 = vpop.f32.mrf.mxu0
    %4652 = vmatmul.bf16.gmra.mxu0 %v3670
    %v4653 = vpop.f32.mrf.mxu0
    %v4654 = vpop.f32.mrf.mxu0
    %4655 = vmatmul.bf16.gmra.mxu0 %v3678
    %v4656 = vpop.f32.mrf.mxu0
    %v4657 = vadd.f32 %v4422, %v4656
    %v4658 = vpop.f32.mrf.mxu0
    %v4659 = vadd.f32 %v4424, %v4658
    %4660 = vmatmul.bf16.gmra.mxu0 %v3686
    %v4661 = vpop.f32.mrf.mxu0
    %v4662 = vpop.f32.mrf.mxu0
    %v4663 = vadd.f32 %v4428, %v4662
    %4664 = vmatmul.bf16.gmra.mxu0 %v3694
    %v4665 = vpop.f32.mrf.mxu0
    %v4666 = vadd.f32 %v4431, %v4665
    %v4667 = vpop.f32.mrf.mxu0
    %4668 = vmatmul.bf16.gmra.mxu0 %v3702
    %v4669 = vpop.f32.mrf.mxu0
    %v4670 = vadd.f32 %v4435, %v4669
    %v4671 = vpop.f32.mrf.mxu0
    %v4672 = vadd.f32 %v4437, %v4671
    %4673 = vmatmul.bf16.gmra.mxu0 %v3710
    %v4674 = vpop.f32.mrf.mxu0
    %v4675 = vpop.f32.mrf.mxu0
    %v4676 = vadd.f32 %v4441, %v4675
    %4677 = vmatmul.bf16.gmra.mxu0 %v3718
    %v4678 = vpop.f32.mrf.mxu0
    %v4679 = vadd.f32 %v4444, %v4678
    %v4680 = vpop.f32.mrf.mxu0
    %4681 = vmatmul.bf16.gmra.mxu0 %v3726
    %v4682 = vpop.f32.mrf.mxu0
    %v4683 = vadd.f32 %v4448, %v4682
    %v4684 = vpop.f32.mrf.mxu0
    %v4685 = vadd.f32 %v4450, %v4684
    %4686 = vmatmul.bf16.gmra.mxu0 %v3734
    %v4687 = vpop.f32.mrf.mxu0
    %v4688 = vpop.f32.mrf.mxu0
    %v4689 = vadd.f32 %v4454, %v4688
    %4690 = vmatmul.bf16.gmra.mxu0 %v3742
    %v4691 = vpop.f32.mrf.mxu0
    %v4692 = vadd.f32 %v4457, %v4691
    %v4693 = vpop.f32.mrf.mxu0
    %4694 = vmatmul.bf16.gmra.mxu0 %v3750
    %v4695 = vpop.f32.mrf.mxu0
    %v4696 = vadd.f32 %v4461, %v4695
    %v4697 = vpop.f32.mrf.mxu0
    %v4698 = vadd.f32 %v4463, %v4697
    %4699 = vmatmul.bf16.gmra.mxu0 %v3758
    %v4700 = vpop.f32.mrf.mxu0
    %v4701 = vpop.f32.mrf.mxu0
    %v4702 = vadd.f32 %v4467, %v4701
    %4703 = vmatmul.bf16.gmra.mxu0 %v3766
    %v4704 = vpop.f32.mrf.mxu0
    %v4705 = vadd.f32 %v4470, %v4704
    %v4706 = vpop.f32.mrf.mxu0
    %4707 = vmatmul.bf16.gmra.mxu0 %v3774
    %v4708 = vpop.f32.mrf.mxu0
    %v4709 = vadd.f32 %v4474, %v4708
    %v4710 = vpop.f32.mrf.mxu0
    %v4711 = vadd.f32 %v4476, %v4710
    %4712 = vmatmul.bf16.gmra.mxu0 %v3782
    %v4713 = vpop.f32.mrf.mxu0
    %v4714 = vpop.f32.mrf.mxu0
    %v4715 = vadd.f32 %v4480, %v4714
    %4716 = vmatmul.bf16.gmra.mxu0 %v3790
    %v4717 = vpop.f32.mrf.mxu0
    %v4718 = vadd.f32 %v4483, %v4717
    %v4719 = vpop.f32.mrf.mxu0
    %4720 = vmatmul.bf16.gmra.mxu0 %v3798
    %v4721 = vpop.f32.mrf.mxu0
    %v4722 = vadd.f32 %v4487, %v4721
    %v4723 = vpop.f32.mrf.mxu0
    %v4724 = vadd.f32 %v4489, %v4723
    %4725 = vmatmul.bf16.gmra.mxu0 %v3806
    %v4726 = vpop.f32.mrf.mxu0
    %v4727 = vpop.f32.mrf.mxu0
    %v4728 = vadd.f32 %v4493, %v4727
    %4729 = vmatmul.bf16.gmra.mxu0 %v3814
    %v4730 = vpop.f32.mrf.mxu0
    %v4731 = vadd.f32 %v4496, %v4730
    %v4732 = vpop.f32.mrf.mxu0
    %4733 = vmatmul.bf16.gmra.mxu0 %v3822
    %v4734 = vpop.f32.mrf.mxu0
    %v4735 = vadd.f32 %v4500, %v4734
    %v4736 = vpop.f32.mrf.mxu0
    %v4737 = vadd.f32 %v4502, %v4736
    %4738 = vmatmul.bf16.gmra.mxu0 %v3830
    %v4739 = vpop.f32.mrf.mxu0
    %v4740 = vpop.f32.mrf.mxu0
    %v4741 = vadd.f32 %v4506, %v4740
    %4742 = vmatmul.bf16.gmra.mxu0 %v3838
    %v4743 = vpop.f32.mrf.mxu0
    %v4744 = vadd.f32 %v4509, %v4743
    %v4745 = vpop.f32.mrf.mxu0
    %4746 = vmatmul.bf16.gmra.mxu0 %v3846
    %v4747 = vpop.f32.mrf.mxu0
    %v4748 = vadd.f32 %v4513, %v4747
    %v4749 = vpop.f32.mrf.mxu0
    %v4750 = vadd.f32 %v4515, %v4749
    %4751 = vmatmul.bf16.gmra.mxu0 %v3854
    %v4752 = vpop.f32.mrf.mxu0
    %v4753 = vpop.f32.mrf.mxu0
    %v4754 = vadd.f32 %v4519, %v4753
    %4755 = vmatmul.bf16.gmra.mxu0 %v3862
    %v4756 = vpop.f32.mrf.mxu0
    %v4757 = vadd.f32 %v4522, %v4756
    %v4758 = vpop.f32.mrf.mxu0
    %4759 = vmatmul.bf16.gmra.mxu0 %v3870
    %v4760 = vpop.f32.mrf.mxu0
    %v4761 = vpop.f32.mrf.mxu0
    %4762 = vmatmul.bf16.gmra.mxu0 %v3878
    %v4763 = vpop.f32.mrf.mxu0
    %v4764 = vpop.f32.mrf.mxu0
    %4765 = vmatmul.bf16.gmra.mxu0 %v3886
    %v4766 = vpop.f32.mrf.mxu0
    %v4767 = vpop.f32.mrf.mxu0
    %4768 = vdwg.mxu0
    %4769 = vmatpush.bf16.msra.mxu0 %v4274
    %4770 = vmatpush.bf16.msra.mxu0 %v4273
    %4771 = vmatpush.bf16.msra.mxu0 %v4272
    %4772 = vmatpush.bf16.msra.mxu0 %v4271
    %4773 = vmatpush.bf16.msra.mxu0 %v4270
    %4774 = vmatpush.bf16.msra.mxu0 %v4269
    %4775 = vmatpush.bf16.msra.mxu0 %v4268
    %4776 = vmatpush.bf16.msra.mxu0 %v4267
    %4777 = vmatmul.bf16.gmra.mxu0 %v3946
    %v4778 = vpop.f32.mrf.mxu0
    %v4779 = vadd.f32 %v4544, %v4778
    %v4780 = vpop.f32.mrf.mxu0
    %v4781 = vadd.f32 %v4546, %v4780
    %4782 = vmatmul.bf16.gmra.mxu0 %v3948
    %v4783 = vpop.f32.mrf.mxu0
    %v4784 = vpop.f32.mrf.mxu0
    %v4785 = vadd.f32 %v4550, %v4784
    %4786 = vmatmul.bf16.gmra.mxu0 %v3950
    %v4787 = vpop.f32.mrf.mxu0
    %v4788 = vadd.f32 %v4553, %v4787
    %v4789 = vpop.f32.mrf.mxu0
    %4790 = vmatmul.bf16.gmra.mxu0 %v3952
    %v4791 = vpop.f32.mrf.mxu0
    %v4792 = vadd.f32 %v4557, %v4791
    %v4793 = vpop.f32.mrf.mxu0
    %v4794 = vadd.f32 %v4559, %v4793
    %4795 = vmatmul.bf16.gmra.mxu0 %v3954
    %v4796 = vpop.f32.mrf.mxu0
    %v4797 = vpop.f32.mrf.mxu0
    %v4798 = vadd.f32 %v4563, %v4797
    %4799 = vmatmul.bf16.gmra.mxu0 %v3956
    %v4800 = vpop.f32.mrf.mxu0
    %v4801 = vadd.f32 %v4566, %v4800
    %v4802 = vpop.f32.mrf.mxu0
    %4803 = vmatmul.bf16.gmra.mxu0 %v3958
    %v4804 = vpop.f32.mrf.mxu0
    %v4805 = vadd.f32 %v4570, %v4804
    %v4806 = vpop.f32.mrf.mxu0
    %v4807 = vadd.f32 %v4572, %v4806
    %4808 = vmatmul.bf16.gmra.mxu0 %v3960
    %v4809 = vpop.f32.mrf.mxu0
    %v4810 = vpop.f32.mrf.mxu0
    %v4811 = vadd.f32 %v4576, %v4810
    %4812 = vmatmul.bf16.gmra.mxu0 %v3962
    %v4813 = vpop.f32.mrf.mxu0
    %v4814 = vadd.f32 %v4579, %v4813
    %v4815 = vpop.f32.mrf.mxu0
    %4816 = vmatmul.bf16.gmra.mxu0 %v3964
    %v4817 = vpop.f32.mrf.mxu0
    %v4818 = vadd.f32 %v4583, %v4817
    %v4819 = vpop.f32.mrf.mxu0
    %v4820 = vadd.f32 %v4585, %v4819
    %4821 = vmatmul.bf16.gmra.mxu0 %v3966
    %v4822 = vpop.f32.mrf.mxu0
    %v4823 = vpop.f32.mrf.mxu0
    %v4824 = vadd.f32 %v4589, %v4823
    %4825 = vmatmul.bf16.gmra.mxu0 %v3968
    %v4826 = vpop.f32.mrf.mxu0
    %v4827 = vadd.f32 %v4592, %v4826
    %v4828 = vpop.f32.mrf.mxu0
    %4829 = vmatmul.bf16.gmra.mxu0 %v3970
    %v4830 = vpop.f32.mrf.mxu0
    %v4831 = vadd.f32 %v4596, %v4830
    %v4832 = vpop.f32.mrf.mxu0
    %v4833 = vadd.f32 %v4598, %v4832
    %4834 = vmatmul.bf16.gmra.mxu0 %v3972
    %v4835 = vpop.f32.mrf.mxu0
    %v4836 = vpop.f32.mrf.mxu0
    %v4837 = vadd.f32 %v4602, %v4836
    %4838 = vmatmul.bf16.gmra.mxu0 %v3974
    %v4839 = vpop.f32.mrf.mxu0
    %v4840 = vadd.f32 %v4605, %v4839
    %v4841 = vpop.f32.mrf.mxu0
    %4842 = vmatmul.bf16.gmra.mxu0 %v3976
    %v4843 = vpop.f32.mrf.mxu0
    %v4844 = vadd.f32 %v4609, %v4843
    %v4845 = vpop.f32.mrf.mxu0
    %v4846 = vadd.f32 %v4611, %v4845
    %4847 = vmatmul.bf16.gmra.mxu0 %v3978
    %v4848 = vpop.f32.mrf.mxu0
    %v4849 = vpop.f32.mrf.mxu0
    %v4850 = vadd.f32 %v4615, %v4849
    %4851 = vmatmul.bf16.gmra.mxu0 %v3980
    %v4852 = vpop.f32.mrf.mxu0
    %v4853 = vadd.f32 %v4618, %v4852
    %v4854 = vpop.f32.mrf.mxu0
    %4855 = vmatmul.bf16.gmra.mxu0 %v3982
    %v4856 = vpop.f32.mrf.mxu0
    %v4857 = vadd.f32 %v4622, %v4856
    %v4858 = vpop.f32.mrf.mxu0
    %v4859 = vadd.f32 %v4624, %v4858
    %4860 = vmatmul.bf16.gmra.mxu0 %v3984
    %v4861 = vpop.f32.mrf.mxu0
    %v4862 = vpop.f32.mrf.mxu0
    %v4863 = vadd.f32 %v4628, %v4862
    %4864 = vmatmul.bf16.gmra.mxu0 %v3986
    %v4865 = vpop.f32.mrf.mxu0
    %v4866 = vadd.f32 %v4631, %v4865
    %v4867 = vpop.f32.mrf.mxu0
    %4868 = vmatmul.bf16.gmra.mxu0 %v3988
    %v4869 = vpop.f32.mrf.mxu0
    %v4870 = vadd.f32 %v4635, %v4869
    %v4871 = vpop.f32.mrf.mxu0
    %v4872 = vadd.f32 %v4637, %v4871
    %4873 = vmatmul.bf16.gmra.mxu0 %v3990
    %v4874 = vpop.f32.mrf.mxu0
    %v4875 = vpop.f32.mrf.mxu0
    %v4876 = vadd.f32 %v4641, %v4875
    %4877 = vmatmul.bf16.gmra.mxu0 %v3992
    %v4878 = vpop.f32.mrf.mxu0
    %v4879 = vadd.f32 %v4644, %v4878
    %v4880 = vpop.f32.mrf.mxu0
    %4881 = vmatmul.bf16.gmra.mxu0 %v3994
    %v4882 = vpop.f32.mrf.mxu0
    %v4883 = vpop.f32.mrf.mxu0
    %4884 = vmatmul.bf16.gmra.mxu0 %v3996
    %v4885 = vpop.f32.mrf.mxu0
    %v4886 = vpop.f32.mrf.mxu0
    %4887 = vmatmul.bf16.gmra.mxu0 %v3998
    %v4888 = vpop.f32.mrf.mxu0
    %v4889 = vpop.f32.mrf.mxu0
    %4890 = vmatmul.bf16.gmra.mxu0 %v4000
    %v4891 = vpop.f32.mrf.mxu0
    %v4892 = vadd.f32 %v4657, %v4891
    %v4893 = vpop.f32.mrf.mxu0
    %v4894 = vadd.f32 %v4659, %v4893
    %4895 = vmatmul.bf16.gmra.mxu0 %v4002
    %v4896 = vpop.f32.mrf.mxu0
    %v4897 = vpop.f32.mrf.mxu0
    %v4898 = vadd.f32 %v4663, %v4897
    %4899 = vmatmul.bf16.gmra.mxu0 %v4004
    %v4900 = vpop.f32.mrf.mxu0
    %v4901 = vadd.f32 %v4666, %v4900
    %v4902 = vpop.f32.mrf.mxu0
    %4903 = vmatmul.bf16.gmra.mxu0 %v4006
    %v4904 = vpop.f32.mrf.mxu0
    %v4905 = vadd.f32 %v4670, %v4904
    %v4906 = vpop.f32.mrf.mxu0
    %v4907 = vadd.f32 %v4672, %v4906
    %4908 = vmatmul.bf16.gmra.mxu0 %v4008
    %v4909 = vpop.f32.mrf.mxu0
    %v4910 = vpop.f32.mrf.mxu0
    %v4911 = vadd.f32 %v4676, %v4910
    %4912 = vmatmul.bf16.gmra.mxu0 %v4010
    %v4913 = vpop.f32.mrf.mxu0
    %v4914 = vadd.f32 %v4679, %v4913
    %v4915 = vpop.f32.mrf.mxu0
    %4916 = vmatmul.bf16.gmra.mxu0 %v4012
    %v4917 = vpop.f32.mrf.mxu0
    %v4918 = vadd.f32 %v4683, %v4917
    %v4919 = vpop.f32.mrf.mxu0
    %v4920 = vadd.f32 %v4685, %v4919
    %4921 = vmatmul.bf16.gmra.mxu0 %v4014
    %v4922 = vpop.f32.mrf.mxu0
    %v4923 = vpop.f32.mrf.mxu0
    %v4924 = vadd.f32 %v4689, %v4923
    %4925 = vmatmul.bf16.gmra.mxu0 %v4016
    %v4926 = vpop.f32.mrf.mxu0
    %v4927 = vadd.f32 %v4692, %v4926
    %v4928 = vpop.f32.mrf.mxu0
    %4929 = vmatmul.bf16.gmra.mxu0 %v4018
    %v4930 = vpop.f32.mrf.mxu0
    %v4931 = vadd.f32 %v4696, %v4930
    %v4932 = vpop.f32.mrf.mxu0
    %v4933 = vadd.f32 %v4698, %v4932
    %4934 = vmatmul.bf16.gmra.mxu0 %v4020
    %v4935 = vpop.f32.mrf.mxu0
    %v4936 = vpop.f32.mrf.mxu0
    %v4937 = vadd.f32 %v4702, %v4936
    %4938 = vmatmul.bf16.gmra.mxu0 %v4022
    %v4939 = vpop.f32.mrf.mxu0
    %v4940 = vadd.f32 %v4705, %v4939
    %v4941 = vpop.f32.mrf.mxu0
    %4942 = vmatmul.bf16.gmra.mxu0 %v4024
    %v4943 = vpop.f32.mrf.mxu0
    %v4944 = vadd.f32 %v4709, %v4943
    %v4945 = vpop.f32.mrf.mxu0
    %v4946 = vadd.f32 %v4711, %v4945
    %4947 = vmatmul.bf16.gmra.mxu0 %v4026
    %v4948 = vpop.f32.mrf.mxu0
    %v4949 = vpop.f32.mrf.mxu0
    %v4950 = vadd.f32 %v4715, %v4949
    %4951 = vmatmul.bf16.gmra.mxu0 %v4028
    %v4952 = vpop.f32.mrf.mxu0
    %v4953 = vadd.f32 %v4718, %v4952
    %v4954 = vpop.f32.mrf.mxu0
    %4955 = vmatmul.bf16.gmra.mxu0 %v4030
    %v4956 = vpop.f32.mrf.mxu0
    %v4957 = vadd.f32 %v4722, %v4956
    %v4958 = vpop.f32.mrf.mxu0
    %v4959 = vadd.f32 %v4724, %v4958
    %4960 = vmatmul.bf16.gmra.mxu0 %v4032
    %v4961 = vpop.f32.mrf.mxu0
    %v4962 = vpop.f32.mrf.mxu0
    %v4963 = vadd.f32 %v4728, %v4962
    %4964 = vmatmul.bf16.gmra.mxu0 %v4034
    %v4965 = vpop.f32.mrf.mxu0
    %v4966 = vadd.f32 %v4731, %v4965
    %v4967 = vpop.f32.mrf.mxu0
    %4968 = vmatmul.bf16.gmra.mxu0 %v4036
    %v4969 = vpop.f32.mrf.mxu0
    %v4970 = vadd.f32 %v4735, %v4969
    %v4971 = vpop.f32.mrf.mxu0
    %v4972 = vadd.f32 %v4737, %v4971
    %4973 = vmatmul.bf16.gmra.mxu0 %v4038
    %v4974 = vpop.f32.mrf.mxu0
    %v4975 = vpop.f32.mrf.mxu0
    %v4976 = vadd.f32 %v4741, %v4975
    %4977 = vmatmul.bf16.gmra.mxu0 %v4040
    %v4978 = vpop.f32.mrf.mxu0
    %v4979 = vadd.f32 %v4744, %v4978
    %v4980 = vpop.f32.mrf.mxu0
    %4981 = vmatmul.bf16.gmra.mxu0 %v4042
    %v4982 = vpop.f32.mrf.mxu0
    %v4983 = vadd.f32 %v4748, %v4982
    %v4984 = vpop.f32.mrf.mxu0
    %v4985 = vadd.f32 %v4750, %v4984
    %4986 = vmatmul.bf16.gmra.mxu0 %v4044
    %v4987 = vpop.f32.mrf.mxu0
    %v4988 = vpop.f32.mrf.mxu0
    %v4989 = vadd.f32 %v4754, %v4988
    %4990 = vmatmul.bf16.gmra.mxu0 %v4046
    %v4991 = vpop.f32.mrf.mxu0
    %v4992 = vadd.f32 %v4757, %v4991
    %v4993 = vpop.f32.mrf.mxu0
    %4994 = vmatmul.bf16.gmra.mxu0 %v4048
    %v4995 = vpop.f32.mrf.mxu0
    %v4996 = vpop.f32.mrf.mxu0
    %4997 = vmatmul.bf16.gmra.mxu0 %v4050
    %v4998 = vpop.f32.mrf.mxu0
    %v4999 = vpop.f32.mrf.mxu0
    %5000 = vmatmul.bf16.gmra.mxu0 %v4052
    %v5001 = vpop.f32.mrf.mxu0
    %v5002 = vpop.f32.mrf.mxu0
    %5003 = vdwg.mxu0
    %v5052 = vunpack.c.l.b16 %v3281
    %v5053 = vunpack.c.l.b16 %v3282
    %v5054 = vunpack.c.l.b16 %v3283
    %v5055 = vunpack.c.l.b16 %v3284
    %v5056 = vunpack.c.l.b16 %v3285
    %v5057 = vunpack.c.l.b16 %v3286
    %v5058 = vunpack.c.l.b16 %v3287
    %v5059 = vunpack.c.l.b16 %v3288
    %v5060 = vunpack.c.l.b16 %v3289
    %v5061 = vunpack.c.l.b16 %v3290
    %v5062 = vunpack.c.l.b16 %v3291
    %v5063 = vunpack.c.l.b16 %v3292
    %v5064 = vunpack.c.l.b16 %v3293
    %v5065 = vunpack.c.l.b16 %v3294
    %v5066 = vunpack.c.l.b16 %v3295
    %v5067 = vunpack.c.l.b16 %v3296
    %v5068 = vunpack.c.l.b16 %v3297
    %v5069 = vunpack.c.l.b16 %v3298
    %v5070 = vunpack.c.l.b16 %v3299
    %v5071 = vunpack.c.l.b16 %v3300
    %v5072 = vunpack.c.l.b16 %v3301
    %v5073 = vunpack.c.l.b16 %v3302
    %v5074 = vunpack.c.l.b16 %v3303
    %v5075 = vunpack.c.l.b16 %v3304
    %v5076 = vunpack.c.l.b16 %v3305
    %v5077 = vunpack.c.l.b16 %v3306
    %v5078 = vunpack.c.l.b16 %v3307
    %v5079 = vunpack.c.l.b16 %v3308
    %v5080 = vunpack.c.l.b16 %v3309
    %v5081 = vunpack.c.l.b16 %v3310
    %v5082 = vunpack.c.l.b16 %v3311
    %v5083 = vunpack.c.l.b16 %v3312
    %v5084 = vunpack.c.l.b16 %v3313
    %v5085 = vunpack.c.l.b16 %v3314
    %v5086 = vunpack.c.l.b16 %v3315
    %v5087 = vunpack.c.l.b16 %v3316
    %v5088 = vunpack.c.l.b16 %v3317
    %v5089 = vunpack.c.l.b16 %v3318
    %v5090 = vunpack.c.l.b16 %v3319
    %v5091 = vunpack.c.l.b16 %v3320
    %v5092 = vunpack.c.l.b16 %v3321
    %v5093 = vunpack.c.l.b16 %v3322
    %v5094 = vunpack.c.l.b16 %v3323
    %v5095 = vunpack.c.l.b16 %v3324
    %v5096 = vunpack.c.l.b16 %v3325
    %v5097 = vunpack.c.l.b16 %v3326
    %v5098 = vunpack.c.l.b16 %v3327
    %v5099 = vunpack.c.l.b16 %v3328
    %v5100 = vpack.c.b16 %v5053, %v5052
    %v5101 = vpack.c.b16 %v5055, %v5054
    %v5102 = vpack.c.b16 %v5057, %v5056
    %v5103 = vpack.c.b16 %v5059, %v5058
    %v5104 = vpack.c.b16 %v5061, %v5060
    %v5105 = vpack.c.b16 %v5063, %v5062
    %v5106 = vpack.c.b16 %v5065, %v5064
    %v5107 = vpack.c.b16 %v5067, %v5066
    %v5108 = vpack.c.b16 %v5069, %v5068
    %v5109 = vpack.c.b16 %v5071, %v5070
    %v5110 = vpack.c.b16 %v5073, %v5072
    %v5111 = vpack.c.b16 %v5075, %v5074
    %v5112 = vpack.c.b16 %v5077, %v5076
    %v5113 = vpack.c.b16 %v5079, %v5078
    %v5114 = vpack.c.b16 %v5081, %v5080
    %v5115 = vpack.c.b16 %v5083, %v5082
    %v5116 = vpack.c.b16 %v5085, %v5084
    %v5117 = vpack.c.b16 %v5087, %v5086
    %v5118 = vpack.c.b16 %v5089, %v5088
    %v5119 = vpack.c.b16 %v5091, %v5090
    %v5120 = vpack.c.b16 %v5093, %v5092
    %v5121 = vpack.c.b16 %v5095, %v5094
    %v5122 = vpack.c.b16 %v5097, %v5096
    %v5123 = vpack.c.b16 %v5099, %v5098
    %5148 = vmatpush.bf16.msra.mxu0 %v5107
    %5149 = vmatpush.bf16.msra.mxu0 %v5106
    %5150 = vmatpush.bf16.msra.mxu0 %v5105
    %5151 = vmatpush.bf16.msra.mxu0 %v5104
    %5152 = vmatpush.bf16.msra.mxu0 %v5103
    %5153 = vmatpush.bf16.msra.mxu0 %v5102
    %5154 = vmatpush.bf16.msra.mxu0 %v5101
    %5155 = vmatpush.bf16.msra.mxu0 %v5100
    %5156 = vmatmul.bf16.gmra.mxu0 %v2512
    %v5157 = vpop.f32.mrf.mxu0
    %v5158 = vadd.f32 %v4779, %v5157
    %v5159 = vpop.f32.mrf.mxu0
    %v5160 = vadd.f32 %v4781, %v5159
    %5161 = vmatmul.bf16.gmra.mxu0 %v2513
    %v5162 = vpop.f32.mrf.mxu0
    %v5163 = vpop.f32.mrf.mxu0
    %v5164 = vadd.f32 %v4785, %v5163
    %5165 = vmatmul.bf16.gmra.mxu0 %v2514
    %v5166 = vpop.f32.mrf.mxu0
    %v5167 = vadd.f32 %v4788, %v5166
    %v5168 = vpop.f32.mrf.mxu0
    %5169 = vmatmul.bf16.gmra.mxu0 %v2515
    %v5170 = vpop.f32.mrf.mxu0
    %v5171 = vadd.f32 %v4792, %v5170
    %v5172 = vpop.f32.mrf.mxu0
    %v5173 = vadd.f32 %v4794, %v5172
    %5174 = vmatmul.bf16.gmra.mxu0 %v2516
    %v5175 = vpop.f32.mrf.mxu0
    %v5176 = vpop.f32.mrf.mxu0
    %v5177 = vadd.f32 %v4798, %v5176
    %5178 = vmatmul.bf16.gmra.mxu0 %v2517
    %v5179 = vpop.f32.mrf.mxu0
    %v5180 = vadd.f32 %v4801, %v5179
    %v5181 = vpop.f32.mrf.mxu0
    %5182 = vmatmul.bf16.gmra.mxu0 %v2518
    %v5183 = vpop.f32.mrf.mxu0
    %v5184 = vadd.f32 %v4805, %v5183
    %v5185 = vpop.f32.mrf.mxu0
    %v5186 = vadd.f32 %v4807, %v5185
    %5187 = vmatmul.bf16.gmra.mxu0 %v2519
    %v5188 = vpop.f32.mrf.mxu0
    %v5189 = vpop.f32.mrf.mxu0
    %v5190 = vadd.f32 %v4811, %v5189
    %5191 = vmatmul.bf16.gmra.mxu0 %v2520
    %v5192 = vpop.f32.mrf.mxu0
    %v5193 = vadd.f32 %v4814, %v5192
    %v5194 = vpop.f32.mrf.mxu0
    %5195 = vmatmul.bf16.gmra.mxu0 %v2521
    %v5196 = vpop.f32.mrf.mxu0
    %v5197 = vadd.f32 %v4818, %v5196
    %v5198 = vpop.f32.mrf.mxu0
    %v5199 = vadd.f32 %v4820, %v5198
    %5200 = vmatmul.bf16.gmra.mxu0 %v2522
    %v5201 = vpop.f32.mrf.mxu0
    %v5202 = vpop.f32.mrf.mxu0
    %v5203 = vadd.f32 %v4824, %v5202
    %5204 = vmatmul.bf16.gmra.mxu0 %v2523
    %v5205 = vpop.f32.mrf.mxu0
    %v5206 = vadd.f32 %v4827, %v5205
    %v5207 = vpop.f32.mrf.mxu0
    %5208 = vmatmul.bf16.gmra.mxu0 %v2524
    %v5209 = vpop.f32.mrf.mxu0
    %v5210 = vadd.f32 %v4831, %v5209
    %v5211 = vpop.f32.mrf.mxu0
    %v5212 = vadd.f32 %v4833, %v5211
    %5213 = vmatmul.bf16.gmra.mxu0 %v2525
    %v5214 = vpop.f32.mrf.mxu0
    %v5215 = vpop.f32.mrf.mxu0
    %v5216 = vadd.f32 %v4837, %v5215
    %5217 = vmatmul.bf16.gmra.mxu0 %v2526
    %v5218 = vpop.f32.mrf.mxu0
    %v5219 = vadd.f32 %v4840, %v5218
    %v5220 = vpop.f32.mrf.mxu0
    %5221 = vmatmul.bf16.gmra.mxu0 %v2527
    %v5222 = vpop.f32.mrf.mxu0
    %v5223 = vadd.f32 %v4844, %v5222
    %v5224 = vpop.f32.mrf.mxu0
    %v5225 = vadd.f32 %v4846, %v5224
    %5226 = vmatmul.bf16.gmra.mxu0 %v2528
    %v5227 = vpop.f32.mrf.mxu0
    %v5228 = vpop.f32.mrf.mxu0
    %v5229 = vadd.f32 %v4850, %v5228
    %5230 = vmatmul.bf16.gmra.mxu0 %v2529
    %v5231 = vpop.f32.mrf.mxu0
    %v5232 = vadd.f32 %v4853, %v5231
    %v5233 = vpop.f32.mrf.mxu0
    %5234 = vmatmul.bf16.gmra.mxu0 %v2530
    %v5235 = vpop.f32.mrf.mxu0
    %v5236 = vadd.f32 %v4857, %v5235
    %v5237 = vpop.f32.mrf.mxu0
    %v5238 = vadd.f32 %v4859, %v5237
    %5239 = vmatmul.bf16.gmra.mxu0 %v2531
    %v5240 = vpop.f32.mrf.mxu0
    %v5241 = vpop.f32.mrf.mxu0
    %v5242 = vadd.f32 %v4863, %v5241
    %5243 = vmatmul.bf16.gmra.mxu0 %v2532
    %v5244 = vpop.f32.mrf.mxu0
    %v5245 = vadd.f32 %v4866, %v5244
    %v5246 = vpop.f32.mrf.mxu0
    %5247 = vmatmul.bf16.gmra.mxu0 %v2533
    %v5248 = vpop.f32.mrf.mxu0
    %v5249 = vadd.f32 %v4870, %v5248
    %v5250 = vpop.f32.mrf.mxu0
    %v5251 = vadd.f32 %v4872, %v5250
    %5252 = vmatmul.bf16.gmra.mxu0 %v2534
    %v5253 = vpop.f32.mrf.mxu0
    %v5254 = vpop.f32.mrf.mxu0
    %v5255 = vadd.f32 %v4876, %v5254
    %5256 = vmatmul.bf16.gmra.mxu0 %v2535
    %v5257 = vpop.f32.mrf.mxu0
    %v5258 = vadd.f32 %v4879, %v5257
    %v5259 = vpop.f32.mrf.mxu0
    %5260 = vmatmul.bf16.gmra.mxu0 %v2536
    %v5261 = vpop.f32.mrf.mxu0
    %v5262 = vpop.f32.mrf.mxu0
    %5263 = vmatmul.bf16.gmra.mxu0 %v2537
    %v5264 = vpop.f32.mrf.mxu0
    %v5265 = vpop.f32.mrf.mxu0
    %5266 = vmatmul.bf16.gmra.mxu0 %v2538
    %v5267 = vpop.f32.mrf.mxu0
    %v5268 = vpop.f32.mrf.mxu0
    %5269 = vmatmul.bf16.gmra.mxu0 %v2539
    %v5270 = vpop.f32.mrf.mxu0
    %v5271 = vadd.f32 %v4892, %v5270
    %v5272 = vpop.f32.mrf.mxu0
    %v5273 = vadd.f32 %v4894, %v5272
    %5274 = vmatmul.bf16.gmra.mxu0 %v2540
    %v5275 = vpop.f32.mrf.mxu0
    %v5276 = vpop.f32.mrf.mxu0
    %v5277 = vadd.f32 %v4898, %v5276
    %5278 = vmatmul.bf16.gmra.mxu0 %v2541
    %v5279 = vpop.f32.mrf.mxu0
    %v5280 = vadd.f32 %v4901, %v5279
    %v5281 = vpop.f32.mrf.mxu0
    %5282 = vmatmul.bf16.gmra.mxu0 %v2542
    %v5283 = vpop.f32.mrf.mxu0
    %v5284 = vadd.f32 %v4905, %v5283
    %v5285 = vpop.f32.mrf.mxu0
    %v5286 = vadd.f32 %v4907, %v5285
    %5287 = vmatmul.bf16.gmra.mxu0 %v2543
    %v5288 = vpop.f32.mrf.mxu0
    %v5289 = vpop.f32.mrf.mxu0
    %v5290 = vadd.f32 %v4911, %v5289
    %5291 = vmatmul.bf16.gmra.mxu0 %v2544
    %v5292 = vpop.f32.mrf.mxu0
    %v5293 = vadd.f32 %v4914, %v5292
    %v5294 = vpop.f32.mrf.mxu0
    %5295 = vmatmul.bf16.gmra.mxu0 %v2545
    %v5296 = vpop.f32.mrf.mxu0
    %v5297 = vadd.f32 %v4918, %v5296
    %v5298 = vpop.f32.mrf.mxu0
    %v5299 = vadd.f32 %v4920, %v5298
    %5300 = vmatmul.bf16.gmra.mxu0 %v2546
    %v5301 = vpop.f32.mrf.mxu0
    %v5302 = vpop.f32.mrf.mxu0
    %v5303 = vadd.f32 %v4924, %v5302
    %5304 = vmatmul.bf16.gmra.mxu0 %v2547
    %v5305 = vpop.f32.mrf.mxu0
    %v5306 = vadd.f32 %v4927, %v5305
    %v5307 = vpop.f32.mrf.mxu0
    %5308 = vmatmul.bf16.gmra.mxu0 %v2548
    %v5309 = vpop.f32.mrf.mxu0
    %v5310 = vadd.f32 %v4931, %v5309
    %v5311 = vpop.f32.mrf.mxu0
    %v5312 = vadd.f32 %v4933, %v5311
    %5313 = vmatmul.bf16.gmra.mxu0 %v2549
    %v5314 = vpop.f32.mrf.mxu0
    %v5315 = vpop.f32.mrf.mxu0
    %v5316 = vadd.f32 %v4937, %v5315
    %5317 = vmatmul.bf16.gmra.mxu0 %v2550
    %v5318 = vpop.f32.mrf.mxu0
    %v5319 = vadd.f32 %v4940, %v5318
    %v5320 = vpop.f32.mrf.mxu0
    %5321 = vmatmul.bf16.gmra.mxu0 %v2551
    %v5322 = vpop.f32.mrf.mxu0
    %v5323 = vadd.f32 %v4944, %v5322
    %v5324 = vpop.f32.mrf.mxu0
    %v5325 = vadd.f32 %v4946, %v5324
    %5326 = vmatmul.bf16.gmra.mxu0 %v2552
    %v5327 = vpop.f32.mrf.mxu0
    %v5328 = vpop.f32.mrf.mxu0
    %v5329 = vadd.f32 %v4950, %v5328
    %5330 = vmatmul.bf16.gmra.mxu0 %v2553
    %v5331 = vpop.f32.mrf.mxu0
    %v5332 = vadd.f32 %v4953, %v5331
    %v5333 = vpop.f32.mrf.mxu0
    %5334 = vmatmul.bf16.gmra.mxu0 %v2554
    %v5335 = vpop.f32.mrf.mxu0
    %v5336 = vadd.f32 %v4957, %v5335
    %v5337 = vpop.f32.mrf.mxu0
    %v5338 = vadd.f32 %v4959, %v5337
    %5339 = vmatmul.bf16.gmra.mxu0 %v2555
    %v5340 = vpop.f32.mrf.mxu0
    %v5341 = vpop.f32.mrf.mxu0
    %v5342 = vadd.f32 %v4963, %v5341
    %5343 = vmatmul.bf16.gmra.mxu0 %v2556
    %v5344 = vpop.f32.mrf.mxu0
    %v5345 = vadd.f32 %v4966, %v5344
    %v5346 = vpop.f32.mrf.mxu0
    %5347 = vmatmul.bf16.gmra.mxu0 %v2557
    %v5348 = vpop.f32.mrf.mxu0
    %v5349 = vadd.f32 %v4970, %v5348
    %v5350 = vpop.f32.mrf.mxu0
    %v5351 = vadd.f32 %v4972, %v5350
    %5352 = vmatmul.bf16.gmra.mxu0 %v2558
    %v5353 = vpop.f32.mrf.mxu0
    %v5354 = vpop.f32.mrf.mxu0
    %v5355 = vadd.f32 %v4976, %v5354
    %5356 = vmatmul.bf16.gmra.mxu0 %v2559
    %v5357 = vpop.f32.mrf.mxu0
    %v5358 = vadd.f32 %v4979, %v5357
    %v5359 = vpop.f32.mrf.mxu0
    %5360 = vmatmul.bf16.gmra.mxu0 %v2560
    %v5361 = vpop.f32.mrf.mxu0
    %v5362 = vadd.f32 %v4983, %v5361
    %v5363 = vpop.f32.mrf.mxu0
    %v5364 = vadd.f32 %v4985, %v5363
    %5365 = vmatmul.bf16.gmra.mxu0 %v2561
    %v5366 = vpop.f32.mrf.mxu0
    %v5367 = vpop.f32.mrf.mxu0
    %v5368 = vadd.f32 %v4989, %v5367
    %5369 = vmatmul.bf16.gmra.mxu0 %v2562
    %v5370 = vpop.f32.mrf.mxu0
    %v5371 = vadd.f32 %v4992, %v5370
    %v5372 = vpop.f32.mrf.mxu0
    %5373 = vmatmul.bf16.gmra.mxu0 %v2563
    %v5374 = vpop.f32.mrf.mxu0
    %v5375 = vpop.f32.mrf.mxu0
    %5376 = vmatmul.bf16.gmra.mxu0 %v2564
    %v5377 = vpop.f32.mrf.mxu0
    %v5378 = vpop.f32.mrf.mxu0
    %5379 = vmatmul.bf16.gmra.mxu0 %v2565
    %v5380 = vpop.f32.mrf.mxu0
    %v5381 = vpop.f32.mrf.mxu0
    %5382 = vdwg.mxu0
    %5383 = vmatpush.bf16.msra.mxu0 %v5115
    %5384 = vmatpush.bf16.msra.mxu0 %v5114
    %5385 = vmatpush.bf16.msra.mxu0 %v5113
    %5386 = vmatpush.bf16.msra.mxu0 %v5112
    %5387 = vmatpush.bf16.msra.mxu0 %v5111
    %5388 = vmatpush.bf16.msra.mxu0 %v5110
    %5389 = vmatpush.bf16.msra.mxu0 %v5109
    %5390 = vmatpush.bf16.msra.mxu0 %v5108
    %5391 = vmatmul.bf16.gmra.mxu0 %v2635
    %v5392 = vpop.f32.mrf.mxu0
    %v5393 = vadd.f32 %v5158, %v5392
    %v5394 = vpop.f32.mrf.mxu0
    %v5395 = vadd.f32 %v5160, %v5394
    %5396 = vmatmul.bf16.gmra.mxu0 %v2643
    %v5397 = vpop.f32.mrf.mxu0
    %v5398 = vpop.f32.mrf.mxu0
    %v5399 = vadd.f32 %v5164, %v5398
    %5400 = vmatmul.bf16.gmra.mxu0 %v2651
    %v5401 = vpop.f32.mrf.mxu0
    %v5402 = vadd.f32 %v5167, %v5401
    %v5403 = vpop.f32.mrf.mxu0
    %5404 = vmatmul.bf16.gmra.mxu0 %v2659
    %v5405 = vpop.f32.mrf.mxu0
    %v5406 = vadd.f32 %v5171, %v5405
    %v5407 = vpop.f32.mrf.mxu0
    %v5408 = vadd.f32 %v5173, %v5407
    %5409 = vmatmul.bf16.gmra.mxu0 %v2667
    %v5410 = vpop.f32.mrf.mxu0
    %v5411 = vpop.f32.mrf.mxu0
    %v5412 = vadd.f32 %v5177, %v5411
    %5413 = vmatmul.bf16.gmra.mxu0 %v2675
    %v5414 = vpop.f32.mrf.mxu0
    %v5415 = vadd.f32 %v5180, %v5414
    %v5416 = vpop.f32.mrf.mxu0
    %5417 = vmatmul.bf16.gmra.mxu0 %v2683
    %v5418 = vpop.f32.mrf.mxu0
    %v5419 = vadd.f32 %v5184, %v5418
    %v5420 = vpop.f32.mrf.mxu0
    %v5421 = vadd.f32 %v5186, %v5420
    %5422 = vmatmul.bf16.gmra.mxu0 %v2691
    %v5423 = vpop.f32.mrf.mxu0
    %v5424 = vpop.f32.mrf.mxu0
    %v5425 = vadd.f32 %v5190, %v5424
    %5426 = vmatmul.bf16.gmra.mxu0 %v2699
    %v5427 = vpop.f32.mrf.mxu0
    %v5428 = vadd.f32 %v5193, %v5427
    %v5429 = vpop.f32.mrf.mxu0
    %5430 = vmatmul.bf16.gmra.mxu0 %v2707
    %v5431 = vpop.f32.mrf.mxu0
    %v5432 = vadd.f32 %v5197, %v5431
    %v5433 = vpop.f32.mrf.mxu0
    %v5434 = vadd.f32 %v5199, %v5433
    %5435 = vmatmul.bf16.gmra.mxu0 %v2715
    %v5436 = vpop.f32.mrf.mxu0
    %v5437 = vpop.f32.mrf.mxu0
    %v5438 = vadd.f32 %v5203, %v5437
    %5439 = vmatmul.bf16.gmra.mxu0 %v2723
    %v5440 = vpop.f32.mrf.mxu0
    %v5441 = vadd.f32 %v5206, %v5440
    %v5442 = vpop.f32.mrf.mxu0
    %5443 = vmatmul.bf16.gmra.mxu0 %v2731
    %v5444 = vpop.f32.mrf.mxu0
    %v5445 = vadd.f32 %v5210, %v5444
    %v5446 = vpop.f32.mrf.mxu0
    %v5447 = vadd.f32 %v5212, %v5446
    %5448 = vmatmul.bf16.gmra.mxu0 %v2739
    %v5449 = vpop.f32.mrf.mxu0
    %v5450 = vpop.f32.mrf.mxu0
    %v5451 = vadd.f32 %v5216, %v5450
    %5452 = vmatmul.bf16.gmra.mxu0 %v2747
    %v5453 = vpop.f32.mrf.mxu0
    %v5454 = vadd.f32 %v5219, %v5453
    %v5455 = vpop.f32.mrf.mxu0
    %5456 = vmatmul.bf16.gmra.mxu0 %v2755
    %v5457 = vpop.f32.mrf.mxu0
    %v5458 = vadd.f32 %v5223, %v5457
    %v5459 = vpop.f32.mrf.mxu0
    %v5460 = vadd.f32 %v5225, %v5459
    %5461 = vmatmul.bf16.gmra.mxu0 %v2763
    %v5462 = vpop.f32.mrf.mxu0
    %v5463 = vpop.f32.mrf.mxu0
    %v5464 = vadd.f32 %v5229, %v5463
    %5465 = vmatmul.bf16.gmra.mxu0 %v2771
    %v5466 = vpop.f32.mrf.mxu0
    %v5467 = vadd.f32 %v5232, %v5466
    %v5468 = vpop.f32.mrf.mxu0
    %5469 = vmatmul.bf16.gmra.mxu0 %v2779
    %v5470 = vpop.f32.mrf.mxu0
    %v5471 = vadd.f32 %v5236, %v5470
    %v5472 = vpop.f32.mrf.mxu0
    %v5473 = vadd.f32 %v5238, %v5472
    %5474 = vmatmul.bf16.gmra.mxu0 %v2787
    %v5475 = vpop.f32.mrf.mxu0
    %v5476 = vpop.f32.mrf.mxu0
    %v5477 = vadd.f32 %v5242, %v5476
    %5478 = vmatmul.bf16.gmra.mxu0 %v2795
    %v5479 = vpop.f32.mrf.mxu0
    %v5480 = vadd.f32 %v5245, %v5479
    %v5481 = vpop.f32.mrf.mxu0
    %5482 = vmatmul.bf16.gmra.mxu0 %v2803
    %v5483 = vpop.f32.mrf.mxu0
    %v5484 = vadd.f32 %v5249, %v5483
    %v5485 = vpop.f32.mrf.mxu0
    %v5486 = vadd.f32 %v5251, %v5485
    %5487 = vmatmul.bf16.gmra.mxu0 %v2811
    %v5488 = vpop.f32.mrf.mxu0
    %v5489 = vpop.f32.mrf.mxu0
    %v5490 = vadd.f32 %v5255, %v5489
    %5491 = vmatmul.bf16.gmra.mxu0 %v2819
    %v5492 = vpop.f32.mrf.mxu0
    %v5493 = vadd.f32 %v5258, %v5492
    %v5494 = vpop.f32.mrf.mxu0
    %5495 = vmatmul.bf16.gmra.mxu0 %v2827
    %v5496 = vpop.f32.mrf.mxu0
    %v5497 = vpop.f32.mrf.mxu0
    %5498 = vmatmul.bf16.gmra.mxu0 %v2835
    %v5499 = vpop.f32.mrf.mxu0
    %v5500 = vpop.f32.mrf.mxu0
    %5501 = vmatmul.bf16.gmra.mxu0 %v2843
    %v5502 = vpop.f32.mrf.mxu0
    %v5503 = vpop.f32.mrf.mxu0
    %5504 = vmatmul.bf16.gmra.mxu0 %v2851
    %v5505 = vpop.f32.mrf.mxu0
    %v5506 = vadd.f32 %v5271, %v5505
    %v5507 = vpop.f32.mrf.mxu0
    %v5508 = vadd.f32 %v5273, %v5507
    %5509 = vmatmul.bf16.gmra.mxu0 %v2859
    %v5510 = vpop.f32.mrf.mxu0
    %v5511 = vpop.f32.mrf.mxu0
    %v5512 = vadd.f32 %v5277, %v5511
    %5513 = vmatmul.bf16.gmra.mxu0 %v2867
    %v5514 = vpop.f32.mrf.mxu0
    %v5515 = vadd.f32 %v5280, %v5514
    %v5516 = vpop.f32.mrf.mxu0
    %5517 = vmatmul.bf16.gmra.mxu0 %v2875
    %v5518 = vpop.f32.mrf.mxu0
    %v5519 = vadd.f32 %v5284, %v5518
    %v5520 = vpop.f32.mrf.mxu0
    %v5521 = vadd.f32 %v5286, %v5520
    %5522 = vmatmul.bf16.gmra.mxu0 %v2883
    %v5523 = vpop.f32.mrf.mxu0
    %v5524 = vpop.f32.mrf.mxu0
    %v5525 = vadd.f32 %v5290, %v5524
    %5526 = vmatmul.bf16.gmra.mxu0 %v2891
    %v5527 = vpop.f32.mrf.mxu0
    %v5528 = vadd.f32 %v5293, %v5527
    %v5529 = vpop.f32.mrf.mxu0
    %5530 = vmatmul.bf16.gmra.mxu0 %v2899
    %v5531 = vpop.f32.mrf.mxu0
    %v5532 = vadd.f32 %v5297, %v5531
    %v5533 = vpop.f32.mrf.mxu0
    %v5534 = vadd.f32 %v5299, %v5533
    %5535 = vmatmul.bf16.gmra.mxu0 %v2907
    %v5536 = vpop.f32.mrf.mxu0
    %v5537 = vpop.f32.mrf.mxu0
    %v5538 = vadd.f32 %v5303, %v5537
    %5539 = vmatmul.bf16.gmra.mxu0 %v2915
    %v5540 = vpop.f32.mrf.mxu0
    %v5541 = vadd.f32 %v5306, %v5540
    %v5542 = vpop.f32.mrf.mxu0
    %5543 = vmatmul.bf16.gmra.mxu0 %v2923
    %v5544 = vpop.f32.mrf.mxu0
    %v5545 = vadd.f32 %v5310, %v5544
    %v5546 = vpop.f32.mrf.mxu0
    %v5547 = vadd.f32 %v5312, %v5546
    %5548 = vmatmul.bf16.gmra.mxu0 %v2931
    %v5549 = vpop.f32.mrf.mxu0
    %v5550 = vpop.f32.mrf.mxu0
    %v5551 = vadd.f32 %v5316, %v5550
    %5552 = vmatmul.bf16.gmra.mxu0 %v2939
    %v5553 = vpop.f32.mrf.mxu0
    %v5554 = vadd.f32 %v5319, %v5553
    %v5555 = vpop.f32.mrf.mxu0
    %5556 = vmatmul.bf16.gmra.mxu0 %v2947
    %v5557 = vpop.f32.mrf.mxu0
    %v5558 = vadd.f32 %v5323, %v5557
    %v5559 = vpop.f32.mrf.mxu0
    %v5560 = vadd.f32 %v5325, %v5559
    %5561 = vmatmul.bf16.gmra.mxu0 %v2955
    %v5562 = vpop.f32.mrf.mxu0
    %v5563 = vpop.f32.mrf.mxu0
    %v5564 = vadd.f32 %v5329, %v5563
    %5565 = vmatmul.bf16.gmra.mxu0 %v2963
    %v5566 = vpop.f32.mrf.mxu0
    %v5567 = vadd.f32 %v5332, %v5566
    %v5568 = vpop.f32.mrf.mxu0
    %5569 = vmatmul.bf16.gmra.mxu0 %v2971
    %v5570 = vpop.f32.mrf.mxu0
    %v5571 = vadd.f32 %v5336, %v5570
    %v5572 = vpop.f32.mrf.mxu0
    %v5573 = vadd.f32 %v5338, %v5572
    %5574 = vmatmul.bf16.gmra.mxu0 %v2979
    %v5575 = vpop.f32.mrf.mxu0
    %v5576 = vpop.f32.mrf.mxu0
    %v5577 = vadd.f32 %v5342, %v5576
    %5578 = vmatmul.bf16.gmra.mxu0 %v2987
    %v5579 = vpop.f32.mrf.mxu0
    %v5580 = vadd.f32 %v5345, %v5579
    %v5581 = vpop.f32.mrf.mxu0
    %5582 = vmatmul.bf16.gmra.mxu0 %v2995
    %v5583 = vpop.f32.mrf.mxu0
    %v5584 = vadd.f32 %v5349, %v5583
    %v5585 = vpop.f32.mrf.mxu0
    %v5586 = vadd.f32 %v5351, %v5585
    %5587 = vmatmul.bf16.gmra.mxu0 %v3003
    %v5588 = vpop.f32.mrf.mxu0
    %v5589 = vpop.f32.mrf.mxu0
    %v5590 = vadd.f32 %v5355, %v5589
    %5591 = vmatmul.bf16.gmra.mxu0 %v3011
    %v5592 = vpop.f32.mrf.mxu0
    %v5593 = vadd.f32 %v5358, %v5592
    %v5594 = vpop.f32.mrf.mxu0
    %5595 = vmatmul.bf16.gmra.mxu0 %v3019
    %v5596 = vpop.f32.mrf.mxu0
    %v5597 = vadd.f32 %v5362, %v5596
    %v5598 = vpop.f32.mrf.mxu0
    %v5599 = vadd.f32 %v5364, %v5598
    %5600 = vmatmul.bf16.gmra.mxu0 %v3027
    %v5601 = vpop.f32.mrf.mxu0
    %v5602 = vpop.f32.mrf.mxu0
    %v5603 = vadd.f32 %v5368, %v5602
    %5604 = vmatmul.bf16.gmra.mxu0 %v3035
    %v5605 = vpop.f32.mrf.mxu0
    %v5606 = vadd.f32 %v5371, %v5605
    %v5607 = vpop.f32.mrf.mxu0
    %5608 = vmatmul.bf16.gmra.mxu0 %v3043
    %v5609 = vpop.f32.mrf.mxu0
    %v5610 = vpop.f32.mrf.mxu0
    %5611 = vmatmul.bf16.gmra.mxu0 %v3051
    %v5612 = vpop.f32.mrf.mxu0
    %v5613 = vpop.f32.mrf.mxu0
    %5614 = vmatmul.bf16.gmra.mxu0 %v3059
    %v5615 = vpop.f32.mrf.mxu0
    %v5616 = vpop.f32.mrf.mxu0
    %5617 = vdwg.mxu0
    %5618 = vmatpush.bf16.msra.mxu0 %v5123
    %5619 = vmatpush.bf16.msra.mxu0 %v5122
    %5620 = vmatpush.bf16.msra.mxu0 %v5121
    %5621 = vmatpush.bf16.msra.mxu0 %v5120
    %5622 = vmatpush.bf16.msra.mxu0 %v5119
    %5623 = vmatpush.bf16.msra.mxu0 %v5118
    %5624 = vmatpush.bf16.msra.mxu0 %v5117
    %5625 = vmatpush.bf16.msra.mxu0 %v5116
    %5626 = vmatmul.bf16.gmra.mxu0 %v3120
    %v5627 = vpop.f32.mrf.mxu0
    %v5628 = vadd.f32 %v5393, %v5627
    %v5629 = vpop.f32.mrf.mxu0
    %v5630 = vadd.f32 %v5395, %v5629
    %5631 = vmatmul.bf16.gmra.mxu0 %v3122
    %v5632 = vpop.f32.mrf.mxu0
    %v5633 = vpop.f32.mrf.mxu0
    %v5634 = vadd.f32 %v5399, %v5633
    %5635 = vmatmul.bf16.gmra.mxu0 %v3124
    %v5636 = vpop.f32.mrf.mxu0
    %v5637 = vadd.f32 %v5402, %v5636
    %v5638 = vpop.f32.mrf.mxu0
    %5639 = vmatmul.bf16.gmra.mxu0 %v3126
    %v5640 = vpop.f32.mrf.mxu0
    %v5641 = vadd.f32 %v5406, %v5640
    %v5642 = vpop.f32.mrf.mxu0
    %v5643 = vadd.f32 %v5408, %v5642
    %5644 = vmatmul.bf16.gmra.mxu0 %v3128
    %v5645 = vpop.f32.mrf.mxu0
    %v5646 = vpop.f32.mrf.mxu0
    %v5647 = vadd.f32 %v5412, %v5646
    %5648 = vmatmul.bf16.gmra.mxu0 %v3130
    %v5649 = vpop.f32.mrf.mxu0
    %v5650 = vadd.f32 %v5415, %v5649
    %v5651 = vpop.f32.mrf.mxu0
    %5652 = vmatmul.bf16.gmra.mxu0 %v3132
    %v5653 = vpop.f32.mrf.mxu0
    %v5654 = vadd.f32 %v5419, %v5653
    %v5655 = vpop.f32.mrf.mxu0
    %v5656 = vadd.f32 %v5421, %v5655
    %5657 = vmatmul.bf16.gmra.mxu0 %v3134
    %v5658 = vpop.f32.mrf.mxu0
    %v5659 = vpop.f32.mrf.mxu0
    %v5660 = vadd.f32 %v5425, %v5659
    %5661 = vmatmul.bf16.gmra.mxu0 %v3136
    %v5662 = vpop.f32.mrf.mxu0
    %v5663 = vadd.f32 %v5428, %v5662
    %v5664 = vpop.f32.mrf.mxu0
    %5665 = vmatmul.bf16.gmra.mxu0 %v3138
    %v5666 = vpop.f32.mrf.mxu0
    %v5667 = vadd.f32 %v5432, %v5666
    %v5668 = vpop.f32.mrf.mxu0
    %v5669 = vadd.f32 %v5434, %v5668
    %5670 = vmatmul.bf16.gmra.mxu0 %v3140
    %v5671 = vpop.f32.mrf.mxu0
    %v5672 = vpop.f32.mrf.mxu0
    %v5673 = vadd.f32 %v5438, %v5672
    %5674 = vmatmul.bf16.gmra.mxu0 %v3142
    %v5675 = vpop.f32.mrf.mxu0
    %v5676 = vadd.f32 %v5441, %v5675
    %v5677 = vpop.f32.mrf.mxu0
    %5678 = vmatmul.bf16.gmra.mxu0 %v3144
    %v5679 = vpop.f32.mrf.mxu0
    %v5680 = vadd.f32 %v5445, %v5679
    %v5681 = vpop.f32.mrf.mxu0
    %v5682 = vadd.f32 %v5447, %v5681
    %5683 = vmatmul.bf16.gmra.mxu0 %v3146
    %v5684 = vpop.f32.mrf.mxu0
    %v5685 = vpop.f32.mrf.mxu0
    %v5686 = vadd.f32 %v5451, %v5685
    %5687 = vmatmul.bf16.gmra.mxu0 %v3148
    %v5688 = vpop.f32.mrf.mxu0
    %v5689 = vadd.f32 %v5454, %v5688
    %v5690 = vpop.f32.mrf.mxu0
    %5691 = vmatmul.bf16.gmra.mxu0 %v3150
    %v5692 = vpop.f32.mrf.mxu0
    %v5693 = vadd.f32 %v5458, %v5692
    %v5694 = vpop.f32.mrf.mxu0
    %v5695 = vadd.f32 %v5460, %v5694
    %5696 = vmatmul.bf16.gmra.mxu0 %v3152
    %v5697 = vpop.f32.mrf.mxu0
    %v5698 = vpop.f32.mrf.mxu0
    %v5699 = vadd.f32 %v5464, %v5698
    %5700 = vmatmul.bf16.gmra.mxu0 %v3154
    %v5701 = vpop.f32.mrf.mxu0
    %v5702 = vadd.f32 %v5467, %v5701
    %v5703 = vpop.f32.mrf.mxu0
    %5704 = vmatmul.bf16.gmra.mxu0 %v3156
    %v5705 = vpop.f32.mrf.mxu0
    %v5706 = vadd.f32 %v5471, %v5705
    %v5707 = vpop.f32.mrf.mxu0
    %v5708 = vadd.f32 %v5473, %v5707
    %5709 = vmatmul.bf16.gmra.mxu0 %v3158
    %v5710 = vpop.f32.mrf.mxu0
    %v5711 = vpop.f32.mrf.mxu0
    %v5712 = vadd.f32 %v5477, %v5711
    %5713 = vmatmul.bf16.gmra.mxu0 %v3160
    %v5714 = vpop.f32.mrf.mxu0
    %v5715 = vadd.f32 %v5480, %v5714
    %v5716 = vpop.f32.mrf.mxu0
    %5717 = vmatmul.bf16.gmra.mxu0 %v3162
    %v5718 = vpop.f32.mrf.mxu0
    %v5719 = vadd.f32 %v5484, %v5718
    %v5720 = vpop.f32.mrf.mxu0
    %v5721 = vadd.f32 %v5486, %v5720
    %5722 = vmatmul.bf16.gmra.mxu0 %v3164
    %v5723 = vpop.f32.mrf.mxu0
    %v5724 = vpop.f32.mrf.mxu0
    %v5725 = vadd.f32 %v5490, %v5724
    %5726 = vmatmul.bf16.gmra.mxu0 %v3166
    %v5727 = vpop.f32.mrf.mxu0
    %v5728 = vadd.f32 %v5493, %v5727
    %v5729 = vpop.f32.mrf.mxu0
    %5730 = vmatmul.bf16.gmra.mxu0 %v3168
    %v5731 = vpop.f32.mrf.mxu0
    %v5732 = vpop.f32.mrf.mxu0
    %5733 = vmatmul.bf16.gmra.mxu0 %v3170
    %v5734 = vpop.f32.mrf.mxu0
    %v5735 = vpop.f32.mrf.mxu0
    %5736 = vmatmul.bf16.gmra.mxu0 %v3172
    %v5737 = vpop.f32.mrf.mxu0
    %v5738 = vpop.f32.mrf.mxu0
    %5739 = vmatmul.bf16.gmra.mxu0 %v3174
    %v5740 = vpop.f32.mrf.mxu0
    %v5741 = vadd.f32 %v5506, %v5740
    %v5742 = vpop.f32.mrf.mxu0
    %v5743 = vadd.f32 %v5508, %v5742
    %5744 = vmatmul.bf16.gmra.mxu0 %v3176
    %v5745 = vpop.f32.mrf.mxu0
    %v5746 = vpop.f32.mrf.mxu0
    %v5747 = vadd.f32 %v5512, %v5746
    %5748 = vmatmul.bf16.gmra.mxu0 %v3178
    %v5749 = vpop.f32.mrf.mxu0
    %v5750 = vadd.f32 %v5515, %v5749
    %v5751 = vpop.f32.mrf.mxu0
    %5752 = vmatmul.bf16.gmra.mxu0 %v3180
    %v5753 = vpop.f32.mrf.mxu0
    %v5754 = vadd.f32 %v5519, %v5753
    %v5755 = vpop.f32.mrf.mxu0
    %v5756 = vadd.f32 %v5521, %v5755
    %5757 = vmatmul.bf16.gmra.mxu0 %v3182
    %v5758 = vpop.f32.mrf.mxu0
    %v5759 = vpop.f32.mrf.mxu0
    %v5760 = vadd.f32 %v5525, %v5759
    %5761 = vmatmul.bf16.gmra.mxu0 %v3184
    %v5762 = vpop.f32.mrf.mxu0
    %v5763 = vadd.f32 %v5528, %v5762
    %v5764 = vpop.f32.mrf.mxu0
    %5765 = vmatmul.bf16.gmra.mxu0 %v3186
    %v5766 = vpop.f32.mrf.mxu0
    %v5767 = vadd.f32 %v5532, %v5766
    %v5768 = vpop.f32.mrf.mxu0
    %v5769 = vadd.f32 %v5534, %v5768
    %5770 = vmatmul.bf16.gmra.mxu0 %v3188
    %v5771 = vpop.f32.mrf.mxu0
    %v5772 = vpop.f32.mrf.mxu0
    %v5773 = vadd.f32 %v5538, %v5772
    %5774 = vmatmul.bf16.gmra.mxu0 %v3190
    %v5775 = vpop.f32.mrf.mxu0
    %v5776 = vadd.f32 %v5541, %v5775
    %v5777 = vpop.f32.mrf.mxu0
    %5778 = vmatmul.bf16.gmra.mxu0 %v3192
    %v5779 = vpop.f32.mrf.mxu0
    %v5780 = vadd.f32 %v5545, %v5779
    %v5781 = vpop.f32.mrf.mxu0
    %v5782 = vadd.f32 %v5547, %v5781
    %5783 = vmatmul.bf16.gmra.mxu0 %v3194
    %v5784 = vpop.f32.mrf.mxu0
    %v5785 = vpop.f32.mrf.mxu0
    %v5786 = vadd.f32 %v5551, %v5785
    %5787 = vmatmul.bf16.gmra.mxu0 %v3196
    %v5788 = vpop.f32.mrf.mxu0
    %v5789 = vadd.f32 %v5554, %v5788
    %v5790 = vpop.f32.mrf.mxu0
    %5791 = vmatmul.bf16.gmra.mxu0 %v3198
    %v5792 = vpop.f32.mrf.mxu0
    %v5793 = vadd.f32 %v5558, %v5792
    %v5794 = vpop.f32.mrf.mxu0
    %v5795 = vadd.f32 %v5560, %v5794
    %5796 = vmatmul.bf16.gmra.mxu0 %v3200
    %v5797 = vpop.f32.mrf.mxu0
    %v5798 = vpop.f32.mrf.mxu0
    %v5799 = vadd.f32 %v5564, %v5798
    %5800 = vmatmul.bf16.gmra.mxu0 %v3202
    %v5801 = vpop.f32.mrf.mxu0
    %v5802 = vadd.f32 %v5567, %v5801
    %v5803 = vpop.f32.mrf.mxu0
    %5804 = vmatmul.bf16.gmra.mxu0 %v3204
    %v5805 = vpop.f32.mrf.mxu0
    %v5806 = vadd.f32 %v5571, %v5805
    %v5807 = vpop.f32.mrf.mxu0
    %v5808 = vadd.f32 %v5573, %v5807
    %5809 = vmatmul.bf16.gmra.mxu0 %v3206
    %v5810 = vpop.f32.mrf.mxu0
    %v5811 = vpop.f32.mrf.mxu0
    %v5812 = vadd.f32 %v5577, %v5811
    %5813 = vmatmul.bf16.gmra.mxu0 %v3208
    %v5814 = vpop.f32.mrf.mxu0
    %v5815 = vadd.f32 %v5580, %v5814
    %v5816 = vpop.f32.mrf.mxu0
    %5817 = vmatmul.bf16.gmra.mxu0 %v3210
    %v5818 = vpop.f32.mrf.mxu0
    %v5819 = vadd.f32 %v5584, %v5818
    %v5820 = vpop.f32.mrf.mxu0
    %v5821 = vadd.f32 %v5586, %v5820
    %5822 = vmatmul.bf16.gmra.mxu0 %v3212
    %v5823 = vpop.f32.mrf.mxu0
    %v5824 = vpop.f32.mrf.mxu0
    %v5825 = vadd.f32 %v5590, %v5824
    %5826 = vmatmul.bf16.gmra.mxu0 %v3214
    %v5827 = vpop.f32.mrf.mxu0
    %v5828 = vadd.f32 %v5593, %v5827
    %v5829 = vpop.f32.mrf.mxu0
    %5830 = vmatmul.bf16.gmra.mxu0 %v3216
    %v5831 = vpop.f32.mrf.mxu0
    %v5832 = vadd.f32 %v5597, %v5831
    %v5833 = vpop.f32.mrf.mxu0
    %v5834 = vadd.f32 %v5599, %v5833
    %5835 = vmatmul.bf16.gmra.mxu0 %v3218
    %v5836 = vpop.f32.mrf.mxu0
    %v5837 = vpop.f32.mrf.mxu0
    %v5838 = vadd.f32 %v5603, %v5837
    %5839 = vmatmul.bf16.gmra.mxu0 %v3220
    %v5840 = vpop.f32.mrf.mxu0
    %v5841 = vadd.f32 %v5606, %v5840
    %v5842 = vpop.f32.mrf.mxu0
    %5843 = vmatmul.bf16.gmra.mxu0 %v3222
    %v5844 = vpop.f32.mrf.mxu0
    %v5845 = vpop.f32.mrf.mxu0
    %5846 = vmatmul.bf16.gmra.mxu0 %v3224
    %v5847 = vpop.f32.mrf.mxu0
    %v5848 = vpop.f32.mrf.mxu0
    %5849 = vmatmul.bf16.gmra.mxu0 %v3226
    %v5850 = vpop.f32.mrf.mxu0
    %v5851 = vpop.f32.mrf.mxu0
    %5852 = vdwg.mxu0
    %v5853 = vld [vmem:[#allocation2 + $0x18] sm:$0xf]
    %v5854 = vld [vmem:[#allocation2 + $0x1c] sm:$0xf]
    %v5855 = vld [vmem:[#allocation2 + $0x20] sm:$0xf]
    %v5856 = vld [vmem:[#allocation2 + $0x24] sm:$0xf]
    %v5857 = vld [vmem:[#allocation2 + $0x28] sm:$0xf]
    %v5858 = vld [vmem:[#allocation2 + $0x2c] sm:$0xf]
    %v5859 = vld [vmem:[#allocation2 + $0x30] sm:$0xf]
    %v5860 = vld [vmem:[#allocation2 + $0x34] sm:$0xf]
    %v5861 = vld [vmem:[#allocation2 + $0x38] sm:$0xf]
    %v5862 = vld [vmem:[#allocation2 + $0x3c] sm:$0xf]
    %v5863 = vld [vmem:[#allocation2 + $0x40] sm:$0xf]
    %v5864 = vld [vmem:[#allocation2 + $0x44] sm:$0xf]
    %v5865 = vld [vmem:[#allocation2 + $0x48] sm:$0xf]
    %v5866 = vld [vmem:[#allocation2 + $0x4c] sm:$0xf]
    %v5867 = vld [vmem:[#allocation2 + $0x50] sm:$0xf]
    %v5868 = vld [vmem:[#allocation2 + $0x54] sm:$0xf]
    %v5869 = vld [vmem:[#allocation2 + $0x58] sm:$0xf]
    %v5870 = vld [vmem:[#allocation2 + $0x5c] sm:$0xf]
    %v5871 = vld [vmem:[#allocation2 + $0x60] sm:$0xf]
    %v5872 = vld [vmem:[#allocation2 + $0x64] sm:$0xf]
    %v5873 = vld [vmem:[#allocation2 + $0x68] sm:$0xf]
    %v5874 = vld [vmem:[#allocation2 + $0x6c] sm:$0xf]
    %v5875 = vld [vmem:[#allocation2 + $0x70] sm:$0xf]
    %v5876 = vld [vmem:[#allocation2 + $0x74] sm:$0xf]
    %v5877 = vld [vmem:[#allocation2 + $0x78] sm:$0xf]
    %v5878 = vld [vmem:[#allocation2 + $0x7c] sm:$0xf]
    %v5879 = vld [vmem:[#allocation2 + $0x80] sm:$0xf]
    %v5880 = vld [vmem:[#allocation2 + $0x84] sm:$0xf]
    %v5881 = vld [vmem:[#allocation2 + $0x88] sm:$0xf]
    %v5882 = vld [vmem:[#allocation2 + $0x8c] sm:$0xf]
    %v5883 = vld [vmem:[#allocation2 + $0x90] sm:$0xf]
    %v5884 = vld [vmem:[#allocation2 + $0x94] sm:$0xf]
    %v5885 = vld [vmem:[#allocation2 + $0x98] sm:$0xf]
    %v5886 = vld [vmem:[#allocation2 + $0x9c] sm:$0xf]
    %v5887 = vld [vmem:[#allocation2 + $0xa0] sm:$0xf]
    %v5888 = vld [vmem:[#allocation2 + $0xa4] sm:$0xf]
    %v5889 = vld [vmem:[#allocation2 + $0xa8] sm:$0xf]
    %v5890 = vld [vmem:[#allocation2 + $0xac] sm:$0xf]
    %v5891 = vld [vmem:[#allocation2 + $0xb0] sm:$0xf]
    %v5892 = vld [vmem:[#allocation2 + $0xb4] sm:$0xf]
    %v5893 = vld [vmem:[#allocation2 + $0xb8] sm:$0xf]
    %v5894 = vld [vmem:[#allocation2 + $0xbc] sm:$0xf]
    %v5895 = vld [vmem:[#allocation2 + $0xc0] sm:$0xf]
    %v5896 = vld [vmem:[#allocation2 + $0xc4] sm:$0xf]
    %v5897 = vld [vmem:[#allocation2 + $0xc8] sm:$0xf]
    %v5898 = vld [vmem:[#allocation2 + $0xcc] sm:$0xf]
    %v5899 = vld [vmem:[#allocation2 + $0xd0] sm:$0xf]
    %v5900 = vld [vmem:[#allocation2 + $0xd4] sm:$0xf]
    %v5901 = vld [vmem:[#allocation2 + $0xd8] sm:$0xf]
    %v5902 = vld [vmem:[#allocation2 + $0xdc] sm:$0xf]
    %v5903 = vld [vmem:[#allocation2 + $0xe0] sm:$0xf]
    %v5904 = vld [vmem:[#allocation2 + $0xe4] sm:$0xf]
    %v5905 = vld [vmem:[#allocation2 + $0xe8] sm:$0xf]
    %v5906 = vld [vmem:[#allocation2 + $0xec] sm:$0xf]
    %v5907 = vld [vmem:[#allocation2 + $0xf0] sm:$0xf]
    %v5908 = vld [vmem:[#allocation2 + $0xf4] sm:$0xf]
    %v5909 = vld [vmem:[#allocation2 + $0xf8] sm:$0xf]
    %v5910 = vld [vmem:[#allocation2 + $0xfc] sm:$0xf]
    %v5911 = vld [vmem:[#allocation2 + $0x100] sm:$0xf]
    %v5912 = vld [vmem:[#allocation2 + $0x104] sm:$0xf]
    %v5913 = vld [vmem:[#allocation2 + $0x108] sm:$0xf]
    %v5914 = vld [vmem:[#allocation2 + $0x10c] sm:$0xf]
    %v5915 = vld [vmem:[#allocation2 + $0x110] sm:$0xf]
    %v5916 = vld [vmem:[#allocation2 + $0x114] sm:$0xf]
    %v5917 = vld [vmem:[#allocation2 + $0x118] sm:$0xf]
    %v5918 = vld [vmem:[#allocation2 + $0x11c] sm:$0xf]
    %v5919 = vld [vmem:[#allocation2 + $0x120] sm:$0xf]
    %v5920 = vld [vmem:[#allocation2 + $0x124] sm:$0xf]
    %v5921 = vld [vmem:[#allocation2 + $0x128] sm:$0xf]
    %v5922 = vld [vmem:[#allocation2 + $0x12c] sm:$0xf]
    %v5923 = vld [vmem:[#allocation2 + $0x130] sm:$0xf]
    %v5924 = vld [vmem:[#allocation2 + $0x134] sm:$0xf]
    %v5925 = vld [vmem:[#allocation2 + $0x138] sm:$0xf]
    %v5926 = vld [vmem:[#allocation2 + $0x13c] sm:$0xf]
    %v5927 = vld [vmem:[#allocation2 + $0x140] sm:$0xf]
    %v5928 = vld [vmem:[#allocation2 + $0x144] sm:$0xf]
    %v5929 = vld [vmem:[#allocation2 + $0x148] sm:$0xf]
    %v5930 = vld [vmem:[#allocation2 + $0x14c] sm:$0xf]
    %v5931 = vld [vmem:[#allocation2 + $0x150] sm:$0xf]
    %v5932 = vld [vmem:[#allocation2 + $0x154] sm:$0xf]
    %v5933 = vld [vmem:[#allocation2 + $0x158] sm:$0xf]
    %v5934 = vld [vmem:[#allocation2 + $0x15c] sm:$0xf]
    %v5935 = vld [vmem:[#allocation2 + $0x160] sm:$0xf]
    %v5936 = vld [vmem:[#allocation2 + $0x164] sm:$0xf]
    %v5937 = vld [vmem:[#allocation2 + $0x168] sm:$0xf]
    %v5938 = vld [vmem:[#allocation2 + $0x16c] sm:$0xf]
    %v5939 = vld [vmem:[#allocation2 + $0x170] sm:$0xf]
    %v5940 = vld [vmem:[#allocation2 + $0x174] sm:$0xf]
    %v5941 = vld [vmem:[#allocation2 + $0x178] sm:$0xf]
    %v5942 = vld [vmem:[#allocation2 + $0x17c] sm:$0xf]
    %v5943 = vld [vmem:[#allocation2 + $0x180] sm:$0xf]
    %v5944 = vld [vmem:[#allocation2 + $0x184] sm:$0xf]
    %v5945 = vld [vmem:[#allocation2 + $0x188] sm:$0xf]
    %v5946 = vld [vmem:[#allocation2 + $0x18c] sm:$0xf]
    %v5947 = vld [vmem:[#allocation2 + $0x190] sm:$0xf]
    %v5948 = vld [vmem:[#allocation2 + $0x194] sm:$0xf]
    %v5949 = vld [vmem:[#allocation2 + $0x198] sm:$0xf]
    %v5950 = vld [vmem:[#allocation2 + $0x19c] sm:$0xf]
    %v5951 = vld [vmem:[#allocation2 + $0x1a0] sm:$0xf]
    %v5952 = vld [vmem:[#allocation2 + $0x1a4] sm:$0xf]
    %v5953 = vld [vmem:[#allocation2 + $0x1a8] sm:$0xf]
    %v5954 = vld [vmem:[#allocation2 + $0x1ac] sm:$0xf]
    %v5955 = vld [vmem:[#allocation2 + $0x1b0] sm:$0xf]
    %v5956 = vld [vmem:[#allocation2 + $0x1b4] sm:$0xf]
    %v5957 = vld [vmem:[#allocation2 + $0x1b8] sm:$0xf]
    %v5958 = vld [vmem:[#allocation2 + $0x1bc] sm:$0xf]
    %v5959 = vld [vmem:[#allocation2 + $0x1c0] sm:$0xf]
    %v5960 = vld [vmem:[#allocation2 + $0x1c4] sm:$0xf]
    %v5961 = vld [vmem:[#allocation2 + $0x18] sm:$0xf]
    %v5962 = vld [vmem:[#allocation2 + $0x1c] sm:$0xf]
    %v5963 = vld [vmem:[#allocation2 + $0x20] sm:$0xf]
    %v5964 = vld [vmem:[#allocation2 + $0x24] sm:$0xf]
    %v5965 = vld [vmem:[#allocation2 + $0x28] sm:$0xf]
    %v5966 = vld [vmem:[#allocation2 + $0x2c] sm:$0xf]
    %v5967 = vld [vmem:[#allocation2 + $0x30] sm:$0xf]
    %v5968 = vld [vmem:[#allocation2 + $0x34] sm:$0xf]
    %v5969 = vld [vmem:[#allocation2 + $0x38] sm:$0xf]
    %v5970 = vld [vmem:[#allocation2 + $0x3c] sm:$0xf]
    %v5971 = vld [vmem:[#allocation2 + $0x40] sm:$0xf]
    %v5972 = vld [vmem:[#allocation2 + $0x44] sm:$0xf]
    %v5973 = vld [vmem:[#allocation2 + $0x48] sm:$0xf]
    %v5974 = vld [vmem:[#allocation2 + $0x4c] sm:$0xf]
    %v5975 = vld [vmem:[#allocation2 + $0x50] sm:$0xf]
    %v5976 = vld [vmem:[#allocation2 + $0x54] sm:$0xf]
    %v5977 = vld [vmem:[#allocation2 + $0x58] sm:$0xf]
    %v5978 = vld [vmem:[#allocation2 + $0x5c] sm:$0xf]
    %v5979 = vld [vmem:[#allocation2 + $0x60] sm:$0xf]
    %v5980 = vld [vmem:[#allocation2 + $0x64] sm:$0xf]
    %v5981 = vld [vmem:[#allocation2 + $0x68] sm:$0xf]
    %v5982 = vld [vmem:[#allocation2 + $0x6c] sm:$0xf]
    %v5983 = vld [vmem:[#allocation2 + $0x70] sm:$0xf]
    %v5984 = vld [vmem:[#allocation2 + $0x74] sm:$0xf]
    %v5985 = vld [vmem:[#allocation2 + $0x78] sm:$0xf]
    %v5986 = vld [vmem:[#allocation2 + $0x7c] sm:$0xf]
    %v5987 = vld [vmem:[#allocation2 + $0x80] sm:$0xf]
    %v5988 = vld [vmem:[#allocation2 + $0x84] sm:$0xf]
    %v5989 = vld [vmem:[#allocation2 + $0x88] sm:$0xf]
    %v5990 = vld [vmem:[#allocation2 + $0x8c] sm:$0xf]
    %v5991 = vld [vmem:[#allocation2 + $0x90] sm:$0xf]
    %v5992 = vld [vmem:[#allocation2 + $0x94] sm:$0xf]
    %v5993 = vld [vmem:[#allocation2 + $0x98] sm:$0xf]
    %v5994 = vld [vmem:[#allocation2 + $0x9c] sm:$0xf]
    %v5995 = vld [vmem:[#allocation2 + $0xa0] sm:$0xf]
    %v5996 = vld [vmem:[#allocation2 + $0xa4] sm:$0xf]
    %v5997 = vld [vmem:[#allocation2 + $0xa8] sm:$0xf]
    %v5998 = vld [vmem:[#allocation2 + $0xac] sm:$0xf]
    %v5999 = vld [vmem:[#allocation2 + $0xb0] sm:$0xf]
    %v6000 = vld [vmem:[#allocation2 + $0xb4] sm:$0xf]
    %v6001 = vld [vmem:[#allocation2 + $0xb8] sm:$0xf]
    %v6002 = vld [vmem:[#allocation2 + $0xbc] sm:$0xf]
    %v6003 = vld [vmem:[#allocation2 + $0xc0] sm:$0xf]
    %v6004 = vld [vmem:[#allocation2 + $0xc4] sm:$0xf]
    %v6005 = vld [vmem:[#allocation2 + $0xc8] sm:$0xf]
    %v6006 = vld [vmem:[#allocation2 + $0xcc] sm:$0xf]
    %v6007 = vld [vmem:[#allocation2 + $0xd0] sm:$0xf]
    %v6008 = vld [vmem:[#allocation2 + $0xd4] sm:$0xf]
    %v6009 = vld [vmem:[#allocation2 + $0xd8] sm:$0xf]
    %v6010 = vld [vmem:[#allocation2 + $0xdc] sm:$0xf]
    %v6011 = vld [vmem:[#allocation2 + $0xe0] sm:$0xf]
    %v6012 = vld [vmem:[#allocation2 + $0xe4] sm:$0xf]
    %v6013 = vld [vmem:[#allocation2 + $0xe8] sm:$0xf]
    %v6014 = vld [vmem:[#allocation2 + $0xec] sm:$0xf]
    %v6015 = vld [vmem:[#allocation2 + $0xf0] sm:$0xf]
    %v6016 = vld [vmem:[#allocation2 + $0xf4] sm:$0xf]
    %v6017 = vld [vmem:[#allocation2 + $0xf8] sm:$0xf]
    %v6018 = vld [vmem:[#allocation2 + $0xfc] sm:$0xf]
    %v6019 = vld [vmem:[#allocation2 + $0x100] sm:$0xf]
    %v6020 = vld [vmem:[#allocation2 + $0x104] sm:$0xf]
    %v6021 = vld [vmem:[#allocation2 + $0x108] sm:$0xf]
    %v6022 = vld [vmem:[#allocation2 + $0x10c] sm:$0xf]
    %v6023 = vld [vmem:[#allocation2 + $0x110] sm:$0xf]
    %v6024 = vld [vmem:[#allocation2 + $0x114] sm:$0xf]
    %v6025 = vld [vmem:[#allocation2 + $0x118] sm:$0xf]
    %v6026 = vld [vmem:[#allocation2 + $0x11c] sm:$0xf]
    %v6027 = vld [vmem:[#allocation2 + $0x120] sm:$0xf]
    %v6028 = vld [vmem:[#allocation2 + $0x124] sm:$0xf]
    %v6029 = vld [vmem:[#allocation2 + $0x128] sm:$0xf]
    %v6030 = vld [vmem:[#allocation2 + $0x12c] sm:$0xf]
    %v6031 = vld [vmem:[#allocation2 + $0x130] sm:$0xf]
    %v6032 = vld [vmem:[#allocation2 + $0x134] sm:$0xf]
    %v6033 = vld [vmem:[#allocation2 + $0x138] sm:$0xf]
    %v6034 = vld [vmem:[#allocation2 + $0x13c] sm:$0xf]
    %v6035 = vld [vmem:[#allocation2 + $0x140] sm:$0xf]
    %v6036 = vld [vmem:[#allocation2 + $0x144] sm:$0xf]
    %v6037 = vld [vmem:[#allocation2 + $0x148] sm:$0xf]
    %v6038 = vld [vmem:[#allocation2 + $0x14c] sm:$0xf]
    %v6039 = vld [vmem:[#allocation2 + $0x150] sm:$0xf]
    %v6040 = vld [vmem:[#allocation2 + $0x154] sm:$0xf]
    %v6041 = vld [vmem:[#allocation2 + $0x158] sm:$0xf]
    %v6042 = vld [vmem:[#allocation2 + $0x15c] sm:$0xf]
    %v6043 = vld [vmem:[#allocation2 + $0x160] sm:$0xf]
    %v6044 = vld [vmem:[#allocation2 + $0x164] sm:$0xf]
    %v6045 = vld [vmem:[#allocation2 + $0x168] sm:$0xf]
    %v6046 = vld [vmem:[#allocation2 + $0x16c] sm:$0xf]
    %v6047 = vld [vmem:[#allocation2 + $0x170] sm:$0xf]
    %v6048 = vld [vmem:[#allocation2 + $0x174] sm:$0xf]
    %v6049 = vld [vmem:[#allocation2 + $0x178] sm:$0xf]
    %v6050 = vld [vmem:[#allocation2 + $0x17c] sm:$0xf]
    %v6051 = vld [vmem:[#allocation2 + $0x180] sm:$0xf]
    %v6052 = vld [vmem:[#allocation2 + $0x184] sm:$0xf]
    %v6053 = vld [vmem:[#allocation2 + $0x188] sm:$0xf]
    %v6054 = vld [vmem:[#allocation2 + $0x18c] sm:$0xf]
    %v6055 = vld [vmem:[#allocation2 + $0x190] sm:$0xf]
    %v6056 = vld [vmem:[#allocation2 + $0x194] sm:$0xf]
    %v6057 = vld [vmem:[#allocation2 + $0x198] sm:$0xf]
    %v6058 = vld [vmem:[#allocation2 + $0x19c] sm:$0xf]
    %v6059 = vld [vmem:[#allocation2 + $0x1a0] sm:$0xf]
    %v6060 = vld [vmem:[#allocation2 + $0x1a4] sm:$0xf]
    %v6061 = vld [vmem:[#allocation2 + $0x1a8] sm:$0xf]
    %v6062 = vld [vmem:[#allocation2 + $0x1ac] sm:$0xf]
    %v6063 = vld [vmem:[#allocation2 + $0x1b0] sm:$0xf]
    %v6064 = vld [vmem:[#allocation2 + $0x1b4] sm:$0xf]
    %v6065 = vld [vmem:[#allocation2 + $0x1b8] sm:$0xf]
    %v6066 = vld [vmem:[#allocation2 + $0x1bc] sm:$0xf]
    %v6067 = vld [vmem:[#allocation2 + $0x1c0] sm:$0xf]
    %v6068 = vld [vmem:[#allocation2 + $0x1c4] sm:$0xf]
    %v6069 = vld [vmem:[#allocation2 + $0x1c8] sm:$0x1]
    %v6070 = vld [vmem:[#allocation2 + $0x18] sm:$0xe]
    %v6179 = vunpack.c.l.b16 %v5853
    %v6180 = vunpack.c.l.b16 %v5854
    %v6181 = vunpack.c.l.b16 %v5855
    %v6182 = vunpack.c.l.b16 %v5856
    %v6183 = vunpack.c.l.b16 %v5857
    %v6184 = vunpack.c.l.b16 %v5858
    %v6185 = vunpack.c.l.b16 %v5859
    %v6186 = vunpack.c.l.b16 %v5860
    %v6187 = vunpack.c.l.b16 %v5861
    %v6188 = vunpack.c.l.b16 %v5862
    %v6189 = vunpack.c.l.b16 %v5863
    %v6190 = vunpack.c.l.b16 %v5864
    %v6191 = vunpack.c.l.b16 %v5865
    %v6192 = vunpack.c.l.b16 %v5866
    %v6193 = vunpack.c.l.b16 %v5867
    %v6194 = vunpack.c.l.b16 %v5868
    %v6195 = vunpack.c.l.b16 %v5869
    %v6196 = vunpack.c.l.b16 %v5870
    %v6197 = vunpack.c.l.b16 %v5871
    %v6198 = vunpack.c.l.b16 %v5872
    %v6199 = vunpack.c.l.b16 %v5873
    %v6200 = vunpack.c.l.b16 %v5874
    %v6201 = vunpack.c.l.b16 %v5875
    %v6202 = vunpack.c.l.b16 %v5876
    %v6203 = vunpack.c.l.b16 %v5877
    %v6204 = vunpack.c.l.b16 %v5878
    %v6205 = vunpack.c.l.b16 %v5879
    %v6206 = vunpack.c.l.b16 %v5880
    %v6207 = vunpack.c.l.b16 %v5881
    %v6208 = vunpack.c.l.b16 %v5882
    %v6209 = vunpack.c.l.b16 %v5883
    %v6210 = vunpack.c.l.b16 %v5884
    %v6211 = vunpack.c.l.b16 %v5885
    %v6212 = vunpack.c.l.b16 %v5886
    %v6213 = vunpack.c.l.b16 %v5887
    %v6214 = vunpack.c.l.b16 %v5888
    %v6215 = vunpack.c.l.b16 %v5889
    %v6216 = vunpack.c.l.b16 %v5890
    %v6217 = vunpack.c.l.b16 %v5891
    %v6218 = vunpack.c.l.b16 %v5892
    %v6219 = vunpack.c.l.b16 %v5893
    %v6220 = vunpack.c.l.b16 %v5894
    %v6221 = vunpack.c.l.b16 %v5895
    %v6222 = vunpack.c.l.b16 %v5896
    %v6223 = vunpack.c.l.b16 %v5897
    %v6224 = vunpack.c.l.b16 %v5898
    %v6225 = vunpack.c.l.b16 %v5899
    %v6226 = vunpack.c.l.b16 %v5900
    %v6227 = vunpack.c.l.b16 %v5901
    %v6228 = vunpack.c.l.b16 %v5902
    %v6229 = vunpack.c.l.b16 %v5903
    %v6230 = vunpack.c.l.b16 %v5904
    %v6231 = vunpack.c.l.b16 %v5905
    %v6232 = vunpack.c.l.b16 %v5906
    %v6233 = vunpack.c.l.b16 %v5907
    %v6234 = vunpack.c.l.b16 %v5908
    %v6235 = vunpack.c.l.b16 %v5909
    %v6236 = vunpack.c.l.b16 %v5910
    %v6237 = vunpack.c.l.b16 %v5911
    %v6238 = vunpack.c.l.b16 %v5912
    %v6239 = vunpack.c.l.b16 %v5913
    %v6240 = vunpack.c.l.b16 %v5914
    %v6241 = vunpack.c.l.b16 %v5915
    %v6242 = vunpack.c.l.b16 %v5916
    %v6243 = vunpack.c.l.b16 %v5917
    %v6244 = vunpack.c.l.b16 %v5918
    %v6245 = vunpack.c.l.b16 %v5919
    %v6246 = vunpack.c.l.b16 %v5920
    %v6247 = vunpack.c.l.b16 %v5921
    %v6248 = vunpack.c.l.b16 %v5922
    %v6249 = vunpack.c.l.b16 %v5923
    %v6250 = vunpack.c.l.b16 %v5924
    %v6251 = vunpack.c.l.b16 %v5925
    %v6252 = vunpack.c.l.b16 %v5926
    %v6253 = vunpack.c.l.b16 %v5927
    %v6254 = vunpack.c.l.b16 %v5928
    %v6255 = vunpack.c.l.b16 %v5929
    %v6256 = vunpack.c.l.b16 %v5930
    %v6257 = vunpack.c.l.b16 %v5931
    %v6258 = vunpack.c.l.b16 %v5932
    %v6259 = vunpack.c.l.b16 %v5933
    %v6260 = vunpack.c.l.b16 %v5934
    %v6261 = vunpack.c.l.b16 %v5935
    %v6262 = vunpack.c.l.b16 %v5936
    %v6263 = vunpack.c.l.b16 %v5937
    %v6264 = vunpack.c.l.b16 %v5938
    %v6265 = vunpack.c.l.b16 %v5939
    %v6266 = vunpack.c.l.b16 %v5940
    %v6267 = vunpack.c.l.b16 %v5941
    %v6268 = vunpack.c.l.b16 %v5942
    %v6269 = vunpack.c.l.b16 %v5943
    %v6270 = vunpack.c.l.b16 %v5944
    %v6271 = vunpack.c.l.b16 %v5945
    %v6272 = vunpack.c.l.b16 %v5946
    %v6273 = vunpack.c.l.b16 %v5947
    %v6274 = vunpack.c.l.b16 %v5948
    %v6275 = vunpack.c.l.b16 %v5949
    %v6276 = vunpack.c.l.b16 %v5950
    %v6277 = vunpack.c.l.b16 %v5951
    %v6278 = vunpack.c.l.b16 %v5952
    %v6279 = vunpack.c.l.b16 %v5953
    %v6280 = vunpack.c.l.b16 %v5954
    %v6281 = vunpack.c.l.b16 %v5955
    %v6282 = vunpack.c.l.b16 %v5956
    %v6283 = vunpack.c.l.b16 %v5957
    %v6284 = vunpack.c.l.b16 %v5958
    %v6285 = vunpack.c.l.b16 %v5959
    %v6286 = vunpack.c.l.b16 %v5960
    %v6287 = vpack.c.b16 %v6180, %v6179
    %v6288 = vpack.c.b16 %v6182, %v6181
    %v6289 = vpack.c.b16 %v6184, %v6183
    %v6290 = vpack.c.b16 %v6186, %v6185
    %v6291 = vpack.c.b16 %v6188, %v6187
    %v6292 = vpack.c.b16 %v6190, %v6189
    %v6293 = vpack.c.b16 %v6192, %v6191
    %v6294 = vpack.c.b16 %v6194, %v6193
    %v6295 = vpack.c.b16 %v6196, %v6195
    %v6296 = vpack.c.b16 %v6198, %v6197
    %v6297 = vpack.c.b16 %v6200, %v6199
    %v6298 = vpack.c.b16 %v6202, %v6201
    %v6299 = vpack.c.b16 %v6204, %v6203
    %v6300 = vpack.c.b16 %v6206, %v6205
    %v6301 = vpack.c.b16 %v6208, %v6207
    %v6302 = vpack.c.b16 %v6210, %v6209
    %v6303 = vpack.c.b16 %v6212, %v6211
    %v6304 = vpack.c.b16 %v6214, %v6213
    %v6305 = vpack.c.b16 %v6216, %v6215
    %v6306 = vpack.c.b16 %v6218, %v6217
    %v6307 = vpack.c.b16 %v6220, %v6219
    %v6308 = vpack.c.b16 %v6222, %v6221
    %v6309 = vpack.c.b16 %v6224, %v6223
    %v6310 = vpack.c.b16 %v6226, %v6225
    %v6311 = vpack.c.b16 %v6228, %v6227
    %v6312 = vpack.c.b16 %v6230, %v6229
    %v6313 = vpack.c.b16 %v6232, %v6231
    %v6314 = vpack.c.b16 %v6234, %v6233
    %v6315 = vpack.c.b16 %v6236, %v6235
    %v6316 = vpack.c.b16 %v6238, %v6237
    %v6317 = vpack.c.b16 %v6240, %v6239
    %v6318 = vpack.c.b16 %v6242, %v6241
    %v6319 = vpack.c.b16 %v6244, %v6243
    %v6320 = vpack.c.b16 %v6246, %v6245
    %v6321 = vpack.c.b16 %v6248, %v6247
    %v6322 = vpack.c.b16 %v6250, %v6249
    %v6323 = vpack.c.b16 %v6252, %v6251
    %v6324 = vpack.c.b16 %v6254, %v6253
    %v6325 = vpack.c.b16 %v6256, %v6255
    %v6326 = vpack.c.b16 %v6258, %v6257
    %v6327 = vpack.c.b16 %v6260, %v6259
    %v6328 = vpack.c.b16 %v6262, %v6261
    %v6329 = vpack.c.b16 %v6264, %v6263
    %v6330 = vpack.c.b16 %v6266, %v6265
    %v6331 = vpack.c.b16 %v6268, %v6267
    %v6332 = vpack.c.b16 %v6270, %v6269
    %v6333 = vpack.c.b16 %v6272, %v6271
    %v6334 = vpack.c.b16 %v6274, %v6273
    %v6335 = vpack.c.b16 %v6276, %v6275
    %v6336 = vpack.c.b16 %v6278, %v6277
    %v6337 = vpack.c.b16 %v6280, %v6279
    %v6338 = vpack.c.b16 %v6282, %v6281
    %v6339 = vpack.c.b16 %v6284, %v6283
    %v6340 = vpack.c.b16 %v6286, %v6285
    %v6504 = vunpack.c.l.b16 %v5961
    %v6505 = vunpack.c.l.b16 %v5962
    %v6506 = vunpack.c.l.b16 %v5963
    %v6507 = vunpack.c.l.b16 %v5964
    %v6508 = vunpack.c.l.b16 %v5965
    %v6509 = vunpack.c.l.b16 %v5966
    %v6510 = vunpack.c.l.b16 %v5967
    %v6511 = vunpack.c.l.b16 %v5968
    %v6512 = vunpack.c.l.b16 %v5969
    %v6513 = vunpack.c.l.b16 %v5970
    %v6514 = vunpack.c.l.b16 %v5971
    %v6515 = vunpack.c.l.b16 %v5972
    %v6516 = vunpack.c.l.b16 %v5973
    %v6517 = vunpack.c.l.b16 %v5974
    %v6518 = vunpack.c.l.b16 %v5975
    %v6519 = vunpack.c.l.b16 %v5976
    %v6520 = vunpack.c.l.b16 %v5977
    %v6521 = vunpack.c.l.b16 %v5978
    %v6522 = vunpack.c.l.b16 %v5979
    %v6523 = vunpack.c.l.b16 %v5980
    %v6524 = vunpack.c.l.b16 %v5981
    %v6525 = vunpack.c.l.b16 %v5982
    %v6526 = vunpack.c.l.b16 %v5983
    %v6527 = vunpack.c.l.b16 %v5984
    %v6528 = vunpack.c.l.b16 %v5985
    %v6529 = vunpack.c.l.b16 %v5986
    %v6530 = vunpack.c.l.b16 %v5987
    %v6531 = vunpack.c.l.b16 %v5988
    %v6532 = vunpack.c.l.b16 %v5989
    %v6533 = vunpack.c.l.b16 %v5990
    %v6534 = vunpack.c.l.b16 %v5991
    %v6535 = vunpack.c.l.b16 %v5992
    %v6536 = vunpack.c.l.b16 %v5993
    %v6537 = vunpack.c.l.b16 %v5994
    %v6538 = vunpack.c.l.b16 %v5995
    %v6539 = vunpack.c.l.b16 %v5996
    %v6540 = vunpack.c.l.b16 %v5997
    %v6541 = vunpack.c.l.b16 %v5998
    %v6542 = vunpack.c.l.b16 %v5999
    %v6543 = vunpack.c.l.b16 %v6000
    %v6544 = vunpack.c.l.b16 %v6001
    %v6545 = vunpack.c.l.b16 %v6002
    %v6546 = vunpack.c.l.b16 %v6003
    %v6547 = vunpack.c.l.b16 %v6004
    %v6548 = vunpack.c.l.b16 %v6005
    %v6549 = vunpack.c.l.b16 %v6006
    %v6550 = vunpack.c.l.b16 %v6007
    %v6551 = vunpack.c.l.b16 %v6008
    %v6552 = vunpack.c.l.b16 %v6009
    %v6553 = vunpack.c.l.b16 %v6010
    %v6554 = vunpack.c.l.b16 %v6011
    %v6555 = vunpack.c.l.b16 %v6012
    %v6556 = vunpack.c.l.b16 %v6013
    %v6557 = vunpack.c.l.b16 %v6014
    %v6558 = vunpack.c.l.b16 %v6015
    %v6559 = vunpack.c.l.b16 %v6016
    %v6560 = vunpack.c.l.b16 %v6017
    %v6561 = vunpack.c.l.b16 %v6018
    %v6562 = vunpack.c.l.b16 %v6019
    %v6563 = vunpack.c.l.b16 %v6020
    %v6564 = vunpack.c.l.b16 %v6021
    %v6565 = vunpack.c.l.b16 %v6022
    %v6566 = vunpack.c.l.b16 %v6023
    %v6567 = vunpack.c.l.b16 %v6024
    %v6568 = vunpack.c.l.b16 %v6025
    %v6569 = vunpack.c.l.b16 %v6026
    %v6570 = vunpack.c.l.b16 %v6027
    %v6571 = vunpack.c.l.b16 %v6028
    %v6572 = vunpack.c.l.b16 %v6029
    %v6573 = vunpack.c.l.b16 %v6030
    %v6574 = vunpack.c.l.b16 %v6031
    %v6575 = vunpack.c.l.b16 %v6032
    %v6576 = vunpack.c.l.b16 %v6033
    %v6577 = vunpack.c.l.b16 %v6034
    %v6578 = vunpack.c.l.b16 %v6035
    %v6579 = vunpack.c.l.b16 %v6036
    %v6580 = vunpack.c.l.b16 %v6037
    %v6581 = vunpack.c.l.b16 %v6038
    %v6582 = vunpack.c.l.b16 %v6039
    %v6583 = vunpack.c.l.b16 %v6040
    %v6584 = vunpack.c.l.b16 %v6041
    %v6585 = vunpack.c.l.b16 %v6042
    %v6586 = vunpack.c.l.b16 %v6043
    %v6587 = vunpack.c.l.b16 %v6044
    %v6588 = vunpack.c.l.b16 %v6045
    %v6589 = vunpack.c.l.b16 %v6046
    %v6590 = vunpack.c.l.b16 %v6047
    %v6591 = vunpack.c.l.b16 %v6048
    %v6592 = vunpack.c.l.b16 %v6049
    %v6593 = vunpack.c.l.b16 %v6050
    %v6594 = vunpack.c.l.b16 %v6051
    %v6595 = vunpack.c.l.b16 %v6052
    %v6596 = vunpack.c.l.b16 %v6053
    %v6597 = vunpack.c.l.b16 %v6054
    %v6598 = vunpack.c.l.b16 %v6055
    %v6599 = vunpack.c.l.b16 %v6056
    %v6600 = vunpack.c.l.b16 %v6057
    %v6601 = vunpack.c.l.b16 %v6058
    %v6602 = vunpack.c.l.b16 %v6059
    %v6603 = vunpack.c.l.b16 %v6060
    %v6604 = vunpack.c.l.b16 %v6061
    %v6605 = vunpack.c.l.b16 %v6062
    %v6606 = vunpack.c.l.b16 %v6063
    %v6607 = vunpack.c.l.b16 %v6064
    %v6608 = vunpack.c.l.b16 %v6065
    %v6609 = vunpack.c.l.b16 %v6066
    %v6610 = vunpack.c.l.b16 %v6067
    %v6611 = vunpack.c.l.b16 %v6068
    %v6612 = vunpack.c.l.b16 %v6069
    %v6613 = vpack.c.b16 %v6505, %v6504
    %v6614 = vpack.c.b16 %v6507, %v6506
    %v6615 = vpack.c.b16 %v6509, %v6508
    %v6616 = vpack.c.b16 %v6511, %v6510
    %v6617 = vpack.c.b16 %v6513, %v6512
    %v6618 = vpack.c.b16 %v6515, %v6514
    %v6619 = vpack.c.b16 %v6517, %v6516
    %v6620 = vpack.c.b16 %v6519, %v6518
    %v6621 = vpack.c.b16 %v6521, %v6520
    %v6622 = vpack.c.b16 %v6523, %v6522
    %v6623 = vpack.c.b16 %v6525, %v6524
    %v6624 = vpack.c.b16 %v6527, %v6526
    %v6625 = vpack.c.b16 %v6529, %v6528
    %v6626 = vpack.c.b16 %v6531, %v6530
    %v6627 = vpack.c.b16 %v6533, %v6532
    %v6628 = vpack.c.b16 %v6535, %v6534
    %v6629 = vpack.c.b16 %v6537, %v6536
    %v6630 = vpack.c.b16 %v6539, %v6538
    %v6631 = vpack.c.b16 %v6541, %v6540
    %v6632 = vpack.c.b16 %v6543, %v6542
    %v6633 = vpack.c.b16 %v6545, %v6544
    %v6634 = vpack.c.b16 %v6547, %v6546
    %v6635 = vpack.c.b16 %v6549, %v6548
    %v6636 = vpack.c.b16 %v6551, %v6550
    %v6637 = vpack.c.b16 %v6553, %v6552
    %v6638 = vpack.c.b16 %v6555, %v6554
    %v6639 = vpack.c.b16 %v6557, %v6556
    %v6640 = vpack.c.b16 %v6559, %v6558
    %v6641 = vpack.c.b16 %v6561, %v6560
    %v6642 = vpack.c.b16 %v6563, %v6562
    %v6643 = vpack.c.b16 %v6565, %v6564
    %v6644 = vpack.c.b16 %v6567, %v6566
    %v6645 = vpack.c.b16 %v6569, %v6568
    %v6646 = vpack.c.b16 %v6571, %v6570
    %v6647 = vpack.c.b16 %v6573, %v6572
    %v6648 = vpack.c.b16 %v6575, %v6574
    %v6649 = vpack.c.b16 %v6577, %v6576
    %v6650 = vpack.c.b16 %v6579, %v6578
    %v6651 = vpack.c.b16 %v6581, %v6580
    %v6652 = vpack.c.b16 %v6583, %v6582
    %v6653 = vpack.c.b16 %v6585, %v6584
    %v6654 = vpack.c.b16 %v6587, %v6586
    %v6655 = vpack.c.b16 %v6589, %v6588
    %v6656 = vpack.c.b16 %v6591, %v6590
    %v6657 = vpack.c.b16 %v6593, %v6592
    %v6658 = vpack.c.b16 %v6595, %v6594
    %v6659 = vpack.c.b16 %v6597, %v6596
    %v6660 = vpack.c.b16 %v6599, %v6598
    %v6661 = vpack.c.b16 %v6601, %v6600
    %v6662 = vpack.c.b16 %v6603, %v6602
    %v6663 = vpack.c.b16 %v6605, %v6604
    %v6664 = vpack.c.b16 %v6607, %v6606
    %v6665 = vpack.c.b16 %v6609, %v6608
    %v6666 = vpack.c.b16 %v6611, %v6610
    %v6667 = vpack.c.b16 %v6612, %v6612
    %v6669 = vshrl.u32 %v6613, 16
    %v6671 = vshll.u32 %v6613, 16
    %v6673 = vrot.slane %v6671, 1
    %v6674 = vor.u32 %v6669, %v6673
    %v6676 = vshll.u32 %v6614, 16
    %v6678 = vrot.slane %v6676, 1
    %v6679 = vsel %vm2623, %v6674, %v6678
    %v6680 = vshrl.u32 %v6614, 16
    %v6682 = vor.u32 %v6680, %v6678
    %v6684 = vshll.u32 %v6615, 16
    %v6686 = vrot.slane %v6684, 1
    %v6687 = vsel %vm2623, %v6682, %v6686
    %v6688 = vshrl.u32 %v6615, 16
    %v6690 = vor.u32 %v6688, %v6686
    %v6692 = vshll.u32 %v6616, 16
    %v6694 = vrot.slane %v6692, 1
    %v6695 = vsel %vm2623, %v6690, %v6694
    %v6696 = vshrl.u32 %v6616, 16
    %v6698 = vor.u32 %v6696, %v6694
    %v6700 = vshll.u32 %v6617, 16
    %v6702 = vrot.slane %v6700, 1
    %v6703 = vsel %vm2623, %v6698, %v6702
    %v6704 = vshrl.u32 %v6617, 16
    %v6706 = vor.u32 %v6704, %v6702
    %v6708 = vshll.u32 %v6618, 16
    %v6710 = vrot.slane %v6708, 1
    %v6711 = vsel %vm2623, %v6706, %v6710
    %v6712 = vshrl.u32 %v6618, 16
    %v6714 = vor.u32 %v6712, %v6710
    %v6716 = vshll.u32 %v6619, 16
    %v6718 = vrot.slane %v6716, 1
    %v6719 = vsel %vm2623, %v6714, %v6718
    %v6720 = vshrl.u32 %v6619, 16
    %v6722 = vor.u32 %v6720, %v6718
    %v6724 = vshll.u32 %v6620, 16
    %v6726 = vrot.slane %v6724, 1
    %v6727 = vsel %vm2623, %v6722, %v6726
    %v6728 = vshrl.u32 %v6620, 16
    %v6730 = vor.u32 %v6728, %v6726
    %v6732 = vshll.u32 %v6621, 16
    %v6734 = vrot.slane %v6732, 1
    %v6735 = vsel %vm2623, %v6730, %v6734
    %v6736 = vshrl.u32 %v6621, 16
    %v6738 = vor.u32 %v6736, %v6734
    %v6740 = vshll.u32 %v6622, 16
    %v6742 = vrot.slane %v6740, 1
    %v6743 = vsel %vm2623, %v6738, %v6742
    %v6744 = vshrl.u32 %v6622, 16
    %v6746 = vor.u32 %v6744, %v6742
    %v6748 = vshll.u32 %v6623, 16
    %v6750 = vrot.slane %v6748, 1
    %v6751 = vsel %vm2623, %v6746, %v6750
    %v6752 = vshrl.u32 %v6623, 16
    %v6754 = vor.u32 %v6752, %v6750
    %v6756 = vshll.u32 %v6624, 16
    %v6758 = vrot.slane %v6756, 1
    %v6759 = vsel %vm2623, %v6754, %v6758
    %v6760 = vshrl.u32 %v6624, 16
    %v6762 = vor.u32 %v6760, %v6758
    %v6764 = vshll.u32 %v6625, 16
    %v6766 = vrot.slane %v6764, 1
    %v6767 = vsel %vm2623, %v6762, %v6766
    %v6768 = vshrl.u32 %v6625, 16
    %v6770 = vor.u32 %v6768, %v6766
    %v6772 = vshll.u32 %v6626, 16
    %v6774 = vrot.slane %v6772, 1
    %v6775 = vsel %vm2623, %v6770, %v6774
    %v6776 = vshrl.u32 %v6626, 16
    %v6778 = vor.u32 %v6776, %v6774
    %v6780 = vshll.u32 %v6627, 16
    %v6782 = vrot.slane %v6780, 1
    %v6783 = vsel %vm2623, %v6778, %v6782
    %v6784 = vshrl.u32 %v6627, 16
    %v6786 = vor.u32 %v6784, %v6782
    %v6788 = vshll.u32 %v6628, 16
    %v6790 = vrot.slane %v6788, 1
    %v6791 = vsel %vm2623, %v6786, %v6790
    %v6792 = vshrl.u32 %v6628, 16
    %v6794 = vor.u32 %v6792, %v6790
    %v6796 = vshll.u32 %v6629, 16
    %v6798 = vrot.slane %v6796, 1
    %v6799 = vsel %vm2623, %v6794, %v6798
    %v6800 = vshrl.u32 %v6629, 16
    %v6802 = vor.u32 %v6800, %v6798
    %v6804 = vshll.u32 %v6630, 16
    %v6806 = vrot.slane %v6804, 1
    %v6807 = vsel %vm2623, %v6802, %v6806
    %v6808 = vshrl.u32 %v6630, 16
    %v6810 = vor.u32 %v6808, %v6806
    %v6812 = vshll.u32 %v6631, 16
    %v6814 = vrot.slane %v6812, 1
    %v6815 = vsel %vm2623, %v6810, %v6814
    %v6816 = vshrl.u32 %v6631, 16
    %v6818 = vor.u32 %v6816, %v6814
    %v6820 = vshll.u32 %v6632, 16
    %v6822 = vrot.slane %v6820, 1
    %v6823 = vsel %vm2623, %v6818, %v6822
    %v6824 = vshrl.u32 %v6632, 16
    %v6826 = vor.u32 %v6824, %v6822
    %v6828 = vshll.u32 %v6633, 16
    %v6830 = vrot.slane %v6828, 1
    %v6831 = vsel %vm2623, %v6826, %v6830
    %v6832 = vshrl.u32 %v6633, 16
    %v6834 = vor.u32 %v6832, %v6830
    %v6836 = vshll.u32 %v6634, 16
    %v6838 = vrot.slane %v6836, 1
    %v6839 = vsel %vm2623, %v6834, %v6838
    %v6840 = vshrl.u32 %v6634, 16
    %v6842 = vor.u32 %v6840, %v6838
    %v6844 = vshll.u32 %v6635, 16
    %v6846 = vrot.slane %v6844, 1
    %v6847 = vsel %vm2623, %v6842, %v6846
    %v6848 = vshrl.u32 %v6635, 16
    %v6850 = vor.u32 %v6848, %v6846
    %v6852 = vshll.u32 %v6636, 16
    %v6854 = vrot.slane %v6852, 1
    %v6855 = vsel %vm2623, %v6850, %v6854
    %v6856 = vshrl.u32 %v6636, 16
    %v6858 = vor.u32 %v6856, %v6854
    %v6860 = vshll.u32 %v6637, 16
    %v6862 = vrot.slane %v6860, 1
    %v6863 = vsel %vm2623, %v6858, %v6862
    %v6864 = vshrl.u32 %v6637, 16
    %v6866 = vor.u32 %v6864, %v6862
    %v6868 = vshll.u32 %v6638, 16
    %v6870 = vrot.slane %v6868, 1
    %v6871 = vsel %vm2623, %v6866, %v6870
    %v6872 = vshrl.u32 %v6638, 16
    %v6874 = vor.u32 %v6872, %v6870
    %v6876 = vshll.u32 %v6639, 16
    %v6878 = vrot.slane %v6876, 1
    %v6879 = vsel %vm2623, %v6874, %v6878
    %v6880 = vshrl.u32 %v6639, 16
    %v6882 = vor.u32 %v6880, %v6878
    %v6884 = vshll.u32 %v6640, 16
    %v6886 = vrot.slane %v6884, 1
    %v6887 = vsel %vm2623, %v6882, %v6886
    %v6888 = vshrl.u32 %v6640, 16
    %v6890 = vor.u32 %v6888, %v6886
    %v6892 = vshll.u32 %v6641, 16
    %v6894 = vrot.slane %v6892, 1
    %v6895 = vsel %vm2623, %v6890, %v6894
    %v6896 = vshrl.u32 %v6641, 16
    %v6898 = vor.u32 %v6896, %v6894
    %v6900 = vshll.u32 %v6642, 16
    %v6902 = vrot.slane %v6900, 1
    %v6903 = vsel %vm2623, %v6898, %v6902
    %v6904 = vshrl.u32 %v6642, 16
    %v6906 = vor.u32 %v6904, %v6902
    %v6908 = vshll.u32 %v6643, 16
    %v6910 = vrot.slane %v6908, 1
    %v6911 = vsel %vm2623, %v6906, %v6910
    %v6912 = vshrl.u32 %v6643, 16
    %v6914 = vor.u32 %v6912, %v6910
    %v6916 = vshll.u32 %v6644, 16
    %v6918 = vrot.slane %v6916, 1
    %v6919 = vsel %vm2623, %v6914, %v6918
    %v6920 = vshrl.u32 %v6644, 16
    %v6922 = vor.u32 %v6920, %v6918
    %v6924 = vshll.u32 %v6645, 16
    %v6926 = vrot.slane %v6924, 1
    %v6927 = vsel %vm2623, %v6922, %v6926
    %v6928 = vshrl.u32 %v6645, 16
    %v6930 = vor.u32 %v6928, %v6926
    %v6932 = vshll.u32 %v6646, 16
    %v6934 = vrot.slane %v6932, 1
    %v6935 = vsel %vm2623, %v6930, %v6934
    %v6936 = vshrl.u32 %v6646, 16
    %v6938 = vor.u32 %v6936, %v6934
    %v6940 = vshll.u32 %v6647, 16
    %v6942 = vrot.slane %v6940, 1
    %v6943 = vsel %vm2623, %v6938, %v6942
    %v6944 = vshrl.u32 %v6647, 16
    %v6946 = vor.u32 %v6944, %v6942
    %v6948 = vshll.u32 %v6648, 16
    %v6950 = vrot.slane %v6948, 1
    %v6951 = vsel %vm2623, %v6946, %v6950
    %v6952 = vshrl.u32 %v6648, 16
    %v6954 = vor.u32 %v6952, %v6950
    %v6956 = vshll.u32 %v6649, 16
    %v6958 = vrot.slane %v6956, 1
    %v6959 = vsel %vm2623, %v6954, %v6958
    %v6960 = vshrl.u32 %v6649, 16
    %v6962 = vor.u32 %v6960, %v6958
    %v6964 = vshll.u32 %v6650, 16
    %v6966 = vrot.slane %v6964, 1
    %v6967 = vsel %vm2623, %v6962, %v6966
    %v6968 = vshrl.u32 %v6650, 16
    %v6970 = vor.u32 %v6968, %v6966
    %v6972 = vshll.u32 %v6651, 16
    %v6974 = vrot.slane %v6972, 1
    %v6975 = vsel %vm2623, %v6970, %v6974
    %v6976 = vshrl.u32 %v6651, 16
    %v6978 = vor.u32 %v6976, %v6974
    %v6980 = vshll.u32 %v6652, 16
    %v6982 = vrot.slane %v6980, 1
    %v6983 = vsel %vm2623, %v6978, %v6982
    %v6984 = vshrl.u32 %v6652, 16
    %v6986 = vor.u32 %v6984, %v6982
    %v6988 = vshll.u32 %v6653, 16
    %v6990 = vrot.slane %v6988, 1
    %v6991 = vsel %vm2623, %v6986, %v6990
    %v6992 = vshrl.u32 %v6653, 16
    %v6994 = vor.u32 %v6992, %v6990
    %v6996 = vshll.u32 %v6654, 16
    %v6998 = vrot.slane %v6996, 1
    %v6999 = vsel %vm2623, %v6994, %v6998
    %v7000 = vshrl.u32 %v6654, 16
    %v7002 = vor.u32 %v7000, %v6998
    %v7004 = vshll.u32 %v6655, 16
    %v7006 = vrot.slane %v7004, 1
    %v7007 = vsel %vm2623, %v7002, %v7006
    %v7008 = vshrl.u32 %v6655, 16
    %v7010 = vor.u32 %v7008, %v7006
    %v7012 = vshll.u32 %v6656, 16
    %v7014 = vrot.slane %v7012, 1
    %v7015 = vsel %vm2623, %v7010, %v7014
    %v7016 = vshrl.u32 %v6656, 16
    %v7018 = vor.u32 %v7016, %v7014
    %v7020 = vshll.u32 %v6657, 16
    %v7022 = vrot.slane %v7020, 1
    %v7023 = vsel %vm2623, %v7018, %v7022
    %v7024 = vshrl.u32 %v6657, 16
    %v7026 = vor.u32 %v7024, %v7022
    %v7028 = vshll.u32 %v6658, 16
    %v7030 = vrot.slane %v7028, 1
    %v7031 = vsel %vm2623, %v7026, %v7030
    %v7032 = vshrl.u32 %v6658, 16
    %v7034 = vor.u32 %v7032, %v7030
    %v7036 = vshll.u32 %v6659, 16
    %v7038 = vrot.slane %v7036, 1
    %v7039 = vsel %vm2623, %v7034, %v7038
    %v7040 = vshrl.u32 %v6659, 16
    %v7042 = vor.u32 %v7040, %v7038
    %v7044 = vshll.u32 %v6660, 16
    %v7046 = vrot.slane %v7044, 1
    %v7047 = vsel %vm2623, %v7042, %v7046
    %v7048 = vshrl.u32 %v6660, 16
    %v7050 = vor.u32 %v7048, %v7046
    %v7052 = vshll.u32 %v6661, 16
    %v7054 = vrot.slane %v7052, 1
    %v7055 = vsel %vm2623, %v7050, %v7054
    %v7056 = vshrl.u32 %v6661, 16
    %v7058 = vor.u32 %v7056, %v7054
    %v7060 = vshll.u32 %v6662, 16
    %v7062 = vrot.slane %v7060, 1
    %v7063 = vsel %vm2623, %v7058, %v7062
    %v7064 = vshrl.u32 %v6662, 16
    %v7066 = vor.u32 %v7064, %v7062
    %v7068 = vshll.u32 %v6663, 16
    %v7070 = vrot.slane %v7068, 1
    %v7071 = vsel %vm2623, %v7066, %v7070
    %v7072 = vshrl.u32 %v6663, 16
    %v7074 = vor.u32 %v7072, %v7070
    %v7076 = vshll.u32 %v6664, 16
    %v7078 = vrot.slane %v7076, 1
    %v7079 = vsel %vm2623, %v7074, %v7078
    %v7080 = vshrl.u32 %v6664, 16
    %v7082 = vor.u32 %v7080, %v7078
    %v7084 = vshll.u32 %v6665, 16
    %v7086 = vrot.slane %v7084, 1
    %v7087 = vsel %vm2623, %v7082, %v7086
    %v7088 = vshrl.u32 %v6665, 16
    %v7090 = vor.u32 %v7088, %v7086
    %v7092 = vshll.u32 %v6666, 16
    %v7094 = vrot.slane %v7092, 1
    %v7095 = vsel %vm2623, %v7090, %v7094
    %v7096 = vshrl.u32 %v6666, 16
    %v7098 = vor.u32 %v7096, %v7094
    %v7100 = vshll.u32 %v6667, 16
    %v7102 = vrot.slane %v7100, 1
    %v7103 = vsel %vm2623, %v7098, %v7102
    %v7159 = vunpack.c.l.b16 %v6070
    %v7160 = vpack.c.b16 %v6505, %v7159
    %v7161 = vrot.slane %v7160, 1
    %v7162 = vrot.slane %v6614, 1
    %v7163 = vsel %vm3117, %v7161, %v7162
    %v7164 = vrot.slane %v6615, 1
    %v7165 = vsel %vm3117, %v7162, %v7164
    %v7166 = vrot.slane %v6616, 1
    %v7167 = vsel %vm3117, %v7164, %v7166
    %v7168 = vrot.slane %v6617, 1
    %v7169 = vsel %vm3117, %v7166, %v7168
    %v7170 = vrot.slane %v6618, 1
    %v7171 = vsel %vm3117, %v7168, %v7170
    %v7172 = vrot.slane %v6619, 1
    %v7173 = vsel %vm3117, %v7170, %v7172
    %v7174 = vrot.slane %v6620, 1
    %v7175 = vsel %vm3117, %v7172, %v7174
    %v7176 = vrot.slane %v6621, 1
    %v7177 = vsel %vm3117, %v7174, %v7176
    %v7178 = vrot.slane %v6622, 1
    %v7179 = vsel %vm3117, %v7176, %v7178
    %v7180 = vrot.slane %v6623, 1
    %v7181 = vsel %vm3117, %v7178, %v7180
    %v7182 = vrot.slane %v6624, 1
    %v7183 = vsel %vm3117, %v7180, %v7182
    %v7184 = vrot.slane %v6625, 1
    %v7185 = vsel %vm3117, %v7182, %v7184
    %v7186 = vrot.slane %v6626, 1
    %v7187 = vsel %vm3117, %v7184, %v7186
    %v7188 = vrot.slane %v6627, 1
    %v7189 = vsel %vm3117, %v7186, %v7188
    %v7190 = vrot.slane %v6628, 1
    %v7191 = vsel %vm3117, %v7188, %v7190
    %v7192 = vrot.slane %v6629, 1
    %v7193 = vsel %vm3117, %v7190, %v7192
    %v7194 = vrot.slane %v6630, 1
    %v7195 = vsel %vm3117, %v7192, %v7194
    %v7196 = vrot.slane %v6631, 1
    %v7197 = vsel %vm3117, %v7194, %v7196
    %v7198 = vrot.slane %v6632, 1
    %v7199 = vsel %vm3117, %v7196, %v7198
    %v7200 = vrot.slane %v6633, 1
    %v7201 = vsel %vm3117, %v7198, %v7200
    %v7202 = vrot.slane %v6634, 1
    %v7203 = vsel %vm3117, %v7200, %v7202
    %v7204 = vrot.slane %v6635, 1
    %v7205 = vsel %vm3117, %v7202, %v7204
    %v7206 = vrot.slane %v6636, 1
    %v7207 = vsel %vm3117, %v7204, %v7206
    %v7208 = vrot.slane %v6637, 1
    %v7209 = vsel %vm3117, %v7206, %v7208
    %v7210 = vrot.slane %v6638, 1
    %v7211 = vsel %vm3117, %v7208, %v7210
    %v7212 = vrot.slane %v6639, 1
    %v7213 = vsel %vm3117, %v7210, %v7212
    %v7214 = vrot.slane %v6640, 1
    %v7215 = vsel %vm3117, %v7212, %v7214
    %v7216 = vrot.slane %v6641, 1
    %v7217 = vsel %vm3117, %v7214, %v7216
    %v7218 = vrot.slane %v6642, 1
    %v7219 = vsel %vm3117, %v7216, %v7218
    %v7220 = vrot.slane %v6643, 1
    %v7221 = vsel %vm3117, %v7218, %v7220
    %v7222 = vrot.slane %v6644, 1
    %v7223 = vsel %vm3117, %v7220, %v7222
    %v7224 = vrot.slane %v6645, 1
    %v7225 = vsel %vm3117, %v7222, %v7224
    %v7226 = vrot.slane %v6646, 1
    %v7227 = vsel %vm3117, %v7224, %v7226
    %v7228 = vrot.slane %v6647, 1
    %v7229 = vsel %vm3117, %v7226, %v7228
    %v7230 = vrot.slane %v6648, 1
    %v7231 = vsel %vm3117, %v7228, %v7230
    %v7232 = vrot.slane %v6649, 1
    %v7233 = vsel %vm3117, %v7230, %v7232
    %v7234 = vrot.slane %v6650, 1
    %v7235 = vsel %vm3117, %v7232, %v7234
    %v7236 = vrot.slane %v6651, 1
    %v7237 = vsel %vm3117, %v7234, %v7236
    %v7238 = vrot.slane %v6652, 1
    %v7239 = vsel %vm3117, %v7236, %v7238
    %v7240 = vrot.slane %v6653, 1
    %v7241 = vsel %vm3117, %v7238, %v7240
    %v7242 = vrot.slane %v6654, 1
    %v7243 = vsel %vm3117, %v7240, %v7242
    %v7244 = vrot.slane %v6655, 1
    %v7245 = vsel %vm3117, %v7242, %v7244
    %v7246 = vrot.slane %v6656, 1
    %v7247 = vsel %vm3117, %v7244, %v7246
    %v7248 = vrot.slane %v6657, 1
    %v7249 = vsel %vm3117, %v7246, %v7248
    %v7250 = vrot.slane %v6658, 1
    %v7251 = vsel %vm3117, %v7248, %v7250
    %v7252 = vrot.slane %v6659, 1
    %v7253 = vsel %vm3117, %v7250, %v7252
    %v7254 = vrot.slane %v6660, 1
    %v7255 = vsel %vm3117, %v7252, %v7254
    %v7256 = vrot.slane %v6661, 1
    %v7257 = vsel %vm3117, %v7254, %v7256
    %v7258 = vrot.slane %v6662, 1
    %v7259 = vsel %vm3117, %v7256, %v7258
    %v7260 = vrot.slane %v6663, 1
    %v7261 = vsel %vm3117, %v7258, %v7260
    %v7262 = vrot.slane %v6664, 1
    %v7263 = vsel %vm3117, %v7260, %v7262
    %v7264 = vrot.slane %v6665, 1
    %v7265 = vsel %vm3117, %v7262, %v7264
    %v7266 = vrot.slane %v6666, 1
    %v7267 = vsel %vm3117, %v7264, %v7266
    %v7268 = vrot.slane %v6667, 1
    %v7269 = vsel %vm3117, %v7266, %v7268
    %v7324 = vld [vmem:[%s5 + $0x180] sm:$0xf]
    %v7325 = vld [vmem:[%s5 + $0x184] sm:$0xf]
    %v7326 = vld [vmem:[%s5 + $0x188] sm:$0xf]
    %v7327 = vld [vmem:[%s5 + $0x18c] sm:$0xf]
    %v7328 = vld [vmem:[%s5 + $0x190] sm:$0xf]
    %v7329 = vld [vmem:[%s5 + $0x194] sm:$0xf]
    %v7330 = vld [vmem:[%s5 + $0x198] sm:$0xf]
    %v7331 = vld [vmem:[%s5 + $0x19c] sm:$0xf]
    %v7332 = vld [vmem:[%s5 + $0x1a0] sm:$0xf]
    %v7333 = vld [vmem:[%s5 + $0x1a4] sm:$0xf]
    %v7334 = vld [vmem:[%s5 + $0x1a8] sm:$0xf]
    %v7335 = vld [vmem:[%s5 + $0x1ac] sm:$0xf]
    %v7336 = vld [vmem:[%s5 + $0x1b0] sm:$0xf]
    %v7337 = vld [vmem:[%s5 + $0x1b4] sm:$0xf]
    %v7338 = vld [vmem:[%s5 + $0x1b8] sm:$0xf]
    %v7339 = vld [vmem:[%s5 + $0x1bc] sm:$0xf]
    %v7340 = vld [vmem:[%s5 + $0x1c0] sm:$0xf]
    %v7341 = vld [vmem:[%s5 + $0x1c4] sm:$0xf]
    %v7342 = vld [vmem:[%s5 + $0x1c8] sm:$0xf]
    %v7343 = vld [vmem:[%s5 + $0x1cc] sm:$0xf]
    %v7344 = vld [vmem:[%s5 + $0x1d0] sm:$0xf]
    %v7345 = vld [vmem:[%s5 + $0x1d4] sm:$0xf]
    %v7346 = vld [vmem:[%s5 + $0x1d8] sm:$0xf]
    %v7347 = vld [vmem:[%s5 + $0x1dc] sm:$0xf]
    %v7348 = vld [vmem:[%s5 + $0x1e0] sm:$0xf]
    %v7349 = vld [vmem:[%s5 + $0x1e4] sm:$0xf]
    %v7350 = vld [vmem:[%s5 + $0x1e8] sm:$0xf]
    %v7351 = vld [vmem:[%s5 + $0x1ec] sm:$0xf]
    %v7352 = vld [vmem:[%s5 + $0x1f0] sm:$0xf]
    %v7353 = vld [vmem:[%s5 + $0x1f4] sm:$0xf]
    %v7354 = vld [vmem:[%s5 + $0x1f8] sm:$0xf]
    %v7355 = vld [vmem:[%s5 + $0x1fc] sm:$0xf]
    %v7356 = vld [vmem:[%s5 + $0x200] sm:$0xf]
    %v7357 = vld [vmem:[%s5 + $0x204] sm:$0xf]
    %v7358 = vld [vmem:[%s5 + $0x208] sm:$0xf]
    %v7359 = vld [vmem:[%s5 + $0x20c] sm:$0xf]
    %v7360 = vld [vmem:[%s5 + $0x210] sm:$0xf]
    %v7361 = vld [vmem:[%s5 + $0x214] sm:$0xf]
    %v7362 = vld [vmem:[%s5 + $0x218] sm:$0xf]
    %v7363 = vld [vmem:[%s5 + $0x21c] sm:$0xf]
    %v7364 = vld [vmem:[%s5 + $0x220] sm:$0xf]
    %v7365 = vld [vmem:[%s5 + $0x224] sm:$0xf]
    %v7366 = vld [vmem:[%s5 + $0x228] sm:$0xf]
    %v7367 = vld [vmem:[%s5 + $0x22c] sm:$0xf]
    %v7368 = vld [vmem:[%s5 + $0x230] sm:$0xf]
    %v7369 = vld [vmem:[%s5 + $0x234] sm:$0xf]
    %v7370 = vld [vmem:[%s5 + $0x238] sm:$0xf]
    %v7371 = vld [vmem:[%s5 + $0x23c] sm:$0xf]
    %v7420 = vunpack.c.l.b16 %v7324
    %v7421 = vunpack.c.l.b16 %v7325
    %v7422 = vunpack.c.l.b16 %v7326
    %v7423 = vunpack.c.l.b16 %v7327
    %v7424 = vunpack.c.l.b16 %v7328
    %v7425 = vunpack.c.l.b16 %v7329
    %v7426 = vunpack.c.l.b16 %v7330
    %v7427 = vunpack.c.l.b16 %v7331
    %v7428 = vunpack.c.l.b16 %v7332
    %v7429 = vunpack.c.l.b16 %v7333
    %v7430 = vunpack.c.l.b16 %v7334
    %v7431 = vunpack.c.l.b16 %v7335
    %v7432 = vunpack.c.l.b16 %v7336
    %v7433 = vunpack.c.l.b16 %v7337
    %v7434 = vunpack.c.l.b16 %v7338
    %v7435 = vunpack.c.l.b16 %v7339
    %v7436 = vunpack.c.l.b16 %v7340
    %v7437 = vunpack.c.l.b16 %v7341
    %v7438 = vunpack.c.l.b16 %v7342
    %v7439 = vunpack.c.l.b16 %v7343
    %v7440 = vunpack.c.l.b16 %v7344
    %v7441 = vunpack.c.l.b16 %v7345
    %v7442 = vunpack.c.l.b16 %v7346
    %v7443 = vunpack.c.l.b16 %v7347
    %v7444 = vunpack.c.l.b16 %v7348
    %v7445 = vunpack.c.l.b16 %v7349
    %v7446 = vunpack.c.l.b16 %v7350
    %v7447 = vunpack.c.l.b16 %v7351
    %v7448 = vunpack.c.l.b16 %v7352
    %v7449 = vunpack.c.l.b16 %v7353
    %v7450 = vunpack.c.l.b16 %v7354
    %v7451 = vunpack.c.l.b16 %v7355
    %v7452 = vunpack.c.l.b16 %v7356
    %v7453 = vunpack.c.l.b16 %v7357
    %v7454 = vunpack.c.l.b16 %v7358
    %v7455 = vunpack.c.l.b16 %v7359
    %v7456 = vunpack.c.l.b16 %v7360
    %v7457 = vunpack.c.l.b16 %v7361
    %v7458 = vunpack.c.l.b16 %v7362
    %v7459 = vunpack.c.l.b16 %v7363
    %v7460 = vunpack.c.l.b16 %v7364
    %v7461 = vunpack.c.l.b16 %v7365
    %v7462 = vunpack.c.l.b16 %v7366
    %v7463 = vunpack.c.l.b16 %v7367
    %v7464 = vunpack.c.l.b16 %v7368
    %v7465 = vunpack.c.l.b16 %v7369
    %v7466 = vunpack.c.l.b16 %v7370
    %v7467 = vunpack.c.l.b16 %v7371
    %v7468 = vpack.c.b16 %v7421, %v7420
    %v7469 = vpack.c.b16 %v7423, %v7422
    %v7470 = vpack.c.b16 %v7425, %v7424
    %v7471 = vpack.c.b16 %v7427, %v7426
    %v7472 = vpack.c.b16 %v7429, %v7428
    %v7473 = vpack.c.b16 %v7431, %v7430
    %v7474 = vpack.c.b16 %v7433, %v7432
    %v7475 = vpack.c.b16 %v7435, %v7434
    %v7476 = vpack.c.b16 %v7437, %v7436
    %v7477 = vpack.c.b16 %v7439, %v7438
    %v7478 = vpack.c.b16 %v7441, %v7440
    %v7479 = vpack.c.b16 %v7443, %v7442
    %v7480 = vpack.c.b16 %v7445, %v7444
    %v7481 = vpack.c.b16 %v7447, %v7446
    %v7482 = vpack.c.b16 %v7449, %v7448
    %v7483 = vpack.c.b16 %v7451, %v7450
    %v7484 = vpack.c.b16 %v7453, %v7452
    %v7485 = vpack.c.b16 %v7455, %v7454
    %v7486 = vpack.c.b16 %v7457, %v7456
    %v7487 = vpack.c.b16 %v7459, %v7458
    %v7488 = vpack.c.b16 %v7461, %v7460
    %v7489 = vpack.c.b16 %v7463, %v7462
    %v7490 = vpack.c.b16 %v7465, %v7464
    %v7491 = vpack.c.b16 %v7467, %v7466
    %7516 = vmatpush.bf16.msra.mxu0 %v7475
    %7517 = vmatpush.bf16.msra.mxu0 %v7474
    %7518 = vmatpush.bf16.msra.mxu0 %v7473
    %7519 = vmatpush.bf16.msra.mxu0 %v7472
    %7520 = vmatpush.bf16.msra.mxu0 %v7471
    %7521 = vmatpush.bf16.msra.mxu0 %v7470
    %7522 = vmatpush.bf16.msra.mxu0 %v7469
    %7523 = vmatpush.bf16.msra.mxu0 %v7468
    %7524 = vmatmul.bf16.gmra.mxu0 %v6287
    %v7525 = vpop.f32.mrf.mxu0
    %v7526 = vadd.f32 0.0, %v7525
    %v7527 = vpop.f32.mrf.mxu0
    %v7528 = vadd.f32 0.0, %v7527
    %7529 = vmatmul.bf16.gmra.mxu0 %v6288
    %v7530 = vpop.f32.mrf.mxu0
    %v7531 = vpop.f32.mrf.mxu0
    %v7532 = vadd.f32 0.0, %v7531
    %7533 = vmatmul.bf16.gmra.mxu0 %v6289
    %v7534 = vpop.f32.mrf.mxu0
    %v7535 = vadd.f32 0.0, %v7534
    %v7536 = vpop.f32.mrf.mxu0
    %7537 = vmatmul.bf16.gmra.mxu0 %v6290
    %v7538 = vpop.f32.mrf.mxu0
    %v7539 = vadd.f32 0.0, %v7538
    %v7540 = vpop.f32.mrf.mxu0
    %v7541 = vadd.f32 0.0, %v7540
    %7542 = vmatmul.bf16.gmra.mxu0 %v6291
    %v7543 = vpop.f32.mrf.mxu0
    %v7544 = vpop.f32.mrf.mxu0
    %v7545 = vadd.f32 0.0, %v7544
    %7546 = vmatmul.bf16.gmra.mxu0 %v6292
    %v7547 = vpop.f32.mrf.mxu0
    %v7548 = vadd.f32 0.0, %v7547
    %v7549 = vpop.f32.mrf.mxu0
    %7550 = vmatmul.bf16.gmra.mxu0 %v6293
    %v7551 = vpop.f32.mrf.mxu0
    %v7552 = vadd.f32 0.0, %v7551
    %v7553 = vpop.f32.mrf.mxu0
    %v7554 = vadd.f32 0.0, %v7553
    %7555 = vmatmul.bf16.gmra.mxu0 %v6294
    %v7556 = vpop.f32.mrf.mxu0
    %v7557 = vpop.f32.mrf.mxu0
    %v7558 = vadd.f32 0.0, %v7557
    %7559 = vmatmul.bf16.gmra.mxu0 %v6295
    %v7560 = vpop.f32.mrf.mxu0
    %v7561 = vadd.f32 0.0, %v7560
    %v7562 = vpop.f32.mrf.mxu0
    %7563 = vmatmul.bf16.gmra.mxu0 %v6296
    %v7564 = vpop.f32.mrf.mxu0
    %v7565 = vadd.f32 0.0, %v7564
    %v7566 = vpop.f32.mrf.mxu0
    %v7567 = vadd.f32 0.0, %v7566
    %7568 = vmatmul.bf16.gmra.mxu0 %v6297
    %v7569 = vpop.f32.mrf.mxu0
    %v7570 = vpop.f32.mrf.mxu0
    %v7571 = vadd.f32 0.0, %v7570
    %7572 = vmatmul.bf16.gmra.mxu0 %v6298
    %v7573 = vpop.f32.mrf.mxu0
    %v7574 = vadd.f32 0.0, %v7573
    %v7575 = vpop.f32.mrf.mxu0
    %7576 = vmatmul.bf16.gmra.mxu0 %v6299
    %v7577 = vpop.f32.mrf.mxu0
    %v7578 = vadd.f32 0.0, %v7577
    %v7579 = vpop.f32.mrf.mxu0
    %v7580 = vadd.f32 0.0, %v7579
    %7581 = vmatmul.bf16.gmra.mxu0 %v6300
    %v7582 = vpop.f32.mrf.mxu0
    %v7583 = vpop.f32.mrf.mxu0
    %v7584 = vadd.f32 0.0, %v7583
    %7585 = vmatmul.bf16.gmra.mxu0 %v6301
    %v7586 = vpop.f32.mrf.mxu0
    %v7587 = vadd.f32 0.0, %v7586
    %v7588 = vpop.f32.mrf.mxu0
    %7589 = vmatmul.bf16.gmra.mxu0 %v6302
    %v7590 = vpop.f32.mrf.mxu0
    %v7591 = vadd.f32 0.0, %v7590
    %v7592 = vpop.f32.mrf.mxu0
    %v7593 = vadd.f32 0.0, %v7592
    %7594 = vmatmul.bf16.gmra.mxu0 %v6303
    %v7595 = vpop.f32.mrf.mxu0
    %v7596 = vpop.f32.mrf.mxu0
    %v7597 = vadd.f32 0.0, %v7596
    %7598 = vmatmul.bf16.gmra.mxu0 %v6304
    %v7599 = vpop.f32.mrf.mxu0
    %v7600 = vadd.f32 0.0, %v7599
    %v7601 = vpop.f32.mrf.mxu0
    %7602 = vmatmul.bf16.gmra.mxu0 %v6305
    %v7603 = vpop.f32.mrf.mxu0
    %v7604 = vadd.f32 0.0, %v7603
    %v7605 = vpop.f32.mrf.mxu0
    %v7606 = vadd.f32 0.0, %v7605
    %7607 = vmatmul.bf16.gmra.mxu0 %v6306
    %v7608 = vpop.f32.mrf.mxu0
    %v7609 = vpop.f32.mrf.mxu0
    %v7610 = vadd.f32 0.0, %v7609
    %7611 = vmatmul.bf16.gmra.mxu0 %v6307
    %v7612 = vpop.f32.mrf.mxu0
    %v7613 = vadd.f32 0.0, %v7612
    %v7614 = vpop.f32.mrf.mxu0
    %7615 = vmatmul.bf16.gmra.mxu0 %v6308
    %v7616 = vpop.f32.mrf.mxu0
    %v7617 = vadd.f32 0.0, %v7616
    %v7618 = vpop.f32.mrf.mxu0
    %v7619 = vadd.f32 0.0, %v7618
    %7620 = vmatmul.bf16.gmra.mxu0 %v6309
    %v7621 = vpop.f32.mrf.mxu0
    %v7622 = vpop.f32.mrf.mxu0
    %v7623 = vadd.f32 0.0, %v7622
    %7624 = vmatmul.bf16.gmra.mxu0 %v6310
    %v7625 = vpop.f32.mrf.mxu0
    %v7626 = vadd.f32 0.0, %v7625
    %v7627 = vpop.f32.mrf.mxu0
    %7628 = vmatmul.bf16.gmra.mxu0 %v6311
    %v7629 = vpop.f32.mrf.mxu0
    %v7630 = vpop.f32.mrf.mxu0
    %7631 = vmatmul.bf16.gmra.mxu0 %v6312
    %v7632 = vpop.f32.mrf.mxu0
    %v7633 = vpop.f32.mrf.mxu0
    %7634 = vmatmul.bf16.gmra.mxu0 %v6313
    %v7635 = vpop.f32.mrf.mxu0
    %v7636 = vpop.f32.mrf.mxu0
    %7637 = vmatmul.bf16.gmra.mxu0 %v6314
    %v7638 = vpop.f32.mrf.mxu0
    %v7639 = vadd.f32 0.0, %v7638
    %v7640 = vpop.f32.mrf.mxu0
    %v7641 = vadd.f32 0.0, %v7640
    %7642 = vmatmul.bf16.gmra.mxu0 %v6315
    %v7643 = vpop.f32.mrf.mxu0
    %v7644 = vpop.f32.mrf.mxu0
    %v7645 = vadd.f32 0.0, %v7644
    %7646 = vmatmul.bf16.gmra.mxu0 %v6316
    %v7647 = vpop.f32.mrf.mxu0
    %v7648 = vadd.f32 0.0, %v7647
    %v7649 = vpop.f32.mrf.mxu0
    %7650 = vmatmul.bf16.gmra.mxu0 %v6317
    %v7651 = vpop.f32.mrf.mxu0
    %v7652 = vadd.f32 0.0, %v7651
    %v7653 = vpop.f32.mrf.mxu0
    %v7654 = vadd.f32 0.0, %v7653
    %7655 = vmatmul.bf16.gmra.mxu0 %v6318
    %v7656 = vpop.f32.mrf.mxu0
    %v7657 = vpop.f32.mrf.mxu0
    %v7658 = vadd.f32 0.0, %v7657
    %7659 = vmatmul.bf16.gmra.mxu0 %v6319
    %v7660 = vpop.f32.mrf.mxu0
    %v7661 = vadd.f32 0.0, %v7660
    %v7662 = vpop.f32.mrf.mxu0
    %7663 = vmatmul.bf16.gmra.mxu0 %v6320
    %v7664 = vpop.f32.mrf.mxu0
    %v7665 = vadd.f32 0.0, %v7664
    %v7666 = vpop.f32.mrf.mxu0
    %v7667 = vadd.f32 0.0, %v7666
    %7668 = vmatmul.bf16.gmra.mxu0 %v6321
    %v7669 = vpop.f32.mrf.mxu0
    %v7670 = vpop.f32.mrf.mxu0
    %v7671 = vadd.f32 0.0, %v7670
    %7672 = vmatmul.bf16.gmra.mxu0 %v6322
    %v7673 = vpop.f32.mrf.mxu0
    %v7674 = vadd.f32 0.0, %v7673
    %v7675 = vpop.f32.mrf.mxu0
    %7676 = vmatmul.bf16.gmra.mxu0 %v6323
    %v7677 = vpop.f32.mrf.mxu0
    %v7678 = vadd.f32 0.0, %v7677
    %v7679 = vpop.f32.mrf.mxu0
    %v7680 = vadd.f32 0.0, %v7679
    %7681 = vmatmul.bf16.gmra.mxu0 %v6324
    %v7682 = vpop.f32.mrf.mxu0
    %v7683 = vpop.f32.mrf.mxu0
    %v7684 = vadd.f32 0.0, %v7683
    %7685 = vmatmul.bf16.gmra.mxu0 %v6325
    %v7686 = vpop.f32.mrf.mxu0
    %v7687 = vadd.f32 0.0, %v7686
    %v7688 = vpop.f32.mrf.mxu0
    %7689 = vmatmul.bf16.gmra.mxu0 %v6326
    %v7690 = vpop.f32.mrf.mxu0
    %v7691 = vadd.f32 0.0, %v7690
    %v7692 = vpop.f32.mrf.mxu0
    %v7693 = vadd.f32 0.0, %v7692
    %7694 = vmatmul.bf16.gmra.mxu0 %v6327
    %v7695 = vpop.f32.mrf.mxu0
    %v7696 = vpop.f32.mrf.mxu0
    %v7697 = vadd.f32 0.0, %v7696
    %7698 = vmatmul.bf16.gmra.mxu0 %v6328
    %v7699 = vpop.f32.mrf.mxu0
    %v7700 = vadd.f32 0.0, %v7699
    %v7701 = vpop.f32.mrf.mxu0
    %7702 = vmatmul.bf16.gmra.mxu0 %v6329
    %v7703 = vpop.f32.mrf.mxu0
    %v7704 = vadd.f32 0.0, %v7703
    %v7705 = vpop.f32.mrf.mxu0
    %v7706 = vadd.f32 0.0, %v7705
    %7707 = vmatmul.bf16.gmra.mxu0 %v6330
    %v7708 = vpop.f32.mrf.mxu0
    %v7709 = vpop.f32.mrf.mxu0
    %v7710 = vadd.f32 0.0, %v7709
    %7711 = vmatmul.bf16.gmra.mxu0 %v6331
    %v7712 = vpop.f32.mrf.mxu0
    %v7713 = vadd.f32 0.0, %v7712
    %v7714 = vpop.f32.mrf.mxu0
    %7715 = vmatmul.bf16.gmra.mxu0 %v6332
    %v7716 = vpop.f32.mrf.mxu0
    %v7717 = vadd.f32 0.0, %v7716
    %v7718 = vpop.f32.mrf.mxu0
    %v7719 = vadd.f32 0.0, %v7718
    %7720 = vmatmul.bf16.gmra.mxu0 %v6333
    %v7721 = vpop.f32.mrf.mxu0
    %v7722 = vpop.f32.mrf.mxu0
    %v7723 = vadd.f32 0.0, %v7722
    %7724 = vmatmul.bf16.gmra.mxu0 %v6334
    %v7725 = vpop.f32.mrf.mxu0
    %v7726 = vadd.f32 0.0, %v7725
    %v7727 = vpop.f32.mrf.mxu0
    %7728 = vmatmul.bf16.gmra.mxu0 %v6335
    %v7729 = vpop.f32.mrf.mxu0
    %v7730 = vadd.f32 0.0, %v7729
    %v7731 = vpop.f32.mrf.mxu0
    %v7732 = vadd.f32 0.0, %v7731
    %7733 = vmatmul.bf16.gmra.mxu0 %v6336
    %v7734 = vpop.f32.mrf.mxu0
    %v7735 = vpop.f32.mrf.mxu0
    %v7736 = vadd.f32 0.0, %v7735
    %7737 = vmatmul.bf16.gmra.mxu0 %v6337
    %v7738 = vpop.f32.mrf.mxu0
    %v7739 = vadd.f32 0.0, %v7738
    %v7740 = vpop.f32.mrf.mxu0
    %7741 = vmatmul.bf16.gmra.mxu0 %v6338
    %v7742 = vpop.f32.mrf.mxu0
    %v7743 = vpop.f32.mrf.mxu0
    %7744 = vmatmul.bf16.gmra.mxu0 %v6339
    %v7745 = vpop.f32.mrf.mxu0
    %v7746 = vpop.f32.mrf.mxu0
    %7747 = vmatmul.bf16.gmra.mxu0 %v6340
    %v7748 = vpop.f32.mrf.mxu0
    %v7749 = vpop.f32.mrf.mxu0
    %7750 = vdwg.mxu0
    %7751 = vmatpush.bf16.msra.mxu0 %v7483
    %7752 = vmatpush.bf16.msra.mxu0 %v7482
    %7753 = vmatpush.bf16.msra.mxu0 %v7481
    %7754 = vmatpush.bf16.msra.mxu0 %v7480
    %7755 = vmatpush.bf16.msra.mxu0 %v7479
    %7756 = vmatpush.bf16.msra.mxu0 %v7478
    %7757 = vmatpush.bf16.msra.mxu0 %v7477
    %7758 = vmatpush.bf16.msra.mxu0 %v7476
    %7759 = vmatmul.bf16.gmra.mxu0 %v6679
    %v7760 = vpop.f32.mrf.mxu0
    %v7761 = vadd.f32 %v7526, %v7760
    %v7762 = vpop.f32.mrf.mxu0
    %v7763 = vadd.f32 %v7528, %v7762
    %7764 = vmatmul.bf16.gmra.mxu0 %v6687
    %v7765 = vpop.f32.mrf.mxu0
    %v7766 = vpop.f32.mrf.mxu0
    %v7767 = vadd.f32 %v7532, %v7766
    %7768 = vmatmul.bf16.gmra.mxu0 %v6695
    %v7769 = vpop.f32.mrf.mxu0
    %v7770 = vadd.f32 %v7535, %v7769
    %v7771 = vpop.f32.mrf.mxu0
    %7772 = vmatmul.bf16.gmra.mxu0 %v6703
    %v7773 = vpop.f32.mrf.mxu0
    %v7774 = vadd.f32 %v7539, %v7773
    %v7775 = vpop.f32.mrf.mxu0
    %v7776 = vadd.f32 %v7541, %v7775
    %7777 = vmatmul.bf16.gmra.mxu0 %v6711
    %v7778 = vpop.f32.mrf.mxu0
    %v7779 = vpop.f32.mrf.mxu0
    %v7780 = vadd.f32 %v7545, %v7779
    %7781 = vmatmul.bf16.gmra.mxu0 %v6719
    %v7782 = vpop.f32.mrf.mxu0
    %v7783 = vadd.f32 %v7548, %v7782
    %v7784 = vpop.f32.mrf.mxu0
    %7785 = vmatmul.bf16.gmra.mxu0 %v6727
    %v7786 = vpop.f32.mrf.mxu0
    %v7787 = vadd.f32 %v7552, %v7786
    %v7788 = vpop.f32.mrf.mxu0
    %v7789 = vadd.f32 %v7554, %v7788
    %7790 = vmatmul.bf16.gmra.mxu0 %v6735
    %v7791 = vpop.f32.mrf.mxu0
    %v7792 = vpop.f32.mrf.mxu0
    %v7793 = vadd.f32 %v7558, %v7792
    %7794 = vmatmul.bf16.gmra.mxu0 %v6743
    %v7795 = vpop.f32.mrf.mxu0
    %v7796 = vadd.f32 %v7561, %v7795
    %v7797 = vpop.f32.mrf.mxu0
    %7798 = vmatmul.bf16.gmra.mxu0 %v6751
    %v7799 = vpop.f32.mrf.mxu0
    %v7800 = vadd.f32 %v7565, %v7799
    %v7801 = vpop.f32.mrf.mxu0
    %v7802 = vadd.f32 %v7567, %v7801
    %7803 = vmatmul.bf16.gmra.mxu0 %v6759
    %v7804 = vpop.f32.mrf.mxu0
    %v7805 = vpop.f32.mrf.mxu0
    %v7806 = vadd.f32 %v7571, %v7805
    %7807 = vmatmul.bf16.gmra.mxu0 %v6767
    %v7808 = vpop.f32.mrf.mxu0
    %v7809 = vadd.f32 %v7574, %v7808
    %v7810 = vpop.f32.mrf.mxu0
    %7811 = vmatmul.bf16.gmra.mxu0 %v6775
    %v7812 = vpop.f32.mrf.mxu0
    %v7813 = vadd.f32 %v7578, %v7812
    %v7814 = vpop.f32.mrf.mxu0
    %v7815 = vadd.f32 %v7580, %v7814
    %7816 = vmatmul.bf16.gmra.mxu0 %v6783
    %v7817 = vpop.f32.mrf.mxu0
    %v7818 = vpop.f32.mrf.mxu0
    %v7819 = vadd.f32 %v7584, %v7818
    %7820 = vmatmul.bf16.gmra.mxu0 %v6791
    %v7821 = vpop.f32.mrf.mxu0
    %v7822 = vadd.f32 %v7587, %v7821
    %v7823 = vpop.f32.mrf.mxu0
    %7824 = vmatmul.bf16.gmra.mxu0 %v6799
    %v7825 = vpop.f32.mrf.mxu0
    %v7826 = vadd.f32 %v7591, %v7825
    %v7827 = vpop.f32.mrf.mxu0
    %v7828 = vadd.f32 %v7593, %v7827
    %7829 = vmatmul.bf16.gmra.mxu0 %v6807
    %v7830 = vpop.f32.mrf.mxu0
    %v7831 = vpop.f32.mrf.mxu0
    %v7832 = vadd.f32 %v7597, %v7831
    %7833 = vmatmul.bf16.gmra.mxu0 %v6815
    %v7834 = vpop.f32.mrf.mxu0
    %v7835 = vadd.f32 %v7600, %v7834
    %v7836 = vpop.f32.mrf.mxu0
    %7837 = vmatmul.bf16.gmra.mxu0 %v6823
    %v7838 = vpop.f32.mrf.mxu0
    %v7839 = vadd.f32 %v7604, %v7838
    %v7840 = vpop.f32.mrf.mxu0
    %v7841 = vadd.f32 %v7606, %v7840
    %7842 = vmatmul.bf16.gmra.mxu0 %v6831
    %v7843 = vpop.f32.mrf.mxu0
    %v7844 = vpop.f32.mrf.mxu0
    %v7845 = vadd.f32 %v7610, %v7844
    %7846 = vmatmul.bf16.gmra.mxu0 %v6839
    %v7847 = vpop.f32.mrf.mxu0
    %v7848 = vadd.f32 %v7613, %v7847
    %v7849 = vpop.f32.mrf.mxu0
    %7850 = vmatmul.bf16.gmra.mxu0 %v6847
    %v7851 = vpop.f32.mrf.mxu0
    %v7852 = vadd.f32 %v7617, %v7851
    %v7853 = vpop.f32.mrf.mxu0
    %v7854 = vadd.f32 %v7619, %v7853
    %7855 = vmatmul.bf16.gmra.mxu0 %v6855
    %v7856 = vpop.f32.mrf.mxu0
    %v7857 = vpop.f32.mrf.mxu0
    %v7858 = vadd.f32 %v7623, %v7857
    %7859 = vmatmul.bf16.gmra.mxu0 %v6863
    %v7860 = vpop.f32.mrf.mxu0
    %v7861 = vadd.f32 %v7626, %v7860
    %v7862 = vpop.f32.mrf.mxu0
    %7863 = vmatmul.bf16.gmra.mxu0 %v6871
    %v7864 = vpop.f32.mrf.mxu0
    %v7865 = vpop.f32.mrf.mxu0
    %7866 = vmatmul.bf16.gmra.mxu0 %v6879
    %v7867 = vpop.f32.mrf.mxu0
    %v7868 = vpop.f32.mrf.mxu0
    %7869 = vmatmul.bf16.gmra.mxu0 %v6887
    %v7870 = vpop.f32.mrf.mxu0
    %v7871 = vpop.f32.mrf.mxu0
    %7872 = vmatmul.bf16.gmra.mxu0 %v6895
    %v7873 = vpop.f32.mrf.mxu0
    %v7874 = vadd.f32 %v7639, %v7873
    %v7875 = vpop.f32.mrf.mxu0
    %v7876 = vadd.f32 %v7641, %v7875
    %7877 = vmatmul.bf16.gmra.mxu0 %v6903
    %v7878 = vpop.f32.mrf.mxu0
    %v7879 = vpop.f32.mrf.mxu0
    %v7880 = vadd.f32 %v7645, %v7879
    %7881 = vmatmul.bf16.gmra.mxu0 %v6911
    %v7882 = vpop.f32.mrf.mxu0
    %v7883 = vadd.f32 %v7648, %v7882
    %v7884 = vpop.f32.mrf.mxu0
    %7885 = vmatmul.bf16.gmra.mxu0 %v6919
    %v7886 = vpop.f32.mrf.mxu0
    %v7887 = vadd.f32 %v7652, %v7886
    %v7888 = vpop.f32.mrf.mxu0
    %v7889 = vadd.f32 %v7654, %v7888
    %7890 = vmatmul.bf16.gmra.mxu0 %v6927
    %v7891 = vpop.f32.mrf.mxu0
    %v7892 = vpop.f32.mrf.mxu0
    %v7893 = vadd.f32 %v7658, %v7892
    %7894 = vmatmul.bf16.gmra.mxu0 %v6935
    %v7895 = vpop.f32.mrf.mxu0
    %v7896 = vadd.f32 %v7661, %v7895
    %v7897 = vpop.f32.mrf.mxu0
    %7898 = vmatmul.bf16.gmra.mxu0 %v6943
    %v7899 = vpop.f32.mrf.mxu0
    %v7900 = vadd.f32 %v7665, %v7899
    %v7901 = vpop.f32.mrf.mxu0
    %v7902 = vadd.f32 %v7667, %v7901
    %7903 = vmatmul.bf16.gmra.mxu0 %v6951
    %v7904 = vpop.f32.mrf.mxu0
    %v7905 = vpop.f32.mrf.mxu0
    %v7906 = vadd.f32 %v7671, %v7905
    %7907 = vmatmul.bf16.gmra.mxu0 %v6959
    %v7908 = vpop.f32.mrf.mxu0
    %v7909 = vadd.f32 %v7674, %v7908
    %v7910 = vpop.f32.mrf.mxu0
    %7911 = vmatmul.bf16.gmra.mxu0 %v6967
    %v7912 = vpop.f32.mrf.mxu0
    %v7913 = vadd.f32 %v7678, %v7912
    %v7914 = vpop.f32.mrf.mxu0
    %v7915 = vadd.f32 %v7680, %v7914
    %7916 = vmatmul.bf16.gmra.mxu0 %v6975
    %v7917 = vpop.f32.mrf.mxu0
    %v7918 = vpop.f32.mrf.mxu0
    %v7919 = vadd.f32 %v7684, %v7918
    %7920 = vmatmul.bf16.gmra.mxu0 %v6983
    %v7921 = vpop.f32.mrf.mxu0
    %v7922 = vadd.f32 %v7687, %v7921
    %v7923 = vpop.f32.mrf.mxu0
    %7924 = vmatmul.bf16.gmra.mxu0 %v6991
    %v7925 = vpop.f32.mrf.mxu0
    %v7926 = vadd.f32 %v7691, %v7925
    %v7927 = vpop.f32.mrf.mxu0
    %v7928 = vadd.f32 %v7693, %v7927
    %7929 = vmatmul.bf16.gmra.mxu0 %v6999
    %v7930 = vpop.f32.mrf.mxu0
    %v7931 = vpop.f32.mrf.mxu0
    %v7932 = vadd.f32 %v7697, %v7931
    %7933 = vmatmul.bf16.gmra.mxu0 %v7007
    %v7934 = vpop.f32.mrf.mxu0
    %v7935 = vadd.f32 %v7700, %v7934
    %v7936 = vpop.f32.mrf.mxu0
    %7937 = vmatmul.bf16.gmra.mxu0 %v7015
    %v7938 = vpop.f32.mrf.mxu0
    %v7939 = vadd.f32 %v7704, %v7938
    %v7940 = vpop.f32.mrf.mxu0
    %v7941 = vadd.f32 %v7706, %v7940
    %7942 = vmatmul.bf16.gmra.mxu0 %v7023
    %v7943 = vpop.f32.mrf.mxu0
    %v7944 = vpop.f32.mrf.mxu0
    %v7945 = vadd.f32 %v7710, %v7944
    %7946 = vmatmul.bf16.gmra.mxu0 %v7031
    %v7947 = vpop.f32.mrf.mxu0
    %v7948 = vadd.f32 %v7713, %v7947
    %v7949 = vpop.f32.mrf.mxu0
    %7950 = vmatmul.bf16.gmra.mxu0 %v7039
    %v7951 = vpop.f32.mrf.mxu0
    %v7952 = vadd.f32 %v7717, %v7951
    %v7953 = vpop.f32.mrf.mxu0
    %v7954 = vadd.f32 %v7719, %v7953
    %7955 = vmatmul.bf16.gmra.mxu0 %v7047
    %v7956 = vpop.f32.mrf.mxu0
    %v7957 = vpop.f32.mrf.mxu0
    %v7958 = vadd.f32 %v7723, %v7957
    %7959 = vmatmul.bf16.gmra.mxu0 %v7055
    %v7960 = vpop.f32.mrf.mxu0
    %v7961 = vadd.f32 %v7726, %v7960
    %v7962 = vpop.f32.mrf.mxu0
    %7963 = vmatmul.bf16.gmra.mxu0 %v7063
    %v7964 = vpop.f32.mrf.mxu0
    %v7965 = vadd.f32 %v7730, %v7964
    %v7966 = vpop.f32.mrf.mxu0
    %v7967 = vadd.f32 %v7732, %v7966
    %7968 = vmatmul.bf16.gmra.mxu0 %v7071
    %v7969 = vpop.f32.mrf.mxu0
    %v7970 = vpop.f32.mrf.mxu0
    %v7971 = vadd.f32 %v7736, %v7970
    %7972 = vmatmul.bf16.gmra.mxu0 %v7079
    %v7973 = vpop.f32.mrf.mxu0
    %v7974 = vadd.f32 %v7739, %v7973
    %v7975 = vpop.f32.mrf.mxu0
    %7976 = vmatmul.bf16.gmra.mxu0 %v7087
    %v7977 = vpop.f32.mrf.mxu0
    %v7978 = vpop.f32.mrf.mxu0
    %7979 = vmatmul.bf16.gmra.mxu0 %v7095
    %v7980 = vpop.f32.mrf.mxu0
    %v7981 = vpop.f32.mrf.mxu0
    %7982 = vmatmul.bf16.gmra.mxu0 %v7103
    %v7983 = vpop.f32.mrf.mxu0
    %v7984 = vpop.f32.mrf.mxu0
    %7985 = vdwg.mxu0
    %7986 = vmatpush.bf16.msra.mxu0 %v7491
    %7987 = vmatpush.bf16.msra.mxu0 %v7490
    %7988 = vmatpush.bf16.msra.mxu0 %v7489
    %7989 = vmatpush.bf16.msra.mxu0 %v7488
    %7990 = vmatpush.bf16.msra.mxu0 %v7487
    %7991 = vmatpush.bf16.msra.mxu0 %v7486
    %7992 = vmatpush.bf16.msra.mxu0 %v7485
    %7993 = vmatpush.bf16.msra.mxu0 %v7484
    %7994 = vmatmul.bf16.gmra.mxu0 %v7163
    %v7995 = vpop.f32.mrf.mxu0
    %v7996 = vadd.f32 %v7761, %v7995
    %v7997 = vpop.f32.mrf.mxu0
    %v7998 = vadd.f32 %v7763, %v7997
    %7999 = vmatmul.bf16.gmra.mxu0 %v7165
    %v8000 = vpop.f32.mrf.mxu0
    %v8001 = vpop.f32.mrf.mxu0
    %v8002 = vadd.f32 %v7767, %v8001
    %8003 = vmatmul.bf16.gmra.mxu0 %v7167
    %v8004 = vpop.f32.mrf.mxu0
    %v8005 = vadd.f32 %v7770, %v8004
    %v8006 = vpop.f32.mrf.mxu0
    %8007 = vmatmul.bf16.gmra.mxu0 %v7169
    %v8008 = vpop.f32.mrf.mxu0
    %v8009 = vadd.f32 %v7774, %v8008
    %v8010 = vpop.f32.mrf.mxu0
    %v8011 = vadd.f32 %v7776, %v8010
    %8012 = vmatmul.bf16.gmra.mxu0 %v7171
    %v8013 = vpop.f32.mrf.mxu0
    %v8014 = vpop.f32.mrf.mxu0
    %v8015 = vadd.f32 %v7780, %v8014
    %8016 = vmatmul.bf16.gmra.mxu0 %v7173
    %v8017 = vpop.f32.mrf.mxu0
    %v8018 = vadd.f32 %v7783, %v8017
    %v8019 = vpop.f32.mrf.mxu0
    %8020 = vmatmul.bf16.gmra.mxu0 %v7175
    %v8021 = vpop.f32.mrf.mxu0
    %v8022 = vadd.f32 %v7787, %v8021
    %v8023 = vpop.f32.mrf.mxu0
    %v8024 = vadd.f32 %v7789, %v8023
    %8025 = vmatmul.bf16.gmra.mxu0 %v7177
    %v8026 = vpop.f32.mrf.mxu0
    %v8027 = vpop.f32.mrf.mxu0
    %v8028 = vadd.f32 %v7793, %v8027
    %8029 = vmatmul.bf16.gmra.mxu0 %v7179
    %v8030 = vpop.f32.mrf.mxu0
    %v8031 = vadd.f32 %v7796, %v8030
    %v8032 = vpop.f32.mrf.mxu0
    %8033 = vmatmul.bf16.gmra.mxu0 %v7181
    %v8034 = vpop.f32.mrf.mxu0
    %v8035 = vadd.f32 %v7800, %v8034
    %v8036 = vpop.f32.mrf.mxu0
    %v8037 = vadd.f32 %v7802, %v8036
    %8038 = vmatmul.bf16.gmra.mxu0 %v7183
    %v8039 = vpop.f32.mrf.mxu0
    %v8040 = vpop.f32.mrf.mxu0
    %v8041 = vadd.f32 %v7806, %v8040
    %8042 = vmatmul.bf16.gmra.mxu0 %v7185
    %v8043 = vpop.f32.mrf.mxu0
    %v8044 = vadd.f32 %v7809, %v8043
    %v8045 = vpop.f32.mrf.mxu0
    %8046 = vmatmul.bf16.gmra.mxu0 %v7187
    %v8047 = vpop.f32.mrf.mxu0
    %v8048 = vadd.f32 %v7813, %v8047
    %v8049 = vpop.f32.mrf.mxu0
    %v8050 = vadd.f32 %v7815, %v8049
    %8051 = vmatmul.bf16.gmra.mxu0 %v7189
    %v8052 = vpop.f32.mrf.mxu0
    %v8053 = vpop.f32.mrf.mxu0
    %v8054 = vadd.f32 %v7819, %v8053
    %8055 = vmatmul.bf16.gmra.mxu0 %v7191
    %v8056 = vpop.f32.mrf.mxu0
    %v8057 = vadd.f32 %v7822, %v8056
    %v8058 = vpop.f32.mrf.mxu0
    %8059 = vmatmul.bf16.gmra.mxu0 %v7193
    %v8060 = vpop.f32.mrf.mxu0
    %v8061 = vadd.f32 %v7826, %v8060
    %v8062 = vpop.f32.mrf.mxu0
    %v8063 = vadd.f32 %v7828, %v8062
    %8064 = vmatmul.bf16.gmra.mxu0 %v7195
    %v8065 = vpop.f32.mrf.mxu0
    %v8066 = vpop.f32.mrf.mxu0
    %v8067 = vadd.f32 %v7832, %v8066
    %8068 = vmatmul.bf16.gmra.mxu0 %v7197
    %v8069 = vpop.f32.mrf.mxu0
    %v8070 = vadd.f32 %v7835, %v8069
    %v8071 = vpop.f32.mrf.mxu0
    %8072 = vmatmul.bf16.gmra.mxu0 %v7199
    %v8073 = vpop.f32.mrf.mxu0
    %v8074 = vadd.f32 %v7839, %v8073
    %v8075 = vpop.f32.mrf.mxu0
    %v8076 = vadd.f32 %v7841, %v8075
    %8077 = vmatmul.bf16.gmra.mxu0 %v7201
    %v8078 = vpop.f32.mrf.mxu0
    %v8079 = vpop.f32.mrf.mxu0
    %v8080 = vadd.f32 %v7845, %v8079
    %8081 = vmatmul.bf16.gmra.mxu0 %v7203
    %v8082 = vpop.f32.mrf.mxu0
    %v8083 = vadd.f32 %v7848, %v8082
    %v8084 = vpop.f32.mrf.mxu0
    %8085 = vmatmul.bf16.gmra.mxu0 %v7205
    %v8086 = vpop.f32.mrf.mxu0
    %v8087 = vadd.f32 %v7852, %v8086
    %v8088 = vpop.f32.mrf.mxu0
    %v8089 = vadd.f32 %v7854, %v8088
    %8090 = vmatmul.bf16.gmra.mxu0 %v7207
    %v8091 = vpop.f32.mrf.mxu0
    %v8092 = vpop.f32.mrf.mxu0
    %v8093 = vadd.f32 %v7858, %v8092
    %8094 = vmatmul.bf16.gmra.mxu0 %v7209
    %v8095 = vpop.f32.mrf.mxu0
    %v8096 = vadd.f32 %v7861, %v8095
    %v8097 = vpop.f32.mrf.mxu0
    %8098 = vmatmul.bf16.gmra.mxu0 %v7211
    %v8099 = vpop.f32.mrf.mxu0
    %v8100 = vpop.f32.mrf.mxu0
    %8101 = vmatmul.bf16.gmra.mxu0 %v7213
    %v8102 = vpop.f32.mrf.mxu0
    %v8103 = vpop.f32.mrf.mxu0
    %8104 = vmatmul.bf16.gmra.mxu0 %v7215
    %v8105 = vpop.f32.mrf.mxu0
    %v8106 = vpop.f32.mrf.mxu0
    %8107 = vmatmul.bf16.gmra.mxu0 %v7217
    %v8108 = vpop.f32.mrf.mxu0
    %v8109 = vadd.f32 %v7874, %v8108
    %v8110 = vpop.f32.mrf.mxu0
    %v8111 = vadd.f32 %v7876, %v8110
    %8112 = vmatmul.bf16.gmra.mxu0 %v7219
    %v8113 = vpop.f32.mrf.mxu0
    %v8114 = vpop.f32.mrf.mxu0
    %v8115 = vadd.f32 %v7880, %v8114
    %8116 = vmatmul.bf16.gmra.mxu0 %v7221
    %v8117 = vpop.f32.mrf.mxu0
    %v8118 = vadd.f32 %v7883, %v8117
    %v8119 = vpop.f32.mrf.mxu0
    %8120 = vmatmul.bf16.gmra.mxu0 %v7223
    %v8121 = vpop.f32.mrf.mxu0
    %v8122 = vadd.f32 %v7887, %v8121
    %v8123 = vpop.f32.mrf.mxu0
    %v8124 = vadd.f32 %v7889, %v8123
    %8125 = vmatmul.bf16.gmra.mxu0 %v7225
    %v8126 = vpop.f32.mrf.mxu0
    %v8127 = vpop.f32.mrf.mxu0
    %v8128 = vadd.f32 %v7893, %v8127
    %8129 = vmatmul.bf16.gmra.mxu0 %v7227
    %v8130 = vpop.f32.mrf.mxu0
    %v8131 = vadd.f32 %v7896, %v8130
    %v8132 = vpop.f32.mrf.mxu0
    %8133 = vmatmul.bf16.gmra.mxu0 %v7229
    %v8134 = vpop.f32.mrf.mxu0
    %v8135 = vadd.f32 %v7900, %v8134
    %v8136 = vpop.f32.mrf.mxu0
    %v8137 = vadd.f32 %v7902, %v8136
    %8138 = vmatmul.bf16.gmra.mxu0 %v7231
    %v8139 = vpop.f32.mrf.mxu0
    %v8140 = vpop.f32.mrf.mxu0
    %v8141 = vadd.f32 %v7906, %v8140
    %8142 = vmatmul.bf16.gmra.mxu0 %v7233
    %v8143 = vpop.f32.mrf.mxu0
    %v8144 = vadd.f32 %v7909, %v8143
    %v8145 = vpop.f32.mrf.mxu0
    %8146 = vmatmul.bf16.gmra.mxu0 %v7235
    %v8147 = vpop.f32.mrf.mxu0
    %v8148 = vadd.f32 %v7913, %v8147
    %v8149 = vpop.f32.mrf.mxu0
    %v8150 = vadd.f32 %v7915, %v8149
    %8151 = vmatmul.bf16.gmra.mxu0 %v7237
    %v8152 = vpop.f32.mrf.mxu0
    %v8153 = vpop.f32.mrf.mxu0
    %v8154 = vadd.f32 %v7919, %v8153
    %8155 = vmatmul.bf16.gmra.mxu0 %v7239
    %v8156 = vpop.f32.mrf.mxu0
    %v8157 = vadd.f32 %v7922, %v8156
    %v8158 = vpop.f32.mrf.mxu0
    %8159 = vmatmul.bf16.gmra.mxu0 %v7241
    %v8160 = vpop.f32.mrf.mxu0
    %v8161 = vadd.f32 %v7926, %v8160
    %v8162 = vpop.f32.mrf.mxu0
    %v8163 = vadd.f32 %v7928, %v8162
    %8164 = vmatmul.bf16.gmra.mxu0 %v7243
    %v8165 = vpop.f32.mrf.mxu0
    %v8166 = vpop.f32.mrf.mxu0
    %v8167 = vadd.f32 %v7932, %v8166
    %8168 = vmatmul.bf16.gmra.mxu0 %v7245
    %v8169 = vpop.f32.mrf.mxu0
    %v8170 = vadd.f32 %v7935, %v8169
    %v8171 = vpop.f32.mrf.mxu0
    %8172 = vmatmul.bf16.gmra.mxu0 %v7247
    %v8173 = vpop.f32.mrf.mxu0
    %v8174 = vadd.f32 %v7939, %v8173
    %v8175 = vpop.f32.mrf.mxu0
    %v8176 = vadd.f32 %v7941, %v8175
    %8177 = vmatmul.bf16.gmra.mxu0 %v7249
    %v8178 = vpop.f32.mrf.mxu0
    %v8179 = vpop.f32.mrf.mxu0
    %v8180 = vadd.f32 %v7945, %v8179
    %8181 = vmatmul.bf16.gmra.mxu0 %v7251
    %v8182 = vpop.f32.mrf.mxu0
    %v8183 = vadd.f32 %v7948, %v8182
    %v8184 = vpop.f32.mrf.mxu0
    %8185 = vmatmul.bf16.gmra.mxu0 %v7253
    %v8186 = vpop.f32.mrf.mxu0
    %v8187 = vadd.f32 %v7952, %v8186
    %v8188 = vpop.f32.mrf.mxu0
    %v8189 = vadd.f32 %v7954, %v8188
    %8190 = vmatmul.bf16.gmra.mxu0 %v7255
    %v8191 = vpop.f32.mrf.mxu0
    %v8192 = vpop.f32.mrf.mxu0
    %v8193 = vadd.f32 %v7958, %v8192
    %8194 = vmatmul.bf16.gmra.mxu0 %v7257
    %v8195 = vpop.f32.mrf.mxu0
    %v8196 = vadd.f32 %v7961, %v8195
    %v8197 = vpop.f32.mrf.mxu0
    %8198 = vmatmul.bf16.gmra.mxu0 %v7259
    %v8199 = vpop.f32.mrf.mxu0
    %v8200 = vadd.f32 %v7965, %v8199
    %v8201 = vpop.f32.mrf.mxu0
    %v8202 = vadd.f32 %v7967, %v8201
    %8203 = vmatmul.bf16.gmra.mxu0 %v7261
    %v8204 = vpop.f32.mrf.mxu0
    %v8205 = vpop.f32.mrf.mxu0
    %v8206 = vadd.f32 %v7971, %v8205
    %8207 = vmatmul.bf16.gmra.mxu0 %v7263
    %v8208 = vpop.f32.mrf.mxu0
    %v8209 = vadd.f32 %v7974, %v8208
    %v8210 = vpop.f32.mrf.mxu0
    %8211 = vmatmul.bf16.gmra.mxu0 %v7265
    %v8212 = vpop.f32.mrf.mxu0
    %v8213 = vpop.f32.mrf.mxu0
    %8214 = vmatmul.bf16.gmra.mxu0 %v7267
    %v8215 = vpop.f32.mrf.mxu0
    %v8216 = vpop.f32.mrf.mxu0
    %8217 = vmatmul.bf16.gmra.mxu0 %v7269
    %v8218 = vpop.f32.mrf.mxu0
    %v8219 = vpop.f32.mrf.mxu0
    %8220 = vdwg.mxu0
    %v8221 = vadd.f32 %v5628, %v7996
    %v8222 = vadd.f32 %v5630, %v7998
    %v8223 = vadd.f32 %v5634, %v8002
    %v8224 = vadd.f32 %v5637, %v8005
    %v8225 = vadd.f32 %v5641, %v8009
    %v8226 = vadd.f32 %v5643, %v8011
    %v8227 = vadd.f32 %v5647, %v8015
    %v8228 = vadd.f32 %v5650, %v8018
    %v8229 = vadd.f32 %v5654, %v8022
    %v8230 = vadd.f32 %v5656, %v8024
    %v8231 = vadd.f32 %v5660, %v8028
    %v8232 = vadd.f32 %v5663, %v8031
    %v8233 = vadd.f32 %v5667, %v8035
    %v8234 = vadd.f32 %v5669, %v8037
    %v8235 = vadd.f32 %v5673, %v8041
    %v8236 = vadd.f32 %v5676, %v8044
    %v8237 = vadd.f32 %v5680, %v8048
    %v8238 = vadd.f32 %v5682, %v8050
    %v8239 = vadd.f32 %v5686, %v8054
    %v8240 = vadd.f32 %v5689, %v8057
    %v8241 = vadd.f32 %v5693, %v8061
    %v8242 = vadd.f32 %v5695, %v8063
    %v8243 = vadd.f32 %v5699, %v8067
    %v8244 = vadd.f32 %v5702, %v8070
    %v8245 = vadd.f32 %v5706, %v8074
    %v8246 = vadd.f32 %v5708, %v8076
    %v8247 = vadd.f32 %v5712, %v8080
    %v8248 = vadd.f32 %v5715, %v8083
    %v8249 = vadd.f32 %v5719, %v8087
    %v8250 = vadd.f32 %v5721, %v8089
    %v8251 = vadd.f32 %v5725, %v8093
    %v8252 = vadd.f32 %v5728, %v8096
    %v8253 = vadd.f32 %v5741, %v8109
    %v8254 = vadd.f32 %v5743, %v8111
    %v8255 = vadd.f32 %v5747, %v8115
    %v8256 = vadd.f32 %v5750, %v8118
    %v8257 = vadd.f32 %v5754, %v8122
    %v8258 = vadd.f32 %v5756, %v8124
    %v8259 = vadd.f32 %v5760, %v8128
    %v8260 = vadd.f32 %v5763, %v8131
    %v8261 = vadd.f32 %v5767, %v8135
    %v8262 = vadd.f32 %v5769, %v8137
    %v8263 = vadd.f32 %v5773, %v8141
    %v8264 = vadd.f32 %v5776, %v8144
    %v8265 = vadd.f32 %v5780, %v8148
    %v8266 = vadd.f32 %v5782, %v8150
    %v8267 = vadd.f32 %v5786, %v8154
    %v8268 = vadd.f32 %v5789, %v8157
    %v8269 = vadd.f32 %v5793, %v8161
    %v8270 = vadd.f32 %v5795, %v8163
    %v8271 = vadd.f32 %v5799, %v8167
    %v8272 = vadd.f32 %v5802, %v8170
    %v8273 = vadd.f32 %v5806, %v8174
    %v8274 = vadd.f32 %v5808, %v8176
    %v8275 = vadd.f32 %v5812, %v8180
    %v8276 = vadd.f32 %v5815, %v8183
    %v8277 = vadd.f32 %v5819, %v8187
    %v8278 = vadd.f32 %v5821, %v8189
    %v8279 = vadd.f32 %v5825, %v8193
    %v8280 = vadd.f32 %v5828, %v8196
    %v8281 = vadd.f32 %v5832, %v8200
    %v8282 = vadd.f32 %v5834, %v8202
    %v8283 = vadd.f32 %v5838, %v8206
    %v8284 = vadd.f32 %v5841, %v8209
    %v8285 = vmax.f32 %v8221, 0.0
    %v8286 = vmax.f32 %v8222, 0.0
    %v8287 = vmax.f32 %v8223, 0.0
    %v8288 = vmax.f32 %v8224, 0.0
    %v8289 = vmax.f32 %v8225, 0.0
    %v8290 = vmax.f32 %v8226, 0.0
    %v8291 = vmax.f32 %v8227, 0.0
    %v8292 = vmax.f32 %v8228, 0.0
    %v8293 = vmax.f32 %v8229, 0.0
    %v8294 = vmax.f32 %v8230, 0.0
    %v8295 = vmax.f32 %v8231, 0.0
    %v8296 = vmax.f32 %v8232, 0.0
    %v8297 = vmax.f32 %v8233, 0.0
    %v8298 = vmax.f32 %v8234, 0.0
    %v8299 = vmax.f32 %v8235, 0.0
    %v8300 = vmax.f32 %v8236, 0.0
    %v8301 = vmax.f32 %v8237, 0.0
    %v8302 = vmax.f32 %v8238, 0.0
    %v8303 = vmax.f32 %v8239, 0.0
    %v8304 = vmax.f32 %v8240, 0.0
    %v8305 = vmax.f32 %v8241, 0.0
    %v8306 = vmax.f32 %v8242, 0.0
    %v8307 = vmax.f32 %v8243, 0.0
    %v8308 = vmax.f32 %v8244, 0.0
    %v8309 = vmax.f32 %v8245, 0.0
    %v8310 = vmax.f32 %v8246, 0.0
    %v8311 = vmax.f32 %v8247, 0.0
    %v8312 = vmax.f32 %v8248, 0.0
    %v8313 = vmax.f32 %v8249, 0.0
    %v8314 = vmax.f32 %v8250, 0.0
    %v8315 = vmax.f32 %v8251, 0.0
    %v8316 = vmax.f32 %v8252, 0.0
    %v8317 = vmax.f32 %v8253, 0.0
    %v8318 = vmax.f32 %v8254, 0.0
    %v8319 = vmax.f32 %v8255, 0.0
    %v8320 = vmax.f32 %v8256, 0.0
    %v8321 = vmax.f32 %v8257, 0.0
    %v8322 = vmax.f32 %v8258, 0.0
    %v8323 = vmax.f32 %v8259, 0.0
    %v8324 = vmax.f32 %v8260, 0.0
    %v8325 = vmax.f32 %v8261, 0.0
    %v8326 = vmax.f32 %v8262, 0.0
    %v8327 = vmax.f32 %v8263, 0.0
    %v8328 = vmax.f32 %v8264, 0.0
    %v8329 = vmax.f32 %v8265, 0.0
    %v8330 = vmax.f32 %v8266, 0.0
    %v8331 = vmax.f32 %v8267, 0.0
    %v8332 = vmax.f32 %v8268, 0.0
    %v8333 = vmax.f32 %v8269, 0.0
    %v8334 = vmax.f32 %v8270, 0.0
    %v8335 = vmax.f32 %v8271, 0.0
    %v8336 = vmax.f32 %v8272, 0.0
    %v8337 = vmax.f32 %v8273, 0.0
    %v8338 = vmax.f32 %v8274, 0.0
    %v8339 = vmax.f32 %v8275, 0.0
    %v8340 = vmax.f32 %v8276, 0.0
    %v8341 = vmax.f32 %v8277, 0.0
    %v8342 = vmax.f32 %v8278, 0.0
    %v8343 = vmax.f32 %v8279, 0.0
    %v8344 = vmax.f32 %v8280, 0.0
    %v8345 = vmax.f32 %v8281, 0.0
    %v8346 = vmax.f32 %v8282, 0.0
    %v8347 = vmax.f32 %v8283, 0.0
    %v8348 = vmax.f32 %v8284, 0.0
    %v8349 = vld [vmem:[%s6] sm:$0x1]
    %v8351 = vperm.slane %v8349, 0
    %v8353 = vmul.f32 %v8285, %v8351
    %v8354 = vmul.f32 %v8286, %v8351
    %v8355 = vmul.f32 %v8287, %v8351
    %v8356 = vmul.f32 %v8288, %v8351
    %v8357 = vmul.f32 %v8289, %v8351
    %v8358 = vmul.f32 %v8290, %v8351
    %v8359 = vmul.f32 %v8291, %v8351
    %v8360 = vmul.f32 %v8292, %v8351
    %v8361 = vmul.f32 %v8293, %v8351
    %v8362 = vmul.f32 %v8294, %v8351
    %v8363 = vmul.f32 %v8295, %v8351
    %v8364 = vmul.f32 %v8296, %v8351
    %v8365 = vmul.f32 %v8297, %v8351
    %v8366 = vmul.f32 %v8298, %v8351
    %v8367 = vmul.f32 %v8299, %v8351
    %v8368 = vmul.f32 %v8300, %v8351
    %v8369 = vmul.f32 %v8301, %v8351
    %v8370 = vmul.f32 %v8302, %v8351
    %v8371 = vmul.f32 %v8303, %v8351
    %v8372 = vmul.f32 %v8304, %v8351
    %v8373 = vmul.f32 %v8305, %v8351
    %v8374 = vmul.f32 %v8306, %v8351
    %v8375 = vmul.f32 %v8307, %v8351
    %v8376 = vmul.f32 %v8308, %v8351
    %v8377 = vmul.f32 %v8309, %v8351
    %v8378 = vmul.f32 %v8310, %v8351
    %v8379 = vmul.f32 %v8311, %v8351
    %v8380 = vmul.f32 %v8312, %v8351
    %v8381 = vmul.f32 %v8313, %v8351
    %v8382 = vmul.f32 %v8314, %v8351
    %v8383 = vmul.f32 %v8315, %v8351
    %v8384 = vmul.f32 %v8316, %v8351
    %v8385 = vmul.f32 %v8317, %v8351
    %v8386 = vmul.f32 %v8318, %v8351
    %v8387 = vmul.f32 %v8319, %v8351
    %v8388 = vmul.f32 %v8320, %v8351
    %v8389 = vmul.f32 %v8321, %v8351
    %v8390 = vmul.f32 %v8322, %v8351
    %v8391 = vmul.f32 %v8323, %v8351
    %v8392 = vmul.f32 %v8324, %v8351
    %v8393 = vmul.f32 %v8325, %v8351
    %v8394 = vmul.f32 %v8326, %v8351
    %v8395 = vmul.f32 %v8327, %v8351
    %v8396 = vmul.f32 %v8328, %v8351
    %v8397 = vmul.f32 %v8329, %v8351
    %v8398 = vmul.f32 %v8330, %v8351
    %v8399 = vmul.f32 %v8331, %v8351
    %v8400 = vmul.f32 %v8332, %v8351
    %v8401 = vmul.f32 %v8333, %v8351
    %v8402 = vmul.f32 %v8334, %v8351
    %v8403 = vmul.f32 %v8335, %v8351
    %v8404 = vmul.f32 %v8336, %v8351
    %v8405 = vmul.f32 %v8337, %v8351
    %v8406 = vmul.f32 %v8338, %v8351
    %v8407 = vmul.f32 %v8339, %v8351
    %v8408 = vmul.f32 %v8340, %v8351
    %v8409 = vmul.f32 %v8341, %v8351
    %v8410 = vmul.f32 %v8342, %v8351
    %v8411 = vmul.f32 %v8343, %v8351
    %v8412 = vmul.f32 %v8344, %v8351
    %v8413 = vmul.f32 %v8345, %v8351
    %v8414 = vmul.f32 %v8346, %v8351
    %v8415 = vmul.f32 %v8347, %v8351
    %v8416 = vmul.f32 %v8348, %v8351
    %v8417 = vld [vmem:[%s7] sm:$0x1]
    %v8419 = vperm.slane %v8417, 0
    %v8421 = vadd.f32 %v8353, %v8419
    %v8422 = vadd.f32 %v8354, %v8419
    %v8423 = vadd.f32 %v8355, %v8419
    %v8424 = vadd.f32 %v8356, %v8419
    %v8425 = vadd.f32 %v8357, %v8419
    %v8426 = vadd.f32 %v8358, %v8419
    %v8427 = vadd.f32 %v8359, %v8419
    %v8428 = vadd.f32 %v8360, %v8419
    %v8429 = vadd.f32 %v8361, %v8419
    %v8430 = vadd.f32 %v8362, %v8419
    %v8431 = vadd.f32 %v8363, %v8419
    %v8432 = vadd.f32 %v8364, %v8419
    %v8433 = vadd.f32 %v8365, %v8419
    %v8434 = vadd.f32 %v8366, %v8419
    %v8435 = vadd.f32 %v8367, %v8419
    %v8436 = vadd.f32 %v8368, %v8419
    %v8437 = vadd.f32 %v8369, %v8419
    %v8438 = vadd.f32 %v8370, %v8419
    %v8439 = vadd.f32 %v8371, %v8419
    %v8440 = vadd.f32 %v8372, %v8419
    %v8441 = vadd.f32 %v8373, %v8419
    %v8442 = vadd.f32 %v8374, %v8419
    %v8443 = vadd.f32 %v8375, %v8419
    %v8444 = vadd.f32 %v8376, %v8419
    %v8445 = vadd.f32 %v8377, %v8419
    %v8446 = vadd.f32 %v8378, %v8419
    %v8447 = vadd.f32 %v8379, %v8419
    %v8448 = vadd.f32 %v8380, %v8419
    %v8449 = vadd.f32 %v8381, %v8419
    %v8450 = vadd.f32 %v8382, %v8419
    %v8451 = vadd.f32 %v8383, %v8419
    %v8452 = vadd.f32 %v8384, %v8419
    %v8453 = vadd.f32 %v8385, %v8419
    %v8454 = vadd.f32 %v8386, %v8419
    %v8455 = vadd.f32 %v8387, %v8419
    %v8456 = vadd.f32 %v8388, %v8419
    %v8457 = vadd.f32 %v8389, %v8419
    %v8458 = vadd.f32 %v8390, %v8419
    %v8459 = vadd.f32 %v8391, %v8419
    %v8460 = vadd.f32 %v8392, %v8419
    %v8461 = vadd.f32 %v8393, %v8419
    %v8462 = vadd.f32 %v8394, %v8419
    %v8463 = vadd.f32 %v8395, %v8419
    %v8464 = vadd.f32 %v8396, %v8419
    %v8465 = vadd.f32 %v8397, %v8419
    %v8466 = vadd.f32 %v8398, %v8419
    %v8467 = vadd.f32 %v8399, %v8419
    %v8468 = vadd.f32 %v8400, %v8419
    %v8469 = vadd.f32 %v8401, %v8419
    %v8470 = vadd.f32 %v8402, %v8419
    %v8471 = vadd.f32 %v8403, %v8419
    %v8472 = vadd.f32 %v8404, %v8419
    %v8473 = vadd.f32 %v8405, %v8419
    %v8474 = vadd.f32 %v8406, %v8419
    %v8475 = vadd.f32 %v8407, %v8419
    %v8476 = vadd.f32 %v8408, %v8419
    %v8477 = vadd.f32 %v8409, %v8419
    %v8478 = vadd.f32 %v8410, %v8419
    %v8479 = vadd.f32 %v8411, %v8419
    %v8480 = vadd.f32 %v8412, %v8419
    %v8481 = vadd.f32 %v8413, %v8419
    %v8482 = vadd.f32 %v8414, %v8419
    %v8483 = vadd.f32 %v8415, %v8419
    %v8484 = vadd.f32 %v8416, %v8419
    %v8485 = vmax.f32 %v8421, %v8423
    %v8486 = vmax.f32 %v8422, %v8424
    %v8487 = vmax.f32 %v8425, %v8427
    %v8488 = vmax.f32 %v8426, %v8428
    %v8489 = vmax.f32 %v8429, %v8431
    %v8490 = vmax.f32 %v8430, %v8432
    %v8491 = vmax.f32 %v8433, %v8435
    %v8492 = vmax.f32 %v8434, %v8436
    %v8493 = vmax.f32 %v8437, %v8439
    %v8494 = vmax.f32 %v8438, %v8440
    %v8495 = vmax.f32 %v8441, %v8443
    %v8496 = vmax.f32 %v8442, %v8444
    %v8497 = vmax.f32 %v8445, %v8447
    %v8498 = vmax.f32 %v8446, %v8448
    %v8499 = vmax.f32 %v8449, %v8451
    %v8500 = vmax.f32 %v8450, %v8452
    %v8501 = vmax.f32 %v8453, %v8455
    %v8502 = vmax.f32 %v8454, %v8456
    %v8503 = vmax.f32 %v8457, %v8459
    %v8504 = vmax.f32 %v8458, %v8460
    %v8505 = vmax.f32 %v8461, %v8463
    %v8506 = vmax.f32 %v8462, %v8464
    %v8507 = vmax.f32 %v8465, %v8467
    %v8508 = vmax.f32 %v8466, %v8468
    %v8509 = vmax.f32 %v8469, %v8471
    %v8510 = vmax.f32 %v8470, %v8472
    %v8511 = vmax.f32 %v8473, %v8475
    %v8512 = vmax.f32 %v8474, %v8476
    %v8513 = vmax.f32 %v8477, %v8479
    %v8514 = vmax.f32 %v8478, %v8480
    %v8515 = vmax.f32 %v8481, %v8483
    %v8516 = vmax.f32 %v8482, %v8484
    %v8549 = vrot.slane %v8485, 2
    %v8550 = vrot.slane %v8485, 4
    %v8551 = vrot.slane %v8485, 6
    %v8552 = vrot.slane %v8486, 2
    %v8553 = vrot.slane %v8486, 4
    %v8554 = vrot.slane %v8486, 6
    %v8555 = vrot.slane %v8487, 2
    %v8556 = vrot.slane %v8487, 4
    %v8557 = vrot.slane %v8487, 6
    %v8558 = vrot.slane %v8488, 2
    %v8559 = vrot.slane %v8488, 4
    %v8560 = vrot.slane %v8488, 6
    %v8561 = vrot.slane %v8489, 2
    %v8562 = vrot.slane %v8489, 4
    %v8563 = vrot.slane %v8489, 6
    %v8564 = vrot.slane %v8490, 2
    %v8565 = vrot.slane %v8490, 4
    %v8566 = vrot.slane %v8490, 6
    %v8567 = vrot.slane %v8491, 2
    %v8568 = vrot.slane %v8491, 4
    %v8569 = vrot.slane %v8491, 6
    %v8570 = vrot.slane %v8492, 2
    %v8571 = vrot.slane %v8492, 4
    %v8572 = vrot.slane %v8492, 6
    %v8573 = vrot.slane %v8493, 2
    %v8574 = vrot.slane %v8493, 4
    %v8575 = vrot.slane %v8493, 6
    %v8576 = vrot.slane %v8494, 2
    %v8577 = vrot.slane %v8494, 4
    %v8578 = vrot.slane %v8494, 6
    %v8579 = vrot.slane %v8495, 2
    %v8580 = vrot.slane %v8495, 4
    %v8581 = vrot.slane %v8495, 6
    %v8582 = vrot.slane %v8496, 2
    %v8583 = vrot.slane %v8496, 4
    %v8584 = vrot.slane %v8496, 6
    %v8585 = vrot.slane %v8497, 2
    %v8586 = vrot.slane %v8497, 4
    %v8587 = vrot.slane %v8497, 6
    %v8588 = vrot.slane %v8498, 2
    %v8589 = vrot.slane %v8498, 4
    %v8590 = vrot.slane %v8498, 6
    %v8591 = vrot.slane %v8499, 2
    %v8592 = vrot.slane %v8499, 4
    %v8593 = vrot.slane %v8499, 6
    %v8594 = vrot.slane %v8500, 2
    %v8595 = vrot.slane %v8500, 4
    %v8596 = vrot.slane %v8500, 6
    %v8597 = vrot.slane %v8501, 2
    %v8598 = vrot.slane %v8501, 4
    %v8599 = vrot.slane %v8501, 6
    %v8600 = vrot.slane %v8502, 2
    %v8601 = vrot.slane %v8502, 4
    %v8602 = vrot.slane %v8502, 6
    %v8603 = vrot.slane %v8503, 2
    %v8604 = vrot.slane %v8503, 4
    %v8605 = vrot.slane %v8503, 6
    %v8606 = vrot.slane %v8504, 2
    %v8607 = vrot.slane %v8504, 4
    %v8608 = vrot.slane %v8504, 6
    %v8609 = vrot.slane %v8505, 2
    %v8610 = vrot.slane %v8505, 4
    %v8611 = vrot.slane %v8505, 6
    %v8612 = vrot.slane %v8506, 2
    %v8613 = vrot.slane %v8506, 4
    %v8614 = vrot.slane %v8506, 6
    %v8615 = vrot.slane %v8507, 2
    %v8616 = vrot.slane %v8507, 4
    %v8617 = vrot.slane %v8507, 6
    %v8618 = vrot.slane %v8508, 2
    %v8619 = vrot.slane %v8508, 4
    %v8620 = vrot.slane %v8508, 6
    %v8621 = vrot.slane %v8509, 2
    %v8622 = vrot.slane %v8509, 4
    %v8623 = vrot.slane %v8509, 6
    %v8624 = vrot.slane %v8510, 2
    %v8625 = vrot.slane %v8510, 4
    %v8626 = vrot.slane %v8510, 6
    %v8627 = vrot.slane %v8511, 2
    %v8628 = vrot.slane %v8511, 4
    %v8629 = vrot.slane %v8511, 6
    %v8630 = vrot.slane %v8512, 2
    %v8631 = vrot.slane %v8512, 4
    %v8632 = vrot.slane %v8512, 6
    %v8633 = vrot.slane %v8513, 2
    %v8634 = vrot.slane %v8513, 4
    %v8635 = vrot.slane %v8513, 6
    %v8636 = vrot.slane %v8514, 2
    %v8637 = vrot.slane %v8514, 4
    %v8638 = vrot.slane %v8514, 6
    %v8639 = vrot.slane %v8515, 2
    %v8640 = vrot.slane %v8515, 4
    %v8641 = vrot.slane %v8515, 6
    %v8642 = vrot.slane %v8516, 2
    %v8643 = vrot.slane %v8516, 4
    %v8644 = vrot.slane %v8516, 6
    %v8741 = vrot.slane %v8485, 7
    %v8742 = vrot.slane %v8741, 2
    %v8743 = vrot.slane %v8549, 7
    %v8744 = vrot.slane %v8743, 2
    %v8745 = vrot.slane %v8550, 7
    %v8746 = vrot.slane %v8745, 2
    %v8747 = vrot.slane %v8551, 7
    %v8748 = vrot.slane %v8747, 2
    %v8749 = vrot.slane %v8486, 7
    %v8750 = vrot.slane %v8749, 2
    %v8751 = vrot.slane %v8552, 7
    %v8752 = vrot.slane %v8751, 2
    %v8753 = vrot.slane %v8553, 7
    %v8754 = vrot.slane %v8753, 2
    %v8755 = vrot.slane %v8554, 7
    %v8756 = vrot.slane %v8755, 2
    %v8757 = vrot.slane %v8487, 7
    %v8758 = vrot.slane %v8757, 2
    %v8759 = vrot.slane %v8555, 7
    %v8760 = vrot.slane %v8759, 2
    %v8761 = vrot.slane %v8556, 7
    %v8762 = vrot.slane %v8761, 2
    %v8763 = vrot.slane %v8557, 7
    %v8764 = vrot.slane %v8763, 2
    %v8765 = vrot.slane %v8488, 7
    %v8766 = vrot.slane %v8765, 2
    %v8767 = vrot.slane %v8558, 7
    %v8768 = vrot.slane %v8767, 2
    %v8769 = vrot.slane %v8559, 7
    %v8770 = vrot.slane %v8769, 2
    %v8771 = vrot.slane %v8560, 7
    %v8772 = vrot.slane %v8771, 2
    %v8773 = vrot.slane %v8489, 7
    %v8774 = vrot.slane %v8773, 2
    %v8775 = vrot.slane %v8561, 7
    %v8776 = vrot.slane %v8775, 2
    %v8777 = vrot.slane %v8562, 7
    %v8778 = vrot.slane %v8777, 2
    %v8779 = vrot.slane %v8563, 7
    %v8780 = vrot.slane %v8779, 2
    %v8781 = vrot.slane %v8490, 7
    %v8782 = vrot.slane %v8781, 2
    %v8783 = vrot.slane %v8564, 7
    %v8784 = vrot.slane %v8783, 2
    %v8785 = vrot.slane %v8565, 7
    %v8786 = vrot.slane %v8785, 2
    %v8787 = vrot.slane %v8566, 7
    %v8788 = vrot.slane %v8787, 2
    %v8789 = vrot.slane %v8491, 7
    %v8790 = vrot.slane %v8789, 2
    %v8791 = vrot.slane %v8567, 7
    %v8792 = vrot.slane %v8791, 2
    %v8793 = vrot.slane %v8568, 7
    %v8794 = vrot.slane %v8793, 2
    %v8795 = vrot.slane %v8569, 7
    %v8796 = vrot.slane %v8795, 2
    %v8797 = vrot.slane %v8492, 7
    %v8798 = vrot.slane %v8797, 2
    %v8799 = vrot.slane %v8570, 7
    %v8800 = vrot.slane %v8799, 2
    %v8801 = vrot.slane %v8571, 7
    %v8802 = vrot.slane %v8801, 2
    %v8803 = vrot.slane %v8572, 7
    %v8804 = vrot.slane %v8803, 2
    %v8805 = vrot.slane %v8493, 7
    %v8806 = vrot.slane %v8805, 2
    %v8807 = vrot.slane %v8573, 7
    %v8808 = vrot.slane %v8807, 2
    %v8809 = vrot.slane %v8574, 7
    %v8810 = vrot.slane %v8809, 2
    %v8811 = vrot.slane %v8575, 7
    %v8812 = vrot.slane %v8811, 2
    %v8813 = vrot.slane %v8494, 7
    %v8814 = vrot.slane %v8813, 2
    %v8815 = vrot.slane %v8576, 7
    %v8816 = vrot.slane %v8815, 2
    %v8817 = vrot.slane %v8577, 7
    %v8818 = vrot.slane %v8817, 2
    %v8819 = vrot.slane %v8578, 7
    %v8820 = vrot.slane %v8819, 2
    %v8821 = vrot.slane %v8495, 7
    %v8822 = vrot.slane %v8821, 2
    %v8823 = vrot.slane %v8579, 7
    %v8824 = vrot.slane %v8823, 2
    %v8825 = vrot.slane %v8580, 7
    %v8826 = vrot.slane %v8825, 2
    %v8827 = vrot.slane %v8581, 7
    %v8828 = vrot.slane %v8827, 2
    %v8829 = vrot.slane %v8496, 7
    %v8830 = vrot.slane %v8829, 2
    %v8831 = vrot.slane %v8582, 7
    %v8832 = vrot.slane %v8831, 2
    %v8833 = vrot.slane %v8583, 7
    %v8834 = vrot.slane %v8833, 2
    %v8835 = vrot.slane %v8584, 7
    %v8836 = vrot.slane %v8835, 2
    %v8837 = vrot.slane %v8497, 7
    %v8838 = vrot.slane %v8837, 2
    %v8839 = vrot.slane %v8585, 7
    %v8840 = vrot.slane %v8839, 2
    %v8841 = vrot.slane %v8586, 7
    %v8842 = vrot.slane %v8841, 2
    %v8843 = vrot.slane %v8587, 7
    %v8844 = vrot.slane %v8843, 2
    %v8845 = vrot.slane %v8498, 7
    %v8846 = vrot.slane %v8845, 2
    %v8847 = vrot.slane %v8588, 7
    %v8848 = vrot.slane %v8847, 2
    %v8849 = vrot.slane %v8589, 7
    %v8850 = vrot.slane %v8849, 2
    %v8851 = vrot.slane %v8590, 7
    %v8852 = vrot.slane %v8851, 2
    %v8853 = vrot.slane %v8499, 7
    %v8854 = vrot.slane %v8853, 2
    %v8855 = vrot.slane %v8591, 7
    %v8856 = vrot.slane %v8855, 2
    %v8857 = vrot.slane %v8592, 7
    %v8858 = vrot.slane %v8857, 2
    %v8859 = vrot.slane %v8593, 7
    %v8860 = vrot.slane %v8859, 2
    %v8861 = vrot.slane %v8500, 7
    %v8862 = vrot.slane %v8861, 2
    %v8863 = vrot.slane %v8594, 7
    %v8864 = vrot.slane %v8863, 2
    %v8865 = vrot.slane %v8595, 7
    %v8866 = vrot.slane %v8865, 2
    %v8867 = vrot.slane %v8596, 7
    %v8868 = vrot.slane %v8867, 2
    %v8869 = vrot.slane %v8501, 7
    %v8870 = vrot.slane %v8869, 2
    %v8871 = vrot.slane %v8597, 7
    %v8872 = vrot.slane %v8871, 2
    %v8873 = vrot.slane %v8598, 7
    %v8874 = vrot.slane %v8873, 2
    %v8875 = vrot.slane %v8599, 7
    %v8876 = vrot.slane %v8875, 2
    %v8877 = vrot.slane %v8502, 7
    %v8878 = vrot.slane %v8877, 2
    %v8879 = vrot.slane %v8600, 7
    %v8880 = vrot.slane %v8879, 2
    %v8881 = vrot.slane %v8601, 7
    %v8882 = vrot.slane %v8881, 2
    %v8883 = vrot.slane %v8602, 7
    %v8884 = vrot.slane %v8883, 2
    %v8885 = vrot.slane %v8503, 7
    %v8886 = vrot.slane %v8885, 2
    %v8887 = vrot.slane %v8603, 7
    %v8888 = vrot.slane %v8887, 2
    %v8889 = vrot.slane %v8604, 7
    %v8890 = vrot.slane %v8889, 2
    %v8891 = vrot.slane %v8605, 7
    %v8892 = vrot.slane %v8891, 2
    %v8893 = vrot.slane %v8504, 7
    %v8894 = vrot.slane %v8893, 2
    %v8895 = vrot.slane %v8606, 7
    %v8896 = vrot.slane %v8895, 2
    %v8897 = vrot.slane %v8607, 7
    %v8898 = vrot.slane %v8897, 2
    %v8899 = vrot.slane %v8608, 7
    %v8900 = vrot.slane %v8899, 2
    %v8901 = vrot.slane %v8505, 7
    %v8902 = vrot.slane %v8901, 2
    %v8903 = vrot.slane %v8609, 7
    %v8904 = vrot.slane %v8903, 2
    %v8905 = vrot.slane %v8610, 7
    %v8906 = vrot.slane %v8905, 2
    %v8907 = vrot.slane %v8611, 7
    %v8908 = vrot.slane %v8907, 2
    %v8909 = vrot.slane %v8506, 7
    %v8910 = vrot.slane %v8909, 2
    %v8911 = vrot.slane %v8612, 7
    %v8912 = vrot.slane %v8911, 2
    %v8913 = vrot.slane %v8613, 7
    %v8914 = vrot.slane %v8913, 2
    %v8915 = vrot.slane %v8614, 7
    %v8916 = vrot.slane %v8915, 2
    %v8917 = vrot.slane %v8507, 7
    %v8918 = vrot.slane %v8917, 2
    %v8919 = vrot.slane %v8615, 7
    %v8920 = vrot.slane %v8919, 2
    %v8921 = vrot.slane %v8616, 7
    %v8922 = vrot.slane %v8921, 2
    %v8923 = vrot.slane %v8617, 7
    %v8924 = vrot.slane %v8923, 2
    %v8925 = vrot.slane %v8508, 7
    %v8926 = vrot.slane %v8925, 2
    %v8927 = vrot.slane %v8618, 7
    %v8928 = vrot.slane %v8927, 2
    %v8929 = vrot.slane %v8619, 7
    %v8930 = vrot.slane %v8929, 2
    %v8931 = vrot.slane %v8620, 7
    %v8932 = vrot.slane %v8931, 2
    %v8933 = vrot.slane %v8509, 7
    %v8934 = vrot.slane %v8933, 2
    %v8935 = vrot.slane %v8621, 7
    %v8936 = vrot.slane %v8935, 2
    %v8937 = vrot.slane %v8622, 7
    %v8938 = vrot.slane %v8937, 2
    %v8939 = vrot.slane %v8623, 7
    %v8940 = vrot.slane %v8939, 2
    %v8941 = vrot.slane %v8510, 7
    %v8942 = vrot.slane %v8941, 2
    %v8943 = vrot.slane %v8624, 7
    %v8944 = vrot.slane %v8943, 2
    %v8945 = vrot.slane %v8625, 7
    %v8946 = vrot.slane %v8945, 2
    %v8947 = vrot.slane %v8626, 7
    %v8948 = vrot.slane %v8947, 2
    %v8949 = vrot.slane %v8511, 7
    %v8950 = vrot.slane %v8949, 2
    %v8951 = vrot.slane %v8627, 7
    %v8952 = vrot.slane %v8951, 2
    %v8953 = vrot.slane %v8628, 7
    %v8954 = vrot.slane %v8953, 2
    %v8955 = vrot.slane %v8629, 7
    %v8956 = vrot.slane %v8955, 2
    %v8957 = vrot.slane %v8512, 7
    %v8958 = vrot.slane %v8957, 2
    %v8959 = vrot.slane %v8630, 7
    %v8960 = vrot.slane %v8959, 2
    %v8961 = vrot.slane %v8631, 7
    %v8962 = vrot.slane %v8961, 2
    %v8963 = vrot.slane %v8632, 7
    %v8964 = vrot.slane %v8963, 2
    %v8965 = vrot.slane %v8513, 7
    %v8966 = vrot.slane %v8965, 2
    %v8967 = vrot.slane %v8633, 7
    %v8968 = vrot.slane %v8967, 2
    %v8969 = vrot.slane %v8634, 7
    %v8970 = vrot.slane %v8969, 2
    %v8971 = vrot.slane %v8635, 7
    %v8972 = vrot.slane %v8971, 2
    %v8973 = vrot.slane %v8514, 7
    %v8974 = vrot.slane %v8973, 2
    %v8975 = vrot.slane %v8636, 7
    %v8976 = vrot.slane %v8975, 2
    %v8977 = vrot.slane %v8637, 7
    %v8978 = vrot.slane %v8977, 2
    %v8979 = vrot.slane %v8638, 7
    %v8980 = vrot.slane %v8979, 2
    %v8981 = vrot.slane %v8515, 7
    %v8982 = vrot.slane %v8981, 2
    %v8983 = vrot.slane %v8639, 7
    %v8984 = vrot.slane %v8983, 2
    %v8985 = vrot.slane %v8640, 7
    %v8986 = vrot.slane %v8985, 2
    %v8987 = vrot.slane %v8641, 7
    %v8988 = vrot.slane %v8987, 2
    %v8989 = vrot.slane %v8516, 7
    %v8990 = vrot.slane %v8989, 2
    %v8991 = vrot.slane %v8642, 7
    %v8992 = vrot.slane %v8991, 2
    %v8993 = vrot.slane %v8643, 7
    %v8994 = vrot.slane %v8993, 2
    %v8995 = vrot.slane %v8644, 7
    %v8996 = vrot.slane %v8995, 2
    %v9125 = vmax.f32 %v8485, %v8742
    %v9126 = vmax.f32 %v8549, %v8744
    %v9127 = vmax.f32 %v8550, %v8746
    %v9128 = vmax.f32 %v8551, %v8748
    %v9129 = vmax.f32 %v8486, %v8750
    %v9130 = vmax.f32 %v8552, %v8752
    %v9131 = vmax.f32 %v8553, %v8754
    %v9132 = vmax.f32 %v8554, %v8756
    %v9133 = vmax.f32 %v8487, %v8758
    %v9134 = vmax.f32 %v8555, %v8760
    %v9135 = vmax.f32 %v8556, %v8762
    %v9136 = vmax.f32 %v8557, %v8764
    %v9137 = vmax.f32 %v8488, %v8766
    %v9138 = vmax.f32 %v8558, %v8768
    %v9139 = vmax.f32 %v8559, %v8770
    %v9140 = vmax.f32 %v8560, %v8772
    %v9141 = vmax.f32 %v8489, %v8774
    %v9142 = vmax.f32 %v8561, %v8776
    %v9143 = vmax.f32 %v8562, %v8778
    %v9144 = vmax.f32 %v8563, %v8780
    %v9145 = vmax.f32 %v8490, %v8782
    %v9146 = vmax.f32 %v8564, %v8784
    %v9147 = vmax.f32 %v8565, %v8786
    %v9148 = vmax.f32 %v8566, %v8788
    %v9149 = vmax.f32 %v8491, %v8790
    %v9150 = vmax.f32 %v8567, %v8792
    %v9151 = vmax.f32 %v8568, %v8794
    %v9152 = vmax.f32 %v8569, %v8796
    %v9153 = vmax.f32 %v8492, %v8798
    %v9154 = vmax.f32 %v8570, %v8800
    %v9155 = vmax.f32 %v8571, %v8802
    %v9156 = vmax.f32 %v8572, %v8804
    %v9157 = vmax.f32 %v8493, %v8806
    %v9158 = vmax.f32 %v8573, %v8808
    %v9159 = vmax.f32 %v8574, %v8810
    %v9160 = vmax.f32 %v8575, %v8812
    %v9161 = vmax.f32 %v8494, %v8814
    %v9162 = vmax.f32 %v8576, %v8816
    %v9163 = vmax.f32 %v8577, %v8818
    %v9164 = vmax.f32 %v8578, %v8820
    %v9165 = vmax.f32 %v8495, %v8822
    %v9166 = vmax.f32 %v8579, %v8824
    %v9167 = vmax.f32 %v8580, %v8826
    %v9168 = vmax.f32 %v8581, %v8828
    %v9169 = vmax.f32 %v8496, %v8830
    %v9170 = vmax.f32 %v8582, %v8832
    %v9171 = vmax.f32 %v8583, %v8834
    %v9172 = vmax.f32 %v8584, %v8836
    %v9173 = vmax.f32 %v8497, %v8838
    %v9174 = vmax.f32 %v8585, %v8840
    %v9175 = vmax.f32 %v8586, %v8842
    %v9176 = vmax.f32 %v8587, %v8844
    %v9177 = vmax.f32 %v8498, %v8846
    %v9178 = vmax.f32 %v8588, %v8848
    %v9179 = vmax.f32 %v8589, %v8850
    %v9180 = vmax.f32 %v8590, %v8852
    %v9181 = vmax.f32 %v8499, %v8854
    %v9182 = vmax.f32 %v8591, %v8856
    %v9183 = vmax.f32 %v8592, %v8858
    %v9184 = vmax.f32 %v8593, %v8860
    %v9185 = vmax.f32 %v8500, %v8862
    %v9186 = vmax.f32 %v8594, %v8864
    %v9187 = vmax.f32 %v8595, %v8866
    %v9188 = vmax.f32 %v8596, %v8868
    %v9189 = vmax.f32 %v8501, %v8870
    %v9190 = vmax.f32 %v8597, %v8872
    %v9191 = vmax.f32 %v8598, %v8874
    %v9192 = vmax.f32 %v8599, %v8876
    %v9193 = vmax.f32 %v8502, %v8878
    %v9194 = vmax.f32 %v8600, %v8880
    %v9195 = vmax.f32 %v8601, %v8882
    %v9196 = vmax.f32 %v8602, %v8884
    %v9197 = vmax.f32 %v8503, %v8886
    %v9198 = vmax.f32 %v8603, %v8888
    %v9199 = vmax.f32 %v8604, %v8890
    %v9200 = vmax.f32 %v8605, %v8892
    %v9201 = vmax.f32 %v8504, %v8894
    %v9202 = vmax.f32 %v8606, %v8896
    %v9203 = vmax.f32 %v8607, %v8898
    %v9204 = vmax.f32 %v8608, %v8900
    %v9205 = vmax.f32 %v8505, %v8902
    %v9206 = vmax.f32 %v8609, %v8904
    %v9207 = vmax.f32 %v8610, %v8906
    %v9208 = vmax.f32 %v8611, %v8908
    %v9209 = vmax.f32 %v8506, %v8910
    %v9210 = vmax.f32 %v8612, %v8912
    %v9211 = vmax.f32 %v8613, %v8914
    %v9212 = vmax.f32 %v8614, %v8916
    %v9213 = vmax.f32 %v8507, %v8918
    %v9214 = vmax.f32 %v8615, %v8920
    %v9215 = vmax.f32 %v8616, %v8922
    %v9216 = vmax.f32 %v8617, %v8924
    %v9217 = vmax.f32 %v8508, %v8926
    %v9218 = vmax.f32 %v8618, %v8928
    %v9219 = vmax.f32 %v8619, %v8930
    %v9220 = vmax.f32 %v8620, %v8932
    %v9221 = vmax.f32 %v8509, %v8934
    %v9222 = vmax.f32 %v8621, %v8936
    %v9223 = vmax.f32 %v8622, %v8938
    %v9224 = vmax.f32 %v8623, %v8940
    %v9225 = vmax.f32 %v8510, %v8942
    %v9226 = vmax.f32 %v8624, %v8944
    %v9227 = vmax.f32 %v8625, %v8946
    %v9228 = vmax.f32 %v8626, %v8948
    %v9229 = vmax.f32 %v8511, %v8950
    %v9230 = vmax.f32 %v8627, %v8952
    %v9231 = vmax.f32 %v8628, %v8954
    %v9232 = vmax.f32 %v8629, %v8956
    %v9233 = vmax.f32 %v8512, %v8958
    %v9234 = vmax.f32 %v8630, %v8960
    %v9235 = vmax.f32 %v8631, %v8962
    %v9236 = vmax.f32 %v8632, %v8964
    %v9237 = vmax.f32 %v8513, %v8966
    %v9238 = vmax.f32 %v8633, %v8968
    %v9239 = vmax.f32 %v8634, %v8970
    %v9240 = vmax.f32 %v8635, %v8972
    %v9241 = vmax.f32 %v8514, %v8974
    %v9242 = vmax.f32 %v8636, %v8976
    %v9243 = vmax.f32 %v8637, %v8978
    %v9244 = vmax.f32 %v8638, %v8980
    %v9245 = vmax.f32 %v8515, %v8982
    %v9246 = vmax.f32 %v8639, %v8984
    %v9247 = vmax.f32 %v8640, %v8986
    %v9248 = vmax.f32 %v8641, %v8988
    %v9249 = vmax.f32 %v8516, %v8990
    %v9250 = vmax.f32 %v8642, %v8992
    %v9251 = vmax.f32 %v8643, %v8994
    %v9252 = vmax.f32 %v8644, %v8996
    %v9253 = vpack.c.bf16 %v9125, %v9125
    %v9254 = vpack.c.bf16 %v9126, %v9126
    %v9255 = vpack.c.bf16 %v9127, %v9127
    %v9256 = vpack.c.bf16 %v9128, %v9128
    %v9257 = vpack.c.bf16 %v9129, %v9129
    %v9258 = vpack.c.bf16 %v9130, %v9130
    %v9259 = vpack.c.bf16 %v9131, %v9131
    %v9260 = vpack.c.bf16 %v9132, %v9132
    %v9261 = vpack.c.bf16 %v9133, %v9133
    %v9262 = vpack.c.bf16 %v9134, %v9134
    %v9263 = vpack.c.bf16 %v9135, %v9135
    %v9264 = vpack.c.bf16 %v9136, %v9136
    %v9265 = vpack.c.bf16 %v9137, %v9137
    %v9266 = vpack.c.bf16 %v9138, %v9138
    %v9267 = vpack.c.bf16 %v9139, %v9139
    %v9268 = vpack.c.bf16 %v9140, %v9140
    %v9269 = vpack.c.bf16 %v9141, %v9141
    %v9270 = vpack.c.bf16 %v9142, %v9142
    %v9271 = vpack.c.bf16 %v9143, %v9143
    %v9272 = vpack.c.bf16 %v9144, %v9144
    %v9273 = vpack.c.bf16 %v9145, %v9145
    %v9274 = vpack.c.bf16 %v9146, %v9146
    %v9275 = vpack.c.bf16 %v9147, %v9147
    %v9276 = vpack.c.bf16 %v9148, %v9148
    %v9277 = vpack.c.bf16 %v9149, %v9149
    %v9278 = vpack.c.bf16 %v9150, %v9150
    %v9279 = vpack.c.bf16 %v9151, %v9151
    %v9280 = vpack.c.bf16 %v9152, %v9152
    %v9281 = vpack.c.bf16 %v9153, %v9153
    %v9282 = vpack.c.bf16 %v9154, %v9154
    %v9283 = vpack.c.bf16 %v9155, %v9155
    %v9284 = vpack.c.bf16 %v9156, %v9156
    %v9285 = vpack.c.bf16 %v9157, %v9157
    %v9286 = vpack.c.bf16 %v9158, %v9158
    %v9287 = vpack.c.bf16 %v9159, %v9159
    %v9288 = vpack.c.bf16 %v9160, %v9160
    %v9289 = vpack.c.bf16 %v9161, %v9161
    %v9290 = vpack.c.bf16 %v9162, %v9162
    %v9291 = vpack.c.bf16 %v9163, %v9163
    %v9292 = vpack.c.bf16 %v9164, %v9164
    %v9293 = vpack.c.bf16 %v9165, %v9165
    %v9294 = vpack.c.bf16 %v9166, %v9166
    %v9295 = vpack.c.bf16 %v9167, %v9167
    %v9296 = vpack.c.bf16 %v9168, %v9168
    %v9297 = vpack.c.bf16 %v9169, %v9169
    %v9298 = vpack.c.bf16 %v9170, %v9170
    %v9299 = vpack.c.bf16 %v9171, %v9171
    %v9300 = vpack.c.bf16 %v9172, %v9172
    %v9301 = vpack.c.bf16 %v9173, %v9173
    %v9302 = vpack.c.bf16 %v9174, %v9174
    %v9303 = vpack.c.bf16 %v9175, %v9175
    %v9304 = vpack.c.bf16 %v9176, %v9176
    %v9305 = vpack.c.bf16 %v9177, %v9177
    %v9306 = vpack.c.bf16 %v9178, %v9178
    %v9307 = vpack.c.bf16 %v9179, %v9179
    %v9308 = vpack.c.bf16 %v9180, %v9180
    %v9309 = vpack.c.bf16 %v9181, %v9181
    %v9310 = vpack.c.bf16 %v9182, %v9182
    %v9311 = vpack.c.bf16 %v9183, %v9183
    %v9312 = vpack.c.bf16 %v9184, %v9184
    %v9313 = vpack.c.bf16 %v9185, %v9185
    %v9314 = vpack.c.bf16 %v9186, %v9186
    %v9315 = vpack.c.bf16 %v9187, %v9187
    %v9316 = vpack.c.bf16 %v9188, %v9188
    %v9317 = vpack.c.bf16 %v9189, %v9189
    %v9318 = vpack.c.bf16 %v9190, %v9190
    %v9319 = vpack.c.bf16 %v9191, %v9191
    %v9320 = vpack.c.bf16 %v9192, %v9192
    %v9321 = vpack.c.bf16 %v9193, %v9193
    %v9322 = vpack.c.bf16 %v9194, %v9194
    %v9323 = vpack.c.bf16 %v9195, %v9195
    %v9324 = vpack.c.bf16 %v9196, %v9196
    %v9325 = vpack.c.bf16 %v9197, %v9197
    %v9326 = vpack.c.bf16 %v9198, %v9198
    %v9327 = vpack.c.bf16 %v9199, %v9199
    %v9328 = vpack.c.bf16 %v9200, %v9200
    %v9329 = vpack.c.bf16 %v9201, %v9201
    %v9330 = vpack.c.bf16 %v9202, %v9202
    %v9331 = vpack.c.bf16 %v9203, %v9203
    %v9332 = vpack.c.bf16 %v9204, %v9204
    %v9333 = vpack.c.bf16 %v9205, %v9205
    %v9334 = vpack.c.bf16 %v9206, %v9206
    %v9335 = vpack.c.bf16 %v9207, %v9207
    %v9336 = vpack.c.bf16 %v9208, %v9208
    %v9337 = vpack.c.bf16 %v9209, %v9209
    %v9338 = vpack.c.bf16 %v9210, %v9210
    %v9339 = vpack.c.bf16 %v9211, %v9211
    %v9340 = vpack.c.bf16 %v9212, %v9212
    %v9341 = vpack.c.bf16 %v9213, %v9213
    %v9342 = vpack.c.bf16 %v9214, %v9214
    %v9343 = vpack.c.bf16 %v9215, %v9215
    %v9344 = vpack.c.bf16 %v9216, %v9216
    %v9345 = vpack.c.bf16 %v9217, %v9217
    %v9346 = vpack.c.bf16 %v9218, %v9218
    %v9347 = vpack.c.bf16 %v9219, %v9219
    %v9348 = vpack.c.bf16 %v9220, %v9220
    %v9349 = vpack.c.bf16 %v9221, %v9221
    %v9350 = vpack.c.bf16 %v9222, %v9222
    %v9351 = vpack.c.bf16 %v9223, %v9223
    %v9352 = vpack.c.bf16 %v9224, %v9224
    %v9353 = vpack.c.bf16 %v9225, %v9225
    %v9354 = vpack.c.bf16 %v9226, %v9226
    %v9355 = vpack.c.bf16 %v9227, %v9227
    %v9356 = vpack.c.bf16 %v9228, %v9228
    %v9357 = vpack.c.bf16 %v9229, %v9229
    %v9358 = vpack.c.bf16 %v9230, %v9230
    %v9359 = vpack.c.bf16 %v9231, %v9231
    %v9360 = vpack.c.bf16 %v9232, %v9232
    %v9361 = vpack.c.bf16 %v9233, %v9233
    %v9362 = vpack.c.bf16 %v9234, %v9234
    %v9363 = vpack.c.bf16 %v9235, %v9235
    %v9364 = vpack.c.bf16 %v9236, %v9236
    %v9365 = vpack.c.bf16 %v9237, %v9237
    %v9366 = vpack.c.bf16 %v9238, %v9238
    %v9367 = vpack.c.bf16 %v9239, %v9239
    %v9368 = vpack.c.bf16 %v9240, %v9240
    %v9369 = vpack.c.bf16 %v9241, %v9241
    %v9370 = vpack.c.bf16 %v9242, %v9242
    %v9371 = vpack.c.bf16 %v9243, %v9243
    %v9372 = vpack.c.bf16 %v9244, %v9244
    %v9373 = vpack.c.bf16 %v9245, %v9245
    %v9374 = vpack.c.bf16 %v9246, %v9246
    %v9375 = vpack.c.bf16 %v9247, %v9247
    %v9376 = vpack.c.bf16 %v9248, %v9248
    %v9377 = vpack.c.bf16 %v9249, %v9249
    %v9378 = vpack.c.bf16 %v9250, %v9250
    %v9379 = vpack.c.bf16 %v9251, %v9251
    %v9380 = vpack.c.bf16 %v9252, %v9252
    %v9509 = vunpack.c.l.b16 %v9253
    %v9510 = vunpack.c.l.b16 %v9254
    %v9511 = vunpack.c.l.b16 %v9255
    %v9512 = vunpack.c.l.b16 %v9256
    %v9513 = vunpack.c.l.b16 %v9257
    %v9514 = vunpack.c.l.b16 %v9258
    %v9515 = vunpack.c.l.b16 %v9259
    %v9516 = vunpack.c.l.b16 %v9260
    %v9517 = vunpack.c.l.b16 %v9261
    %v9518 = vunpack.c.l.b16 %v9262
    %v9519 = vunpack.c.l.b16 %v9263
    %v9520 = vunpack.c.l.b16 %v9264
    %v9521 = vunpack.c.l.b16 %v9265
    %v9522 = vunpack.c.l.b16 %v9266
    %v9523 = vunpack.c.l.b16 %v9267
    %v9524 = vunpack.c.l.b16 %v9268
    %v9525 = vunpack.c.l.b16 %v9269
    %v9526 = vunpack.c.l.b16 %v9270
    %v9527 = vunpack.c.l.b16 %v9271
    %v9528 = vunpack.c.l.b16 %v9272
    %v9529 = vunpack.c.l.b16 %v9273
    %v9530 = vunpack.c.l.b16 %v9274
    %v9531 = vunpack.c.l.b16 %v9275
    %v9532 = vunpack.c.l.b16 %v9276
    %v9533 = vunpack.c.l.b16 %v9277
    %v9534 = vunpack.c.l.b16 %v9278
    %v9535 = vunpack.c.l.b16 %v9279
    %v9536 = vunpack.c.l.b16 %v9280
    %v9537 = vunpack.c.l.b16 %v9281
    %v9538 = vunpack.c.l.b16 %v9282
    %v9539 = vunpack.c.l.b16 %v9283
    %v9540 = vunpack.c.l.b16 %v9284
    %v9541 = vunpack.c.l.b16 %v9285
    %v9542 = vunpack.c.l.b16 %v9286
    %v9543 = vunpack.c.l.b16 %v9287
    %v9544 = vunpack.c.l.b16 %v9288
    %v9545 = vunpack.c.l.b16 %v9289
    %v9546 = vunpack.c.l.b16 %v9290
    %v9547 = vunpack.c.l.b16 %v9291
    %v9548 = vunpack.c.l.b16 %v9292
    %v9549 = vunpack.c.l.b16 %v9293
    %v9550 = vunpack.c.l.b16 %v9294
    %v9551 = vunpack.c.l.b16 %v9295
    %v9552 = vunpack.c.l.b16 %v9296
    %v9553 = vunpack.c.l.b16 %v9297
    %v9554 = vunpack.c.l.b16 %v9298
    %v9555 = vunpack.c.l.b16 %v9299
    %v9556 = vunpack.c.l.b16 %v9300
    %v9557 = vunpack.c.l.b16 %v9301
    %v9558 = vunpack.c.l.b16 %v9302
    %v9559 = vunpack.c.l.b16 %v9303
    %v9560 = vunpack.c.l.b16 %v9304
    %v9561 = vunpack.c.l.b16 %v9305
    %v9562 = vunpack.c.l.b16 %v9306
    %v9563 = vunpack.c.l.b16 %v9307
    %v9564 = vunpack.c.l.b16 %v9308
    %v9565 = vunpack.c.l.b16 %v9309
    %v9566 = vunpack.c.l.b16 %v9310
    %v9567 = vunpack.c.l.b16 %v9311
    %v9568 = vunpack.c.l.b16 %v9312
    %v9569 = vunpack.c.l.b16 %v9313
    %v9570 = vunpack.c.l.b16 %v9314
    %v9571 = vunpack.c.l.b16 %v9315
    %v9572 = vunpack.c.l.b16 %v9316
    %v9573 = vunpack.c.l.b16 %v9317
    %v9574 = vunpack.c.l.b16 %v9318
    %v9575 = vunpack.c.l.b16 %v9319
    %v9576 = vunpack.c.l.b16 %v9320
    %v9577 = vunpack.c.l.b16 %v9321
    %v9578 = vunpack.c.l.b16 %v9322
    %v9579 = vunpack.c.l.b16 %v9323
    %v9580 = vunpack.c.l.b16 %v9324
    %v9581 = vunpack.c.l.b16 %v9325
    %v9582 = vunpack.c.l.b16 %v9326
    %v9583 = vunpack.c.l.b16 %v9327
    %v9584 = vunpack.c.l.b16 %v9328
    %v9585 = vunpack.c.l.b16 %v9329
    %v9586 = vunpack.c.l.b16 %v9330
    %v9587 = vunpack.c.l.b16 %v9331
    %v9588 = vunpack.c.l.b16 %v9332
    %v9589 = vunpack.c.l.b16 %v9333
    %v9590 = vunpack.c.l.b16 %v9334
    %v9591 = vunpack.c.l.b16 %v9335
    %v9592 = vunpack.c.l.b16 %v9336
    %v9593 = vunpack.c.l.b16 %v9337
    %v9594 = vunpack.c.l.b16 %v9338
    %v9595 = vunpack.c.l.b16 %v9339
    %v9596 = vunpack.c.l.b16 %v9340
    %v9597 = vunpack.c.l.b16 %v9341
    %v9598 = vunpack.c.l.b16 %v9342
    %v9599 = vunpack.c.l.b16 %v9343
    %v9600 = vunpack.c.l.b16 %v9344
    %v9601 = vunpack.c.l.b16 %v9345
    %v9602 = vunpack.c.l.b16 %v9346
    %v9603 = vunpack.c.l.b16 %v9347
    %v9604 = vunpack.c.l.b16 %v9348
    %v9605 = vunpack.c.l.b16 %v9349
    %v9606 = vunpack.c.l.b16 %v9350
    %v9607 = vunpack.c.l.b16 %v9351
    %v9608 = vunpack.c.l.b16 %v9352
    %v9609 = vunpack.c.l.b16 %v9353
    %v9610 = vunpack.c.l.b16 %v9354
    %v9611 = vunpack.c.l.b16 %v9355
    %v9612 = vunpack.c.l.b16 %v9356
    %v9613 = vunpack.c.l.b16 %v9357
    %v9614 = vunpack.c.l.b16 %v9358
    %v9615 = vunpack.c.l.b16 %v9359
    %v9616 = vunpack.c.l.b16 %v9360
    %v9617 = vunpack.c.l.b16 %v9361
    %v9618 = vunpack.c.l.b16 %v9362
    %v9619 = vunpack.c.l.b16 %v9363
    %v9620 = vunpack.c.l.b16 %v9364
    %v9621 = vunpack.c.l.b16 %v9365
    %v9622 = vunpack.c.l.b16 %v9366
    %v9623 = vunpack.c.l.b16 %v9367
    %v9624 = vunpack.c.l.b16 %v9368
    %v9625 = vunpack.c.l.b16 %v9369
    %v9626 = vunpack.c.l.b16 %v9370
    %v9627 = vunpack.c.l.b16 %v9371
    %v9628 = vunpack.c.l.b16 %v9372
    %v9629 = vunpack.c.l.b16 %v9373
    %v9630 = vunpack.c.l.b16 %v9374
    %v9631 = vunpack.c.l.b16 %v9375
    %v9632 = vunpack.c.l.b16 %v9376
    %v9633 = vunpack.c.l.b16 %v9377
    %v9634 = vunpack.c.l.b16 %v9378
    %v9635 = vunpack.c.l.b16 %v9379
    %v9636 = vunpack.c.l.b16 %v9380
    %v9637 = vrot.slane %v9510, 7
    %vm9638 = vcmask 1041409
    %v9639 = vsel %vm9638, %v9637, %v9509
    %v9640 = vrot.slane %v9511, 6
    %vm9641 = vcmask 1042434
    %v9642 = vsel %vm9641, %v9640, %v9639
    %v9643 = vrot.slane %v9512, 5
    %vm9644 = vcmask 1043459
    %v9645 = vsel %vm9644, %v9643, %v9642
    %v9646 = vrot.slane %v9513, 4
    %vm9647 = vcmask 1044484
    %v9648 = vsel %vm9647, %v9646, %v9645
    %v9649 = vrot.slane %v9514, 3
    %vm9650 = vcmask 1045509
    %v9651 = vsel %vm9650, %v9649, %v9648
    %v9652 = vrot.slane %v9515, 2
    %vm9653 = vcmask 1046534
    %v9654 = vsel %vm9653, %v9652, %v9651
    %v9655 = vrot.slane %v9516, 1
    %vm9656 = vcmask 1047559
    %v9657 = vsel %vm9656, %v9655, %v9654
    %v9658 = vrot.slane %v9518, 7
    %v9659 = vsel %vm9638, %v9658, %v9517
    %v9660 = vrot.slane %v9519, 6
    %v9661 = vsel %vm9641, %v9660, %v9659
    %v9662 = vrot.slane %v9520, 5
    %v9663 = vsel %vm9644, %v9662, %v9661
    %v9664 = vrot.slane %v9521, 4
    %v9665 = vsel %vm9647, %v9664, %v9663
    %v9666 = vrot.slane %v9522, 3
    %v9667 = vsel %vm9650, %v9666, %v9665
    %v9668 = vrot.slane %v9523, 2
    %v9669 = vsel %vm9653, %v9668, %v9667
    %v9670 = vrot.slane %v9524, 1
    %v9671 = vsel %vm9656, %v9670, %v9669
    %v9672 = vrot.slane %v9526, 7
    %v9673 = vsel %vm9638, %v9672, %v9525
    %v9674 = vrot.slane %v9527, 6
    %v9675 = vsel %vm9641, %v9674, %v9673
    %v9676 = vrot.slane %v9528, 5
    %v9677 = vsel %vm9644, %v9676, %v9675
    %v9678 = vrot.slane %v9529, 4
    %v9679 = vsel %vm9647, %v9678, %v9677
    %v9680 = vrot.slane %v9530, 3
    %v9681 = vsel %vm9650, %v9680, %v9679
    %v9682 = vrot.slane %v9531, 2
    %v9683 = vsel %vm9653, %v9682, %v9681
    %v9684 = vrot.slane %v9532, 1
    %v9685 = vsel %vm9656, %v9684, %v9683
    %v9686 = vrot.slane %v9534, 7
    %v9687 = vsel %vm9638, %v9686, %v9533
    %v9688 = vrot.slane %v9535, 6
    %v9689 = vsel %vm9641, %v9688, %v9687
    %v9690 = vrot.slane %v9536, 5
    %v9691 = vsel %vm9644, %v9690, %v9689
    %v9692 = vrot.slane %v9537, 4
    %v9693 = vsel %vm9647, %v9692, %v9691
    %v9694 = vrot.slane %v9538, 3
    %v9695 = vsel %vm9650, %v9694, %v9693
    %v9696 = vrot.slane %v9539, 2
    %v9697 = vsel %vm9653, %v9696, %v9695
    %v9698 = vrot.slane %v9540, 1
    %v9699 = vsel %vm9656, %v9698, %v9697
    %v9700 = vrot.slane %v9542, 7
    %v9701 = vsel %vm9638, %v9700, %v9541
    %v9702 = vrot.slane %v9543, 6
    %v9703 = vsel %vm9641, %v9702, %v9701
    %v9704 = vrot.slane %v9544, 5
    %v9705 = vsel %vm9644, %v9704, %v9703
    %v9706 = vrot.slane %v9545, 4
    %v9707 = vsel %vm9647, %v9706, %v9705
    %v9708 = vrot.slane %v9546, 3
    %v9709 = vsel %vm9650, %v9708, %v9707
    %v9710 = vrot.slane %v9547, 2
    %v9711 = vsel %vm9653, %v9710, %v9709
    %v9712 = vrot.slane %v9548, 1
    %v9713 = vsel %vm9656, %v9712, %v9711
    %v9714 = vrot.slane %v9550, 7
    %v9715 = vsel %vm9638, %v9714, %v9549
    %v9716 = vrot.slane %v9551, 6
    %v9717 = vsel %vm9641, %v9716, %v9715
    %v9718 = vrot.slane %v9552, 5
    %v9719 = vsel %vm9644, %v9718, %v9717
    %v9720 = vrot.slane %v9553, 4
    %v9721 = vsel %vm9647, %v9720, %v9719
    %v9722 = vrot.slane %v9554, 3
    %v9723 = vsel %vm9650, %v9722, %v9721
    %v9724 = vrot.slane %v9555, 2
    %v9725 = vsel %vm9653, %v9724, %v9723
    %v9726 = vrot.slane %v9556, 1
    %v9727 = vsel %vm9656, %v9726, %v9725
    %v9728 = vrot.slane %v9558, 7
    %v9729 = vsel %vm9638, %v9728, %v9557
    %v9730 = vrot.slane %v9559, 6
    %v9731 = vsel %vm9641, %v9730, %v9729
    %v9732 = vrot.slane %v9560, 5
    %v9733 = vsel %vm9644, %v9732, %v9731
    %v9734 = vrot.slane %v9561, 4
    %v9735 = vsel %vm9647, %v9734, %v9733
    %v9736 = vrot.slane %v9562, 3
    %v9737 = vsel %vm9650, %v9736, %v9735
    %v9738 = vrot.slane %v9563, 2
    %v9739 = vsel %vm9653, %v9738, %v9737
    %v9740 = vrot.slane %v9564, 1
    %v9741 = vsel %vm9656, %v9740, %v9739
    %v9742 = vrot.slane %v9566, 7
    %v9743 = vsel %vm9638, %v9742, %v9565
    %v9744 = vrot.slane %v9567, 6
    %v9745 = vsel %vm9641, %v9744, %v9743
    %v9746 = vrot.slane %v9568, 5
    %v9747 = vsel %vm9644, %v9746, %v9745
    %v9748 = vrot.slane %v9569, 4
    %v9749 = vsel %vm9647, %v9748, %v9747
    %v9750 = vrot.slane %v9570, 3
    %v9751 = vsel %vm9650, %v9750, %v9749
    %v9752 = vrot.slane %v9571, 2
    %v9753 = vsel %vm9653, %v9752, %v9751
    %v9754 = vrot.slane %v9572, 1
    %v9755 = vsel %vm9656, %v9754, %v9753
    %v9756 = vrot.slane %v9574, 7
    %v9757 = vsel %vm9638, %v9756, %v9573
    %v9758 = vrot.slane %v9575, 6
    %v9759 = vsel %vm9641, %v9758, %v9757
    %v9760 = vrot.slane %v9576, 5
    %v9761 = vsel %vm9644, %v9760, %v9759
    %v9762 = vrot.slane %v9577, 4
    %v9763 = vsel %vm9647, %v9762, %v9761
    %v9764 = vrot.slane %v9578, 3
    %v9765 = vsel %vm9650, %v9764, %v9763
    %v9766 = vrot.slane %v9579, 2
    %v9767 = vsel %vm9653, %v9766, %v9765
    %v9768 = vrot.slane %v9580, 1
    %v9769 = vsel %vm9656, %v9768, %v9767
    %v9770 = vrot.slane %v9582, 7
    %v9771 = vsel %vm9638, %v9770, %v9581
    %v9772 = vrot.slane %v9583, 6
    %v9773 = vsel %vm9641, %v9772, %v9771
    %v9774 = vrot.slane %v9584, 5
    %v9775 = vsel %vm9644, %v9774, %v9773
    %v9776 = vrot.slane %v9585, 4
    %v9777 = vsel %vm9647, %v9776, %v9775
    %v9778 = vrot.slane %v9586, 3
    %v9779 = vsel %vm9650, %v9778, %v9777
    %v9780 = vrot.slane %v9587, 2
    %v9781 = vsel %vm9653, %v9780, %v9779
    %v9782 = vrot.slane %v9588, 1
    %v9783 = vsel %vm9656, %v9782, %v9781
    %v9784 = vrot.slane %v9590, 7
    %v9785 = vsel %vm9638, %v9784, %v9589
    %v9786 = vrot.slane %v9591, 6
    %v9787 = vsel %vm9641, %v9786, %v9785
    %v9788 = vrot.slane %v9592, 5
    %v9789 = vsel %vm9644, %v9788, %v9787
    %v9790 = vrot.slane %v9593, 4
    %v9791 = vsel %vm9647, %v9790, %v9789
    %v9792 = vrot.slane %v9594, 3
    %v9793 = vsel %vm9650, %v9792, %v9791
    %v9794 = vrot.slane %v9595, 2
    %v9795 = vsel %vm9653, %v9794, %v9793
    %v9796 = vrot.slane %v9596, 1
    %v9797 = vsel %vm9656, %v9796, %v9795
    %v9798 = vrot.slane %v9598, 7
    %v9799 = vsel %vm9638, %v9798, %v9597
    %v9800 = vrot.slane %v9599, 6
    %v9801 = vsel %vm9641, %v9800, %v9799
    %v9802 = vrot.slane %v9600, 5
    %v9803 = vsel %vm9644, %v9802, %v9801
    %v9804 = vrot.slane %v9601, 4
    %v9805 = vsel %vm9647, %v9804, %v9803
    %v9806 = vrot.slane %v9602, 3
    %v9807 = vsel %vm9650, %v9806, %v9805
    %v9808 = vrot.slane %v9603, 2
    %v9809 = vsel %vm9653, %v9808, %v9807
    %v9810 = vrot.slane %v9604, 1
    %v9811 = vsel %vm9656, %v9810, %v9809
    %v9812 = vrot.slane %v9606, 7
    %v9813 = vsel %vm9638, %v9812, %v9605
    %v9814 = vrot.slane %v9607, 6
    %v9815 = vsel %vm9641, %v9814, %v9813
    %v9816 = vrot.slane %v9608, 5
    %v9817 = vsel %vm9644, %v9816, %v9815
    %v9818 = vrot.slane %v9609, 4
    %v9819 = vsel %vm9647, %v9818, %v9817
    %v9820 = vrot.slane %v9610, 3
    %v9821 = vsel %vm9650, %v9820, %v9819
    %v9822 = vrot.slane %v9611, 2
    %v9823 = vsel %vm9653, %v9822, %v9821
    %v9824 = vrot.slane %v9612, 1
    %v9825 = vsel %vm9656, %v9824, %v9823
    %v9826 = vrot.slane %v9614, 7
    %v9827 = vsel %vm9638, %v9826, %v9613
    %v9828 = vrot.slane %v9615, 6
    %v9829 = vsel %vm9641, %v9828, %v9827
    %v9830 = vrot.slane %v9616, 5
    %v9831 = vsel %vm9644, %v9830, %v9829
    %v9832 = vrot.slane %v9617, 4
    %v9833 = vsel %vm9647, %v9832, %v9831
    %v9834 = vrot.slane %v9618, 3
    %v9835 = vsel %vm9650, %v9834, %v9833
    %v9836 = vrot.slane %v9619, 2
    %v9837 = vsel %vm9653, %v9836, %v9835
    %v9838 = vrot.slane %v9620, 1
    %v9839 = vsel %vm9656, %v9838, %v9837
    %v9840 = vrot.slane %v9622, 7
    %v9841 = vsel %vm9638, %v9840, %v9621
    %v9842 = vrot.slane %v9623, 6
    %v9843 = vsel %vm9641, %v9842, %v9841
    %v9844 = vrot.slane %v9624, 5
    %v9845 = vsel %vm9644, %v9844, %v9843
    %v9846 = vrot.slane %v9625, 4
    %v9847 = vsel %vm9647, %v9846, %v9845
    %v9848 = vrot.slane %v9626, 3
    %v9849 = vsel %vm9650, %v9848, %v9847
    %v9850 = vrot.slane %v9627, 2
    %v9851 = vsel %vm9653, %v9850, %v9849
    %v9852 = vrot.slane %v9628, 1
    %v9853 = vsel %vm9656, %v9852, %v9851
    %v9854 = vrot.slane %v9630, 7
    %v9855 = vsel %vm9638, %v9854, %v9629
    %v9856 = vrot.slane %v9631, 6
    %v9857 = vsel %vm9641, %v9856, %v9855
    %v9858 = vrot.slane %v9632, 5
    %v9859 = vsel %vm9644, %v9858, %v9857
    %v9860 = vrot.slane %v9633, 4
    %v9861 = vsel %vm9647, %v9860, %v9859
    %v9862 = vrot.slane %v9634, 3
    %v9863 = vsel %vm9650, %v9862, %v9861
    %v9864 = vrot.slane %v9635, 2
    %v9865 = vsel %vm9653, %v9864, %v9863
    %v9866 = vrot.slane %v9636, 1
    %v9867 = vsel %vm9656, %v9866, %v9865
    %v9868 = vpack.c.b16 %v9657, %v9657
    %v9869 = vpack.c.b16 %v9671, %v9671
    %v9870 = vpack.c.b16 %v9685, %v9685
    %v9871 = vpack.c.b16 %v9699, %v9699
    %v9872 = vpack.c.b16 %v9713, %v9713
    %v9873 = vpack.c.b16 %v9727, %v9727
    %v9874 = vpack.c.b16 %v9741, %v9741
    %v9875 = vpack.c.b16 %v9755, %v9755
    %v9876 = vpack.c.b16 %v9769, %v9769
    %v9877 = vpack.c.b16 %v9783, %v9783
    %v9878 = vpack.c.b16 %v9797, %v9797
    %v9879 = vpack.c.b16 %v9811, %v9811
    %v9880 = vpack.c.b16 %v9825, %v9825
    %v9881 = vpack.c.b16 %v9839, %v9839
    %v9882 = vpack.c.b16 %v9853, %v9853
    %v9883 = vpack.c.b16 %v9867, %v9867
    %9900 = vst [vmem:[#allocation3] sm:$0xf] %v9868
    %9901 = vst [vmem:[#allocation3 + $0x4] sm:$0xf] %v9869
    %9902 = vst [vmem:[#allocation3 + $0x8] sm:$0xf] %v9870
    %9903 = vst [vmem:[#allocation3 + $0xc] sm:$0xf] %v9871
    %9904 = vst [vmem:[#allocation3 + $0x10] sm:$0xf] %v9872
    %9905 = vst [vmem:[#allocation3 + $0x14] sm:$0xf] %v9873
    %9906 = vst [vmem:[#allocation3 + $0x18] sm:$0xf] %v9874
    %9907 = vst [vmem:[#allocation3 + $0x1c] sm:$0xf] %v9875
    %9908 = vst [vmem:[#allocation3 + $0x20] sm:$0xf] %v9876
    %9909 = vst [vmem:[#allocation3 + $0x24] sm:$0xf] %v9877
    %9910 = vst [vmem:[#allocation3 + $0x28] sm:$0xf] %v9878
    %9911 = vst [vmem:[#allocation3 + $0x2c] sm:$0xf] %v9879
    %9912 = vst [vmem:[#allocation3 + $0x30] sm:$0xf] %v9880
    %9913 = vst [vmem:[#allocation3 + $0x34] sm:$0xf] %v9881
    %9914 = vst [vmem:[#allocation3 + $0x38] sm:$0xf] %v9882
    %9915 = vst [vmem:[#allocation3 + $0x3c] sm:$0xf] %v9883
    // Predicated region
    $region34: #{tpu_custom_call.1} parent=1 // pred_check
      _
    $region35: #{tpu_custom_call.1} parent=1 // pred_check_branch
      %9917 = sbr.rel (0) target = $region37
    $region36: #{tpu_custom_call.1} parent=1 // pred_region
      %9919 = vsyncadd [#allocation4], 0
      %s9920 = sshll.u32 [#allocation3], 4
      %s9921 = int_to_ptr.vmem [resolvable:$true] %s9920
      %s9922 = sshll.u32 %s8, 4
      %s9923 = int_to_ptr.hbm [resolvable:$true] %s9922
      %9928 = dma.vmem_to_hbm [thread:$0]  %s9921, 1024, %s9923, [#allocation4], 64, 64, 4
    $region37: #{tpu_custom_call.1} parent=1 // pred_fallthru
      _
    // Predicated region
    $region38: #{tpu_custom_call.1} parent=1 // pred_check
      _
    $region39: #{tpu_custom_call.1} parent=1 // pred_check_branch
      %9930 = sbr.rel (0) target = $region41
    $region40: #{tpu_custom_call.1} parent=1 // pred_region
      %9932 = dma.done [#allocation4], 1024
    $region41: #{tpu_custom_call.1} parent=1 // pred_fallthru
      _
    %9933 = vsyncpa [#allocation4], 1

</llo_original>
